<compile_context>
chip_gen: v5e
topology: v5e:2x2
jax: 0.10.0
libtpu: 0.0.40
codegen_flags: <defaults>
</compile_context>

<pallas_src>
import functools

import jax
import jax.numpy as jnp
from jax.experimental import pallas as pl
from jax.experimental.pallas import tpu as pltpu

LANE = 128  # all internal channel dims are padded to this lane width


def _round_up(x, m):
    return (x + m - 1) // m * m


def _choose_batch_tile(n, l):
    """Samples per grid step. Target M = nb*L ~ 1024 rows per step (>=512 per
    the MXU fill/drain amortisation rule) while keeping the per-step activation
    working set far below the 32 MiB scoped VMEM (v7x-safe)."""
    n8 = _round_up(max(n, 1), 8)
    target_rows = 1024
    nb = max(8, (target_rows // max(l, 1)) // 8 * 8)
    return min(nb, n8)


def _const_spec(shape):
    zeros = (0,) * len(shape)
    return pl.BlockSpec(shape, lambda i: zeros)


# ----------------------------------------------------------------------------
# Encoder kernel: stem conv -> grouped bottleneck + residual -> avgpool -> h
# One grid step processes `nb` whole samples (M = nb*L rows of 128 lanes).
# ----------------------------------------------------------------------------
def _encoder_kernel(x_ref,                       # (nb, L, 3*c_in)  f32 im2col-lite
                    stem_w_ref, stem_b_ref,      # (3*c_in, Cp) f32, (1, Cp) f32
                    c1_w_ref, c1_b_ref,          # (Cp, Cp) bf16,    (1, Cp) f32
                    c2_w_ref, c2_b_ref,          # (3, Cp, Cp) bf16, (1, Cp) f32
                    c3ds_w_ref, c3ds_b_ref,      # (2*Cp, Cp) bf16,  (1, Cp) f32
                    h_ref,                       # (nb, Cp) f32 output
                    *, nb, l, cp):
    bf16 = jnp.bfloat16
    m = nb * l
    k_in = x_ref.shape[-1]

    # ---- stem Conv1d(k=3, pad=1) + folded BN + ReLU as ONE f32 dot ----------
    x = x_ref[...].reshape(m, k_in)
    ident = jnp.dot(x, stem_w_ref[...], preferred_element_type=jnp.float32)
    ident = jnp.maximum(ident + stem_b_ref[...], 0.0)      # (m, cp) f32
    ident_bf = ident.astype(bf16)                           # cast ONCE, reused

    # ---- bottleneck conv1 (1x1) + BN + ReLU ---------------------------------
    t = jnp.dot(ident_bf, c1_w_ref[...], preferred_element_type=jnp.float32)
    t = jnp.maximum(t + c1_b_ref[...], 0.0)                 # (m, cp) f32
    t_bf = t.astype(bf16)

    # ---- grouped conv2 (k=3, pad=1): XLU rolls + boundary masks, no copies --
    pos = jax.lax.broadcasted_iota(jnp.int32, (m, cp), 0) % l
    t_up = jnp.where(pos == 0, 0.0,
                     pltpu.roll(t, shift=1, axis=0)).astype(bf16)      # t[r-1]
    t_dn = jnp.where(pos == l - 1, 0.0,
                     pltpu.roll(t, shift=m - 1, axis=0)).astype(bf16)  # t[r+1]
    acc2 = jnp.dot(t_up, c2_w_ref[0], preferred_element_type=jnp.float32)
    acc2 = acc2 + jnp.dot(t_bf, c2_w_ref[1], preferred_element_type=jnp.float32)
    acc2 = acc2 + jnp.dot(t_dn, c2_w_ref[2], preferred_element_type=jnp.float32)
    t2_bf = jnp.maximum(acc2 + c2_b_ref[...], 0.0).astype(bf16)

    # ---- conv3 + downsample fused into ONE K=2*Cp dot, residual add + ReLU --
    cat = jnp.concatenate([t2_bf, ident_bf], axis=-1)       # (m, 2*cp) bf16
    y = jnp.dot(cat, c3ds_w_ref[...], preferred_element_type=jnp.float32)
    y = jnp.maximum(y + c3ds_b_ref[...], 0.0)               # (m, cp) f32

    # ---- global average pool over L -> representation h (fc = Identity) ----
    h_ref[...] = jnp.mean(y.reshape(nb, l, cp), axis=1)


# ----------------------------------------------------------------------------
# Projector kernel (full-batch M): Linear -> ReLU -> Linear, bias-free
# ----------------------------------------------------------------------------
def _projector_kernel(h_ref, p1_ref, p2_ref, z_ref):
    bf16 = jnp.bfloat16
    h_bf = h_ref[...].astype(bf16)
    z1 = jnp.maximum(
        jnp.dot(h_bf, p1_ref[...], preferred_element_type=jnp.float32), 0.0)
    z_ref[...] = jnp.dot(z1.astype(bf16), p2_ref[...],
                         preferred_element_type=jnp.float32)


# ----------------------------------------------------------------------------
# Forward pass wrapper:  h = encoder(x);  z = projector(h);  return (h, z)
# ----------------------------------------------------------------------------
def simclr_multi_resnext_forward(x_ncl, packed):
    n, c_in, l = x_ncl.shape
    cp = LANE
    k_in = 3 * c_in

    nb = _choose_batch_tile(n, l)
    n_pad = _round_up(n, nb)

    # ---- input layout plumbing (tiny): im2col-lite operand (n_pad, L, 3*c_in)
    x_nlc = jnp.transpose(x_ncl, (0, 2, 1)).astype(jnp.float32)
    x_nlc = jnp.pad(x_nlc, ((0, n_pad - n), (0, 0), (0, 0)))
    xp = jnp.pad(x_nlc, ((0, 0), (1, 1), (0, 0)))            # conv pad=1 halo
    x_taps = jnp.concatenate([xp[:, j:j + l, :] for j in range(3)], axis=-1)

    grid = (n_pad // nb,)
    enc_kernel = functools.partial(_encoder_kernel, nb=nb, l=l, cp=cp)

    enc_flops = 2 * n_pad * l * (k_in * cp + 6 * cp * cp)
    enc_bytes = (n_pad * l * k_in * 4                 # x_taps
                 + k_in * cp * 4 + 6 * cp * cp * 2    # weights (f32 stem + bf16)
                 + 4 * cp * 4                         # biases
                 + n_pad * cp * 4)                    # h out

    h_pad = pl.pallas_call(
        enc_kernel,
        out_shape=jax.ShapeDtypeStruct((n_pad, cp), jnp.float32),
        grid=grid,
        in_specs=[
            pl.BlockSpec((nb, l, k_in), lambda i: (i, 0, 0)),
            _const_spec((k_in, cp)),
            _const_spec((1, cp)),
            _const_spec((cp, cp)),
            _const_spec((1, cp)),
            _const_spec((3, cp, cp)),
            _const_spec((1, cp)),
            _const_spec((2 * cp, cp)),
            _const_spec((1, cp)),
        ],
        out_specs=pl.BlockSpec((nb, cp), lambda i: (i, 0)),
        compiler_params=pltpu.CompilerParams(
            dimension_semantics=("parallel",),
            vmem_limit_bytes=32 * 1024 * 1024),
        cost_estimate=pl.CostEstimate(
            flops=enc_flops, transcendentals=0, bytes_accessed=enc_bytes),
    )(x_taps,
      packed['stem_w'], packed['stem_b'],
      packed['c1_w'], packed['c1_b'],
      packed['c2_w'], packed['c2_b'],
      packed['c3ds_w'], packed['c3ds_b'])

    # ---- projector on the full (n_pad, cp) representation -------------------
    pb = min(n_pad, 512)
    rows = _round_up(n_pad, pb)
    h_proj_in = h_pad if rows == n_pad else jnp.pad(
        h_pad, ((0, rows - n_pad), (0, 0)))

    z_pad = pl.pallas_call(
        _projector_kernel,
        out_shape=jax.ShapeDtypeStruct((rows, cp), jnp.float32),
        grid=(rows // pb,),
        in_specs=[
            pl.BlockSpec((pb, cp), lambda i: (i, 0)),
            _const_spec((cp, cp)),
            _const_spec((cp, cp)),
        ],
        out_specs=pl.BlockSpec((pb, cp), lambda i: (i, 0)),
        compiler_params=pltpu.CompilerParams(
            dimension_semantics=("parallel",),
            vmem_limit_bytes=32 * 1024 * 1024),
        cost_estimate=pl.CostEstimate(
            flops=4 * rows * cp * cp, transcendentals=0,
            bytes_accessed=rows * cp * 8 + 2 * cp * cp * 2),
    )(h_proj_in, packed['p1_w'], packed['p2_w'])

    h = h_pad[:n, :packed['n_features']]
    z = z_pad[:n, :packed['projection_dim']]
    return h, z


# ----------------------------------------------------------------------------
# Parameter construction & packing (runs ONCE, hoisted out of the forward)
# ----------------------------------------------------------------------------
def _fold_bn(w_oik, gamma, beta, mean, var, eps=1e-5):
    scale = gamma / jnp.sqrt(var + eps)
    return w_oik * scale[:, None, None], beta - mean * scale


def _conv_to_taps(w_oik, c_in_total, groups, cp):
    """PyTorch Conv1d weight (C_out, C_in//g, k) -> (k, Cp, Cp) tap matrices
    (block-diagonal over groups, zero-padded to the 128-lane width)."""
    c_out, c_in_g, k = w_oik.shape
    if groups == 1:
        W = jnp.transpose(w_oik, (2, 1, 0))                  # (k, c_in, c_out)
    else:
        c_out_g = c_out // groups
        W = jnp.zeros((k, c_in_total, c_out), jnp.float32)
        for g in range(groups):                              # pack-time only
            wg = jnp.transpose(w_oik[g * c_out_g:(g + 1) * c_out_g], (2, 1, 0))
            W = W.at[:, g * c_in_g:(g + 1) * c_in_g,
                     g * c_out_g:(g + 1) * c_out_g].set(wg)
    Wp = jnp.zeros((k, cp, cp), jnp.float32)
    return Wp.at[:, :c_in_total, :c_out].set(W)


def _pad_mat(w_io, cp):
    out = jnp.zeros((cp, cp), jnp.float32)
    return out.at[:w_io.shape[0], :w_io.shape[1]].set(w_io)


def _pad_bias(b, cp):
    out = jnp.zeros((1, cp), jnp.float32)
    return out.at[0, :b.shape[0]].set(b)


def make_params(c_in, width, n_features, projection_dim, groups, cp=LANE):
    key = jax.random.PRNGKey(42)
    ks = jax.random.split(key, 12)

    def w(k, shape, scale=0.1):
        return scale * jax.random.normal(k, shape, jnp.float32)

    def bn(k, c):
        k1, k2 = jax.random.split(k)
        gamma = 1.0 + 0.05 * jax.random.normal(k1, (c,), jnp.float32)
        beta = 0.05 * jax.random.normal(k2, (c,), jnp.float32)
        return gamma, beta, jnp.zeros((c,), jnp.float32), jnp.ones((c,), jnp.float32)

    stem_w, stem_b = _fold_bn(w(ks[0], (width, c_in, 3)), *bn(ks[1], width))
    c1_w, c1_b = _fold_bn(w(ks[2], (width, width, 1)), *bn(ks[3], width))
    c2_w, c2_b = _fold_bn(w(ks[4], (width, width // groups, 3)), *bn(ks[5], width))
    c3_w, c3_b = _fold_bn(w(ks[6], (n_features, width, 1)), *bn(ks[7], n_features))
    ds_w, ds_b = _fold_bn(w(ks[8], (n_features, width, 1)), *bn(ks[9], n_features))
    p1_w = w(ks[10], (n_features, n_features))           # (in, out), bias-free
    p2_w = w(ks[11], (n_features, projection_dim))       # (in, out), bias-free

    bf16 = jnp.bfloat16

    # stem as im2col-lite weight (3*c_in, Cp); kept f32 (input fidelity, tiny K)
    stem_packed = jnp.zeros((3 * c_in, cp), jnp.float32)
    stem_packed = stem_packed.at[:, :width].set(
        jnp.transpose(stem_w, (2, 1, 0)).reshape(3 * c_in, width))

    # conv3 + downsample stacked into ONE K=2*Cp weight; biases folded together
    c3ds_w = jnp.zeros((2 * cp, cp), jnp.float32)
    c3ds_w = c3ds_w.at[:width, :n_features].set(c3_w[:, :, 0].T)
    c3ds_w = c3ds_w.at[cp:cp + width, :n_features].set(ds_w[:, :, 0].T)

    return {
        'stem_w': stem_packed,
        'stem_b': _pad_bias(stem_b, cp),
        'c1_w': _pad_mat(c1_w[:, :, 0].T, cp).astype(bf16),
        'c1_b': _pad_bias(c1_b, cp),
        'c2_w': _conv_to_taps(c2_w, width, groups, cp).astype(bf16),
        'c2_b': _pad_bias(c2_b, cp),
        'c3ds_w': c3ds_w.astype(bf16),
        'c3ds_b': _pad_bias(c3_b + ds_b, cp),
        'p1_w': _pad_mat(p1_w, cp).astype(bf16),
        'p2_w': _pad_mat(p2_w, cp).astype(bf16),
        'n_features': n_features,
        'projection_dim': projection_dim,
    }


# ----------------------------------------------------------------------------
# Pure-jnp f32 reference over the same packed weights (validates the roll/mask
# conv, the im2col stem and the fused conv3+downsample)
# ----------------------------------------------------------------------------
def _reference_forward(x_ncl, packed):
    f = lambda a: jnp.asarray(a, jnp.float32)
    n, c_in, l = x_ncl.shape
    cp = LANE
    x = jnp.transpose(x_ncl, (0, 2, 1)).astype(jnp.float32)       # (n, l, c_in)
    xp = jnp.pad(x, ((0, 0), (1, 1), (0, 0)))
    stem_w = f(packed['stem_w'])
    acc = jnp.zeros((n, l, cp), jnp.float32)
    for j in range(3):
        acc = acc + jnp.einsum('nlc,cd->nld', xp[:, j:j + l, :],
                               stem_w[j * c_in:(j + 1) * c_in])
    ident = jnp.maximum(acc + packed['stem_b'][0], 0.0)
    t = jnp.maximum(jnp.einsum('nlc,cd->nld', ident, f(packed['c1_w']))
                    + packed['c1_b'][0], 0.0)
    tp = jnp.pad(t, ((0, 0), (1, 1), (0, 0)))
    c2 = f(packed['c2_w'])
    acc2 = jnp.zeros((n, l, cp), jnp.float32)
    for j in range(3):
        acc2 = acc2 + jnp.einsum('nlc,cd->nld', tp[:, j:j + l, :], c2[j])
    t2 = jnp.maximum(acc2 + packed['c2_b'][0], 0.0)
    c3ds = f(packed['c3ds_w'])
    y = (jnp.einsum('nlc,cd->nld', t2, c3ds[:cp])
         + jnp.einsum('nlc,cd->nld', ident, c3ds[cp:])
         + packed['c3ds_b'][0])
    y = jnp.maximum(y, 0.0)
    h = jnp.mean(y, axis=1)
    z = jnp.maximum(h @ f(packed['p1_w']), 0.0) @ f(packed['p2_w'])
    return h[:, :packed['n_features']], z[:, :packed['projection_dim']]


# ----------------------------------------------------------------------------
if __name__ == "__main__":
    # Small 1-D ResNeXt-style shapes (N, C, L); N/L chosen so the batch-tiled
    # grid has 2 steps with M = 1024 rows per step.
    N, C_IN, L = 16, 4, 128
    WIDTH = 32            # bottleneck width
    N_FEATURES = 64       # encoder.fc.in_features (representation dim)
    PROJECTION_DIM = 32
    GROUPS = 4

    x = jax.random.normal(jax.random.PRNGKey(0), (N, C_IN, L), jnp.float32)
    params = make_params(C_IN, WIDTH, N_FEATURES, PROJECTION_DIM, GROUPS)

    h, z = simclr_multi_resnext_forward(x, params)
    jax.block_until_ready(h)
    jax.block_until_ready(z)

    assert h.shape == (N, N_FEATURES)
    assert z.shape == (N, PROJECTION_DIM)

    # Kernel uses bf16 MXU operands (f32 accumulation) after the f32 stem.
    h_ref, z_ref = _reference_forward(x, params)
    assert bool(jnp.allclose(h, h_ref, atol=2e-2, rtol=2e-2)), "h mismatch"
    assert bool(jnp.allclose(z, z_ref, atol=2e-2, rtol=2e-2)), "z mismatch"

    print("KERNEL_OK")
</pallas_src>

<mosaic_0001>
module attributes {stable_mosaic.version = 11 : i64} {
  func.func @_encoder_kernel(%arg0: i32, %arg1: memref<8x128x12xf32, #tpu.memory_space<vmem>>, %arg2: memref<12x128xf32, #tpu.memory_space<vmem>>, %arg3: memref<1x128xf32, #tpu.memory_space<vmem>>, %arg4: memref<128x128xbf16, #tpu.memory_space<vmem>>, %arg5: memref<1x128xf32, #tpu.memory_space<vmem>>, %arg6: memref<3x128x128xbf16, #tpu.memory_space<vmem>>, %arg7: memref<1x128xf32, #tpu.memory_space<vmem>>, %arg8: memref<256x128xbf16, #tpu.memory_space<vmem>>, %arg9: memref<1x128xf32, #tpu.memory_space<vmem>>, %arg10: memref<8x128xf32, #tpu.memory_space<vmem>>) attributes {dimension_semantics = [#tpu.dimension_semantics<parallel>], iteration_bounds = array<i64: 2>, scalar_prefetch = 0 : i64, scratch_operands = 0 : i64, tpu.core_type = #tpu.core_type<tc>, window_params = [{transform_indices = @transform_0, window_bounds = array<i64: 8, 128, 12>}, {pipeline_mode = #tpu.pipeline_mode<synchronous>, transform_indices = @transform_1, window_bounds = array<i64: 12, 128>}, {pipeline_mode = #tpu.pipeline_mode<synchronous>, transform_indices = @transform_2, window_bounds = array<i64: 1, 128>}, {pipeline_mode = #tpu.pipeline_mode<synchronous>, transform_indices = @transform_3, window_bounds = array<i64: 128, 128>}, {pipeline_mode = #tpu.pipeline_mode<synchronous>, transform_indices = @transform_4, window_bounds = array<i64: 1, 128>}, {pipeline_mode = #tpu.pipeline_mode<synchronous>, transform_indices = @transform_5, window_bounds = array<i64: 3, 128, 128>}, {pipeline_mode = #tpu.pipeline_mode<synchronous>, transform_indices = @transform_6, window_bounds = array<i64: 1, 128>}, {pipeline_mode = #tpu.pipeline_mode<synchronous>, transform_indices = @transform_7, window_bounds = array<i64: 256, 128>}, {pipeline_mode = #tpu.pipeline_mode<synchronous>, transform_indices = @transform_8, window_bounds = array<i64: 1, 128>}, {transform_indices = @transform_9, window_bounds = array<i64: 8, 128>}]} {
    %c0 = arith.constant 0 : index
    %c0_0 = arith.constant 0 : index
    %c0_1 = arith.constant 0 : index
    %0 = vector.load %arg1[%c0, %c0_0, %c0_1] : memref<8x128x12xf32, #tpu.memory_space<vmem>>, vector<8x128x12xf32>
    %1 = vector.shape_cast %0 : vector<8x128x12xf32> to vector<1024x12xf32>
    %c0_2 = arith.constant 0 : index
    %c0_3 = arith.constant 0 : index
    %2 = vector.load %arg2[%c0_2, %c0_3] : memref<12x128xf32, #tpu.memory_space<vmem>>, vector<12x128xf32>
    %cst = arith.constant dense<0.000000e+00> : vector<1024x128xf32>
    %3 = tpu.matmul %1, %2, %cst {dimension_numbers = #tpu.dot_dimension_numbers<[1], [0], [0], [1], [0, 0, 1, 1], [], []>} : vector<1024x12xf32>, vector<12x128xf32>, vector<1024x128xf32> -> vector<1024x128xf32>
    %c0_4 = arith.constant 0 : index
    %c0_5 = arith.constant 0 : index
    %4 = vector.load %arg3[%c0_4, %c0_5] : memref<1x128xf32, #tpu.memory_space<vmem>>, vector<1x128xf32>
    %5 = vector.broadcast %4 : vector<1x128xf32> to vector<1024x128xf32>
    %6 = arith.addf %3, %5 : vector<1024x128xf32>
    %cst_6 = arith.constant 0.000000e+00 : f32
    %7 = vector.broadcast %cst_6 : f32 to vector<1024x128xf32>
    %8 = arith.maximumf %6, %7 : vector<1024x128xf32>
    %9 = arith.truncf %8 : vector<1024x128xf32> to vector<1024x128xbf16>
    %c0_7 = arith.constant 0 : index
    %c0_8 = arith.constant 0 : index
    %10 = vector.load %arg4[%c0_7, %c0_8] : memref<128x128xbf16, #tpu.memory_space<vmem>>, vector<128x128xbf16>
    %cst_9 = arith.constant dense<0.000000e+00> : vector<1024x128xf32>
    %11 = tpu.matmul %9, %10, %cst_9 {dimension_numbers = #tpu.dot_dimension_numbers<[1], [0], [0], [1], [0, 0, 1, 1], [], []>} : vector<1024x128xbf16>, vector<128x128xbf16>, vector<1024x128xf32> -> vector<1024x128xf32>
    %c0_10 = arith.constant 0 : index
    %c0_11 = arith.constant 0 : index
    %12 = vector.load %arg5[%c0_10, %c0_11] : memref<1x128xf32, #tpu.memory_space<vmem>>, vector<1x128xf32>
    %13 = vector.broadcast %12 : vector<1x128xf32> to vector<1024x128xf32>
    %14 = arith.addf %11, %13 : vector<1024x128xf32>
    %cst_12 = arith.constant 0.000000e+00 : f32
    %15 = vector.broadcast %cst_12 : f32 to vector<1024x128xf32>
    %16 = arith.maximumf %14, %15 : vector<1024x128xf32>
    %17 = arith.truncf %16 : vector<1024x128xf32> to vector<1024x128xbf16>
    %18 = tpu.iota {dimensions = array<i32: 0>} : vector<1024x128xi32>
    %c128_i32 = arith.constant 128 : i32
    %c0_i32 = arith.constant 0 : i32
    %19 = arith.cmpi eq, %c128_i32, %c0_i32 : i32
    %c1_i32 = arith.constant 1 : i32
    %20 = arith.select %19, %c1_i32, %c128_i32 : i32
    %21 = vector.broadcast %20 : i32 to vector<1024x128xi32>
    %22 = arith.remsi %18, %21 : vector<1024x128xi32>
    %c0_i32_13 = arith.constant 0 : i32
    %23 = vector.broadcast %c0_i32_13 : i32 to vector<1024x128xi32>
    %24 = arith.cmpi ne, %22, %23 : vector<1024x128xi32>
    %c0_i32_14 = arith.constant 0 : i32
    %25 = vector.broadcast %c0_i32_14 : i32 to vector<1024x128xi32>
    %26 = arith.cmpi slt, %22, %25 : vector<1024x128xi32>
    %c0_i32_15 = arith.constant 0 : i32
    %27 = arith.cmpi slt, %20, %c0_i32_15 : i32
    %28 = vector.broadcast %27 : i1 to vector<1024x128xi1>
    %29 = vector.broadcast %28 : vector<1024x128xi1> to vector<1024x128xi1>
    %30 = arith.xori %26, %29 : vector<1024x128xi1>
    %31 = arith.andi %30, %24 : vector<1024x128xi1>
    %32 = vector.broadcast %20 : i32 to vector<1024x128xi32>
    %33 = arith.addi %22, %32 : vector<1024x128xi32>
    %34 = arith.select %31, %33, %22 : vector<1024x128xi1>, vector<1024x128xi32>
    %c0_i32_16 = arith.constant 0 : i32
    %35 = vector.broadcast %c0_i32_16 : i32 to vector<1024x128xi32>
    %36 = arith.cmpi eq, %34, %35 : vector<1024x128xi32>
    %c1_i32_17 = arith.constant 1 : i32
    %37 = tpu.dynamic_rotate %16 by %c1_i32_17 dim 0 : vector<1024x128xf32>, i32 -> vector<1024x128xf32>
    %cst_18 = arith.constant 0.000000e+00 : f32
    %38 = vector.broadcast %cst_18 : f32 to vector<1024x128xf32>
    %39 = arith.select %36, %38, %37 : vector<1024x128xi1>, vector<1024x128xf32>
    %40 = arith.truncf %39 : vector<1024x128xf32> to vector<1024x128xbf16>
    %c127_i32 = arith.constant 127 : i32
    %41 = vector.broadcast %c127_i32 : i32 to vector<1024x128xi32>
    %42 = arith.cmpi eq, %34, %41 : vector<1024x128xi32>
    %c1023_i32 = arith.constant 1023 : i32
    %43 = tpu.dynamic_rotate %16 by %c1023_i32 dim 0 : vector<1024x128xf32>, i32 -> vector<1024x128xf32>
    %cst_19 = arith.constant 0.000000e+00 : f32
    %44 = vector.broadcast %cst_19 : f32 to vector<1024x128xf32>
    %45 = arith.select %42, %44, %43 : vector<1024x128xi1>, vector<1024x128xf32>
    %46 = arith.truncf %45 : vector<1024x128xf32> to vector<1024x128xbf16>
    %c0_20 = arith.constant 0 : index
    %c0_21 = arith.constant 0 : index
    %c0_22 = arith.constant 0 : index
    %47 = vector.load %arg6[%c0_20, %c0_21, %c0_22] : memref<3x128x128xbf16, #tpu.memory_space<vmem>>, vector<1x128x128xbf16>
    %48 = vector.shape_cast %47 : vector<1x128x128xbf16> to vector<128x128xbf16>
    %cst_23 = arith.constant dense<0.000000e+00> : vector<1024x128xf32>
    %49 = tpu.matmul %40, %48, %cst_23 {dimension_numbers = #tpu.dot_dimension_numbers<[1], [0], [0], [1], [0, 0, 1, 1], [], []>} : vector<1024x128xbf16>, vector<128x128xbf16>, vector<1024x128xf32> -> vector<1024x128xf32>
    %c1 = arith.constant 1 : index
    %c0_24 = arith.constant 0 : index
    %c0_25 = arith.constant 0 : index
    %50 = vector.load %arg6[%c1, %c0_24, %c0_25] : memref<3x128x128xbf16, #tpu.memory_space<vmem>>, vector<1x128x128xbf16>
    %51 = vector.shape_cast %50 : vector<1x128x128xbf16> to vector<128x128xbf16>
    %cst_26 = arith.constant dense<0.000000e+00> : vector<1024x128xf32>
    %52 = tpu.matmul %17, %51, %cst_26 {dimension_numbers = #tpu.dot_dimension_numbers<[1], [0], [0], [1], [0, 0, 1, 1], [], []>} : vector<1024x128xbf16>, vector<128x128xbf16>, vector<1024x128xf32> -> vector<1024x128xf32>
    %53 = arith.addf %49, %52 : vector<1024x128xf32>
    %c2 = arith.constant 2 : index
    %c0_27 = arith.constant 0 : index
    %c0_28 = arith.constant 0 : index
    %54 = vector.load %arg6[%c2, %c0_27, %c0_28] : memref<3x128x128xbf16, #tpu.memory_space<vmem>>, vector<1x128x128xbf16>
    %55 = vector.shape_cast %54 : vector<1x128x128xbf16> to vector<128x128xbf16>
    %cst_29 = arith.constant dense<0.000000e+00> : vector<1024x128xf32>
    %56 = tpu.matmul %46, %55, %cst_29 {dimension_numbers = #tpu.dot_dimension_numbers<[1], [0], [0], [1], [0, 0, 1, 1], [], []>} : vector<1024x128xbf16>, vector<128x128xbf16>, vector<1024x128xf32> -> vector<1024x128xf32>
    %57 = arith.addf %53, %56 : vector<1024x128xf32>
    %c0_30 = arith.constant 0 : index
    %c0_31 = arith.constant 0 : index
    %58 = vector.load %arg7[%c0_30, %c0_31] : memref<1x128xf32, #tpu.memory_space<vmem>>, vector<1x128xf32>
    %59 = vector.broadcast %58 : vector<1x128xf32> to vector<1024x128xf32>
    %60 = arith.addf %57, %59 : vector<1024x128xf32>
    %cst_32 = arith.constant 0.000000e+00 : f32
    %61 = vector.broadcast %cst_32 : f32 to vector<1024x128xf32>
    %62 = arith.maximumf %60, %61 : vector<1024x128xf32>
    %63 = arith.truncf %62 : vector<1024x128xf32> to vector<1024x128xbf16>
    %64 = tpu.concatenate %63, %9 in 1 : vector<1024x128xbf16>, vector<1024x128xbf16> -> vector<1024x256xbf16>
    %c0_33 = arith.constant 0 : index
    %c0_34 = arith.constant 0 : index
    %65 = vector.load %arg8[%c0_33, %c0_34] : memref<256x128xbf16, #tpu.memory_space<vmem>>, vector<256x128xbf16>
    %cst_35 = arith.constant dense<0.000000e+00> : vector<1024x128xf32>
    %66 = tpu.matmul %64, %65, %cst_35 {dimension_numbers = #tpu.dot_dimension_numbers<[1], [0], [0], [1], [0, 0, 1, 1], [], []>} : vector<1024x256xbf16>, vector<256x128xbf16>, vector<1024x128xf32> -> vector<1024x128xf32>
    %c0_36 = arith.constant 0 : index
    %c0_37 = arith.constant 0 : index
    %67 = vector.load %arg9[%c0_36, %c0_37] : memref<1x128xf32, #tpu.memory_space<vmem>>, vector<1x128xf32>
    %68 = vector.broadcast %67 : vector<1x128xf32> to vector<1024x128xf32>
    %69 = arith.addf %66, %68 : vector<1024x128xf32>
    %cst_38 = arith.constant 0.000000e+00 : f32
    %70 = vector.broadcast %cst_38 : f32 to vector<1024x128xf32>
    %71 = arith.maximumf %69, %70 : vector<1024x128xf32>
    %72 = vector.shape_cast %71 : vector<1024x128xf32> to vector<8x128x128xf32>
    %cst_39 = arith.constant dense<0.000000e+00> : vector<8x128xf32>
    %73 = vector.multi_reduction <add>, %72, %cst_39 [1] : vector<8x128x128xf32> to vector<8x128xf32>
    %cst_40 = arith.constant 1.280000e+02 : f32
    %74 = vector.broadcast %cst_40 : f32 to vector<8x128xf32>
    %75 = arith.divf %73, %74 : vector<8x128xf32>
    %c0_41 = arith.constant 0 : index
    %c0_42 = arith.constant 0 : index
    %76 = vector.load %arg10[%c0_41, %c0_42] : memref<8x128xf32, #tpu.memory_space<vmem>>, vector<8x128xf32>
    tpu.vector_store %arg10[%c0_41, %c0_42], %75 {strides = array<i32>} : memref<8x128xf32, #tpu.memory_space<vmem>>, vector<8x128xf32>,
    return
  }
  func.func @transform_0(%arg0: i32) -> (i32, i32, i32) {
    %c0_i32 = arith.constant 0 : i32
    %c0_i32_0 = arith.constant 0 : i32
    %c0_i32_1 = arith.constant 0 : i32
    return %arg0, %c0_i32, %c0_i32_0 : i32, i32, i32
  }
  func.func @transform_1(%arg0: i32) -> (i32, i32) {
    %c0_i32 = arith.constant 0 : i32
    %c0_i32_0 = arith.constant 0 : i32
    %c0_i32_1 = arith.constant 0 : i32
    return %c0_i32, %c0_i32_0 : i32, i32
  }
  func.func @transform_2(%arg0: i32) -> (i32, i32) {
    %c0_i32 = arith.constant 0 : i32
    %c0_i32_0 = arith.constant 0 : i32
    %c0_i32_1 = arith.constant 0 : i32
    return %c0_i32, %c0_i32_0 : i32, i32
  }
  func.func @transform_3(%arg0: i32) -> (i32, i32) {
    %c0_i32 = arith.constant 0 : i32
    %c0_i32_0 = arith.constant 0 : i32
    %c0_i32_1 = arith.constant 0 : i32
    return %c0_i32, %c0_i32_0 : i32, i32
  }
  func.func @transform_4(%arg0: i32) -> (i32, i32) {
    %c0_i32 = arith.constant 0 : i32
    %c0_i32_0 = arith.constant 0 : i32
    %c0_i32_1 = arith.constant 0 : i32
    return %c0_i32, %c0_i32_0 : i32, i32
  }
  func.func @transform_5(%arg0: i32) -> (i32, i32, i32) {
    %c0_i32 = arith.constant 0 : i32
    %c0_i32_0 = arith.constant 0 : i32
    %c0_i32_1 = arith.constant 0 : i32
    %c0_i32_2 = arith.constant 0 : i32
    return %c0_i32, %c0_i32_0, %c0_i32_1 : i32, i32, i32
  }
  func.func @transform_6(%arg0: i32) -> (i32, i32) {
    %c0_i32 = arith.constant 0 : i32
    %c0_i32_0 = arith.constant 0 : i32
    %c0_i32_1 = arith.constant 0 : i32
    return %c0_i32, %c0_i32_0 : i32, i32
  }
  func.func @transform_7(%arg0: i32) -> (i32, i32) {
    %c0_i32 = arith.constant 0 : i32
    %c0_i32_0 = arith.constant 0 : i32
    %c0_i32_1 = arith.constant 0 : i32
    return %c0_i32, %c0_i32_0 : i32, i32
  }
  func.func @transform_8(%arg0: i32) -> (i32, i32) {
    %c0_i32 = arith.constant 0 : i32
    %c0_i32_0 = arith.constant 0 : i32
    %c0_i32_1 = arith.constant 0 : i32
    return %c0_i32, %c0_i32_0 : i32, i32
  }
  func.func @transform_9(%arg0: i32) -> (i32, i32) {
    %c0_i32 = arith.constant 0 : i32
    %c0_i32_0 = arith.constant 0 : i32
    return %arg0, %c0_i32 : i32, i32
  }
}

</mosaic_0001>

<llo_original>
// kernel: tpu_custom_call.1
$region0: #{tpu_custom_call.1}
  #allocation0 [shape = 'u32[]', space=smem, size = 0x4, offset = 0x4, fixed_abs, tag = 'smem constant byte address 0x4 - core index']
  #allocation1 [shape = 'u32[72,128]{1,0:T(1,128)}', space=vmem, size = 0x9000, scoped, tag = 'internal scratch']
  %s0 = inlined_call_operand.vmem [shape: f32[16,128,12], index: 0, kind: input, shape index: {}]
  %s1 = inlined_call_operand.vmem [shape: f32[12,128], index: 1, kind: input, shape index: {}]
  %s2 = inlined_call_operand.vmem [shape: f32[1,128], index: 2, kind: input, shape index: {}]
  %s3 = inlined_call_operand.vmem [shape: bf16[128,128], index: 3, kind: input, shape index: {}]
  %s4 = inlined_call_operand.vmem [shape: f32[1,128], index: 4, kind: input, shape index: {}]
  %s5 = inlined_call_operand.vmem [shape: bf16[3,128,128], index: 5, kind: input, shape index: {}]
  %s6 = inlined_call_operand.vmem [shape: f32[1,128], index: 6, kind: input, shape index: {}]
  %s7 = inlined_call_operand.vmem [shape: bf16[256,128], index: 7, kind: input, shape index: {}]
  %s8 = inlined_call_operand.vmem [shape: f32[1,128], index: 8, kind: input, shape index: {}]
  %s9 = inlined_call_operand.hbm [shape: f32[16,128], index: 9, kind: output, shape index: {}]
  %s10 = sld [smem:[#allocation0]]
  $region69: #{tpu_custom_call.1} parent=0
    _
  %s12 = ssub.s32 1, %s10
  %s13 = scalar_select 0, %s12, %s10
  $region1: #{tpu_custom_call.1} parent=0
    #allocation2 [shape = 'u8[8192]{0}', space=vmem, size = 0x2000, scoped, tag = 'output window, operand 0']
    #allocation3 [shape = 's32[2]{0}', space=sflag, size = 0x8, scoped, tag = 'scoped memory for tpu_custom_call.1']
    %14 = vsyncpa [#allocation3], 0
    %s15 = scalar_lea.sflag [#allocation3], 1
    %16 = vsyncpa %s15, 0
    loop: start=0, step=1, limit=4
    $region2: #{tpu_custom_call.1} parent=1 // loop_pre_header
      _
    $region3: #{tpu_custom_call.1} parent=1 // loop_header
      %s18 = sphi 0, %s22
      %p19 = scmp.ge.s32.totalorder %s18, 4
      %s28 = sphi 0, %s30
      %s31 = sphi 0, %s28
      %s32 = sphi 0, %s31
      %s48 = sphi 0, %s32
      %s52 = sphi 0, %s52
      %s54 = sphi 0, %s52
      %s55 = sphi 0, %s54
      %s69 = sphi 0, %s55
      %s73 = sphi 0, %s73
      %s75 = sphi 0, %s73
      %s76 = sphi 0, %s75
      %s90 = sphi 0, %s76
      %s94 = sphi 0, %s94
      %s96 = sphi 0, %s94
      %s97 = sphi 0, %s96
      %s111 = sphi 0, %s97
      %s115 = sphi 0, %s115
      %s117 = sphi 0, %s115
      %s118 = sphi 0, %s117
      %s132 = sphi 0, %s118
      %s136 = sphi 0, %s136
      %s138 = sphi 0, %s136
      %s139 = sphi 0, %s138
      %s153 = sphi 0, %s139
      %s157 = sphi 0, %s157
      %s159 = sphi 0, %s157
      %s160 = sphi 0, %s159
      %s174 = sphi 0, %s160
      %s178 = sphi 0, %s178
      %s180 = sphi 0, %s178
      %s181 = sphi 0, %s180
      %s195 = sphi 0, %s181
      %s199 = sphi 0, %s199
      %s201 = sphi 0, %s199
      %s202 = sphi 0, %s201
      %s216 = sphi 0, %s202
      %s222 = sphi 0, %s224
      %s225 = sphi 0, %s222
      %s226 = sphi 0, %s225
      %s242 = sphi 0, %s226
    $region4: #{tpu_custom_call.1} parent=1 // loop_header_branch
      %21 = sbr.rel (%p19) target = $region8
    $region5: #{tpu_custom_call.1} parent=1 // loop_body
      %s23 = ssub.s32 %s18, 1
      %s24 = ssub.s32 %s18, 2
      %s25 = sadd.s32 %s18, 1
      %s26 = ssub.s32 %s18, %s25
      %p27 = scmp.eq.s32.totalorder %s26, 0
      %s29 = sadd.s32 %s28, 1
      %s30 = scalar_select %p27, %s28, %s29
      %p33 = pneg %p27
      %p34 = scmp.eq.s32.totalorder %s18, 1
      %p35 = por %p33, %p34
      %p36 = scmp.ne.s32.totalorder %s28, %s31
      %p37 = scmp.eq.s32.totalorder %s18, 0
      %p38 = por %p36, %p37
      %p39 = scmp.ne.s32.totalorder %s28, %s31
      %p40 = scmp.eq.s32.totalorder %s23, 1
      %p41 = por %p39, %p40
      %p42 = scmp.ne.s32.totalorder %s31, %s32
      %p43 = scmp.eq.s32.totalorder %s23, 0
      %p44 = por %p42, %p43
      %p45 = scmp.ne.s32.totalorder %s31, %s32
      %p46 = scmp.eq.s32.totalorder %s24, 1
      %p47 = por %p45, %p46
      %p49 = scmp.ne.s32.totalorder %s32, %s48
      %p50 = scmp.eq.s32.totalorder %s24, 0
      %p51 = por %p49, %p50
      %s53 = sadd.s32 %s52, 1
      %p56 = scmp.eq.s32.totalorder %s18, 1
      %p57 = scmp.ne.s32.totalorder %s52, %s54
      %p58 = scmp.eq.s32.totalorder %s18, 0
      %p59 = por %p57, %p58
      %p60 = scmp.ne.s32.totalorder %s52, %s54
      %p61 = scmp.eq.s32.totalorder %s23, 1
      %p62 = por %p60, %p61
      %p63 = scmp.ne.s32.totalorder %s54, %s55
      %p64 = scmp.eq.s32.totalorder %s23, 0
      %p65 = por %p63, %p64
      %p66 = scmp.ne.s32.totalorder %s54, %s55
      %p67 = scmp.eq.s32.totalorder %s24, 1
      %p68 = por %p66, %p67
      %p70 = scmp.ne.s32.totalorder %s55, %s69
      %p71 = scmp.eq.s32.totalorder %s24, 0
      %p72 = por %p70, %p71
      %s74 = sadd.s32 %s73, 1
      %p77 = scmp.eq.s32.totalorder %s18, 1
      %p78 = scmp.ne.s32.totalorder %s73, %s75
      %p79 = scmp.eq.s32.totalorder %s18, 0
      %p80 = por %p78, %p79
      %p81 = scmp.ne.s32.totalorder %s73, %s75
      %p82 = scmp.eq.s32.totalorder %s23, 1
      %p83 = por %p81, %p82
      %p84 = scmp.ne.s32.totalorder %s75, %s76
      %p85 = scmp.eq.s32.totalorder %s23, 0
      %p86 = por %p84, %p85
      %p87 = scmp.ne.s32.totalorder %s75, %s76
      %p88 = scmp.eq.s32.totalorder %s24, 1
      %p89 = por %p87, %p88
      %p91 = scmp.ne.s32.totalorder %s76, %s90
      %p92 = scmp.eq.s32.totalorder %s24, 0
      %p93 = por %p91, %p92
      %s95 = sadd.s32 %s94, 1
      %p98 = scmp.eq.s32.totalorder %s18, 1
      %p99 = scmp.ne.s32.totalorder %s94, %s96
      %p100 = scmp.eq.s32.totalorder %s18, 0
      %p101 = por %p99, %p100
      %p102 = scmp.ne.s32.totalorder %s94, %s96
      %p103 = scmp.eq.s32.totalorder %s23, 1
      %p104 = por %p102, %p103
      %p105 = scmp.ne.s32.totalorder %s96, %s97
      %p106 = scmp.eq.s32.totalorder %s23, 0
      %p107 = por %p105, %p106
      %p108 = scmp.ne.s32.totalorder %s96, %s97
      %p109 = scmp.eq.s32.totalorder %s24, 1
      %p110 = por %p108, %p109
      %p112 = scmp.ne.s32.totalorder %s97, %s111
      %p113 = scmp.eq.s32.totalorder %s24, 0
      %p114 = por %p112, %p113
      %s116 = sadd.s32 %s115, 1
      %p119 = scmp.eq.s32.totalorder %s18, 1
      %p120 = scmp.ne.s32.totalorder %s115, %s117
      %p121 = scmp.eq.s32.totalorder %s18, 0
      %p122 = por %p120, %p121
      %p123 = scmp.ne.s32.totalorder %s115, %s117
      %p124 = scmp.eq.s32.totalorder %s23, 1
      %p125 = por %p123, %p124
      %p126 = scmp.ne.s32.totalorder %s117, %s118
      %p127 = scmp.eq.s32.totalorder %s23, 0
      %p128 = por %p126, %p127
      %p129 = scmp.ne.s32.totalorder %s117, %s118
      %p130 = scmp.eq.s32.totalorder %s24, 1
      %p131 = por %p129, %p130
      %p133 = scmp.ne.s32.totalorder %s118, %s132
      %p134 = scmp.eq.s32.totalorder %s24, 0
      %p135 = por %p133, %p134
      %s137 = sadd.s32 %s136, 1
      %p140 = scmp.eq.s32.totalorder %s18, 1
      %p141 = scmp.ne.s32.totalorder %s136, %s138
      %p142 = scmp.eq.s32.totalorder %s18, 0
      %p143 = por %p141, %p142
      %p144 = scmp.ne.s32.totalorder %s136, %s138
      %p145 = scmp.eq.s32.totalorder %s23, 1
      %p146 = por %p144, %p145
      %p147 = scmp.ne.s32.totalorder %s138, %s139
      %p148 = scmp.eq.s32.totalorder %s23, 0
      %p149 = por %p147, %p148
      %p150 = scmp.ne.s32.totalorder %s138, %s139
      %p151 = scmp.eq.s32.totalorder %s24, 1
      %p152 = por %p150, %p151
      %p154 = scmp.ne.s32.totalorder %s139, %s153
      %p155 = scmp.eq.s32.totalorder %s24, 0
      %p156 = por %p154, %p155
      %s158 = sadd.s32 %s157, 1
      %p161 = scmp.eq.s32.totalorder %s18, 1
      %p162 = scmp.ne.s32.totalorder %s157, %s159
      %p163 = scmp.eq.s32.totalorder %s18, 0
      %p164 = por %p162, %p163
      %p165 = scmp.ne.s32.totalorder %s157, %s159
      %p166 = scmp.eq.s32.totalorder %s23, 1
      %p167 = por %p165, %p166
      %p168 = scmp.ne.s32.totalorder %s159, %s160
      %p169 = scmp.eq.s32.totalorder %s23, 0
      %p170 = por %p168, %p169
      %p171 = scmp.ne.s32.totalorder %s159, %s160
      %p172 = scmp.eq.s32.totalorder %s24, 1
      %p173 = por %p171, %p172
      %p175 = scmp.ne.s32.totalorder %s160, %s174
      %p176 = scmp.eq.s32.totalorder %s24, 0
      %p177 = por %p175, %p176
      %s179 = sadd.s32 %s178, 1
      %p182 = scmp.eq.s32.totalorder %s18, 1
      %p183 = scmp.ne.s32.totalorder %s178, %s180
      %p184 = scmp.eq.s32.totalorder %s18, 0
      %p185 = por %p183, %p184
      %p186 = scmp.ne.s32.totalorder %s178, %s180
      %p187 = scmp.eq.s32.totalorder %s23, 1
      %p188 = por %p186, %p187
      %p189 = scmp.ne.s32.totalorder %s180, %s181
      %p190 = scmp.eq.s32.totalorder %s23, 0
      %p191 = por %p189, %p190
      %p192 = scmp.ne.s32.totalorder %s180, %s181
      %p193 = scmp.eq.s32.totalorder %s24, 1
      %p194 = por %p192, %p193
      %p196 = scmp.ne.s32.totalorder %s181, %s195
      %p197 = scmp.eq.s32.totalorder %s24, 0
      %p198 = por %p196, %p197
      %s200 = sadd.s32 %s199, 1
      %p203 = scmp.eq.s32.totalorder %s18, 1
      %p204 = scmp.ne.s32.totalorder %s199, %s201
      %p205 = scmp.eq.s32.totalorder %s18, 0
      %p206 = por %p204, %p205
      %p207 = scmp.ne.s32.totalorder %s199, %s201
      %p208 = scmp.eq.s32.totalorder %s23, 1
      %p209 = por %p207, %p208
      %p210 = scmp.ne.s32.totalorder %s201, %s202
      %p211 = scmp.eq.s32.totalorder %s23, 0
      %p212 = por %p210, %p211
      %p213 = scmp.ne.s32.totalorder %s201, %s202
      %p214 = scmp.eq.s32.totalorder %s24, 1
      %p215 = por %p213, %p214
      %p217 = scmp.ne.s32.totalorder %s202, %s216
      %p218 = scmp.eq.s32.totalorder %s24, 0
      %p219 = por %p217, %p218
      %s220 = ssub.s32 %s18, %s25
      %p221 = scmp.eq.s32.totalorder %s220, 0
      %s223 = sadd.s32 %s222, 1
      %s224 = scalar_select %p221, %s222, %s223
      %p227 = pneg %p221
      %p228 = scmp.eq.s32.totalorder %s18, 1
      %p229 = por %p227, %p228
      %p230 = scmp.ne.s32.totalorder %s222, %s225
      %p231 = scmp.eq.s32.totalorder %s18, 0
      %p232 = por %p230, %p231
      %p233 = scmp.ne.s32.totalorder %s222, %s225
      %p234 = scmp.eq.s32.totalorder %s23, 1
      %p235 = por %p233, %p234
      %p236 = scmp.ne.s32.totalorder %s225, %s226
      %p237 = scmp.eq.s32.totalorder %s23, 0
      %p238 = por %p236, %p237
      %p239 = scmp.ne.s32.totalorder %s225, %s226
      %p240 = scmp.eq.s32.totalorder %s24, 1
      %p241 = por %p239, %p240
      %p243 = scmp.ne.s32.totalorder %s226, %s242
      %p244 = scmp.eq.s32.totalorder %s24, 0
      %p245 = por %p243, %p244
      %p246 = scmp.le.s32.totalorder 1, %s18
      %p247 = scmp.lt.s32.totalorder %s18, 3
      %p248 = pnand %p246, %p247
      %p249 = pneg %p248
      // Predicated region
      $region9: #{tpu_custom_call.1} parent=5 // pred_check
        _
      $region10: #{tpu_custom_call.1} parent=5 // pred_check_branch
        %251 = sbr.rel (%p248) target = $region12
      $region11: #{tpu_custom_call.1} parent=5 // pred_region
        %s252 = ssub.s32 %s18, 1
        // Predicated region
        $region13: #{tpu_custom_call.1} parent=11 // pred_check
          %p253 = pneg %p65
        $region14: #{tpu_custom_call.1} parent=11 // pred_check_branch
          %255 = sbr.rel (%p253) target = $region16
        $region15: #{tpu_custom_call.1} parent=11 // pred_region
          _
        $region16: #{tpu_custom_call.1} parent=11 // pred_fallthru
          _
        // Predicated region
        $region17: #{tpu_custom_call.1} parent=11 // pred_check
          %p256 = pneg %p86
        $region18: #{tpu_custom_call.1} parent=11 // pred_check_branch
          %258 = sbr.rel (%p256) target = $region20
        $region19: #{tpu_custom_call.1} parent=11 // pred_region
          _
        $region20: #{tpu_custom_call.1} parent=11 // pred_fallthru
          _
        // Predicated region
        $region21: #{tpu_custom_call.1} parent=11 // pred_check
          %p259 = pneg %p107
        $region22: #{tpu_custom_call.1} parent=11 // pred_check_branch
          %261 = sbr.rel (%p259) target = $region24
        $region23: #{tpu_custom_call.1} parent=11 // pred_region
          _
        $region24: #{tpu_custom_call.1} parent=11 // pred_fallthru
          _
        // Predicated region
        $region25: #{tpu_custom_call.1} parent=11 // pred_check
          %p262 = pneg %p128
        $region26: #{tpu_custom_call.1} parent=11 // pred_check_branch
          %264 = sbr.rel (%p262) target = $region28
        $region27: #{tpu_custom_call.1} parent=11 // pred_region
          _
        $region28: #{tpu_custom_call.1} parent=11 // pred_fallthru
          _
        // Predicated region
        $region29: #{tpu_custom_call.1} parent=11 // pred_check
          %p265 = pneg %p149
        $region30: #{tpu_custom_call.1} parent=11 // pred_check_branch
          %267 = sbr.rel (%p265) target = $region32
        $region31: #{tpu_custom_call.1} parent=11 // pred_region
          _
        $region32: #{tpu_custom_call.1} parent=11 // pred_fallthru
          _
        // Predicated region
        $region33: #{tpu_custom_call.1} parent=11 // pred_check
          %p268 = pneg %p170
        $region34: #{tpu_custom_call.1} parent=11 // pred_check_branch
          %270 = sbr.rel (%p268) target = $region36
        $region35: #{tpu_custom_call.1} parent=11 // pred_region
          _
        $region36: #{tpu_custom_call.1} parent=11 // pred_fallthru
          _
        // Predicated region
        $region37: #{tpu_custom_call.1} parent=11 // pred_check
          %p271 = pneg %p191
        $region38: #{tpu_custom_call.1} parent=11 // pred_check_branch
          %273 = sbr.rel (%p271) target = $region40
        $region39: #{tpu_custom_call.1} parent=11 // pred_region
          _
        $region40: #{tpu_custom_call.1} parent=11 // pred_fallthru
          _
        // Predicated region
        $region41: #{tpu_custom_call.1} parent=11 // pred_check
          %p274 = pneg %p212
        $region42: #{tpu_custom_call.1} parent=11 // pred_check_branch
          %276 = sbr.rel (%p274) target = $region44
        $region43: #{tpu_custom_call.1} parent=11 // pred_region
          _
        $region44: #{tpu_custom_call.1} parent=11 // pred_fallthru
          _
      $region12: #{tpu_custom_call.1} parent=5 // pred_fallthru
        _
      %p277 = scmp.lt.s32.totalorder %s18, 2
      // Predicated region
      $region45: #{tpu_custom_call.1} parent=5 // pred_check
        %p278 = pneg %p277
      $region46: #{tpu_custom_call.1} parent=5 // pred_check_branch
        %280 = sbr.rel (%p278) target = $region48
      $region47: #{tpu_custom_call.1} parent=5 // pred_region
        // Predicated region
        $region49: #{tpu_custom_call.1} parent=47 // pred_check
          %p281 = pneg %p38
        $region50: #{tpu_custom_call.1} parent=47 // pred_check_branch
          %283 = sbr.rel (%p281) target = $region52
        $region51: #{tpu_custom_call.1} parent=47 // pred_region
          %s284 = smul.u32 8, %s18
          %p285 = scmp.lt.s32.totalorder %s284, 15
          %s286 = scalar_select %p285, %s284, 15
          %s287 = smul.addr %s286, 16
          %s288 = smul.addr %s287, 8
          %s289 = scalar_lea.vmem %s0, %s288
          %s290 = smul.u32 8, %s18
        $region52: #{tpu_custom_call.1} parent=47 // pred_fallthru
          _
      $region48: #{tpu_custom_call.1} parent=5 // pred_fallthru
        _
      %p291 = scmp.le.s32.totalorder 1, %s18
      %p292 = scmp.lt.s32.totalorder %s18, 3
      %p293 = pnand %p291, %p292
      %p294 = pneg %p293
      // Predicated region
      $region53: #{tpu_custom_call.1} parent=5 // pred_check
        _
      $region54: #{tpu_custom_call.1} parent=5 // pred_check_branch
        %296 = sbr.rel (%p293) target = $region56
      $region55: #{tpu_custom_call.1} parent=5 // pred_region
        %s297 = ssub.s32 %s18, 1
        %s298 = smul.u32 8, %s23
        %p299 = scmp.lt.s32.totalorder %s298, 15
        %s300 = scalar_select %p299, %s298, 15
        %s301 = smul.addr %s300, 16
        %s302 = smul.addr %s301, 8
        %s303 = scalar_lea.vmem %s0, %s302
        %p304 = pneg %p44
        %p305 = pneg %p41
        %p306 = pneg %p65
        %p307 = pneg %p62
        %p308 = pneg %p86
        %p309 = pneg %p83
        %p310 = pneg %p107
        %p311 = pneg %p104
        %p312 = pneg %p128
        %p313 = pneg %p125
        %p314 = pneg %p149
        %p315 = pneg %p146
        %p316 = pneg %p170
        %p317 = pneg %p167
        %p318 = pneg %p191
        %p319 = pneg %p188
        %p320 = pneg %p212
        %p321 = pneg %p209
        %p322 = pneg %p238
        %p323 = pneg %p235
        %s324 = sand.u32 %s225, 1
        %s325 = scalar_lea.sflag [#allocation3], %s324
        %s326 = sand.u32 %s225, 1
        %s327 = smul.addr %s326, 8
        %s328 = scalar_lea.vmem [#allocation2], %s327
        %s329 = smul.u32 8, %s23
        %p330 = scmp.lt.s32.totalorder %s329, 15
        %s331 = scalar_select %p330, %s329, 15
        %s332 = smul.addr %s331, 16
        %s333 = smul.addr %s332, 8
        %s334 = scalar_lea.vmem %s0, %s333
        %s335 = smul.u32 8, %s23
        %v336 = vld [vmem:[%s334] sm:$0xff]
        %v337 = vld [vmem:[%s334 + $0x8] sm:$0xff]
        %v338 = vld [vmem:[%s334 + $0x10] sm:$0xff]
        %v339 = vld [vmem:[%s334 + $0x18] sm:$0xff]
        %v340 = vld [vmem:[%s334 + $0x20] sm:$0xff]
        %v341 = vld [vmem:[%s334 + $0x28] sm:$0xff]
        %v342 = vld [vmem:[%s334 + $0x30] sm:$0xff]
        %v343 = vld [vmem:[%s334 + $0x38] sm:$0xff]
        %v344 = vld [vmem:[%s334 + $0x40] sm:$0xff]
        %v345 = vld [vmem:[%s334 + $0x48] sm:$0xff]
        %v346 = vld [vmem:[%s334 + $0x50] sm:$0xff]
        %v347 = vld [vmem:[%s334 + $0x58] sm:$0xff]
        %v348 = vld [vmem:[%s334 + $0x60] sm:$0xff]
        %v349 = vld [vmem:[%s334 + $0x68] sm:$0xff]
        %v350 = vld [vmem:[%s334 + $0x70] sm:$0xff]
        %v351 = vld [vmem:[%s334 + $0x78] sm:$0xff]
        %v352 = vld [vmem:[%s334 + $0x80] sm:$0xff]
        %v353 = vld [vmem:[%s334 + $0x88] sm:$0xff]
        %v354 = vld [vmem:[%s334 + $0x90] sm:$0xff]
        %v355 = vld [vmem:[%s334 + $0x98] sm:$0xff]
        %v356 = vld [vmem:[%s334 + $0xa0] sm:$0xff]
        %v357 = vld [vmem:[%s334 + $0xa8] sm:$0xff]
        %v358 = vld [vmem:[%s334 + $0xb0] sm:$0xff]
        %v359 = vld [vmem:[%s334 + $0xb8] sm:$0xff]
        %v360 = vld [vmem:[%s334 + $0xc0] sm:$0xff]
        %v361 = vld [vmem:[%s334 + $0xc8] sm:$0xff]
        %v362 = vld [vmem:[%s334 + $0xd0] sm:$0xff]
        %v363 = vld [vmem:[%s334 + $0xd8] sm:$0xff]
        %v364 = vld [vmem:[%s334 + $0xe0] sm:$0xff]
        %v365 = vld [vmem:[%s334 + $0xe8] sm:$0xff]
        %v366 = vld [vmem:[%s334 + $0xf0] sm:$0xff]
        %v367 = vld [vmem:[%s334 + $0xf8] sm:$0xff]
        %v368 = vld [vmem:[%s334 + $0x100] sm:$0xff]
        %v369 = vld [vmem:[%s334 + $0x108] sm:$0xff]
        %v370 = vld [vmem:[%s334 + $0x110] sm:$0xff]
        %v371 = vld [vmem:[%s334 + $0x118] sm:$0xff]
        %v372 = vld [vmem:[%s334 + $0x120] sm:$0xff]
        %v373 = vld [vmem:[%s334 + $0x128] sm:$0xff]
        %v374 = vld [vmem:[%s334 + $0x130] sm:$0xff]
        %v375 = vld [vmem:[%s334 + $0x138] sm:$0xff]
        %v376 = vld [vmem:[%s334 + $0x140] sm:$0xff]
        %v377 = vld [vmem:[%s334 + $0x148] sm:$0xff]
        %v378 = vld [vmem:[%s334 + $0x150] sm:$0xff]
        %v379 = vld [vmem:[%s334 + $0x158] sm:$0xff]
        %v380 = vld [vmem:[%s334 + $0x160] sm:$0xff]
        %v381 = vld [vmem:[%s334 + $0x168] sm:$0xff]
        %v382 = vld [vmem:[%s334 + $0x170] sm:$0xff]
        %v383 = vld [vmem:[%s334 + $0x178] sm:$0xff]
        %v384 = vld [vmem:[%s334 + $0x180] sm:$0xff]
        %v385 = vld [vmem:[%s334 + $0x188] sm:$0xff]
        %v386 = vld [vmem:[%s334 + $0x190] sm:$0xff]
        %v387 = vld [vmem:[%s334 + $0x198] sm:$0xff]
        %v388 = vld [vmem:[%s334 + $0x1a0] sm:$0xff]
        %v389 = vld [vmem:[%s334 + $0x1a8] sm:$0xff]
        %v390 = vld [vmem:[%s334 + $0x1b0] sm:$0xff]
        %v391 = vld [vmem:[%s334 + $0x1b8] sm:$0xff]
        %v392 = vld [vmem:[%s334 + $0x1c0] sm:$0xff]
        %v393 = vld [vmem:[%s334 + $0x1c8] sm:$0xff]
        %v394 = vld [vmem:[%s334 + $0x1d0] sm:$0xff]
        %v395 = vld [vmem:[%s334 + $0x1d8] sm:$0xff]
        %v396 = vld [vmem:[%s334 + $0x1e0] sm:$0xff]
        %v397 = vld [vmem:[%s334 + $0x1e8] sm:$0xff]
        %v398 = vld [vmem:[%s334 + $0x1f0] sm:$0xff]
        %v399 = vld [vmem:[%s334 + $0x1f8] sm:$0xff]
        %v400 = vld [vmem:[%s334 + $0x200] sm:$0xff]
        %v401 = vld [vmem:[%s334 + $0x208] sm:$0xff]
        %v402 = vld [vmem:[%s334 + $0x210] sm:$0xff]
        %v403 = vld [vmem:[%s334 + $0x218] sm:$0xff]
        %v404 = vld [vmem:[%s334 + $0x220] sm:$0xff]
        %v405 = vld [vmem:[%s334 + $0x228] sm:$0xff]
        %v406 = vld [vmem:[%s334 + $0x230] sm:$0xff]
        %v407 = vld [vmem:[%s334 + $0x238] sm:$0xff]
        %v408 = vld [vmem:[%s334 + $0x240] sm:$0xff]
        %v409 = vld [vmem:[%s334 + $0x248] sm:$0xff]
        %v410 = vld [vmem:[%s334 + $0x250] sm:$0xff]
        %v411 = vld [vmem:[%s334 + $0x258] sm:$0xff]
        %v412 = vld [vmem:[%s334 + $0x260] sm:$0xff]
        %v413 = vld [vmem:[%s334 + $0x268] sm:$0xff]
        %v414 = vld [vmem:[%s334 + $0x270] sm:$0xff]
        %v415 = vld [vmem:[%s334 + $0x278] sm:$0xff]
        %v416 = vld [vmem:[%s334 + $0x280] sm:$0xff]
        %v417 = vld [vmem:[%s334 + $0x288] sm:$0xff]
        %v418 = vld [vmem:[%s334 + $0x290] sm:$0xff]
        %v419 = vld [vmem:[%s334 + $0x298] sm:$0xff]
        %v420 = vld [vmem:[%s334 + $0x2a0] sm:$0xff]
        %v421 = vld [vmem:[%s334 + $0x2a8] sm:$0xff]
        %v422 = vld [vmem:[%s334 + $0x2b0] sm:$0xff]
        %v423 = vld [vmem:[%s334 + $0x2b8] sm:$0xff]
        %v424 = vld [vmem:[%s334 + $0x2c0] sm:$0xff]
        %v425 = vld [vmem:[%s334 + $0x2c8] sm:$0xff]
        %v426 = vld [vmem:[%s334 + $0x2d0] sm:$0xff]
        %v427 = vld [vmem:[%s334 + $0x2d8] sm:$0xff]
        %v428 = vld [vmem:[%s334 + $0x2e0] sm:$0xff]
        %v429 = vld [vmem:[%s334 + $0x2e8] sm:$0xff]
        %v430 = vld [vmem:[%s334 + $0x2f0] sm:$0xff]
        %v431 = vld [vmem:[%s334 + $0x2f8] sm:$0xff]
        %v432 = vld [vmem:[%s334 + $0x300] sm:$0xff]
        %v433 = vld [vmem:[%s334 + $0x308] sm:$0xff]
        %v434 = vld [vmem:[%s334 + $0x310] sm:$0xff]
        %v435 = vld [vmem:[%s334 + $0x318] sm:$0xff]
        %v436 = vld [vmem:[%s334 + $0x320] sm:$0xff]
        %v437 = vld [vmem:[%s334 + $0x328] sm:$0xff]
        %v438 = vld [vmem:[%s334 + $0x330] sm:$0xff]
        %v439 = vld [vmem:[%s334 + $0x338] sm:$0xff]
        %v440 = vld [vmem:[%s334 + $0x340] sm:$0xff]
        %v441 = vld [vmem:[%s334 + $0x348] sm:$0xff]
        %v442 = vld [vmem:[%s334 + $0x350] sm:$0xff]
        %v443 = vld [vmem:[%s334 + $0x358] sm:$0xff]
        %v444 = vld [vmem:[%s334 + $0x360] sm:$0xff]
        %v445 = vld [vmem:[%s334 + $0x368] sm:$0xff]
        %v446 = vld [vmem:[%s334 + $0x370] sm:$0xff]
        %v447 = vld [vmem:[%s334 + $0x378] sm:$0xff]
        %v448 = vld [vmem:[%s334 + $0x380] sm:$0xff]
        %v449 = vld [vmem:[%s334 + $0x388] sm:$0xff]
        %v450 = vld [vmem:[%s334 + $0x390] sm:$0xff]
        %v451 = vld [vmem:[%s334 + $0x398] sm:$0xff]
        %v452 = vld [vmem:[%s334 + $0x3a0] sm:$0xff]
        %v453 = vld [vmem:[%s334 + $0x3a8] sm:$0xff]
        %v454 = vld [vmem:[%s334 + $0x3b0] sm:$0xff]
        %v455 = vld [vmem:[%s334 + $0x3b8] sm:$0xff]
        %v456 = vld [vmem:[%s334 + $0x3c0] sm:$0xff]
        %v457 = vld [vmem:[%s334 + $0x3c8] sm:$0xff]
        %v458 = vld [vmem:[%s334 + $0x3d0] sm:$0xff]
        %v459 = vld [vmem:[%s334 + $0x3d8] sm:$0xff]
        %v460 = vld [vmem:[%s334 + $0x3e0] sm:$0xff]
        %v461 = vld [vmem:[%s334 + $0x3e8] sm:$0xff]
        %v462 = vld [vmem:[%s334 + $0x3f0] sm:$0xff]
        %v463 = vld [vmem:[%s334 + $0x3f8] sm:$0xff]
        %v464 = vld [vmem:[%s1] sm:$0xff]
        %v465 = vld [vmem:[%s1 + $0x8] sm:$0xf]
        %v466 = vld [vmem:[%s2] sm:$0x1]
        %v468 = vperm.slane %v466, 0
        %vm470 = vcmask 97280
        %v472 = vsel %vm470, %v336, 0
        %v475 = vsel %vm470, %v337, 0
        %v478 = vsel %vm470, %v338, 0
        %v481 = vsel %vm470, %v339, 0
        %v484 = vsel %vm470, %v340, 0
        %v487 = vsel %vm470, %v341, 0
        %v490 = vsel %vm470, %v342, 0
        %v493 = vsel %vm470, %v343, 0
        %v496 = vsel %vm470, %v344, 0
        %v499 = vsel %vm470, %v345, 0
        %v502 = vsel %vm470, %v346, 0
        %v505 = vsel %vm470, %v347, 0
        %v508 = vsel %vm470, %v348, 0
        %v511 = vsel %vm470, %v349, 0
        %v514 = vsel %vm470, %v350, 0
        %v517 = vsel %vm470, %v351, 0
        %v520 = vsel %vm470, %v352, 0
        %v523 = vsel %vm470, %v353, 0
        %v526 = vsel %vm470, %v354, 0
        %v529 = vsel %vm470, %v355, 0
        %v532 = vsel %vm470, %v356, 0
        %v535 = vsel %vm470, %v357, 0
        %v538 = vsel %vm470, %v358, 0
        %v541 = vsel %vm470, %v359, 0
        %v544 = vsel %vm470, %v360, 0
        %v547 = vsel %vm470, %v361, 0
        %v550 = vsel %vm470, %v362, 0
        %v553 = vsel %vm470, %v363, 0
        %v556 = vsel %vm470, %v364, 0
        %v559 = vsel %vm470, %v365, 0
        %v562 = vsel %vm470, %v366, 0
        %v565 = vsel %vm470, %v367, 0
        %v568 = vsel %vm470, %v368, 0
        %v571 = vsel %vm470, %v369, 0
        %v574 = vsel %vm470, %v370, 0
        %v577 = vsel %vm470, %v371, 0
        %v580 = vsel %vm470, %v372, 0
        %v583 = vsel %vm470, %v373, 0
        %v586 = vsel %vm470, %v374, 0
        %v589 = vsel %vm470, %v375, 0
        %v592 = vsel %vm470, %v376, 0
        %v595 = vsel %vm470, %v377, 0
        %v598 = vsel %vm470, %v378, 0
        %v601 = vsel %vm470, %v379, 0
        %v604 = vsel %vm470, %v380, 0
        %v607 = vsel %vm470, %v381, 0
        %v610 = vsel %vm470, %v382, 0
        %v613 = vsel %vm470, %v383, 0
        %v616 = vsel %vm470, %v384, 0
        %v619 = vsel %vm470, %v385, 0
        %v622 = vsel %vm470, %v386, 0
        %v625 = vsel %vm470, %v387, 0
        %v628 = vsel %vm470, %v388, 0
        %v631 = vsel %vm470, %v389, 0
        %v634 = vsel %vm470, %v390, 0
        %v637 = vsel %vm470, %v391, 0
        %v640 = vsel %vm470, %v392, 0
        %v643 = vsel %vm470, %v393, 0
        %v646 = vsel %vm470, %v394, 0
        %v649 = vsel %vm470, %v395, 0
        %v652 = vsel %vm470, %v396, 0
        %v655 = vsel %vm470, %v397, 0
        %v658 = vsel %vm470, %v398, 0
        %v661 = vsel %vm470, %v399, 0
        %v664 = vsel %vm470, %v400, 0
        %v667 = vsel %vm470, %v401, 0
        %v670 = vsel %vm470, %v402, 0
        %v673 = vsel %vm470, %v403, 0
        %v676 = vsel %vm470, %v404, 0
        %v679 = vsel %vm470, %v405, 0
        %v682 = vsel %vm470, %v406, 0
        %v685 = vsel %vm470, %v407, 0
        %v688 = vsel %vm470, %v408, 0
        %v691 = vsel %vm470, %v409, 0
        %v694 = vsel %vm470, %v410, 0
        %v697 = vsel %vm470, %v411, 0
        %v700 = vsel %vm470, %v412, 0
        %v703 = vsel %vm470, %v413, 0
        %v706 = vsel %vm470, %v414, 0
        %v709 = vsel %vm470, %v415, 0
        %v712 = vsel %vm470, %v416, 0
        %v715 = vsel %vm470, %v417, 0
        %v718 = vsel %vm470, %v418, 0
        %v721 = vsel %vm470, %v419, 0
        %v724 = vsel %vm470, %v420, 0
        %v727 = vsel %vm470, %v421, 0
        %v730 = vsel %vm470, %v422, 0
        %v733 = vsel %vm470, %v423, 0
        %v736 = vsel %vm470, %v424, 0
        %v739 = vsel %vm470, %v425, 0
        %v742 = vsel %vm470, %v426, 0
        %v745 = vsel %vm470, %v427, 0
        %v748 = vsel %vm470, %v428, 0
        %v751 = vsel %vm470, %v429, 0
        %v754 = vsel %vm470, %v430, 0
        %v757 = vsel %vm470, %v431, 0
        %v760 = vsel %vm470, %v432, 0
        %v763 = vsel %vm470, %v433, 0
        %v766 = vsel %vm470, %v434, 0
        %v769 = vsel %vm470, %v435, 0
        %v772 = vsel %vm470, %v436, 0
        %v775 = vsel %vm470, %v437, 0
        %v778 = vsel %vm470, %v438, 0
        %v781 = vsel %vm470, %v439, 0
        %v784 = vsel %vm470, %v440, 0
        %v787 = vsel %vm470, %v441, 0
        %v790 = vsel %vm470, %v442, 0
        %v793 = vsel %vm470, %v443, 0
        %v796 = vsel %vm470, %v444, 0
        %v799 = vsel %vm470, %v445, 0
        %v802 = vsel %vm470, %v446, 0
        %v805 = vsel %vm470, %v447, 0
        %v808 = vsel %vm470, %v448, 0
        %v811 = vsel %vm470, %v449, 0
        %v814 = vsel %vm470, %v450, 0
        %v817 = vsel %vm470, %v451, 0
        %v820 = vsel %vm470, %v452, 0
        %v823 = vsel %vm470, %v453, 0
        %v826 = vsel %vm470, %v454, 0
        %v829 = vsel %vm470, %v455, 0
        %v832 = vsel %vm470, %v456, 0
        %v835 = vsel %vm470, %v457, 0
        %v838 = vsel %vm470, %v458, 0
        %v841 = vsel %vm470, %v459, 0
        %v844 = vsel %vm470, %v460, 0
        %v847 = vsel %vm470, %v461, 0
        %v850 = vsel %vm470, %v462, 0
        %v853 = vsel %vm470, %v463, 0
        %vm855 = vcmask 1043456
        %v857 = vsel %vm855, %v465, 0
        %859 = vmatpush.msra.mxu0 0.0
        %860 = vmatpush.msra.mxu0 0.0
        %861 = vmatpush.msra.mxu0 0.0
        %862 = vmatpush.msra.mxu0 0.0
        %863 = vmatpush.msra.mxu0 0.0
        %864 = vmatpush.msra.mxu0 0.0
        %865 = vmatpush.msra.mxu0 0.0
        %866 = vmatpush.msra.mxu0 0.0
        %867 = vmatpush.msra.mxu0 0.0
        %868 = vmatpush.msra.mxu0 0.0
        %869 = vmatpush.msra.mxu0 0.0
        %870 = vmatpush.msra.mxu0 0.0
        %871 = vmatpush.msra.mxu0 0.0
        %872 = vmatpush.msra.mxu0 0.0
        %873 = vmatpush.msra.mxu0 %v857
        %874 = vmatpush.msra.mxu0 %v464
        %875 = vmatmul.f32.gmra.mxu0 %v472
        %v876 = vpop.f32.mrf.mxu0
        %v877 = vadd.f32 %v468, %v876
        %878 = vmatmul.f32.gmra.mxu0 %v475
        %v879 = vpop.f32.mrf.mxu0
        %v880 = vadd.f32 %v468, %v879
        %881 = vmatmul.f32.gmra.mxu0 %v478
        %v882 = vpop.f32.mrf.mxu0
        %v883 = vadd.f32 %v468, %v882
        %884 = vmatmul.f32.gmra.mxu0 %v481
        %v885 = vpop.f32.mrf.mxu0
        %v886 = vadd.f32 %v468, %v885
        %887 = vmatmul.f32.gmra.mxu0 %v484
        %v888 = vpop.f32.mrf.mxu0
        %v889 = vadd.f32 %v468, %v888
        %890 = vmatmul.f32.gmra.mxu0 %v487
        %v891 = vpop.f32.mrf.mxu0
        %v892 = vadd.f32 %v468, %v891
        %893 = vmatmul.f32.gmra.mxu0 %v490
        %v894 = vpop.f32.mrf.mxu0
        %v895 = vadd.f32 %v468, %v894
        %896 = vmatmul.f32.gmra.mxu0 %v493
        %v897 = vpop.f32.mrf.mxu0
        %v898 = vadd.f32 %v468, %v897
        %899 = vmatmul.f32.gmra.mxu0 %v496
        %v900 = vpop.f32.mrf.mxu0
        %v901 = vadd.f32 %v468, %v900
        %902 = vmatmul.f32.gmra.mxu0 %v499
        %v903 = vpop.f32.mrf.mxu0
        %v904 = vadd.f32 %v468, %v903
        %905 = vmatmul.f32.gmra.mxu0 %v502
        %v906 = vpop.f32.mrf.mxu0
        %v907 = vadd.f32 %v468, %v906
        %908 = vmatmul.f32.gmra.mxu0 %v505
        %v909 = vpop.f32.mrf.mxu0
        %v910 = vadd.f32 %v468, %v909
        %911 = vmatmul.f32.gmra.mxu0 %v508
        %v912 = vpop.f32.mrf.mxu0
        %v913 = vadd.f32 %v468, %v912
        %914 = vmatmul.f32.gmra.mxu0 %v511
        %v915 = vpop.f32.mrf.mxu0
        %v916 = vadd.f32 %v468, %v915
        %917 = vmatmul.f32.gmra.mxu0 %v514
        %v918 = vpop.f32.mrf.mxu0
        %v919 = vadd.f32 %v468, %v918
        %920 = vmatmul.f32.gmra.mxu0 %v517
        %v921 = vpop.f32.mrf.mxu0
        %v922 = vadd.f32 %v468, %v921
        %923 = vmatmul.f32.gmra.mxu0 %v520
        %v924 = vpop.f32.mrf.mxu0
        %v925 = vadd.f32 %v468, %v924
        %926 = vmatmul.f32.gmra.mxu0 %v523
        %v927 = vpop.f32.mrf.mxu0
        %v928 = vadd.f32 %v468, %v927
        %929 = vmatmul.f32.gmra.mxu0 %v526
        %v930 = vpop.f32.mrf.mxu0
        %v931 = vadd.f32 %v468, %v930
        %932 = vmatmul.f32.gmra.mxu0 %v529
        %v933 = vpop.f32.mrf.mxu0
        %v934 = vadd.f32 %v468, %v933
        %935 = vmatmul.f32.gmra.mxu0 %v532
        %v936 = vpop.f32.mrf.mxu0
        %v937 = vadd.f32 %v468, %v936
        %938 = vmatmul.f32.gmra.mxu0 %v535
        %v939 = vpop.f32.mrf.mxu0
        %v940 = vadd.f32 %v468, %v939
        %941 = vmatmul.f32.gmra.mxu0 %v538
        %v942 = vpop.f32.mrf.mxu0
        %v943 = vadd.f32 %v468, %v942
        %944 = vmatmul.f32.gmra.mxu0 %v541
        %v945 = vpop.f32.mrf.mxu0
        %v946 = vadd.f32 %v468, %v945
        %947 = vmatmul.f32.gmra.mxu0 %v544
        %v948 = vpop.f32.mrf.mxu0
        %v949 = vadd.f32 %v468, %v948
        %950 = vmatmul.f32.gmra.mxu0 %v547
        %v951 = vpop.f32.mrf.mxu0
        %v952 = vadd.f32 %v468, %v951
        %953 = vmatmul.f32.gmra.mxu0 %v550
        %v954 = vpop.f32.mrf.mxu0
        %v955 = vadd.f32 %v468, %v954
        %956 = vmatmul.f32.gmra.mxu0 %v553
        %v957 = vpop.f32.mrf.mxu0
        %v958 = vadd.f32 %v468, %v957
        %959 = vmatmul.f32.gmra.mxu0 %v556
        %v960 = vpop.f32.mrf.mxu0
        %v961 = vadd.f32 %v468, %v960
        %962 = vmatmul.f32.gmra.mxu0 %v559
        %v963 = vpop.f32.mrf.mxu0
        %v964 = vadd.f32 %v468, %v963
        %965 = vmatmul.f32.gmra.mxu0 %v562
        %v966 = vpop.f32.mrf.mxu0
        %v967 = vadd.f32 %v468, %v966
        %968 = vmatmul.f32.gmra.mxu0 %v565
        %v969 = vpop.f32.mrf.mxu0
        %v970 = vadd.f32 %v468, %v969
        %971 = vmatmul.f32.gmra.mxu0 %v568
        %v972 = vpop.f32.mrf.mxu0
        %v973 = vadd.f32 %v468, %v972
        %974 = vmatmul.f32.gmra.mxu0 %v571
        %v975 = vpop.f32.mrf.mxu0
        %v976 = vadd.f32 %v468, %v975
        %977 = vmatmul.f32.gmra.mxu0 %v574
        %v978 = vpop.f32.mrf.mxu0
        %v979 = vadd.f32 %v468, %v978
        %980 = vmatmul.f32.gmra.mxu0 %v577
        %v981 = vpop.f32.mrf.mxu0
        %v982 = vadd.f32 %v468, %v981
        %983 = vmatmul.f32.gmra.mxu0 %v580
        %v984 = vpop.f32.mrf.mxu0
        %v985 = vadd.f32 %v468, %v984
        %986 = vmatmul.f32.gmra.mxu0 %v583
        %v987 = vpop.f32.mrf.mxu0
        %v988 = vadd.f32 %v468, %v987
        %989 = vmatmul.f32.gmra.mxu0 %v586
        %v990 = vpop.f32.mrf.mxu0
        %v991 = vadd.f32 %v468, %v990
        %992 = vmatmul.f32.gmra.mxu0 %v589
        %v993 = vpop.f32.mrf.mxu0
        %v994 = vadd.f32 %v468, %v993
        %995 = vmatmul.f32.gmra.mxu0 %v592
        %v996 = vpop.f32.mrf.mxu0
        %v997 = vadd.f32 %v468, %v996
        %998 = vmatmul.f32.gmra.mxu0 %v595
        %v999 = vpop.f32.mrf.mxu0
        %v1000 = vadd.f32 %v468, %v999
        %1001 = vmatmul.f32.gmra.mxu0 %v598
        %v1002 = vpop.f32.mrf.mxu0
        %v1003 = vadd.f32 %v468, %v1002
        %1004 = vmatmul.f32.gmra.mxu0 %v601
        %v1005 = vpop.f32.mrf.mxu0
        %v1006 = vadd.f32 %v468, %v1005
        %1007 = vmatmul.f32.gmra.mxu0 %v604
        %v1008 = vpop.f32.mrf.mxu0
        %v1009 = vadd.f32 %v468, %v1008
        %1010 = vmatmul.f32.gmra.mxu0 %v607
        %v1011 = vpop.f32.mrf.mxu0
        %v1012 = vadd.f32 %v468, %v1011
        %1013 = vmatmul.f32.gmra.mxu0 %v610
        %v1014 = vpop.f32.mrf.mxu0
        %v1015 = vadd.f32 %v468, %v1014
        %1016 = vmatmul.f32.gmra.mxu0 %v613
        %v1017 = vpop.f32.mrf.mxu0
        %v1018 = vadd.f32 %v468, %v1017
        %1019 = vmatmul.f32.gmra.mxu0 %v616
        %v1020 = vpop.f32.mrf.mxu0
        %v1021 = vadd.f32 %v468, %v1020
        %1022 = vmatmul.f32.gmra.mxu0 %v619
        %v1023 = vpop.f32.mrf.mxu0
        %v1024 = vadd.f32 %v468, %v1023
        %1025 = vmatmul.f32.gmra.mxu0 %v622
        %v1026 = vpop.f32.mrf.mxu0
        %v1027 = vadd.f32 %v468, %v1026
        %1028 = vmatmul.f32.gmra.mxu0 %v625
        %v1029 = vpop.f32.mrf.mxu0
        %v1030 = vadd.f32 %v468, %v1029
        %1031 = vmatmul.f32.gmra.mxu0 %v628
        %v1032 = vpop.f32.mrf.mxu0
        %v1033 = vadd.f32 %v468, %v1032
        %1034 = vmatmul.f32.gmra.mxu0 %v631
        %v1035 = vpop.f32.mrf.mxu0
        %v1036 = vadd.f32 %v468, %v1035
        %1037 = vmatmul.f32.gmra.mxu0 %v634
        %v1038 = vpop.f32.mrf.mxu0
        %v1039 = vadd.f32 %v468, %v1038
        %1040 = vmatmul.f32.gmra.mxu0 %v637
        %v1041 = vpop.f32.mrf.mxu0
        %v1042 = vadd.f32 %v468, %v1041
        %1043 = vmatmul.f32.gmra.mxu0 %v640
        %v1044 = vpop.f32.mrf.mxu0
        %v1045 = vadd.f32 %v468, %v1044
        %1046 = vmatmul.f32.gmra.mxu0 %v643
        %v1047 = vpop.f32.mrf.mxu0
        %v1048 = vadd.f32 %v468, %v1047
        %1049 = vmatmul.f32.gmra.mxu0 %v646
        %v1050 = vpop.f32.mrf.mxu0
        %v1051 = vadd.f32 %v468, %v1050
        %1052 = vmatmul.f32.gmra.mxu0 %v649
        %v1053 = vpop.f32.mrf.mxu0
        %v1054 = vadd.f32 %v468, %v1053
        %1055 = vmatmul.f32.gmra.mxu0 %v652
        %v1056 = vpop.f32.mrf.mxu0
        %v1057 = vadd.f32 %v468, %v1056
        %1058 = vmatmul.f32.gmra.mxu0 %v655
        %v1059 = vpop.f32.mrf.mxu0
        %v1060 = vadd.f32 %v468, %v1059
        %1061 = vmatmul.f32.gmra.mxu0 %v658
        %v1062 = vpop.f32.mrf.mxu0
        %v1063 = vadd.f32 %v468, %v1062
        %1064 = vmatmul.f32.gmra.mxu0 %v661
        %v1065 = vpop.f32.mrf.mxu0
        %v1066 = vadd.f32 %v468, %v1065
        %1067 = vmatmul.f32.gmra.mxu0 %v664
        %v1068 = vpop.f32.mrf.mxu0
        %v1069 = vadd.f32 %v468, %v1068
        %1070 = vmatmul.f32.gmra.mxu0 %v667
        %v1071 = vpop.f32.mrf.mxu0
        %v1072 = vadd.f32 %v468, %v1071
        %1073 = vmatmul.f32.gmra.mxu0 %v670
        %v1074 = vpop.f32.mrf.mxu0
        %v1075 = vadd.f32 %v468, %v1074
        %1076 = vmatmul.f32.gmra.mxu0 %v673
        %v1077 = vpop.f32.mrf.mxu0
        %v1078 = vadd.f32 %v468, %v1077
        %1079 = vmatmul.f32.gmra.mxu0 %v676
        %v1080 = vpop.f32.mrf.mxu0
        %v1081 = vadd.f32 %v468, %v1080
        %1082 = vmatmul.f32.gmra.mxu0 %v679
        %v1083 = vpop.f32.mrf.mxu0
        %v1084 = vadd.f32 %v468, %v1083
        %1085 = vmatmul.f32.gmra.mxu0 %v682
        %v1086 = vpop.f32.mrf.mxu0
        %v1087 = vadd.f32 %v468, %v1086
        %1088 = vmatmul.f32.gmra.mxu0 %v685
        %v1089 = vpop.f32.mrf.mxu0
        %v1090 = vadd.f32 %v468, %v1089
        %1091 = vmatmul.f32.gmra.mxu0 %v688
        %v1092 = vpop.f32.mrf.mxu0
        %v1093 = vadd.f32 %v468, %v1092
        %1094 = vmatmul.f32.gmra.mxu0 %v691
        %v1095 = vpop.f32.mrf.mxu0
        %v1096 = vadd.f32 %v468, %v1095
        %1097 = vmatmul.f32.gmra.mxu0 %v694
        %v1098 = vpop.f32.mrf.mxu0
        %v1099 = vadd.f32 %v468, %v1098
        %1100 = vmatmul.f32.gmra.mxu0 %v697
        %v1101 = vpop.f32.mrf.mxu0
        %v1102 = vadd.f32 %v468, %v1101
        %1103 = vmatmul.f32.gmra.mxu0 %v700
        %v1104 = vpop.f32.mrf.mxu0
        %v1105 = vadd.f32 %v468, %v1104
        %1106 = vmatmul.f32.gmra.mxu0 %v703
        %v1107 = vpop.f32.mrf.mxu0
        %v1108 = vadd.f32 %v468, %v1107
        %1109 = vmatmul.f32.gmra.mxu0 %v706
        %v1110 = vpop.f32.mrf.mxu0
        %v1111 = vadd.f32 %v468, %v1110
        %1112 = vmatmul.f32.gmra.mxu0 %v709
        %v1113 = vpop.f32.mrf.mxu0
        %v1114 = vadd.f32 %v468, %v1113
        %1115 = vmatmul.f32.gmra.mxu0 %v712
        %v1116 = vpop.f32.mrf.mxu0
        %v1117 = vadd.f32 %v468, %v1116
        %1118 = vmatmul.f32.gmra.mxu0 %v715
        %v1119 = vpop.f32.mrf.mxu0
        %v1120 = vadd.f32 %v468, %v1119
        %1121 = vmatmul.f32.gmra.mxu0 %v718
        %v1122 = vpop.f32.mrf.mxu0
        %v1123 = vadd.f32 %v468, %v1122
        %1124 = vmatmul.f32.gmra.mxu0 %v721
        %v1125 = vpop.f32.mrf.mxu0
        %v1126 = vadd.f32 %v468, %v1125
        %1127 = vmatmul.f32.gmra.mxu0 %v724
        %v1128 = vpop.f32.mrf.mxu0
        %v1129 = vadd.f32 %v468, %v1128
        %1130 = vmatmul.f32.gmra.mxu0 %v727
        %v1131 = vpop.f32.mrf.mxu0
        %v1132 = vadd.f32 %v468, %v1131
        %1133 = vmatmul.f32.gmra.mxu0 %v730
        %v1134 = vpop.f32.mrf.mxu0
        %v1135 = vadd.f32 %v468, %v1134
        %1136 = vmatmul.f32.gmra.mxu0 %v733
        %v1137 = vpop.f32.mrf.mxu0
        %v1138 = vadd.f32 %v468, %v1137
        %1139 = vmatmul.f32.gmra.mxu0 %v736
        %v1140 = vpop.f32.mrf.mxu0
        %v1141 = vadd.f32 %v468, %v1140
        %1142 = vmatmul.f32.gmra.mxu0 %v739
        %v1143 = vpop.f32.mrf.mxu0
        %v1144 = vadd.f32 %v468, %v1143
        %1145 = vmatmul.f32.gmra.mxu0 %v742
        %v1146 = vpop.f32.mrf.mxu0
        %v1147 = vadd.f32 %v468, %v1146
        %1148 = vmatmul.f32.gmra.mxu0 %v745
        %v1149 = vpop.f32.mrf.mxu0
        %v1150 = vadd.f32 %v468, %v1149
        %1151 = vmatmul.f32.gmra.mxu0 %v748
        %v1152 = vpop.f32.mrf.mxu0
        %v1153 = vadd.f32 %v468, %v1152
        %1154 = vmatmul.f32.gmra.mxu0 %v751
        %v1155 = vpop.f32.mrf.mxu0
        %v1156 = vadd.f32 %v468, %v1155
        %1157 = vmatmul.f32.gmra.mxu0 %v754
        %v1158 = vpop.f32.mrf.mxu0
        %v1159 = vadd.f32 %v468, %v1158
        %1160 = vmatmul.f32.gmra.mxu0 %v757
        %v1161 = vpop.f32.mrf.mxu0
        %v1162 = vadd.f32 %v468, %v1161
        %1163 = vmatmul.f32.gmra.mxu0 %v760
        %v1164 = vpop.f32.mrf.mxu0
        %v1165 = vadd.f32 %v468, %v1164
        %1166 = vmatmul.f32.gmra.mxu0 %v763
        %v1167 = vpop.f32.mrf.mxu0
        %v1168 = vadd.f32 %v468, %v1167
        %1169 = vmatmul.f32.gmra.mxu0 %v766
        %v1170 = vpop.f32.mrf.mxu0
        %v1171 = vadd.f32 %v468, %v1170
        %1172 = vmatmul.f32.gmra.mxu0 %v769
        %v1173 = vpop.f32.mrf.mxu0
        %v1174 = vadd.f32 %v468, %v1173
        %1175 = vmatmul.f32.gmra.mxu0 %v772
        %v1176 = vpop.f32.mrf.mxu0
        %v1177 = vadd.f32 %v468, %v1176
        %1178 = vmatmul.f32.gmra.mxu0 %v775
        %v1179 = vpop.f32.mrf.mxu0
        %v1180 = vadd.f32 %v468, %v1179
        %1181 = vmatmul.f32.gmra.mxu0 %v778
        %v1182 = vpop.f32.mrf.mxu0
        %v1183 = vadd.f32 %v468, %v1182
        %1184 = vmatmul.f32.gmra.mxu0 %v781
        %v1185 = vpop.f32.mrf.mxu0
        %v1186 = vadd.f32 %v468, %v1185
        %1187 = vmatmul.f32.gmra.mxu0 %v784
        %v1188 = vpop.f32.mrf.mxu0
        %v1189 = vadd.f32 %v468, %v1188
        %1190 = vmatmul.f32.gmra.mxu0 %v787
        %v1191 = vpop.f32.mrf.mxu0
        %v1192 = vadd.f32 %v468, %v1191
        %1193 = vmatmul.f32.gmra.mxu0 %v790
        %v1194 = vpop.f32.mrf.mxu0
        %v1195 = vadd.f32 %v468, %v1194
        %1196 = vmatmul.f32.gmra.mxu0 %v793
        %v1197 = vpop.f32.mrf.mxu0
        %v1198 = vadd.f32 %v468, %v1197
        %1199 = vmatmul.f32.gmra.mxu0 %v796
        %v1200 = vpop.f32.mrf.mxu0
        %v1201 = vadd.f32 %v468, %v1200
        %1202 = vmatmul.f32.gmra.mxu0 %v799
        %v1203 = vpop.f32.mrf.mxu0
        %v1204 = vadd.f32 %v468, %v1203
        %1205 = vmatmul.f32.gmra.mxu0 %v802
        %v1206 = vpop.f32.mrf.mxu0
        %v1207 = vadd.f32 %v468, %v1206
        %1208 = vmatmul.f32.gmra.mxu0 %v805
        %v1209 = vpop.f32.mrf.mxu0
        %v1210 = vadd.f32 %v468, %v1209
        %1211 = vmatmul.f32.gmra.mxu0 %v808
        %v1212 = vpop.f32.mrf.mxu0
        %v1213 = vadd.f32 %v468, %v1212
        %1214 = vmatmul.f32.gmra.mxu0 %v811
        %v1215 = vpop.f32.mrf.mxu0
        %v1216 = vadd.f32 %v468, %v1215
        %1217 = vmatmul.f32.gmra.mxu0 %v814
        %v1218 = vpop.f32.mrf.mxu0
        %v1219 = vadd.f32 %v468, %v1218
        %1220 = vmatmul.f32.gmra.mxu0 %v817
        %v1221 = vpop.f32.mrf.mxu0
        %v1222 = vadd.f32 %v468, %v1221
        %1223 = vmatmul.f32.gmra.mxu0 %v820
        %v1224 = vpop.f32.mrf.mxu0
        %v1225 = vadd.f32 %v468, %v1224
        %1226 = vmatmul.f32.gmra.mxu0 %v823
        %v1227 = vpop.f32.mrf.mxu0
        %v1228 = vadd.f32 %v468, %v1227
        %1229 = vmatmul.f32.gmra.mxu0 %v826
        %v1230 = vpop.f32.mrf.mxu0
        %v1231 = vadd.f32 %v468, %v1230
        %1232 = vmatmul.f32.gmra.mxu0 %v829
        %v1233 = vpop.f32.mrf.mxu0
        %v1234 = vadd.f32 %v468, %v1233
        %1235 = vmatmul.f32.gmra.mxu0 %v832
        %v1236 = vpop.f32.mrf.mxu0
        %v1237 = vadd.f32 %v468, %v1236
        %1238 = vmatmul.f32.gmra.mxu0 %v835
        %v1239 = vpop.f32.mrf.mxu0
        %v1240 = vadd.f32 %v468, %v1239
        %1241 = vmatmul.f32.gmra.mxu0 %v838
        %v1242 = vpop.f32.mrf.mxu0
        %v1243 = vadd.f32 %v468, %v1242
        %1244 = vmatmul.f32.gmra.mxu0 %v841
        %v1245 = vpop.f32.mrf.mxu0
        %v1246 = vadd.f32 %v468, %v1245
        %1247 = vmatmul.f32.gmra.mxu0 %v844
        %v1248 = vpop.f32.mrf.mxu0
        %v1249 = vadd.f32 %v468, %v1248
        %1250 = vmatmul.f32.gmra.mxu0 %v847
        %v1251 = vpop.f32.mrf.mxu0
        %v1252 = vadd.f32 %v468, %v1251
        %1253 = vmatmul.f32.gmra.mxu0 %v850
        %v1254 = vpop.f32.mrf.mxu0
        %v1255 = vadd.f32 %v468, %v1254
        %1256 = vmatmul.f32.gmra.mxu0 %v853
        %v1257 = vpop.f32.mrf.mxu0
        %v1258 = vadd.f32 %v468, %v1257
        %1259 = vdwg.mxu0
        %v1260 = vmax.f32 %v877, 0.0
        %v1261 = vmax.f32 %v880, 0.0
        %v1262 = vmax.f32 %v883, 0.0
        %v1263 = vmax.f32 %v886, 0.0
        %v1264 = vmax.f32 %v889, 0.0
        %v1265 = vmax.f32 %v892, 0.0
        %v1266 = vmax.f32 %v895, 0.0
        %v1267 = vmax.f32 %v898, 0.0
        %v1268 = vmax.f32 %v901, 0.0
        %v1269 = vmax.f32 %v904, 0.0
        %v1270 = vmax.f32 %v907, 0.0
        %v1271 = vmax.f32 %v910, 0.0
        %v1272 = vmax.f32 %v913, 0.0
        %v1273 = vmax.f32 %v916, 0.0
        %v1274 = vmax.f32 %v919, 0.0
        %v1275 = vmax.f32 %v922, 0.0
        %v1276 = vmax.f32 %v925, 0.0
        %v1277 = vmax.f32 %v928, 0.0
        %v1278 = vmax.f32 %v931, 0.0
        %v1279 = vmax.f32 %v934, 0.0
        %v1280 = vmax.f32 %v937, 0.0
        %v1281 = vmax.f32 %v940, 0.0
        %v1282 = vmax.f32 %v943, 0.0
        %v1283 = vmax.f32 %v946, 0.0
        %v1284 = vmax.f32 %v949, 0.0
        %v1285 = vmax.f32 %v952, 0.0
        %v1286 = vmax.f32 %v955, 0.0
        %v1287 = vmax.f32 %v958, 0.0
        %v1288 = vmax.f32 %v961, 0.0
        %v1289 = vmax.f32 %v964, 0.0
        %v1290 = vmax.f32 %v967, 0.0
        %v1291 = vmax.f32 %v970, 0.0
        %v1292 = vmax.f32 %v973, 0.0
        %v1293 = vmax.f32 %v976, 0.0
        %v1294 = vmax.f32 %v979, 0.0
        %v1295 = vmax.f32 %v982, 0.0
        %v1296 = vmax.f32 %v985, 0.0
        %v1297 = vmax.f32 %v988, 0.0
        %v1298 = vmax.f32 %v991, 0.0
        %v1299 = vmax.f32 %v994, 0.0
        %v1300 = vmax.f32 %v997, 0.0
        %v1301 = vmax.f32 %v1000, 0.0
        %v1302 = vmax.f32 %v1003, 0.0
        %v1303 = vmax.f32 %v1006, 0.0
        %v1304 = vmax.f32 %v1009, 0.0
        %v1305 = vmax.f32 %v1012, 0.0
        %v1306 = vmax.f32 %v1015, 0.0
        %v1307 = vmax.f32 %v1018, 0.0
        %v1308 = vmax.f32 %v1021, 0.0
        %v1309 = vmax.f32 %v1024, 0.0
        %v1310 = vmax.f32 %v1027, 0.0
        %v1311 = vmax.f32 %v1030, 0.0
        %v1312 = vmax.f32 %v1033, 0.0
        %v1313 = vmax.f32 %v1036, 0.0
        %v1314 = vmax.f32 %v1039, 0.0
        %v1315 = vmax.f32 %v1042, 0.0
        %v1316 = vmax.f32 %v1045, 0.0
        %v1317 = vmax.f32 %v1048, 0.0
        %v1318 = vmax.f32 %v1051, 0.0
        %v1319 = vmax.f32 %v1054, 0.0
        %v1320 = vmax.f32 %v1057, 0.0
        %v1321 = vmax.f32 %v1060, 0.0
        %v1322 = vmax.f32 %v1063, 0.0
        %v1323 = vmax.f32 %v1066, 0.0
        %v1324 = vmax.f32 %v1069, 0.0
        %v1325 = vmax.f32 %v1072, 0.0
        %v1326 = vmax.f32 %v1075, 0.0
        %v1327 = vmax.f32 %v1078, 0.0
        %v1328 = vmax.f32 %v1081, 0.0
        %v1329 = vmax.f32 %v1084, 0.0
        %v1330 = vmax.f32 %v1087, 0.0
        %v1331 = vmax.f32 %v1090, 0.0
        %v1332 = vmax.f32 %v1093, 0.0
        %v1333 = vmax.f32 %v1096, 0.0
        %v1334 = vmax.f32 %v1099, 0.0
        %v1335 = vmax.f32 %v1102, 0.0
        %v1336 = vmax.f32 %v1105, 0.0
        %v1337 = vmax.f32 %v1108, 0.0
        %v1338 = vmax.f32 %v1111, 0.0
        %v1339 = vmax.f32 %v1114, 0.0
        %v1340 = vmax.f32 %v1117, 0.0
        %v1341 = vmax.f32 %v1120, 0.0
        %v1342 = vmax.f32 %v1123, 0.0
        %v1343 = vmax.f32 %v1126, 0.0
        %v1344 = vmax.f32 %v1129, 0.0
        %v1345 = vmax.f32 %v1132, 0.0
        %v1346 = vmax.f32 %v1135, 0.0
        %v1347 = vmax.f32 %v1138, 0.0
        %v1348 = vmax.f32 %v1141, 0.0
        %v1349 = vmax.f32 %v1144, 0.0
        %v1350 = vmax.f32 %v1147, 0.0
        %v1351 = vmax.f32 %v1150, 0.0
        %v1352 = vmax.f32 %v1153, 0.0
        %v1353 = vmax.f32 %v1156, 0.0
        %v1354 = vmax.f32 %v1159, 0.0
        %v1355 = vmax.f32 %v1162, 0.0
        %v1356 = vmax.f32 %v1165, 0.0
        %v1357 = vmax.f32 %v1168, 0.0
        %v1358 = vmax.f32 %v1171, 0.0
        %v1359 = vmax.f32 %v1174, 0.0
        %v1360 = vmax.f32 %v1177, 0.0
        %v1361 = vmax.f32 %v1180, 0.0
        %v1362 = vmax.f32 %v1183, 0.0
        %v1363 = vmax.f32 %v1186, 0.0
        %v1364 = vmax.f32 %v1189, 0.0
        %v1365 = vmax.f32 %v1192, 0.0
        %v1366 = vmax.f32 %v1195, 0.0
        %v1367 = vmax.f32 %v1198, 0.0
        %v1368 = vmax.f32 %v1201, 0.0
        %v1369 = vmax.f32 %v1204, 0.0
        %v1370 = vmax.f32 %v1207, 0.0
        %v1371 = vmax.f32 %v1210, 0.0
        %v1372 = vmax.f32 %v1213, 0.0
        %v1373 = vmax.f32 %v1216, 0.0
        %v1374 = vmax.f32 %v1219, 0.0
        %v1375 = vmax.f32 %v1222, 0.0
        %v1376 = vmax.f32 %v1225, 0.0
        %v1377 = vmax.f32 %v1228, 0.0
        %v1378 = vmax.f32 %v1231, 0.0
        %v1379 = vmax.f32 %v1234, 0.0
        %v1380 = vmax.f32 %v1237, 0.0
        %v1381 = vmax.f32 %v1240, 0.0
        %v1382 = vmax.f32 %v1243, 0.0
        %v1383 = vmax.f32 %v1246, 0.0
        %v1384 = vmax.f32 %v1249, 0.0
        %v1385 = vmax.f32 %v1252, 0.0
        %v1386 = vmax.f32 %v1255, 0.0
        %v1387 = vmax.f32 %v1258, 0.0
        %v1388 = vpack.c.bf16 %v1260, %v1260
        %v1389 = vpack.c.bf16 %v1261, %v1261
        %v1390 = vpack.c.bf16 %v1262, %v1262
        %v1391 = vpack.c.bf16 %v1263, %v1263
        %v1392 = vpack.c.bf16 %v1264, %v1264
        %v1393 = vpack.c.bf16 %v1265, %v1265
        %v1394 = vpack.c.bf16 %v1266, %v1266
        %v1395 = vpack.c.bf16 %v1267, %v1267
        %v1396 = vpack.c.bf16 %v1268, %v1268
        %v1397 = vpack.c.bf16 %v1269, %v1269
        %v1398 = vpack.c.bf16 %v1270, %v1270
        %v1399 = vpack.c.bf16 %v1271, %v1271
        %v1400 = vpack.c.bf16 %v1272, %v1272
        %v1401 = vpack.c.bf16 %v1273, %v1273
        %v1402 = vpack.c.bf16 %v1274, %v1274
        %v1403 = vpack.c.bf16 %v1275, %v1275
        %v1404 = vpack.c.bf16 %v1276, %v1276
        %v1405 = vpack.c.bf16 %v1277, %v1277
        %v1406 = vpack.c.bf16 %v1278, %v1278
        %v1407 = vpack.c.bf16 %v1279, %v1279
        %v1408 = vpack.c.bf16 %v1280, %v1280
        %v1409 = vpack.c.bf16 %v1281, %v1281
        %v1410 = vpack.c.bf16 %v1282, %v1282
        %v1411 = vpack.c.bf16 %v1283, %v1283
        %v1412 = vpack.c.bf16 %v1284, %v1284
        %v1413 = vpack.c.bf16 %v1285, %v1285
        %v1414 = vpack.c.bf16 %v1286, %v1286
        %v1415 = vpack.c.bf16 %v1287, %v1287
        %v1416 = vpack.c.bf16 %v1288, %v1288
        %v1417 = vpack.c.bf16 %v1289, %v1289
        %v1418 = vpack.c.bf16 %v1290, %v1290
        %v1419 = vpack.c.bf16 %v1291, %v1291
        %v1420 = vpack.c.bf16 %v1292, %v1292
        %v1421 = vpack.c.bf16 %v1293, %v1293
        %v1422 = vpack.c.bf16 %v1294, %v1294
        %v1423 = vpack.c.bf16 %v1295, %v1295
        %v1424 = vpack.c.bf16 %v1296, %v1296
        %v1425 = vpack.c.bf16 %v1297, %v1297
        %v1426 = vpack.c.bf16 %v1298, %v1298
        %v1427 = vpack.c.bf16 %v1299, %v1299
        %v1428 = vpack.c.bf16 %v1300, %v1300
        %v1429 = vpack.c.bf16 %v1301, %v1301
        %v1430 = vpack.c.bf16 %v1302, %v1302
        %v1431 = vpack.c.bf16 %v1303, %v1303
        %v1432 = vpack.c.bf16 %v1304, %v1304
        %v1433 = vpack.c.bf16 %v1305, %v1305
        %v1434 = vpack.c.bf16 %v1306, %v1306
        %v1435 = vpack.c.bf16 %v1307, %v1307
        %v1436 = vpack.c.bf16 %v1308, %v1308
        %v1437 = vpack.c.bf16 %v1309, %v1309
        %v1438 = vpack.c.bf16 %v1310, %v1310
        %v1439 = vpack.c.bf16 %v1311, %v1311
        %v1440 = vpack.c.bf16 %v1312, %v1312
        %v1441 = vpack.c.bf16 %v1313, %v1313
        %v1442 = vpack.c.bf16 %v1314, %v1314
        %v1443 = vpack.c.bf16 %v1315, %v1315
        %v1444 = vpack.c.bf16 %v1316, %v1316
        %v1445 = vpack.c.bf16 %v1317, %v1317
        %v1446 = vpack.c.bf16 %v1318, %v1318
        %v1447 = vpack.c.bf16 %v1319, %v1319
        %v1448 = vpack.c.bf16 %v1320, %v1320
        %v1449 = vpack.c.bf16 %v1321, %v1321
        %v1450 = vpack.c.bf16 %v1322, %v1322
        %v1451 = vpack.c.bf16 %v1323, %v1323
        %v1452 = vpack.c.bf16 %v1324, %v1324
        %v1453 = vpack.c.bf16 %v1325, %v1325
        %v1454 = vpack.c.bf16 %v1326, %v1326
        %v1455 = vpack.c.bf16 %v1327, %v1327
        %v1456 = vpack.c.bf16 %v1328, %v1328
        %v1457 = vpack.c.bf16 %v1329, %v1329
        %v1458 = vpack.c.bf16 %v1330, %v1330
        %v1459 = vpack.c.bf16 %v1331, %v1331
        %v1460 = vpack.c.bf16 %v1332, %v1332
        %v1461 = vpack.c.bf16 %v1333, %v1333
        %v1462 = vpack.c.bf16 %v1334, %v1334
        %v1463 = vpack.c.bf16 %v1335, %v1335
        %v1464 = vpack.c.bf16 %v1336, %v1336
        %v1465 = vpack.c.bf16 %v1337, %v1337
        %v1466 = vpack.c.bf16 %v1338, %v1338
        %v1467 = vpack.c.bf16 %v1339, %v1339
        %v1468 = vpack.c.bf16 %v1340, %v1340
        %v1469 = vpack.c.bf16 %v1341, %v1341
        %v1470 = vpack.c.bf16 %v1342, %v1342
        %v1471 = vpack.c.bf16 %v1343, %v1343
        %v1472 = vpack.c.bf16 %v1344, %v1344
        %v1473 = vpack.c.bf16 %v1345, %v1345
        %v1474 = vpack.c.bf16 %v1346, %v1346
        %v1475 = vpack.c.bf16 %v1347, %v1347
        %v1476 = vpack.c.bf16 %v1348, %v1348
        %v1477 = vpack.c.bf16 %v1349, %v1349
        %v1478 = vpack.c.bf16 %v1350, %v1350
        %v1479 = vpack.c.bf16 %v1351, %v1351
        %v1480 = vpack.c.bf16 %v1352, %v1352
        %v1481 = vpack.c.bf16 %v1353, %v1353
        %v1482 = vpack.c.bf16 %v1354, %v1354
        %v1483 = vpack.c.bf16 %v1355, %v1355
        %v1484 = vpack.c.bf16 %v1356, %v1356
        %v1485 = vpack.c.bf16 %v1357, %v1357
        %v1486 = vpack.c.bf16 %v1358, %v1358
        %v1487 = vpack.c.bf16 %v1359, %v1359
        %v1488 = vpack.c.bf16 %v1360, %v1360
        %v1489 = vpack.c.bf16 %v1361, %v1361
        %v1490 = vpack.c.bf16 %v1362, %v1362
        %v1491 = vpack.c.bf16 %v1363, %v1363
        %v1492 = vpack.c.bf16 %v1364, %v1364
        %v1493 = vpack.c.bf16 %v1365, %v1365
        %v1494 = vpack.c.bf16 %v1366, %v1366
        %v1495 = vpack.c.bf16 %v1367, %v1367
        %v1496 = vpack.c.bf16 %v1368, %v1368
        %v1497 = vpack.c.bf16 %v1369, %v1369
        %v1498 = vpack.c.bf16 %v1370, %v1370
        %v1499 = vpack.c.bf16 %v1371, %v1371
        %v1500 = vpack.c.bf16 %v1372, %v1372
        %v1501 = vpack.c.bf16 %v1373, %v1373
        %v1502 = vpack.c.bf16 %v1374, %v1374
        %v1503 = vpack.c.bf16 %v1375, %v1375
        %v1504 = vpack.c.bf16 %v1376, %v1376
        %v1505 = vpack.c.bf16 %v1377, %v1377
        %v1506 = vpack.c.bf16 %v1378, %v1378
        %v1507 = vpack.c.bf16 %v1379, %v1379
        %v1508 = vpack.c.bf16 %v1380, %v1380
        %v1509 = vpack.c.bf16 %v1381, %v1381
        %v1510 = vpack.c.bf16 %v1382, %v1382
        %v1511 = vpack.c.bf16 %v1383, %v1383
        %v1512 = vpack.c.bf16 %v1384, %v1384
        %v1513 = vpack.c.bf16 %v1385, %v1385
        %v1514 = vpack.c.bf16 %v1386, %v1386
        %v1515 = vpack.c.bf16 %v1387, %v1387
        %v1516 = vld [vmem:[%s3] sm:$0xf]
        %v1517 = vld [vmem:[%s3 + $0x4] sm:$0xf]
        %v1518 = vld [vmem:[%s3 + $0x8] sm:$0xf]
        %v1519 = vld [vmem:[%s3 + $0xc] sm:$0xf]
        %v1520 = vld [vmem:[%s3 + $0x10] sm:$0xf]
        %v1521 = vld [vmem:[%s3 + $0x14] sm:$0xf]
        %v1522 = vld [vmem:[%s3 + $0x18] sm:$0xf]
        %v1523 = vld [vmem:[%s3 + $0x1c] sm:$0xf]
        %v1524 = vld [vmem:[%s3 + $0x20] sm:$0xf]
        %v1525 = vld [vmem:[%s3 + $0x24] sm:$0xf]
        %v1526 = vld [vmem:[%s3 + $0x28] sm:$0xf]
        %v1527 = vld [vmem:[%s3 + $0x2c] sm:$0xf]
        %v1528 = vld [vmem:[%s3 + $0x30] sm:$0xf]
        %v1529 = vld [vmem:[%s3 + $0x34] sm:$0xf]
        %v1530 = vld [vmem:[%s3 + $0x38] sm:$0xf]
        %v1531 = vld [vmem:[%s3 + $0x3c] sm:$0xf]
        %v1532 = vld [vmem:[%s4] sm:$0x1]
        %v1534 = vperm.slane %v1532, 0
        %v1664 = vunpack.c.l.b16 %v1388
        %v1665 = vunpack.c.l.b16 %v1389
        %v1666 = vunpack.c.l.b16 %v1390
        %v1667 = vunpack.c.l.b16 %v1391
        %v1668 = vunpack.c.l.b16 %v1392
        %v1669 = vunpack.c.l.b16 %v1393
        %v1670 = vunpack.c.l.b16 %v1394
        %v1671 = vunpack.c.l.b16 %v1395
        %v1672 = vunpack.c.l.b16 %v1396
        %v1673 = vunpack.c.l.b16 %v1397
        %v1674 = vunpack.c.l.b16 %v1398
        %v1675 = vunpack.c.l.b16 %v1399
        %v1676 = vunpack.c.l.b16 %v1400
        %v1677 = vunpack.c.l.b16 %v1401
        %v1678 = vunpack.c.l.b16 %v1402
        %v1679 = vunpack.c.l.b16 %v1403
        %v1680 = vunpack.c.l.b16 %v1404
        %v1681 = vunpack.c.l.b16 %v1405
        %v1682 = vunpack.c.l.b16 %v1406
        %v1683 = vunpack.c.l.b16 %v1407
        %v1684 = vunpack.c.l.b16 %v1408
        %v1685 = vunpack.c.l.b16 %v1409
        %v1686 = vunpack.c.l.b16 %v1410
        %v1687 = vunpack.c.l.b16 %v1411
        %v1688 = vunpack.c.l.b16 %v1412
        %v1689 = vunpack.c.l.b16 %v1413
        %v1690 = vunpack.c.l.b16 %v1414
        %v1691 = vunpack.c.l.b16 %v1415
        %v1692 = vunpack.c.l.b16 %v1416
        %v1693 = vunpack.c.l.b16 %v1417
        %v1694 = vunpack.c.l.b16 %v1418
        %v1695 = vunpack.c.l.b16 %v1419
        %v1696 = vunpack.c.l.b16 %v1420
        %v1697 = vunpack.c.l.b16 %v1421
        %v1698 = vunpack.c.l.b16 %v1422
        %v1699 = vunpack.c.l.b16 %v1423
        %v1700 = vunpack.c.l.b16 %v1424
        %v1701 = vunpack.c.l.b16 %v1425
        %v1702 = vunpack.c.l.b16 %v1426
        %v1703 = vunpack.c.l.b16 %v1427
        %v1704 = vunpack.c.l.b16 %v1428
        %v1705 = vunpack.c.l.b16 %v1429
        %v1706 = vunpack.c.l.b16 %v1430
        %v1707 = vunpack.c.l.b16 %v1431
        %v1708 = vunpack.c.l.b16 %v1432
        %v1709 = vunpack.c.l.b16 %v1433
        %v1710 = vunpack.c.l.b16 %v1434
        %v1711 = vunpack.c.l.b16 %v1435
        %v1712 = vunpack.c.l.b16 %v1436
        %v1713 = vunpack.c.l.b16 %v1437
        %v1714 = vunpack.c.l.b16 %v1438
        %v1715 = vunpack.c.l.b16 %v1439
        %v1716 = vunpack.c.l.b16 %v1440
        %v1717 = vunpack.c.l.b16 %v1441
        %v1718 = vunpack.c.l.b16 %v1442
        %v1719 = vunpack.c.l.b16 %v1443
        %v1720 = vunpack.c.l.b16 %v1444
        %v1721 = vunpack.c.l.b16 %v1445
        %v1722 = vunpack.c.l.b16 %v1446
        %v1723 = vunpack.c.l.b16 %v1447
        %v1724 = vunpack.c.l.b16 %v1448
        %v1725 = vunpack.c.l.b16 %v1449
        %v1726 = vunpack.c.l.b16 %v1450
        %v1727 = vunpack.c.l.b16 %v1451
        %v1728 = vunpack.c.l.b16 %v1452
        %v1729 = vunpack.c.l.b16 %v1453
        %v1730 = vunpack.c.l.b16 %v1454
        %v1731 = vunpack.c.l.b16 %v1455
        %v1732 = vunpack.c.l.b16 %v1456
        %v1733 = vunpack.c.l.b16 %v1457
        %v1734 = vunpack.c.l.b16 %v1458
        %v1735 = vunpack.c.l.b16 %v1459
        %v1736 = vunpack.c.l.b16 %v1460
        %v1737 = vunpack.c.l.b16 %v1461
        %v1738 = vunpack.c.l.b16 %v1462
        %v1739 = vunpack.c.l.b16 %v1463
        %v1740 = vunpack.c.l.b16 %v1464
        %v1741 = vunpack.c.l.b16 %v1465
        %v1742 = vunpack.c.l.b16 %v1466
        %v1743 = vunpack.c.l.b16 %v1467
        %v1744 = vunpack.c.l.b16 %v1468
        %v1745 = vunpack.c.l.b16 %v1469
        %v1746 = vunpack.c.l.b16 %v1470
        %v1747 = vunpack.c.l.b16 %v1471
        %v1748 = vunpack.c.l.b16 %v1472
        %v1749 = vunpack.c.l.b16 %v1473
        %v1750 = vunpack.c.l.b16 %v1474
        %v1751 = vunpack.c.l.b16 %v1475
        %v1752 = vunpack.c.l.b16 %v1476
        %v1753 = vunpack.c.l.b16 %v1477
        %v1754 = vunpack.c.l.b16 %v1478
        %v1755 = vunpack.c.l.b16 %v1479
        %v1756 = vunpack.c.l.b16 %v1480
        %v1757 = vunpack.c.l.b16 %v1481
        %v1758 = vunpack.c.l.b16 %v1482
        %v1759 = vunpack.c.l.b16 %v1483
        %v1760 = vunpack.c.l.b16 %v1484
        %v1761 = vunpack.c.l.b16 %v1485
        %v1762 = vunpack.c.l.b16 %v1486
        %v1763 = vunpack.c.l.b16 %v1487
        %v1764 = vunpack.c.l.b16 %v1488
        %v1765 = vunpack.c.l.b16 %v1489
        %v1766 = vunpack.c.l.b16 %v1490
        %v1767 = vunpack.c.l.b16 %v1491
        %v1768 = vunpack.c.l.b16 %v1492
        %v1769 = vunpack.c.l.b16 %v1493
        %v1770 = vunpack.c.l.b16 %v1494
        %v1771 = vunpack.c.l.b16 %v1495
        %v1772 = vunpack.c.l.b16 %v1496
        %v1773 = vunpack.c.l.b16 %v1497
        %v1774 = vunpack.c.l.b16 %v1498
        %v1775 = vunpack.c.l.b16 %v1499
        %v1776 = vunpack.c.l.b16 %v1500
        %v1777 = vunpack.c.l.b16 %v1501
        %v1778 = vunpack.c.l.b16 %v1502
        %v1779 = vunpack.c.l.b16 %v1503
        %v1780 = vunpack.c.l.b16 %v1504
        %v1781 = vunpack.c.l.b16 %v1505
        %v1782 = vunpack.c.l.b16 %v1506
        %v1783 = vunpack.c.l.b16 %v1507
        %v1784 = vunpack.c.l.b16 %v1508
        %v1785 = vunpack.c.l.b16 %v1509
        %v1786 = vunpack.c.l.b16 %v1510
        %v1787 = vunpack.c.l.b16 %v1511
        %v1788 = vunpack.c.l.b16 %v1512
        %v1789 = vunpack.c.l.b16 %v1513
        %v1790 = vunpack.c.l.b16 %v1514
        %v1791 = vunpack.c.l.b16 %v1515
        %v1792 = vpack.c.b16 %v1665, %v1664
        %v1793 = vpack.c.b16 %v1667, %v1666
        %v1794 = vpack.c.b16 %v1669, %v1668
        %v1795 = vpack.c.b16 %v1671, %v1670
        %v1796 = vpack.c.b16 %v1673, %v1672
        %v1797 = vpack.c.b16 %v1675, %v1674
        %v1798 = vpack.c.b16 %v1677, %v1676
        %v1799 = vpack.c.b16 %v1679, %v1678
        %v1800 = vpack.c.b16 %v1681, %v1680
        %v1801 = vpack.c.b16 %v1683, %v1682
        %v1802 = vpack.c.b16 %v1685, %v1684
        %v1803 = vpack.c.b16 %v1687, %v1686
        %v1804 = vpack.c.b16 %v1689, %v1688
        %v1805 = vpack.c.b16 %v1691, %v1690
        %v1806 = vpack.c.b16 %v1693, %v1692
        %v1807 = vpack.c.b16 %v1695, %v1694
        %v1808 = vpack.c.b16 %v1697, %v1696
        %v1809 = vpack.c.b16 %v1699, %v1698
        %v1810 = vpack.c.b16 %v1701, %v1700
        %v1811 = vpack.c.b16 %v1703, %v1702
        %v1812 = vpack.c.b16 %v1705, %v1704
        %v1813 = vpack.c.b16 %v1707, %v1706
        %v1814 = vpack.c.b16 %v1709, %v1708
        %v1815 = vpack.c.b16 %v1711, %v1710
        %v1816 = vpack.c.b16 %v1713, %v1712
        %v1817 = vpack.c.b16 %v1715, %v1714
        %v1818 = vpack.c.b16 %v1717, %v1716
        %v1819 = vpack.c.b16 %v1719, %v1718
        %v1820 = vpack.c.b16 %v1721, %v1720
        %v1821 = vpack.c.b16 %v1723, %v1722
        %v1822 = vpack.c.b16 %v1725, %v1724
        %v1823 = vpack.c.b16 %v1727, %v1726
        %v1824 = vpack.c.b16 %v1729, %v1728
        %v1825 = vpack.c.b16 %v1731, %v1730
        %v1826 = vpack.c.b16 %v1733, %v1732
        %v1827 = vpack.c.b16 %v1735, %v1734
        %v1828 = vpack.c.b16 %v1737, %v1736
        %v1829 = vpack.c.b16 %v1739, %v1738
        %v1830 = vpack.c.b16 %v1741, %v1740
        %v1831 = vpack.c.b16 %v1743, %v1742
        %v1832 = vpack.c.b16 %v1745, %v1744
        %v1833 = vpack.c.b16 %v1747, %v1746
        %v1834 = vpack.c.b16 %v1749, %v1748
        %v1835 = vpack.c.b16 %v1751, %v1750
        %v1836 = vpack.c.b16 %v1753, %v1752
        %v1837 = vpack.c.b16 %v1755, %v1754
        %v1838 = vpack.c.b16 %v1757, %v1756
        %v1839 = vpack.c.b16 %v1759, %v1758
        %v1840 = vpack.c.b16 %v1761, %v1760
        %v1841 = vpack.c.b16 %v1763, %v1762
        %v1842 = vpack.c.b16 %v1765, %v1764
        %v1843 = vpack.c.b16 %v1767, %v1766
        %v1844 = vpack.c.b16 %v1769, %v1768
        %v1845 = vpack.c.b16 %v1771, %v1770
        %v1846 = vpack.c.b16 %v1773, %v1772
        %v1847 = vpack.c.b16 %v1775, %v1774
        %v1848 = vpack.c.b16 %v1777, %v1776
        %v1849 = vpack.c.b16 %v1779, %v1778
        %v1850 = vpack.c.b16 %v1781, %v1780
        %v1851 = vpack.c.b16 %v1783, %v1782
        %v1852 = vpack.c.b16 %v1785, %v1784
        %v1853 = vpack.c.b16 %v1787, %v1786
        %v1854 = vpack.c.b16 %v1789, %v1788
        %v1855 = vpack.c.b16 %v1791, %v1790
        %v1936 = vunpack.c.l.b16 %v1516
        %v1937 = vunpack.c.l.b16 %v1517
        %v1938 = vunpack.c.l.b16 %v1518
        %v1939 = vunpack.c.l.b16 %v1519
        %v1940 = vunpack.c.l.b16 %v1520
        %v1941 = vunpack.c.l.b16 %v1521
        %v1942 = vunpack.c.l.b16 %v1522
        %v1943 = vunpack.c.l.b16 %v1523
        %v1944 = vunpack.c.l.b16 %v1524
        %v1945 = vunpack.c.l.b16 %v1525
        %v1946 = vunpack.c.l.b16 %v1526
        %v1947 = vunpack.c.l.b16 %v1527
        %v1948 = vunpack.c.l.b16 %v1528
        %v1949 = vunpack.c.l.b16 %v1529
        %v1950 = vunpack.c.l.b16 %v1530
        %v1951 = vunpack.c.l.b16 %v1531
        %v1952 = vpack.c.b16 %v1937, %v1936
        %v1953 = vpack.c.b16 %v1939, %v1938
        %v1954 = vpack.c.b16 %v1941, %v1940
        %v1955 = vpack.c.b16 %v1943, %v1942
        %v1956 = vpack.c.b16 %v1945, %v1944
        %v1957 = vpack.c.b16 %v1947, %v1946
        %v1958 = vpack.c.b16 %v1949, %v1948
        %v1959 = vpack.c.b16 %v1951, %v1950
        %1968 = vmatpush.bf16.msra.mxu0 %v1959
        %1969 = vmatpush.bf16.msra.mxu0 %v1958
        %1970 = vmatpush.bf16.msra.mxu0 %v1957
        %1971 = vmatpush.bf16.msra.mxu0 %v1956
        %1972 = vmatpush.bf16.msra.mxu0 %v1955
        %1973 = vmatpush.bf16.msra.mxu0 %v1954
        %1974 = vmatpush.bf16.msra.mxu0 %v1953
        %1975 = vmatpush.bf16.msra.mxu0 %v1952
        %1976 = vmatmul.bf16.gmra.mxu0 %v1792
        %v1977 = vpop.f32.mrf.mxu0
        %v1978 = vadd.f32 %v1534, %v1977
        %v1979 = vpop.f32.mrf.mxu0
        %v1980 = vadd.f32 %v1534, %v1979
        %1981 = vmatmul.bf16.gmra.mxu0 %v1793
        %v1982 = vpop.f32.mrf.mxu0
        %v1983 = vadd.f32 %v1534, %v1982
        %v1984 = vpop.f32.mrf.mxu0
        %v1985 = vadd.f32 %v1534, %v1984
        %1986 = vmatmul.bf16.gmra.mxu0 %v1794
        %v1987 = vpop.f32.mrf.mxu0
        %v1988 = vadd.f32 %v1534, %v1987
        %v1989 = vpop.f32.mrf.mxu0
        %v1990 = vadd.f32 %v1534, %v1989
        %1991 = vmatmul.bf16.gmra.mxu0 %v1795
        %v1992 = vpop.f32.mrf.mxu0
        %v1993 = vadd.f32 %v1534, %v1992
        %v1994 = vpop.f32.mrf.mxu0
        %v1995 = vadd.f32 %v1534, %v1994
        %1996 = vmatmul.bf16.gmra.mxu0 %v1796
        %v1997 = vpop.f32.mrf.mxu0
        %v1998 = vadd.f32 %v1534, %v1997
        %v1999 = vpop.f32.mrf.mxu0
        %v2000 = vadd.f32 %v1534, %v1999
        %2001 = vmatmul.bf16.gmra.mxu0 %v1797
        %v2002 = vpop.f32.mrf.mxu0
        %v2003 = vadd.f32 %v1534, %v2002
        %v2004 = vpop.f32.mrf.mxu0
        %v2005 = vadd.f32 %v1534, %v2004
        %2006 = vmatmul.bf16.gmra.mxu0 %v1798
        %v2007 = vpop.f32.mrf.mxu0
        %v2008 = vadd.f32 %v1534, %v2007
        %v2009 = vpop.f32.mrf.mxu0
        %v2010 = vadd.f32 %v1534, %v2009
        %2011 = vmatmul.bf16.gmra.mxu0 %v1799
        %v2012 = vpop.f32.mrf.mxu0
        %v2013 = vadd.f32 %v1534, %v2012
        %v2014 = vpop.f32.mrf.mxu0
        %v2015 = vadd.f32 %v1534, %v2014
        %2016 = vmatmul.bf16.gmra.mxu0 %v1800
        %v2017 = vpop.f32.mrf.mxu0
        %v2018 = vadd.f32 %v1534, %v2017
        %v2019 = vpop.f32.mrf.mxu0
        %v2020 = vadd.f32 %v1534, %v2019
        %2021 = vmatmul.bf16.gmra.mxu0 %v1801
        %v2022 = vpop.f32.mrf.mxu0
        %v2023 = vadd.f32 %v1534, %v2022
        %v2024 = vpop.f32.mrf.mxu0
        %v2025 = vadd.f32 %v1534, %v2024
        %2026 = vmatmul.bf16.gmra.mxu0 %v1802
        %v2027 = vpop.f32.mrf.mxu0
        %v2028 = vadd.f32 %v1534, %v2027
        %v2029 = vpop.f32.mrf.mxu0
        %v2030 = vadd.f32 %v1534, %v2029
        %2031 = vmatmul.bf16.gmra.mxu0 %v1803
        %v2032 = vpop.f32.mrf.mxu0
        %v2033 = vadd.f32 %v1534, %v2032
        %v2034 = vpop.f32.mrf.mxu0
        %v2035 = vadd.f32 %v1534, %v2034
        %2036 = vmatmul.bf16.gmra.mxu0 %v1804
        %v2037 = vpop.f32.mrf.mxu0
        %v2038 = vadd.f32 %v1534, %v2037
        %v2039 = vpop.f32.mrf.mxu0
        %v2040 = vadd.f32 %v1534, %v2039
        %2041 = vmatmul.bf16.gmra.mxu0 %v1805
        %v2042 = vpop.f32.mrf.mxu0
        %v2043 = vadd.f32 %v1534, %v2042
        %v2044 = vpop.f32.mrf.mxu0
        %v2045 = vadd.f32 %v1534, %v2044
        %2046 = vmatmul.bf16.gmra.mxu0 %v1806
        %v2047 = vpop.f32.mrf.mxu0
        %v2048 = vadd.f32 %v1534, %v2047
        %v2049 = vpop.f32.mrf.mxu0
        %v2050 = vadd.f32 %v1534, %v2049
        %2051 = vmatmul.bf16.gmra.mxu0 %v1807
        %v2052 = vpop.f32.mrf.mxu0
        %v2053 = vadd.f32 %v1534, %v2052
        %v2054 = vpop.f32.mrf.mxu0
        %v2055 = vadd.f32 %v1534, %v2054
        %2056 = vmatmul.bf16.gmra.mxu0 %v1808
        %v2057 = vpop.f32.mrf.mxu0
        %v2058 = vadd.f32 %v1534, %v2057
        %v2059 = vpop.f32.mrf.mxu0
        %v2060 = vadd.f32 %v1534, %v2059
        %2061 = vmatmul.bf16.gmra.mxu0 %v1809
        %v2062 = vpop.f32.mrf.mxu0
        %v2063 = vadd.f32 %v1534, %v2062
        %v2064 = vpop.f32.mrf.mxu0
        %v2065 = vadd.f32 %v1534, %v2064
        %2066 = vmatmul.bf16.gmra.mxu0 %v1810
        %v2067 = vpop.f32.mrf.mxu0
        %v2068 = vadd.f32 %v1534, %v2067
        %v2069 = vpop.f32.mrf.mxu0
        %v2070 = vadd.f32 %v1534, %v2069
        %2071 = vmatmul.bf16.gmra.mxu0 %v1811
        %v2072 = vpop.f32.mrf.mxu0
        %v2073 = vadd.f32 %v1534, %v2072
        %v2074 = vpop.f32.mrf.mxu0
        %v2075 = vadd.f32 %v1534, %v2074
        %2076 = vmatmul.bf16.gmra.mxu0 %v1812
        %v2077 = vpop.f32.mrf.mxu0
        %v2078 = vadd.f32 %v1534, %v2077
        %v2079 = vpop.f32.mrf.mxu0
        %v2080 = vadd.f32 %v1534, %v2079
        %2081 = vmatmul.bf16.gmra.mxu0 %v1813
        %v2082 = vpop.f32.mrf.mxu0
        %v2083 = vadd.f32 %v1534, %v2082
        %v2084 = vpop.f32.mrf.mxu0
        %v2085 = vadd.f32 %v1534, %v2084
        %2086 = vmatmul.bf16.gmra.mxu0 %v1814
        %v2087 = vpop.f32.mrf.mxu0
        %v2088 = vadd.f32 %v1534, %v2087
        %v2089 = vpop.f32.mrf.mxu0
        %v2090 = vadd.f32 %v1534, %v2089
        %2091 = vmatmul.bf16.gmra.mxu0 %v1815
        %v2092 = vpop.f32.mrf.mxu0
        %v2093 = vadd.f32 %v1534, %v2092
        %v2094 = vpop.f32.mrf.mxu0
        %v2095 = vadd.f32 %v1534, %v2094
        %2096 = vmatmul.bf16.gmra.mxu0 %v1816
        %v2097 = vpop.f32.mrf.mxu0
        %v2098 = vadd.f32 %v1534, %v2097
        %v2099 = vpop.f32.mrf.mxu0
        %v2100 = vadd.f32 %v1534, %v2099
        %2101 = vmatmul.bf16.gmra.mxu0 %v1817
        %v2102 = vpop.f32.mrf.mxu0
        %v2103 = vadd.f32 %v1534, %v2102
        %v2104 = vpop.f32.mrf.mxu0
        %v2105 = vadd.f32 %v1534, %v2104
        %2106 = vmatmul.bf16.gmra.mxu0 %v1818
        %v2107 = vpop.f32.mrf.mxu0
        %v2108 = vadd.f32 %v1534, %v2107
        %v2109 = vpop.f32.mrf.mxu0
        %v2110 = vadd.f32 %v1534, %v2109
        %2111 = vmatmul.bf16.gmra.mxu0 %v1819
        %v2112 = vpop.f32.mrf.mxu0
        %v2113 = vadd.f32 %v1534, %v2112
        %v2114 = vpop.f32.mrf.mxu0
        %v2115 = vadd.f32 %v1534, %v2114
        %2116 = vmatmul.bf16.gmra.mxu0 %v1820
        %v2117 = vpop.f32.mrf.mxu0
        %v2118 = vadd.f32 %v1534, %v2117
        %v2119 = vpop.f32.mrf.mxu0
        %v2120 = vadd.f32 %v1534, %v2119
        %2121 = vmatmul.bf16.gmra.mxu0 %v1821
        %v2122 = vpop.f32.mrf.mxu0
        %v2123 = vadd.f32 %v1534, %v2122
        %v2124 = vpop.f32.mrf.mxu0
        %v2125 = vadd.f32 %v1534, %v2124
        %2126 = vmatmul.bf16.gmra.mxu0 %v1822
        %v2127 = vpop.f32.mrf.mxu0
        %v2128 = vadd.f32 %v1534, %v2127
        %v2129 = vpop.f32.mrf.mxu0
        %v2130 = vadd.f32 %v1534, %v2129
        %2131 = vmatmul.bf16.gmra.mxu0 %v1823
        %v2132 = vpop.f32.mrf.mxu0
        %v2133 = vadd.f32 %v1534, %v2132
        %v2134 = vpop.f32.mrf.mxu0
        %v2135 = vadd.f32 %v1534, %v2134
        %2136 = vmatmul.bf16.gmra.mxu0 %v1824
        %v2137 = vpop.f32.mrf.mxu0
        %v2138 = vadd.f32 %v1534, %v2137
        %v2139 = vpop.f32.mrf.mxu0
        %v2140 = vadd.f32 %v1534, %v2139
        %2141 = vmatmul.bf16.gmra.mxu0 %v1825
        %v2142 = vpop.f32.mrf.mxu0
        %v2143 = vadd.f32 %v1534, %v2142
        %v2144 = vpop.f32.mrf.mxu0
        %v2145 = vadd.f32 %v1534, %v2144
        %2146 = vmatmul.bf16.gmra.mxu0 %v1826
        %v2147 = vpop.f32.mrf.mxu0
        %v2148 = vadd.f32 %v1534, %v2147
        %v2149 = vpop.f32.mrf.mxu0
        %v2150 = vadd.f32 %v1534, %v2149
        %2151 = vmatmul.bf16.gmra.mxu0 %v1827
        %v2152 = vpop.f32.mrf.mxu0
        %v2153 = vadd.f32 %v1534, %v2152
        %v2154 = vpop.f32.mrf.mxu0
        %v2155 = vadd.f32 %v1534, %v2154
        %2156 = vmatmul.bf16.gmra.mxu0 %v1828
        %v2157 = vpop.f32.mrf.mxu0
        %v2158 = vadd.f32 %v1534, %v2157
        %v2159 = vpop.f32.mrf.mxu0
        %v2160 = vadd.f32 %v1534, %v2159
        %2161 = vmatmul.bf16.gmra.mxu0 %v1829
        %v2162 = vpop.f32.mrf.mxu0
        %v2163 = vadd.f32 %v1534, %v2162
        %v2164 = vpop.f32.mrf.mxu0
        %v2165 = vadd.f32 %v1534, %v2164
        %2166 = vmatmul.bf16.gmra.mxu0 %v1830
        %v2167 = vpop.f32.mrf.mxu0
        %v2168 = vadd.f32 %v1534, %v2167
        %v2169 = vpop.f32.mrf.mxu0
        %v2170 = vadd.f32 %v1534, %v2169
        %2171 = vmatmul.bf16.gmra.mxu0 %v1831
        %v2172 = vpop.f32.mrf.mxu0
        %v2173 = vadd.f32 %v1534, %v2172
        %v2174 = vpop.f32.mrf.mxu0
        %v2175 = vadd.f32 %v1534, %v2174
        %2176 = vmatmul.bf16.gmra.mxu0 %v1832
        %v2177 = vpop.f32.mrf.mxu0
        %v2178 = vadd.f32 %v1534, %v2177
        %v2179 = vpop.f32.mrf.mxu0
        %v2180 = vadd.f32 %v1534, %v2179
        %2181 = vmatmul.bf16.gmra.mxu0 %v1833
        %v2182 = vpop.f32.mrf.mxu0
        %v2183 = vadd.f32 %v1534, %v2182
        %v2184 = vpop.f32.mrf.mxu0
        %v2185 = vadd.f32 %v1534, %v2184
        %2186 = vmatmul.bf16.gmra.mxu0 %v1834
        %v2187 = vpop.f32.mrf.mxu0
        %v2188 = vadd.f32 %v1534, %v2187
        %v2189 = vpop.f32.mrf.mxu0
        %v2190 = vadd.f32 %v1534, %v2189
        %2191 = vmatmul.bf16.gmra.mxu0 %v1835
        %v2192 = vpop.f32.mrf.mxu0
        %v2193 = vadd.f32 %v1534, %v2192
        %v2194 = vpop.f32.mrf.mxu0
        %v2195 = vadd.f32 %v1534, %v2194
        %2196 = vmatmul.bf16.gmra.mxu0 %v1836
        %v2197 = vpop.f32.mrf.mxu0
        %v2198 = vadd.f32 %v1534, %v2197
        %v2199 = vpop.f32.mrf.mxu0
        %v2200 = vadd.f32 %v1534, %v2199
        %2201 = vmatmul.bf16.gmra.mxu0 %v1837
        %v2202 = vpop.f32.mrf.mxu0
        %v2203 = vadd.f32 %v1534, %v2202
        %v2204 = vpop.f32.mrf.mxu0
        %v2205 = vadd.f32 %v1534, %v2204
        %2206 = vmatmul.bf16.gmra.mxu0 %v1838
        %v2207 = vpop.f32.mrf.mxu0
        %v2208 = vadd.f32 %v1534, %v2207
        %v2209 = vpop.f32.mrf.mxu0
        %v2210 = vadd.f32 %v1534, %v2209
        %2211 = vmatmul.bf16.gmra.mxu0 %v1839
        %v2212 = vpop.f32.mrf.mxu0
        %v2213 = vadd.f32 %v1534, %v2212
        %v2214 = vpop.f32.mrf.mxu0
        %v2215 = vadd.f32 %v1534, %v2214
        %2216 = vmatmul.bf16.gmra.mxu0 %v1840
        %v2217 = vpop.f32.mrf.mxu0
        %v2218 = vadd.f32 %v1534, %v2217
        %v2219 = vpop.f32.mrf.mxu0
        %v2220 = vadd.f32 %v1534, %v2219
        %2221 = vmatmul.bf16.gmra.mxu0 %v1841
        %v2222 = vpop.f32.mrf.mxu0
        %v2223 = vadd.f32 %v1534, %v2222
        %v2224 = vpop.f32.mrf.mxu0
        %v2225 = vadd.f32 %v1534, %v2224
        %2226 = vmatmul.bf16.gmra.mxu0 %v1842
        %v2227 = vpop.f32.mrf.mxu0
        %v2228 = vadd.f32 %v1534, %v2227
        %v2229 = vpop.f32.mrf.mxu0
        %v2230 = vadd.f32 %v1534, %v2229
        %2231 = vmatmul.bf16.gmra.mxu0 %v1843
        %v2232 = vpop.f32.mrf.mxu0
        %v2233 = vadd.f32 %v1534, %v2232
        %v2234 = vpop.f32.mrf.mxu0
        %v2235 = vadd.f32 %v1534, %v2234
        %2236 = vmatmul.bf16.gmra.mxu0 %v1844
        %v2237 = vpop.f32.mrf.mxu0
        %v2238 = vadd.f32 %v1534, %v2237
        %v2239 = vpop.f32.mrf.mxu0
        %v2240 = vadd.f32 %v1534, %v2239
        %2241 = vmatmul.bf16.gmra.mxu0 %v1845
        %v2242 = vpop.f32.mrf.mxu0
        %v2243 = vadd.f32 %v1534, %v2242
        %v2244 = vpop.f32.mrf.mxu0
        %v2245 = vadd.f32 %v1534, %v2244
        %2246 = vmatmul.bf16.gmra.mxu0 %v1846
        %v2247 = vpop.f32.mrf.mxu0
        %v2248 = vadd.f32 %v1534, %v2247
        %v2249 = vpop.f32.mrf.mxu0
        %v2250 = vadd.f32 %v1534, %v2249
        %2251 = vmatmul.bf16.gmra.mxu0 %v1847
        %v2252 = vpop.f32.mrf.mxu0
        %v2253 = vadd.f32 %v1534, %v2252
        %v2254 = vpop.f32.mrf.mxu0
        %v2255 = vadd.f32 %v1534, %v2254
        %2256 = vmatmul.bf16.gmra.mxu0 %v1848
        %v2257 = vpop.f32.mrf.mxu0
        %v2258 = vadd.f32 %v1534, %v2257
        %v2259 = vpop.f32.mrf.mxu0
        %v2260 = vadd.f32 %v1534, %v2259
        %2261 = vmatmul.bf16.gmra.mxu0 %v1849
        %v2262 = vpop.f32.mrf.mxu0
        %v2263 = vadd.f32 %v1534, %v2262
        %v2264 = vpop.f32.mrf.mxu0
        %v2265 = vadd.f32 %v1534, %v2264
        %2266 = vmatmul.bf16.gmra.mxu0 %v1850
        %v2267 = vpop.f32.mrf.mxu0
        %v2268 = vadd.f32 %v1534, %v2267
        %v2269 = vpop.f32.mrf.mxu0
        %v2270 = vadd.f32 %v1534, %v2269
        %2271 = vmatmul.bf16.gmra.mxu0 %v1851
        %v2272 = vpop.f32.mrf.mxu0
        %v2273 = vadd.f32 %v1534, %v2272
        %v2274 = vpop.f32.mrf.mxu0
        %v2275 = vadd.f32 %v1534, %v2274
        %2276 = vmatmul.bf16.gmra.mxu0 %v1852
        %v2277 = vpop.f32.mrf.mxu0
        %v2278 = vadd.f32 %v1534, %v2277
        %v2279 = vpop.f32.mrf.mxu0
        %v2280 = vadd.f32 %v1534, %v2279
        %2281 = vmatmul.bf16.gmra.mxu0 %v1853
        %v2282 = vpop.f32.mrf.mxu0
        %v2283 = vadd.f32 %v1534, %v2282
        %v2284 = vpop.f32.mrf.mxu0
        %v2285 = vadd.f32 %v1534, %v2284
        %2286 = vmatmul.bf16.gmra.mxu0 %v1854
        %v2287 = vpop.f32.mrf.mxu0
        %v2288 = vadd.f32 %v1534, %v2287
        %v2289 = vpop.f32.mrf.mxu0
        %v2290 = vadd.f32 %v1534, %v2289
        %2291 = vmatmul.bf16.gmra.mxu0 %v1855
        %v2292 = vpop.f32.mrf.mxu0
        %v2293 = vadd.f32 %v1534, %v2292
        %v2294 = vpop.f32.mrf.mxu0
        %v2295 = vadd.f32 %v1534, %v2294
        %2296 = vdwg.mxu0
        %v2297 = vmax.f32 %v1978, 0.0
        %v2298 = vmax.f32 %v1980, 0.0
        %v2299 = vmax.f32 %v1983, 0.0
        %v2300 = vmax.f32 %v1985, 0.0
        %v2301 = vmax.f32 %v1988, 0.0
        %v2302 = vmax.f32 %v1990, 0.0
        %v2303 = vmax.f32 %v1993, 0.0
        %v2304 = vmax.f32 %v1995, 0.0
        %v2305 = vmax.f32 %v1998, 0.0
        %v2306 = vmax.f32 %v2000, 0.0
        %v2307 = vmax.f32 %v2003, 0.0
        %v2308 = vmax.f32 %v2005, 0.0
        %v2309 = vmax.f32 %v2008, 0.0
        %v2310 = vmax.f32 %v2010, 0.0
        %v2311 = vmax.f32 %v2013, 0.0
        %v2312 = vmax.f32 %v2015, 0.0
        %v2313 = vmax.f32 %v2018, 0.0
        %v2314 = vmax.f32 %v2020, 0.0
        %v2315 = vmax.f32 %v2023, 0.0
        %v2316 = vmax.f32 %v2025, 0.0
        %v2317 = vmax.f32 %v2028, 0.0
        %v2318 = vmax.f32 %v2030, 0.0
        %v2319 = vmax.f32 %v2033, 0.0
        %v2320 = vmax.f32 %v2035, 0.0
        %v2321 = vmax.f32 %v2038, 0.0
        %v2322 = vmax.f32 %v2040, 0.0
        %v2323 = vmax.f32 %v2043, 0.0
        %v2324 = vmax.f32 %v2045, 0.0
        %v2325 = vmax.f32 %v2048, 0.0
        %v2326 = vmax.f32 %v2050, 0.0
        %v2327 = vmax.f32 %v2053, 0.0
        %v2328 = vmax.f32 %v2055, 0.0
        %v2329 = vmax.f32 %v2058, 0.0
        %v2330 = vmax.f32 %v2060, 0.0
        %v2331 = vmax.f32 %v2063, 0.0
        %v2332 = vmax.f32 %v2065, 0.0
        %v2333 = vmax.f32 %v2068, 0.0
        %v2334 = vmax.f32 %v2070, 0.0
        %v2335 = vmax.f32 %v2073, 0.0
        %v2336 = vmax.f32 %v2075, 0.0
        %v2337 = vmax.f32 %v2078, 0.0
        %v2338 = vmax.f32 %v2080, 0.0
        %v2339 = vmax.f32 %v2083, 0.0
        %v2340 = vmax.f32 %v2085, 0.0
        %v2341 = vmax.f32 %v2088, 0.0
        %v2342 = vmax.f32 %v2090, 0.0
        %v2343 = vmax.f32 %v2093, 0.0
        %v2344 = vmax.f32 %v2095, 0.0
        %v2345 = vmax.f32 %v2098, 0.0
        %v2346 = vmax.f32 %v2100, 0.0
        %v2347 = vmax.f32 %v2103, 0.0
        %v2348 = vmax.f32 %v2105, 0.0
        %v2349 = vmax.f32 %v2108, 0.0
        %v2350 = vmax.f32 %v2110, 0.0
        %v2351 = vmax.f32 %v2113, 0.0
        %v2352 = vmax.f32 %v2115, 0.0
        %v2353 = vmax.f32 %v2118, 0.0
        %v2354 = vmax.f32 %v2120, 0.0
        %v2355 = vmax.f32 %v2123, 0.0
        %v2356 = vmax.f32 %v2125, 0.0
        %v2357 = vmax.f32 %v2128, 0.0
        %v2358 = vmax.f32 %v2130, 0.0
        %v2359 = vmax.f32 %v2133, 0.0
        %v2360 = vmax.f32 %v2135, 0.0
        %v2361 = vmax.f32 %v2138, 0.0
        %v2362 = vmax.f32 %v2140, 0.0
        %v2363 = vmax.f32 %v2143, 0.0
        %v2364 = vmax.f32 %v2145, 0.0
        %v2365 = vmax.f32 %v2148, 0.0
        %v2366 = vmax.f32 %v2150, 0.0
        %v2367 = vmax.f32 %v2153, 0.0
        %v2368 = vmax.f32 %v2155, 0.0
        %v2369 = vmax.f32 %v2158, 0.0
        %v2370 = vmax.f32 %v2160, 0.0
        %v2371 = vmax.f32 %v2163, 0.0
        %v2372 = vmax.f32 %v2165, 0.0
        %v2373 = vmax.f32 %v2168, 0.0
        %v2374 = vmax.f32 %v2170, 0.0
        %v2375 = vmax.f32 %v2173, 0.0
        %v2376 = vmax.f32 %v2175, 0.0
        %v2377 = vmax.f32 %v2178, 0.0
        %v2378 = vmax.f32 %v2180, 0.0
        %v2379 = vmax.f32 %v2183, 0.0
        %v2380 = vmax.f32 %v2185, 0.0
        %v2381 = vmax.f32 %v2188, 0.0
        %v2382 = vmax.f32 %v2190, 0.0
        %v2383 = vmax.f32 %v2193, 0.0
        %v2384 = vmax.f32 %v2195, 0.0
        %v2385 = vmax.f32 %v2198, 0.0
        %v2386 = vmax.f32 %v2200, 0.0
        %v2387 = vmax.f32 %v2203, 0.0
        %v2388 = vmax.f32 %v2205, 0.0
        %v2389 = vmax.f32 %v2208, 0.0
        %v2390 = vmax.f32 %v2210, 0.0
        %v2391 = vmax.f32 %v2213, 0.0
        %v2392 = vmax.f32 %v2215, 0.0
        %v2393 = vmax.f32 %v2218, 0.0
        %v2394 = vmax.f32 %v2220, 0.0
        %v2395 = vmax.f32 %v2223, 0.0
        %v2396 = vmax.f32 %v2225, 0.0
        %v2397 = vmax.f32 %v2228, 0.0
        %v2398 = vmax.f32 %v2230, 0.0
        %v2399 = vmax.f32 %v2233, 0.0
        %v2400 = vmax.f32 %v2235, 0.0
        %v2401 = vmax.f32 %v2238, 0.0
        %v2402 = vmax.f32 %v2240, 0.0
        %v2403 = vmax.f32 %v2243, 0.0
        %v2404 = vmax.f32 %v2245, 0.0
        %v2405 = vmax.f32 %v2248, 0.0
        %v2406 = vmax.f32 %v2250, 0.0
        %v2407 = vmax.f32 %v2253, 0.0
        %v2408 = vmax.f32 %v2255, 0.0
        %v2409 = vmax.f32 %v2258, 0.0
        %v2410 = vmax.f32 %v2260, 0.0
        %v2411 = vmax.f32 %v2263, 0.0
        %v2412 = vmax.f32 %v2265, 0.0
        %v2413 = vmax.f32 %v2268, 0.0
        %v2414 = vmax.f32 %v2270, 0.0
        %v2415 = vmax.f32 %v2273, 0.0
        %v2416 = vmax.f32 %v2275, 0.0
        %v2417 = vmax.f32 %v2278, 0.0
        %v2418 = vmax.f32 %v2280, 0.0
        %v2419 = vmax.f32 %v2283, 0.0
        %v2420 = vmax.f32 %v2285, 0.0
        %v2421 = vmax.f32 %v2288, 0.0
        %v2422 = vmax.f32 %v2290, 0.0
        %v2423 = vmax.f32 %v2293, 0.0
        %v2424 = vmax.f32 %v2295, 0.0
        %v2425 = vpack.c.bf16 %v2298, %v2297
        %v2426 = vpack.c.bf16 %v2300, %v2299
        %v2427 = vpack.c.bf16 %v2302, %v2301
        %v2428 = vpack.c.bf16 %v2304, %v2303
        %v2429 = vpack.c.bf16 %v2306, %v2305
        %v2430 = vpack.c.bf16 %v2308, %v2307
        %v2431 = vpack.c.bf16 %v2310, %v2309
        %v2432 = vpack.c.bf16 %v2312, %v2311
        %v2433 = vpack.c.bf16 %v2314, %v2313
        %v2434 = vpack.c.bf16 %v2316, %v2315
        %v2435 = vpack.c.bf16 %v2318, %v2317
        %v2436 = vpack.c.bf16 %v2320, %v2319
        %v2437 = vpack.c.bf16 %v2322, %v2321
        %v2438 = vpack.c.bf16 %v2324, %v2323
        %v2439 = vpack.c.bf16 %v2326, %v2325
        %v2440 = vpack.c.bf16 %v2328, %v2327
        %v2441 = vpack.c.bf16 %v2330, %v2329
        %v2442 = vpack.c.bf16 %v2332, %v2331
        %v2443 = vpack.c.bf16 %v2334, %v2333
        %v2444 = vpack.c.bf16 %v2336, %v2335
        %v2445 = vpack.c.bf16 %v2338, %v2337
        %v2446 = vpack.c.bf16 %v2340, %v2339
        %v2447 = vpack.c.bf16 %v2342, %v2341
        %v2448 = vpack.c.bf16 %v2344, %v2343
        %v2449 = vpack.c.bf16 %v2346, %v2345
        %v2450 = vpack.c.bf16 %v2348, %v2347
        %v2451 = vpack.c.bf16 %v2350, %v2349
        %v2452 = vpack.c.bf16 %v2352, %v2351
        %v2453 = vpack.c.bf16 %v2354, %v2353
        %v2454 = vpack.c.bf16 %v2356, %v2355
        %v2455 = vpack.c.bf16 %v2358, %v2357
        %v2456 = vpack.c.bf16 %v2360, %v2359
        %v2457 = vpack.c.bf16 %v2362, %v2361
        %v2458 = vpack.c.bf16 %v2364, %v2363
        %v2459 = vpack.c.bf16 %v2366, %v2365
        %v2460 = vpack.c.bf16 %v2368, %v2367
        %v2461 = vpack.c.bf16 %v2370, %v2369
        %v2462 = vpack.c.bf16 %v2372, %v2371
        %v2463 = vpack.c.bf16 %v2374, %v2373
        %v2464 = vpack.c.bf16 %v2376, %v2375
        %v2465 = vpack.c.bf16 %v2378, %v2377
        %v2466 = vpack.c.bf16 %v2380, %v2379
        %v2467 = vpack.c.bf16 %v2382, %v2381
        %v2468 = vpack.c.bf16 %v2384, %v2383
        %v2469 = vpack.c.bf16 %v2386, %v2385
        %v2470 = vpack.c.bf16 %v2388, %v2387
        %v2471 = vpack.c.bf16 %v2390, %v2389
        %v2472 = vpack.c.bf16 %v2392, %v2391
        %v2473 = vpack.c.bf16 %v2394, %v2393
        %v2474 = vpack.c.bf16 %v2396, %v2395
        %v2475 = vpack.c.bf16 %v2398, %v2397
        %v2476 = vpack.c.bf16 %v2400, %v2399
        %v2477 = vpack.c.bf16 %v2402, %v2401
        %v2478 = vpack.c.bf16 %v2404, %v2403
        %v2479 = vpack.c.bf16 %v2406, %v2405
        %v2480 = vpack.c.bf16 %v2408, %v2407
        %v2481 = vpack.c.bf16 %v2410, %v2409
        %v2482 = vpack.c.bf16 %v2412, %v2411
        %v2483 = vpack.c.bf16 %v2414, %v2413
        %v2484 = vpack.c.bf16 %v2416, %v2415
        %v2485 = vpack.c.bf16 %v2418, %v2417
        %v2486 = vpack.c.bf16 %v2420, %v2419
        %v2487 = vpack.c.bf16 %v2422, %v2421
        %v2488 = vpack.c.bf16 %v2424, %v2423
        %v2489 = vlaneseq
        %v2490 = vshrl.u32 %v2489, 7
        %v2491 = vadd.s32 %v2490, 8
        %v2492 = vadd.s32 %v2490, 16
        %v2493 = vadd.s32 %v2490, 24
        %v2494 = vadd.s32 %v2490, 32
        %v2495 = vadd.s32 %v2490, 40
        %v2496 = vadd.s32 %v2490, 48
        %v2497 = vadd.s32 %v2490, 56
        %v2498 = vadd.s32 %v2490, 64
        %v2499 = vadd.s32 %v2490, 72
        %v2500 = vadd.s32 %v2490, 80
        %v2501 = vadd.s32 %v2490, 88
        %v2502 = vadd.s32 %v2490, 96
        %v2503 = vadd.s32 %v2490, 104
        %v2504 = vadd.s32 %v2490, 112
        %v2505 = vadd.s32 %v2490, 120
        %v2506 = vadd.s32 %v2490, 128
        %v2507 = vadd.s32 %v2490, 136
        %v2508 = vadd.s32 %v2490, 144
        %v2509 = vadd.s32 %v2490, 152
        %v2510 = vadd.s32 %v2490, 160
        %v2511 = vadd.s32 %v2490, 168
        %v2512 = vadd.s32 %v2490, 176
        %v2513 = vadd.s32 %v2490, 184
        %v2514 = vadd.s32 %v2490, 192
        %v2515 = vadd.s32 %v2490, 200
        %v2516 = vadd.s32 %v2490, 208
        %v2517 = vadd.s32 %v2490, 216
        %v2518 = vadd.s32 %v2490, 224
        %v2519 = vadd.s32 %v2490, 232
        %v2520 = vadd.s32 %v2490, 240
        %v2521 = vadd.s32 %v2490, 248
        %v2522 = vadd.s32 %v2490, 256
        %v2523 = vadd.s32 %v2490, 264
        %v2524 = vadd.s32 %v2490, 272
        %v2525 = vadd.s32 %v2490, 280
        %v2526 = vadd.s32 %v2490, 288
        %v2527 = vadd.s32 %v2490, 296
        %v2528 = vadd.s32 %v2490, 304
        %v2529 = vadd.s32 %v2490, 312
        %v2530 = vadd.s32 %v2490, 320
        %v2531 = vadd.s32 %v2490, 328
        %v2532 = vadd.s32 %v2490, 336
        %v2533 = vadd.s32 %v2490, 344
        %v2534 = vadd.s32 %v2490, 352
        %v2535 = vadd.s32 %v2490, 360
        %v2536 = vadd.s32 %v2490, 368
        %v2537 = vadd.s32 %v2490, 376
        %v2538 = vadd.s32 %v2490, 384
        %v2539 = vadd.s32 %v2490, 392
        %v2540 = vadd.s32 %v2490, 400
        %v2541 = vadd.s32 %v2490, 408
        %v2542 = vadd.s32 %v2490, 416
        %v2543 = vadd.s32 %v2490, 424
        %v2544 = vadd.s32 %v2490, 432
        %v2545 = vadd.s32 %v2490, 440
        %v2546 = vadd.s32 %v2490, 448
        %v2547 = vadd.s32 %v2490, 456
        %v2548 = vadd.s32 %v2490, 464
        %v2549 = vadd.s32 %v2490, 472
        %v2550 = vadd.s32 %v2490, 480
        %v2551 = vadd.s32 %v2490, 488
        %v2552 = vadd.s32 %v2490, 496
        %v2553 = vadd.s32 %v2490, 504
        %v2554 = vadd.s32 %v2490, 512
        %v2555 = vadd.s32 %v2490, 520
        %v2556 = vadd.s32 %v2490, 528
        %v2557 = vadd.s32 %v2490, 536
        %v2558 = vadd.s32 %v2490, 544
        %v2559 = vadd.s32 %v2490, 552
        %v2560 = vadd.s32 %v2490, 560
        %v2561 = vadd.s32 %v2490, 568
        %v2562 = vadd.s32 %v2490, 576
        %v2563 = vadd.s32 %v2490, 584
        %v2564 = vadd.s32 %v2490, 592
        %v2565 = vadd.s32 %v2490, 600
        %v2566 = vadd.s32 %v2490, 608
        %v2567 = vadd.s32 %v2490, 616
        %v2568 = vadd.s32 %v2490, 624
        %v2569 = vadd.s32 %v2490, 632
        %v2570 = vadd.s32 %v2490, 640
        %v2571 = vadd.s32 %v2490, 648
        %v2572 = vadd.s32 %v2490, 656
        %v2573 = vadd.s32 %v2490, 664
        %v2574 = vadd.s32 %v2490, 672
        %v2575 = vadd.s32 %v2490, 680
        %v2576 = vadd.s32 %v2490, 688
        %v2577 = vadd.s32 %v2490, 696
        %v2578 = vadd.s32 %v2490, 704
        %v2579 = vadd.s32 %v2490, 712
        %v2580 = vadd.s32 %v2490, 720
        %v2581 = vadd.s32 %v2490, 728
        %v2582 = vadd.s32 %v2490, 736
        %v2583 = vadd.s32 %v2490, 744
        %v2584 = vadd.s32 %v2490, 752
        %v2585 = vadd.s32 %v2490, 760
        %v2586 = vadd.s32 %v2490, 768
        %v2587 = vadd.s32 %v2490, 776
        %v2588 = vadd.s32 %v2490, 784
        %v2589 = vadd.s32 %v2490, 792
        %v2590 = vadd.s32 %v2490, 800
        %v2591 = vadd.s32 %v2490, 808
        %v2592 = vadd.s32 %v2490, 816
        %v2593 = vadd.s32 %v2490, 824
        %v2594 = vadd.s32 %v2490, 832
        %v2595 = vadd.s32 %v2490, 840
        %v2596 = vadd.s32 %v2490, 848
        %v2597 = vadd.s32 %v2490, 856
        %v2598 = vadd.s32 %v2490, 864
        %v2599 = vadd.s32 %v2490, 872
        %v2600 = vadd.s32 %v2490, 880
        %v2601 = vadd.s32 %v2490, 888
        %v2602 = vadd.s32 %v2490, 896
        %v2603 = vadd.s32 %v2490, 904
        %v2604 = vadd.s32 %v2490, 912
        %v2605 = vadd.s32 %v2490, 920
        %v2606 = vadd.s32 %v2490, 928
        %v2607 = vadd.s32 %v2490, 936
        %v2608 = vadd.s32 %v2490, 944
        %v2609 = vadd.s32 %v2490, 952
        %v2610 = vadd.s32 %v2490, 960
        %v2611 = vadd.s32 %v2490, 968
        %v2612 = vadd.s32 %v2490, 976
        %v2613 = vadd.s32 %v2490, 984
        %v2614 = vadd.s32 %v2490, 992
        %v2615 = vadd.s32 %v2490, 1000
        %v2616 = vadd.s32 %v2490, 1008
        %v2617 = vadd.s32 %v2490, 1016
        %vm2618 = vcmp.lt.s32.totalorder %v2490, 0
        %v2619 = vsub.s32 0, %v2490
        %v2620 = vsel %vm2618, %v2619, %v2490
        %v2621 = vshrl.u32 %v2620, 7
        %v2622 = vand.u32 %v2620, 127
        %v2623 = vsub.s32 0, %v2622
        %v2624 = vsel %vm2618, %v2623, %v2622
        %vm2625 = vcmp.lt.s32.totalorder %v2491, 0
        %v2626 = vsub.s32 0, %v2491
        %v2627 = vsel %vm2625, %v2626, %v2491
        %v2628 = vshrl.u32 %v2627, 7
        %v2629 = vand.u32 %v2627, 127
        %v2630 = vsub.s32 0, %v2629
        %v2631 = vsel %vm2625, %v2630, %v2629
        %vm2632 = vcmp.lt.s32.totalorder %v2492, 0
        %v2633 = vsub.s32 0, %v2492
        %v2634 = vsel %vm2632, %v2633, %v2492
        %v2635 = vshrl.u32 %v2634, 7
        %v2636 = vand.u32 %v2634, 127
        %v2637 = vsub.s32 0, %v2636
        %v2638 = vsel %vm2632, %v2637, %v2636
        %vm2639 = vcmp.lt.s32.totalorder %v2493, 0
        %v2640 = vsub.s32 0, %v2493
        %v2641 = vsel %vm2639, %v2640, %v2493
        %v2642 = vshrl.u32 %v2641, 7
        %v2643 = vand.u32 %v2641, 127
        %v2644 = vsub.s32 0, %v2643
        %v2645 = vsel %vm2639, %v2644, %v2643
        %vm2646 = vcmp.lt.s32.totalorder %v2494, 0
        %v2647 = vsub.s32 0, %v2494
        %v2648 = vsel %vm2646, %v2647, %v2494
        %v2649 = vshrl.u32 %v2648, 7
        %v2650 = vand.u32 %v2648, 127
        %v2651 = vsub.s32 0, %v2650
        %v2652 = vsel %vm2646, %v2651, %v2650
        %vm2653 = vcmp.lt.s32.totalorder %v2495, 0
        %v2654 = vsub.s32 0, %v2495
        %v2655 = vsel %vm2653, %v2654, %v2495
        %v2656 = vshrl.u32 %v2655, 7
        %v2657 = vand.u32 %v2655, 127
        %v2658 = vsub.s32 0, %v2657
        %v2659 = vsel %vm2653, %v2658, %v2657
        %vm2660 = vcmp.lt.s32.totalorder %v2496, 0
        %v2661 = vsub.s32 0, %v2496
        %v2662 = vsel %vm2660, %v2661, %v2496
        %v2663 = vshrl.u32 %v2662, 7
        %v2664 = vand.u32 %v2662, 127
        %v2665 = vsub.s32 0, %v2664
        %v2666 = vsel %vm2660, %v2665, %v2664
        %vm2667 = vcmp.lt.s32.totalorder %v2497, 0
        %v2668 = vsub.s32 0, %v2497
        %v2669 = vsel %vm2667, %v2668, %v2497
        %v2670 = vshrl.u32 %v2669, 7
        %v2671 = vand.u32 %v2669, 127
        %v2672 = vsub.s32 0, %v2671
        %v2673 = vsel %vm2667, %v2672, %v2671
        %vm2674 = vcmp.lt.s32.totalorder %v2498, 0
        %v2675 = vsub.s32 0, %v2498
        %v2676 = vsel %vm2674, %v2675, %v2498
        %v2677 = vshrl.u32 %v2676, 7
        %v2678 = vand.u32 %v2676, 127
        %v2679 = vsub.s32 0, %v2678
        %v2680 = vsel %vm2674, %v2679, %v2678
        %vm2681 = vcmp.lt.s32.totalorder %v2499, 0
        %v2682 = vsub.s32 0, %v2499
        %v2683 = vsel %vm2681, %v2682, %v2499
        %v2684 = vshrl.u32 %v2683, 7
        %v2685 = vand.u32 %v2683, 127
        %v2686 = vsub.s32 0, %v2685
        %v2687 = vsel %vm2681, %v2686, %v2685
        %vm2688 = vcmp.lt.s32.totalorder %v2500, 0
        %v2689 = vsub.s32 0, %v2500
        %v2690 = vsel %vm2688, %v2689, %v2500
        %v2691 = vshrl.u32 %v2690, 7
        %v2692 = vand.u32 %v2690, 127
        %v2693 = vsub.s32 0, %v2692
        %v2694 = vsel %vm2688, %v2693, %v2692
        %vm2695 = vcmp.lt.s32.totalorder %v2501, 0
        %v2696 = vsub.s32 0, %v2501
        %v2697 = vsel %vm2695, %v2696, %v2501
        %v2698 = vshrl.u32 %v2697, 7
        %v2699 = vand.u32 %v2697, 127
        %v2700 = vsub.s32 0, %v2699
        %v2701 = vsel %vm2695, %v2700, %v2699
        %vm2702 = vcmp.lt.s32.totalorder %v2502, 0
        %v2703 = vsub.s32 0, %v2502
        %v2704 = vsel %vm2702, %v2703, %v2502
        %v2705 = vshrl.u32 %v2704, 7
        %v2706 = vand.u32 %v2704, 127
        %v2707 = vsub.s32 0, %v2706
        %v2708 = vsel %vm2702, %v2707, %v2706
        %vm2709 = vcmp.lt.s32.totalorder %v2503, 0
        %v2710 = vsub.s32 0, %v2503
        %v2711 = vsel %vm2709, %v2710, %v2503
        %v2712 = vshrl.u32 %v2711, 7
        %v2713 = vand.u32 %v2711, 127
        %v2714 = vsub.s32 0, %v2713
        %v2715 = vsel %vm2709, %v2714, %v2713
        %vm2716 = vcmp.lt.s32.totalorder %v2504, 0
        %v2717 = vsub.s32 0, %v2504
        %v2718 = vsel %vm2716, %v2717, %v2504
        %v2719 = vshrl.u32 %v2718, 7
        %v2720 = vand.u32 %v2718, 127
        %v2721 = vsub.s32 0, %v2720
        %v2722 = vsel %vm2716, %v2721, %v2720
        %vm2723 = vcmp.lt.s32.totalorder %v2505, 0
        %v2724 = vsub.s32 0, %v2505
        %v2725 = vsel %vm2723, %v2724, %v2505
        %v2726 = vshrl.u32 %v2725, 7
        %v2727 = vand.u32 %v2725, 127
        %v2728 = vsub.s32 0, %v2727
        %v2729 = vsel %vm2723, %v2728, %v2727
        %vm2730 = vcmp.lt.s32.totalorder %v2506, 0
        %v2731 = vsub.s32 0, %v2506
        %v2732 = vsel %vm2730, %v2731, %v2506
        %v2733 = vshrl.u32 %v2732, 7
        %v2734 = vand.u32 %v2732, 127
        %v2735 = vsub.s32 0, %v2734
        %v2736 = vsel %vm2730, %v2735, %v2734
        %vm2737 = vcmp.lt.s32.totalorder %v2507, 0
        %v2738 = vsub.s32 0, %v2507
        %v2739 = vsel %vm2737, %v2738, %v2507
        %v2740 = vshrl.u32 %v2739, 7
        %v2741 = vand.u32 %v2739, 127
        %v2742 = vsub.s32 0, %v2741
        %v2743 = vsel %vm2737, %v2742, %v2741
        %vm2744 = vcmp.lt.s32.totalorder %v2508, 0
        %v2745 = vsub.s32 0, %v2508
        %v2746 = vsel %vm2744, %v2745, %v2508
        %v2747 = vshrl.u32 %v2746, 7
        %v2748 = vand.u32 %v2746, 127
        %v2749 = vsub.s32 0, %v2748
        %v2750 = vsel %vm2744, %v2749, %v2748
        %vm2751 = vcmp.lt.s32.totalorder %v2509, 0
        %v2752 = vsub.s32 0, %v2509
        %v2753 = vsel %vm2751, %v2752, %v2509
        %v2754 = vshrl.u32 %v2753, 7
        %v2755 = vand.u32 %v2753, 127
        %v2756 = vsub.s32 0, %v2755
        %v2757 = vsel %vm2751, %v2756, %v2755
        %vm2758 = vcmp.lt.s32.totalorder %v2510, 0
        %v2759 = vsub.s32 0, %v2510
        %v2760 = vsel %vm2758, %v2759, %v2510
        %v2761 = vshrl.u32 %v2760, 7
        %v2762 = vand.u32 %v2760, 127
        %v2763 = vsub.s32 0, %v2762
        %v2764 = vsel %vm2758, %v2763, %v2762
        %vm2765 = vcmp.lt.s32.totalorder %v2511, 0
        %v2766 = vsub.s32 0, %v2511
        %v2767 = vsel %vm2765, %v2766, %v2511
        %v2768 = vshrl.u32 %v2767, 7
        %v2769 = vand.u32 %v2767, 127
        %v2770 = vsub.s32 0, %v2769
        %v2771 = vsel %vm2765, %v2770, %v2769
        %vm2772 = vcmp.lt.s32.totalorder %v2512, 0
        %v2773 = vsub.s32 0, %v2512
        %v2774 = vsel %vm2772, %v2773, %v2512
        %v2775 = vshrl.u32 %v2774, 7
        %v2776 = vand.u32 %v2774, 127
        %v2777 = vsub.s32 0, %v2776
        %v2778 = vsel %vm2772, %v2777, %v2776
        %vm2779 = vcmp.lt.s32.totalorder %v2513, 0
        %v2780 = vsub.s32 0, %v2513
        %v2781 = vsel %vm2779, %v2780, %v2513
        %v2782 = vshrl.u32 %v2781, 7
        %v2783 = vand.u32 %v2781, 127
        %v2784 = vsub.s32 0, %v2783
        %v2785 = vsel %vm2779, %v2784, %v2783
        %vm2786 = vcmp.lt.s32.totalorder %v2514, 0
        %v2787 = vsub.s32 0, %v2514
        %v2788 = vsel %vm2786, %v2787, %v2514
        %v2789 = vshrl.u32 %v2788, 7
        %v2790 = vand.u32 %v2788, 127
        %v2791 = vsub.s32 0, %v2790
        %v2792 = vsel %vm2786, %v2791, %v2790
        %vm2793 = vcmp.lt.s32.totalorder %v2515, 0
        %v2794 = vsub.s32 0, %v2515
        %v2795 = vsel %vm2793, %v2794, %v2515
        %v2796 = vshrl.u32 %v2795, 7
        %v2797 = vand.u32 %v2795, 127
        %v2798 = vsub.s32 0, %v2797
        %v2799 = vsel %vm2793, %v2798, %v2797
        %vm2800 = vcmp.lt.s32.totalorder %v2516, 0
        %v2801 = vsub.s32 0, %v2516
        %v2802 = vsel %vm2800, %v2801, %v2516
        %v2803 = vshrl.u32 %v2802, 7
        %v2804 = vand.u32 %v2802, 127
        %v2805 = vsub.s32 0, %v2804
        %v2806 = vsel %vm2800, %v2805, %v2804
        %vm2807 = vcmp.lt.s32.totalorder %v2517, 0
        %v2808 = vsub.s32 0, %v2517
        %v2809 = vsel %vm2807, %v2808, %v2517
        %v2810 = vshrl.u32 %v2809, 7
        %v2811 = vand.u32 %v2809, 127
        %v2812 = vsub.s32 0, %v2811
        %v2813 = vsel %vm2807, %v2812, %v2811
        %vm2814 = vcmp.lt.s32.totalorder %v2518, 0
        %v2815 = vsub.s32 0, %v2518
        %v2816 = vsel %vm2814, %v2815, %v2518
        %v2817 = vshrl.u32 %v2816, 7
        %v2818 = vand.u32 %v2816, 127
        %v2819 = vsub.s32 0, %v2818
        %v2820 = vsel %vm2814, %v2819, %v2818
        %vm2821 = vcmp.lt.s32.totalorder %v2519, 0
        %v2822 = vsub.s32 0, %v2519
        %v2823 = vsel %vm2821, %v2822, %v2519
        %v2824 = vshrl.u32 %v2823, 7
        %v2825 = vand.u32 %v2823, 127
        %v2826 = vsub.s32 0, %v2825
        %v2827 = vsel %vm2821, %v2826, %v2825
        %vm2828 = vcmp.lt.s32.totalorder %v2520, 0
        %v2829 = vsub.s32 0, %v2520
        %v2830 = vsel %vm2828, %v2829, %v2520
        %v2831 = vshrl.u32 %v2830, 7
        %v2832 = vand.u32 %v2830, 127
        %v2833 = vsub.s32 0, %v2832
        %v2834 = vsel %vm2828, %v2833, %v2832
        %vm2835 = vcmp.lt.s32.totalorder %v2521, 0
        %v2836 = vsub.s32 0, %v2521
        %v2837 = vsel %vm2835, %v2836, %v2521
        %v2838 = vshrl.u32 %v2837, 7
        %v2839 = vand.u32 %v2837, 127
        %v2840 = vsub.s32 0, %v2839
        %v2841 = vsel %vm2835, %v2840, %v2839
        %vm2842 = vcmp.lt.s32.totalorder %v2522, 0
        %v2843 = vsub.s32 0, %v2522
        %v2844 = vsel %vm2842, %v2843, %v2522
        %v2845 = vshrl.u32 %v2844, 7
        %v2846 = vand.u32 %v2844, 127
        %v2847 = vsub.s32 0, %v2846
        %v2848 = vsel %vm2842, %v2847, %v2846
        %vm2849 = vcmp.lt.s32.totalorder %v2523, 0
        %v2850 = vsub.s32 0, %v2523
        %v2851 = vsel %vm2849, %v2850, %v2523
        %v2852 = vshrl.u32 %v2851, 7
        %v2853 = vand.u32 %v2851, 127
        %v2854 = vsub.s32 0, %v2853
        %v2855 = vsel %vm2849, %v2854, %v2853
        %vm2856 = vcmp.lt.s32.totalorder %v2524, 0
        %v2857 = vsub.s32 0, %v2524
        %v2858 = vsel %vm2856, %v2857, %v2524
        %v2859 = vshrl.u32 %v2858, 7
        %v2860 = vand.u32 %v2858, 127
        %v2861 = vsub.s32 0, %v2860
        %v2862 = vsel %vm2856, %v2861, %v2860
        %vm2863 = vcmp.lt.s32.totalorder %v2525, 0
        %v2864 = vsub.s32 0, %v2525
        %v2865 = vsel %vm2863, %v2864, %v2525
        %v2866 = vshrl.u32 %v2865, 7
        %v2867 = vand.u32 %v2865, 127
        %v2868 = vsub.s32 0, %v2867
        %v2869 = vsel %vm2863, %v2868, %v2867
        %vm2870 = vcmp.lt.s32.totalorder %v2526, 0
        %v2871 = vsub.s32 0, %v2526
        %v2872 = vsel %vm2870, %v2871, %v2526
        %v2873 = vshrl.u32 %v2872, 7
        %v2874 = vand.u32 %v2872, 127
        %v2875 = vsub.s32 0, %v2874
        %v2876 = vsel %vm2870, %v2875, %v2874
        %vm2877 = vcmp.lt.s32.totalorder %v2527, 0
        %v2878 = vsub.s32 0, %v2527
        %v2879 = vsel %vm2877, %v2878, %v2527
        %v2880 = vshrl.u32 %v2879, 7
        %v2881 = vand.u32 %v2879, 127
        %v2882 = vsub.s32 0, %v2881
        %v2883 = vsel %vm2877, %v2882, %v2881
        %vm2884 = vcmp.lt.s32.totalorder %v2528, 0
        %v2885 = vsub.s32 0, %v2528
        %v2886 = vsel %vm2884, %v2885, %v2528
        %v2887 = vshrl.u32 %v2886, 7
        %v2888 = vand.u32 %v2886, 127
        %v2889 = vsub.s32 0, %v2888
        %v2890 = vsel %vm2884, %v2889, %v2888
        %vm2891 = vcmp.lt.s32.totalorder %v2529, 0
        %v2892 = vsub.s32 0, %v2529
        %v2893 = vsel %vm2891, %v2892, %v2529
        %v2894 = vshrl.u32 %v2893, 7
        %v2895 = vand.u32 %v2893, 127
        %v2896 = vsub.s32 0, %v2895
        %v2897 = vsel %vm2891, %v2896, %v2895
        %vm2898 = vcmp.lt.s32.totalorder %v2530, 0
        %v2899 = vsub.s32 0, %v2530
        %v2900 = vsel %vm2898, %v2899, %v2530
        %v2901 = vshrl.u32 %v2900, 7
        %v2902 = vand.u32 %v2900, 127
        %v2903 = vsub.s32 0, %v2902
        %v2904 = vsel %vm2898, %v2903, %v2902
        %vm2905 = vcmp.lt.s32.totalorder %v2531, 0
        %v2906 = vsub.s32 0, %v2531
        %v2907 = vsel %vm2905, %v2906, %v2531
        %v2908 = vshrl.u32 %v2907, 7
        %v2909 = vand.u32 %v2907, 127
        %v2910 = vsub.s32 0, %v2909
        %v2911 = vsel %vm2905, %v2910, %v2909
        %vm2912 = vcmp.lt.s32.totalorder %v2532, 0
        %v2913 = vsub.s32 0, %v2532
        %v2914 = vsel %vm2912, %v2913, %v2532
        %v2915 = vshrl.u32 %v2914, 7
        %v2916 = vand.u32 %v2914, 127
        %v2917 = vsub.s32 0, %v2916
        %v2918 = vsel %vm2912, %v2917, %v2916
        %vm2919 = vcmp.lt.s32.totalorder %v2533, 0
        %v2920 = vsub.s32 0, %v2533
        %v2921 = vsel %vm2919, %v2920, %v2533
        %v2922 = vshrl.u32 %v2921, 7
        %v2923 = vand.u32 %v2921, 127
        %v2924 = vsub.s32 0, %v2923
        %v2925 = vsel %vm2919, %v2924, %v2923
        %vm2926 = vcmp.lt.s32.totalorder %v2534, 0
        %v2927 = vsub.s32 0, %v2534
        %v2928 = vsel %vm2926, %v2927, %v2534
        %v2929 = vshrl.u32 %v2928, 7
        %v2930 = vand.u32 %v2928, 127
        %v2931 = vsub.s32 0, %v2930
        %v2932 = vsel %vm2926, %v2931, %v2930
        %vm2933 = vcmp.lt.s32.totalorder %v2535, 0
        %v2934 = vsub.s32 0, %v2535
        %v2935 = vsel %vm2933, %v2934, %v2535
        %v2936 = vshrl.u32 %v2935, 7
        %v2937 = vand.u32 %v2935, 127
        %v2938 = vsub.s32 0, %v2937
        %v2939 = vsel %vm2933, %v2938, %v2937
        %vm2940 = vcmp.lt.s32.totalorder %v2536, 0
        %v2941 = vsub.s32 0, %v2536
        %v2942 = vsel %vm2940, %v2941, %v2536
        %v2943 = vshrl.u32 %v2942, 7
        %v2944 = vand.u32 %v2942, 127
        %v2945 = vsub.s32 0, %v2944
        %v2946 = vsel %vm2940, %v2945, %v2944
        %vm2947 = vcmp.lt.s32.totalorder %v2537, 0
        %v2948 = vsub.s32 0, %v2537
        %v2949 = vsel %vm2947, %v2948, %v2537
        %v2950 = vshrl.u32 %v2949, 7
        %v2951 = vand.u32 %v2949, 127
        %v2952 = vsub.s32 0, %v2951
        %v2953 = vsel %vm2947, %v2952, %v2951
        %vm2954 = vcmp.lt.s32.totalorder %v2538, 0
        %v2955 = vsub.s32 0, %v2538
        %v2956 = vsel %vm2954, %v2955, %v2538
        %v2957 = vshrl.u32 %v2956, 7
        %v2958 = vand.u32 %v2956, 127
        %v2959 = vsub.s32 0, %v2958
        %v2960 = vsel %vm2954, %v2959, %v2958
        %vm2961 = vcmp.lt.s32.totalorder %v2539, 0
        %v2962 = vsub.s32 0, %v2539
        %v2963 = vsel %vm2961, %v2962, %v2539
        %v2964 = vshrl.u32 %v2963, 7
        %v2965 = vand.u32 %v2963, 127
        %v2966 = vsub.s32 0, %v2965
        %v2967 = vsel %vm2961, %v2966, %v2965
        %vm2968 = vcmp.lt.s32.totalorder %v2540, 0
        %v2969 = vsub.s32 0, %v2540
        %v2970 = vsel %vm2968, %v2969, %v2540
        %v2971 = vshrl.u32 %v2970, 7
        %v2972 = vand.u32 %v2970, 127
        %v2973 = vsub.s32 0, %v2972
        %v2974 = vsel %vm2968, %v2973, %v2972
        %vm2975 = vcmp.lt.s32.totalorder %v2541, 0
        %v2976 = vsub.s32 0, %v2541
        %v2977 = vsel %vm2975, %v2976, %v2541
        %v2978 = vshrl.u32 %v2977, 7
        %v2979 = vand.u32 %v2977, 127
        %v2980 = vsub.s32 0, %v2979
        %v2981 = vsel %vm2975, %v2980, %v2979
        %vm2982 = vcmp.lt.s32.totalorder %v2542, 0
        %v2983 = vsub.s32 0, %v2542
        %v2984 = vsel %vm2982, %v2983, %v2542
        %v2985 = vshrl.u32 %v2984, 7
        %v2986 = vand.u32 %v2984, 127
        %v2987 = vsub.s32 0, %v2986
        %v2988 = vsel %vm2982, %v2987, %v2986
        %vm2989 = vcmp.lt.s32.totalorder %v2543, 0
        %v2990 = vsub.s32 0, %v2543
        %v2991 = vsel %vm2989, %v2990, %v2543
        %v2992 = vshrl.u32 %v2991, 7
        %v2993 = vand.u32 %v2991, 127
        %v2994 = vsub.s32 0, %v2993
        %v2995 = vsel %vm2989, %v2994, %v2993
        %vm2996 = vcmp.lt.s32.totalorder %v2544, 0
        %v2997 = vsub.s32 0, %v2544
        %v2998 = vsel %vm2996, %v2997, %v2544
        %v2999 = vshrl.u32 %v2998, 7
        %v3000 = vand.u32 %v2998, 127
        %v3001 = vsub.s32 0, %v3000
        %v3002 = vsel %vm2996, %v3001, %v3000
        %vm3003 = vcmp.lt.s32.totalorder %v2545, 0
        %v3004 = vsub.s32 0, %v2545
        %v3005 = vsel %vm3003, %v3004, %v2545
        %v3006 = vshrl.u32 %v3005, 7
        %v3007 = vand.u32 %v3005, 127
        %v3008 = vsub.s32 0, %v3007
        %v3009 = vsel %vm3003, %v3008, %v3007
        %vm3010 = vcmp.lt.s32.totalorder %v2546, 0
        %v3011 = vsub.s32 0, %v2546
        %v3012 = vsel %vm3010, %v3011, %v2546
        %v3013 = vshrl.u32 %v3012, 7
        %v3014 = vand.u32 %v3012, 127
        %v3015 = vsub.s32 0, %v3014
        %v3016 = vsel %vm3010, %v3015, %v3014
        %vm3017 = vcmp.lt.s32.totalorder %v2547, 0
        %v3018 = vsub.s32 0, %v2547
        %v3019 = vsel %vm3017, %v3018, %v2547
        %v3020 = vshrl.u32 %v3019, 7
        %v3021 = vand.u32 %v3019, 127
        %v3022 = vsub.s32 0, %v3021
        %v3023 = vsel %vm3017, %v3022, %v3021
        %vm3024 = vcmp.lt.s32.totalorder %v2548, 0
        %v3025 = vsub.s32 0, %v2548
        %v3026 = vsel %vm3024, %v3025, %v2548
        %v3027 = vshrl.u32 %v3026, 7
        %v3028 = vand.u32 %v3026, 127
        %v3029 = vsub.s32 0, %v3028
        %v3030 = vsel %vm3024, %v3029, %v3028
        %vm3031 = vcmp.lt.s32.totalorder %v2549, 0
        %v3032 = vsub.s32 0, %v2549
        %v3033 = vsel %vm3031, %v3032, %v2549
        %v3034 = vshrl.u32 %v3033, 7
        %v3035 = vand.u32 %v3033, 127
        %v3036 = vsub.s32 0, %v3035
        %v3037 = vsel %vm3031, %v3036, %v3035
        %vm3038 = vcmp.lt.s32.totalorder %v2550, 0
        %v3039 = vsub.s32 0, %v2550
        %v3040 = vsel %vm3038, %v3039, %v2550
        %v3041 = vshrl.u32 %v3040, 7
        %v3042 = vand.u32 %v3040, 127
        %v3043 = vsub.s32 0, %v3042
        %v3044 = vsel %vm3038, %v3043, %v3042
        %vm3045 = vcmp.lt.s32.totalorder %v2551, 0
        %v3046 = vsub.s32 0, %v2551
        %v3047 = vsel %vm3045, %v3046, %v2551
        %v3048 = vshrl.u32 %v3047, 7
        %v3049 = vand.u32 %v3047, 127
        %v3050 = vsub.s32 0, %v3049
        %v3051 = vsel %vm3045, %v3050, %v3049
        %vm3052 = vcmp.lt.s32.totalorder %v2552, 0
        %v3053 = vsub.s32 0, %v2552
        %v3054 = vsel %vm3052, %v3053, %v2552
        %v3055 = vshrl.u32 %v3054, 7
        %v3056 = vand.u32 %v3054, 127
        %v3057 = vsub.s32 0, %v3056
        %v3058 = vsel %vm3052, %v3057, %v3056
        %vm3059 = vcmp.lt.s32.totalorder %v2553, 0
        %v3060 = vsub.s32 0, %v2553
        %v3061 = vsel %vm3059, %v3060, %v2553
        %v3062 = vshrl.u32 %v3061, 7
        %v3063 = vand.u32 %v3061, 127
        %v3064 = vsub.s32 0, %v3063
        %v3065 = vsel %vm3059, %v3064, %v3063
        %vm3066 = vcmp.lt.s32.totalorder %v2554, 0
        %v3067 = vsub.s32 0, %v2554
        %v3068 = vsel %vm3066, %v3067, %v2554
        %v3069 = vshrl.u32 %v3068, 7
        %v3070 = vand.u32 %v3068, 127
        %v3071 = vsub.s32 0, %v3070
        %v3072 = vsel %vm3066, %v3071, %v3070
        %vm3073 = vcmp.lt.s32.totalorder %v2555, 0
        %v3074 = vsub.s32 0, %v2555
        %v3075 = vsel %vm3073, %v3074, %v2555
        %v3076 = vshrl.u32 %v3075, 7
        %v3077 = vand.u32 %v3075, 127
        %v3078 = vsub.s32 0, %v3077
        %v3079 = vsel %vm3073, %v3078, %v3077
        %vm3080 = vcmp.lt.s32.totalorder %v2556, 0
        %v3081 = vsub.s32 0, %v2556
        %v3082 = vsel %vm3080, %v3081, %v2556
        %v3083 = vshrl.u32 %v3082, 7
        %v3084 = vand.u32 %v3082, 127
        %v3085 = vsub.s32 0, %v3084
        %v3086 = vsel %vm3080, %v3085, %v3084
        %vm3087 = vcmp.lt.s32.totalorder %v2557, 0
        %v3088 = vsub.s32 0, %v2557
        %v3089 = vsel %vm3087, %v3088, %v2557
        %v3090 = vshrl.u32 %v3089, 7
        %v3091 = vand.u32 %v3089, 127
        %v3092 = vsub.s32 0, %v3091
        %v3093 = vsel %vm3087, %v3092, %v3091
        %vm3094 = vcmp.lt.s32.totalorder %v2558, 0
        %v3095 = vsub.s32 0, %v2558
        %v3096 = vsel %vm3094, %v3095, %v2558
        %v3097 = vshrl.u32 %v3096, 7
        %v3098 = vand.u32 %v3096, 127
        %v3099 = vsub.s32 0, %v3098
        %v3100 = vsel %vm3094, %v3099, %v3098
        %vm3101 = vcmp.lt.s32.totalorder %v2559, 0
        %v3102 = vsub.s32 0, %v2559
        %v3103 = vsel %vm3101, %v3102, %v2559
        %v3104 = vshrl.u32 %v3103, 7
        %v3105 = vand.u32 %v3103, 127
        %v3106 = vsub.s32 0, %v3105
        %v3107 = vsel %vm3101, %v3106, %v3105
        %vm3108 = vcmp.lt.s32.totalorder %v2560, 0
        %v3109 = vsub.s32 0, %v2560
        %v3110 = vsel %vm3108, %v3109, %v2560
        %v3111 = vshrl.u32 %v3110, 7
        %v3112 = vand.u32 %v3110, 127
        %v3113 = vsub.s32 0, %v3112
        %v3114 = vsel %vm3108, %v3113, %v3112
        %vm3115 = vcmp.lt.s32.totalorder %v2561, 0
        %v3116 = vsub.s32 0, %v2561
        %v3117 = vsel %vm3115, %v3116, %v2561
        %v3118 = vshrl.u32 %v3117, 7
        %v3119 = vand.u32 %v3117, 127
        %v3120 = vsub.s32 0, %v3119
        %v3121 = vsel %vm3115, %v3120, %v3119
        %vm3122 = vcmp.lt.s32.totalorder %v2562, 0
        %v3123 = vsub.s32 0, %v2562
        %v3124 = vsel %vm3122, %v3123, %v2562
        %v3125 = vshrl.u32 %v3124, 7
        %v3126 = vand.u32 %v3124, 127
        %v3127 = vsub.s32 0, %v3126
        %v3128 = vsel %vm3122, %v3127, %v3126
        %vm3129 = vcmp.lt.s32.totalorder %v2563, 0
        %v3130 = vsub.s32 0, %v2563
        %v3131 = vsel %vm3129, %v3130, %v2563
        %v3132 = vshrl.u32 %v3131, 7
        %v3133 = vand.u32 %v3131, 127
        %v3134 = vsub.s32 0, %v3133
        %v3135 = vsel %vm3129, %v3134, %v3133
        %vm3136 = vcmp.lt.s32.totalorder %v2564, 0
        %v3137 = vsub.s32 0, %v2564
        %v3138 = vsel %vm3136, %v3137, %v2564
        %v3139 = vshrl.u32 %v3138, 7
        %v3140 = vand.u32 %v3138, 127
        %v3141 = vsub.s32 0, %v3140
        %v3142 = vsel %vm3136, %v3141, %v3140
        %vm3143 = vcmp.lt.s32.totalorder %v2565, 0
        %v3144 = vsub.s32 0, %v2565
        %v3145 = vsel %vm3143, %v3144, %v2565
        %v3146 = vshrl.u32 %v3145, 7
        %v3147 = vand.u32 %v3145, 127
        %v3148 = vsub.s32 0, %v3147
        %v3149 = vsel %vm3143, %v3148, %v3147
        %vm3150 = vcmp.lt.s32.totalorder %v2566, 0
        %v3151 = vsub.s32 0, %v2566
        %v3152 = vsel %vm3150, %v3151, %v2566
        %v3153 = vshrl.u32 %v3152, 7
        %v3154 = vand.u32 %v3152, 127
        %v3155 = vsub.s32 0, %v3154
        %v3156 = vsel %vm3150, %v3155, %v3154
        %vm3157 = vcmp.lt.s32.totalorder %v2567, 0
        %v3158 = vsub.s32 0, %v2567
        %v3159 = vsel %vm3157, %v3158, %v2567
        %v3160 = vshrl.u32 %v3159, 7
        %v3161 = vand.u32 %v3159, 127
        %v3162 = vsub.s32 0, %v3161
        %v3163 = vsel %vm3157, %v3162, %v3161
        %vm3164 = vcmp.lt.s32.totalorder %v2568, 0
        %v3165 = vsub.s32 0, %v2568
        %v3166 = vsel %vm3164, %v3165, %v2568
        %v3167 = vshrl.u32 %v3166, 7
        %v3168 = vand.u32 %v3166, 127
        %v3169 = vsub.s32 0, %v3168
        %v3170 = vsel %vm3164, %v3169, %v3168
        %vm3171 = vcmp.lt.s32.totalorder %v2569, 0
        %v3172 = vsub.s32 0, %v2569
        %v3173 = vsel %vm3171, %v3172, %v2569
        %v3174 = vshrl.u32 %v3173, 7
        %v3175 = vand.u32 %v3173, 127
        %v3176 = vsub.s32 0, %v3175
        %v3177 = vsel %vm3171, %v3176, %v3175
        %vm3178 = vcmp.lt.s32.totalorder %v2570, 0
        %v3179 = vsub.s32 0, %v2570
        %v3180 = vsel %vm3178, %v3179, %v2570
        %v3181 = vshrl.u32 %v3180, 7
        %v3182 = vand.u32 %v3180, 127
        %v3183 = vsub.s32 0, %v3182
        %v3184 = vsel %vm3178, %v3183, %v3182
        %vm3185 = vcmp.lt.s32.totalorder %v2571, 0
        %v3186 = vsub.s32 0, %v2571
        %v3187 = vsel %vm3185, %v3186, %v2571
        %v3188 = vshrl.u32 %v3187, 7
        %v3189 = vand.u32 %v3187, 127
        %v3190 = vsub.s32 0, %v3189
        %v3191 = vsel %vm3185, %v3190, %v3189
        %vm3192 = vcmp.lt.s32.totalorder %v2572, 0
        %v3193 = vsub.s32 0, %v2572
        %v3194 = vsel %vm3192, %v3193, %v2572
        %v3195 = vshrl.u32 %v3194, 7
        %v3196 = vand.u32 %v3194, 127
        %v3197 = vsub.s32 0, %v3196
        %v3198 = vsel %vm3192, %v3197, %v3196
        %vm3199 = vcmp.lt.s32.totalorder %v2573, 0
        %v3200 = vsub.s32 0, %v2573
        %v3201 = vsel %vm3199, %v3200, %v2573
        %v3202 = vshrl.u32 %v3201, 7
        %v3203 = vand.u32 %v3201, 127
        %v3204 = vsub.s32 0, %v3203
        %v3205 = vsel %vm3199, %v3204, %v3203
        %vm3206 = vcmp.lt.s32.totalorder %v2574, 0
        %v3207 = vsub.s32 0, %v2574
        %v3208 = vsel %vm3206, %v3207, %v2574
        %v3209 = vshrl.u32 %v3208, 7
        %v3210 = vand.u32 %v3208, 127
        %v3211 = vsub.s32 0, %v3210
        %v3212 = vsel %vm3206, %v3211, %v3210
        %vm3213 = vcmp.lt.s32.totalorder %v2575, 0
        %v3214 = vsub.s32 0, %v2575
        %v3215 = vsel %vm3213, %v3214, %v2575
        %v3216 = vshrl.u32 %v3215, 7
        %v3217 = vand.u32 %v3215, 127
        %v3218 = vsub.s32 0, %v3217
        %v3219 = vsel %vm3213, %v3218, %v3217
        %vm3220 = vcmp.lt.s32.totalorder %v2576, 0
        %v3221 = vsub.s32 0, %v2576
        %v3222 = vsel %vm3220, %v3221, %v2576
        %v3223 = vshrl.u32 %v3222, 7
        %v3224 = vand.u32 %v3222, 127
        %v3225 = vsub.s32 0, %v3224
        %v3226 = vsel %vm3220, %v3225, %v3224
        %vm3227 = vcmp.lt.s32.totalorder %v2577, 0
        %v3228 = vsub.s32 0, %v2577
        %v3229 = vsel %vm3227, %v3228, %v2577
        %v3230 = vshrl.u32 %v3229, 7
        %v3231 = vand.u32 %v3229, 127
        %v3232 = vsub.s32 0, %v3231
        %v3233 = vsel %vm3227, %v3232, %v3231
        %vm3234 = vcmp.lt.s32.totalorder %v2578, 0
        %v3235 = vsub.s32 0, %v2578
        %v3236 = vsel %vm3234, %v3235, %v2578
        %v3237 = vshrl.u32 %v3236, 7
        %v3238 = vand.u32 %v3236, 127
        %v3239 = vsub.s32 0, %v3238
        %v3240 = vsel %vm3234, %v3239, %v3238
        %vm3241 = vcmp.lt.s32.totalorder %v2579, 0
        %v3242 = vsub.s32 0, %v2579
        %v3243 = vsel %vm3241, %v3242, %v2579
        %v3244 = vshrl.u32 %v3243, 7
        %v3245 = vand.u32 %v3243, 127
        %v3246 = vsub.s32 0, %v3245
        %v3247 = vsel %vm3241, %v3246, %v3245
        %vm3248 = vcmp.lt.s32.totalorder %v2580, 0
        %v3249 = vsub.s32 0, %v2580
        %v3250 = vsel %vm3248, %v3249, %v2580
        %v3251 = vshrl.u32 %v3250, 7
        %v3252 = vand.u32 %v3250, 127
        %v3253 = vsub.s32 0, %v3252
        %v3254 = vsel %vm3248, %v3253, %v3252
        %vm3255 = vcmp.lt.s32.totalorder %v2581, 0
        %v3256 = vsub.s32 0, %v2581
        %v3257 = vsel %vm3255, %v3256, %v2581
        %v3258 = vshrl.u32 %v3257, 7
        %v3259 = vand.u32 %v3257, 127
        %v3260 = vsub.s32 0, %v3259
        %v3261 = vsel %vm3255, %v3260, %v3259
        %vm3262 = vcmp.lt.s32.totalorder %v2582, 0
        %v3263 = vsub.s32 0, %v2582
        %v3264 = vsel %vm3262, %v3263, %v2582
        %v3265 = vshrl.u32 %v3264, 7
        %v3266 = vand.u32 %v3264, 127
        %v3267 = vsub.s32 0, %v3266
        %v3268 = vsel %vm3262, %v3267, %v3266
        %vm3269 = vcmp.lt.s32.totalorder %v2583, 0
        %v3270 = vsub.s32 0, %v2583
        %v3271 = vsel %vm3269, %v3270, %v2583
        %v3272 = vshrl.u32 %v3271, 7
        %v3273 = vand.u32 %v3271, 127
        %v3274 = vsub.s32 0, %v3273
        %v3275 = vsel %vm3269, %v3274, %v3273
        %vm3276 = vcmp.lt.s32.totalorder %v2584, 0
        %v3277 = vsub.s32 0, %v2584
        %v3278 = vsel %vm3276, %v3277, %v2584
        %v3279 = vshrl.u32 %v3278, 7
        %v3280 = vand.u32 %v3278, 127
        %v3281 = vsub.s32 0, %v3280
        %v3282 = vsel %vm3276, %v3281, %v3280
        %vm3283 = vcmp.lt.s32.totalorder %v2585, 0
        %v3284 = vsub.s32 0, %v2585
        %v3285 = vsel %vm3283, %v3284, %v2585
        %v3286 = vshrl.u32 %v3285, 7
        %v3287 = vand.u32 %v3285, 127
        %v3288 = vsub.s32 0, %v3287
        %v3289 = vsel %vm3283, %v3288, %v3287
        %vm3290 = vcmp.lt.s32.totalorder %v2586, 0
        %v3291 = vsub.s32 0, %v2586
        %v3292 = vsel %vm3290, %v3291, %v2586
        %v3293 = vshrl.u32 %v3292, 7
        %v3294 = vand.u32 %v3292, 127
        %v3295 = vsub.s32 0, %v3294
        %v3296 = vsel %vm3290, %v3295, %v3294
        %vm3297 = vcmp.lt.s32.totalorder %v2587, 0
        %v3298 = vsub.s32 0, %v2587
        %v3299 = vsel %vm3297, %v3298, %v2587
        %v3300 = vshrl.u32 %v3299, 7
        %v3301 = vand.u32 %v3299, 127
        %v3302 = vsub.s32 0, %v3301
        %v3303 = vsel %vm3297, %v3302, %v3301
        %vm3304 = vcmp.lt.s32.totalorder %v2588, 0
        %v3305 = vsub.s32 0, %v2588
        %v3306 = vsel %vm3304, %v3305, %v2588
        %v3307 = vshrl.u32 %v3306, 7
        %v3308 = vand.u32 %v3306, 127
        %v3309 = vsub.s32 0, %v3308
        %v3310 = vsel %vm3304, %v3309, %v3308
        %vm3311 = vcmp.lt.s32.totalorder %v2589, 0
        %v3312 = vsub.s32 0, %v2589
        %v3313 = vsel %vm3311, %v3312, %v2589
        %v3314 = vshrl.u32 %v3313, 7
        %v3315 = vand.u32 %v3313, 127
        %v3316 = vsub.s32 0, %v3315
        %v3317 = vsel %vm3311, %v3316, %v3315
        %vm3318 = vcmp.lt.s32.totalorder %v2590, 0
        %v3319 = vsub.s32 0, %v2590
        %v3320 = vsel %vm3318, %v3319, %v2590
        %v3321 = vshrl.u32 %v3320, 7
        %v3322 = vand.u32 %v3320, 127
        %v3323 = vsub.s32 0, %v3322
        %v3324 = vsel %vm3318, %v3323, %v3322
        %vm3325 = vcmp.lt.s32.totalorder %v2591, 0
        %v3326 = vsub.s32 0, %v2591
        %v3327 = vsel %vm3325, %v3326, %v2591
        %v3328 = vshrl.u32 %v3327, 7
        %v3329 = vand.u32 %v3327, 127
        %v3330 = vsub.s32 0, %v3329
        %v3331 = vsel %vm3325, %v3330, %v3329
        %vm3332 = vcmp.lt.s32.totalorder %v2592, 0
        %v3333 = vsub.s32 0, %v2592
        %v3334 = vsel %vm3332, %v3333, %v2592
        %v3335 = vshrl.u32 %v3334, 7
        %v3336 = vand.u32 %v3334, 127
        %v3337 = vsub.s32 0, %v3336
        %v3338 = vsel %vm3332, %v3337, %v3336
        %vm3339 = vcmp.lt.s32.totalorder %v2593, 0
        %v3340 = vsub.s32 0, %v2593
        %v3341 = vsel %vm3339, %v3340, %v2593
        %v3342 = vshrl.u32 %v3341, 7
        %v3343 = vand.u32 %v3341, 127
        %v3344 = vsub.s32 0, %v3343
        %v3345 = vsel %vm3339, %v3344, %v3343
        %vm3346 = vcmp.lt.s32.totalorder %v2594, 0
        %v3347 = vsub.s32 0, %v2594
        %v3348 = vsel %vm3346, %v3347, %v2594
        %v3349 = vshrl.u32 %v3348, 7
        %v3350 = vand.u32 %v3348, 127
        %v3351 = vsub.s32 0, %v3350
        %v3352 = vsel %vm3346, %v3351, %v3350
        %vm3353 = vcmp.lt.s32.totalorder %v2595, 0
        %v3354 = vsub.s32 0, %v2595
        %v3355 = vsel %vm3353, %v3354, %v2595
        %v3356 = vshrl.u32 %v3355, 7
        %v3357 = vand.u32 %v3355, 127
        %v3358 = vsub.s32 0, %v3357
        %v3359 = vsel %vm3353, %v3358, %v3357
        %vm3360 = vcmp.lt.s32.totalorder %v2596, 0
        %v3361 = vsub.s32 0, %v2596
        %v3362 = vsel %vm3360, %v3361, %v2596
        %v3363 = vshrl.u32 %v3362, 7
        %v3364 = vand.u32 %v3362, 127
        %v3365 = vsub.s32 0, %v3364
        %v3366 = vsel %vm3360, %v3365, %v3364
        %vm3367 = vcmp.lt.s32.totalorder %v2597, 0
        %v3368 = vsub.s32 0, %v2597
        %v3369 = vsel %vm3367, %v3368, %v2597
        %v3370 = vshrl.u32 %v3369, 7
        %v3371 = vand.u32 %v3369, 127
        %v3372 = vsub.s32 0, %v3371
        %v3373 = vsel %vm3367, %v3372, %v3371
        %vm3374 = vcmp.lt.s32.totalorder %v2598, 0
        %v3375 = vsub.s32 0, %v2598
        %v3376 = vsel %vm3374, %v3375, %v2598
        %v3377 = vshrl.u32 %v3376, 7
        %v3378 = vand.u32 %v3376, 127
        %v3379 = vsub.s32 0, %v3378
        %v3380 = vsel %vm3374, %v3379, %v3378
        %vm3381 = vcmp.lt.s32.totalorder %v2599, 0
        %v3382 = vsub.s32 0, %v2599
        %v3383 = vsel %vm3381, %v3382, %v2599
        %v3384 = vshrl.u32 %v3383, 7
        %v3385 = vand.u32 %v3383, 127
        %v3386 = vsub.s32 0, %v3385
        %v3387 = vsel %vm3381, %v3386, %v3385
        %vm3388 = vcmp.lt.s32.totalorder %v2600, 0
        %v3389 = vsub.s32 0, %v2600
        %v3390 = vsel %vm3388, %v3389, %v2600
        %v3391 = vshrl.u32 %v3390, 7
        %v3392 = vand.u32 %v3390, 127
        %v3393 = vsub.s32 0, %v3392
        %v3394 = vsel %vm3388, %v3393, %v3392
        %vm3395 = vcmp.lt.s32.totalorder %v2601, 0
        %v3396 = vsub.s32 0, %v2601
        %v3397 = vsel %vm3395, %v3396, %v2601
        %v3398 = vshrl.u32 %v3397, 7
        %v3399 = vand.u32 %v3397, 127
        %v3400 = vsub.s32 0, %v3399
        %v3401 = vsel %vm3395, %v3400, %v3399
        %vm3402 = vcmp.lt.s32.totalorder %v2602, 0
        %v3403 = vsub.s32 0, %v2602
        %v3404 = vsel %vm3402, %v3403, %v2602
        %v3405 = vshrl.u32 %v3404, 7
        %v3406 = vand.u32 %v3404, 127
        %v3407 = vsub.s32 0, %v3406
        %v3408 = vsel %vm3402, %v3407, %v3406
        %vm3409 = vcmp.lt.s32.totalorder %v2603, 0
        %v3410 = vsub.s32 0, %v2603
        %v3411 = vsel %vm3409, %v3410, %v2603
        %v3412 = vshrl.u32 %v3411, 7
        %v3413 = vand.u32 %v3411, 127
        %v3414 = vsub.s32 0, %v3413
        %v3415 = vsel %vm3409, %v3414, %v3413
        %vm3416 = vcmp.lt.s32.totalorder %v2604, 0
        %v3417 = vsub.s32 0, %v2604
        %v3418 = vsel %vm3416, %v3417, %v2604
        %v3419 = vshrl.u32 %v3418, 7
        %v3420 = vand.u32 %v3418, 127
        %v3421 = vsub.s32 0, %v3420
        %v3422 = vsel %vm3416, %v3421, %v3420
        %vm3423 = vcmp.lt.s32.totalorder %v2605, 0
        %v3424 = vsub.s32 0, %v2605
        %v3425 = vsel %vm3423, %v3424, %v2605
        %v3426 = vshrl.u32 %v3425, 7
        %v3427 = vand.u32 %v3425, 127
        %v3428 = vsub.s32 0, %v3427
        %v3429 = vsel %vm3423, %v3428, %v3427
        %vm3430 = vcmp.lt.s32.totalorder %v2606, 0
        %v3431 = vsub.s32 0, %v2606
        %v3432 = vsel %vm3430, %v3431, %v2606
        %v3433 = vshrl.u32 %v3432, 7
        %v3434 = vand.u32 %v3432, 127
        %v3435 = vsub.s32 0, %v3434
        %v3436 = vsel %vm3430, %v3435, %v3434
        %vm3437 = vcmp.lt.s32.totalorder %v2607, 0
        %v3438 = vsub.s32 0, %v2607
        %v3439 = vsel %vm3437, %v3438, %v2607
        %v3440 = vshrl.u32 %v3439, 7
        %v3441 = vand.u32 %v3439, 127
        %v3442 = vsub.s32 0, %v3441
        %v3443 = vsel %vm3437, %v3442, %v3441
        %vm3444 = vcmp.lt.s32.totalorder %v2608, 0
        %v3445 = vsub.s32 0, %v2608
        %v3446 = vsel %vm3444, %v3445, %v2608
        %v3447 = vshrl.u32 %v3446, 7
        %v3448 = vand.u32 %v3446, 127
        %v3449 = vsub.s32 0, %v3448
        %v3450 = vsel %vm3444, %v3449, %v3448
        %vm3451 = vcmp.lt.s32.totalorder %v2609, 0
        %v3452 = vsub.s32 0, %v2609
        %v3453 = vsel %vm3451, %v3452, %v2609
        %v3454 = vshrl.u32 %v3453, 7
        %v3455 = vand.u32 %v3453, 127
        %v3456 = vsub.s32 0, %v3455
        %v3457 = vsel %vm3451, %v3456, %v3455
        %vm3458 = vcmp.lt.s32.totalorder %v2610, 0
        %v3459 = vsub.s32 0, %v2610
        %v3460 = vsel %vm3458, %v3459, %v2610
        %v3461 = vshrl.u32 %v3460, 7
        %v3462 = vand.u32 %v3460, 127
        %v3463 = vsub.s32 0, %v3462
        %v3464 = vsel %vm3458, %v3463, %v3462
        %vm3465 = vcmp.lt.s32.totalorder %v2611, 0
        %v3466 = vsub.s32 0, %v2611
        %v3467 = vsel %vm3465, %v3466, %v2611
        %v3468 = vshrl.u32 %v3467, 7
        %v3469 = vand.u32 %v3467, 127
        %v3470 = vsub.s32 0, %v3469
        %v3471 = vsel %vm3465, %v3470, %v3469
        %vm3472 = vcmp.lt.s32.totalorder %v2612, 0
        %v3473 = vsub.s32 0, %v2612
        %v3474 = vsel %vm3472, %v3473, %v2612
        %v3475 = vshrl.u32 %v3474, 7
        %v3476 = vand.u32 %v3474, 127
        %v3477 = vsub.s32 0, %v3476
        %v3478 = vsel %vm3472, %v3477, %v3476
        %vm3479 = vcmp.lt.s32.totalorder %v2613, 0
        %v3480 = vsub.s32 0, %v2613
        %v3481 = vsel %vm3479, %v3480, %v2613
        %v3482 = vshrl.u32 %v3481, 7
        %v3483 = vand.u32 %v3481, 127
        %v3484 = vsub.s32 0, %v3483
        %v3485 = vsel %vm3479, %v3484, %v3483
        %vm3486 = vcmp.lt.s32.totalorder %v2614, 0
        %v3487 = vsub.s32 0, %v2614
        %v3488 = vsel %vm3486, %v3487, %v2614
        %v3489 = vshrl.u32 %v3488, 7
        %v3490 = vand.u32 %v3488, 127
        %v3491 = vsub.s32 0, %v3490
        %v3492 = vsel %vm3486, %v3491, %v3490
        %vm3493 = vcmp.lt.s32.totalorder %v2615, 0
        %v3494 = vsub.s32 0, %v2615
        %v3495 = vsel %vm3493, %v3494, %v2615
        %v3496 = vshrl.u32 %v3495, 7
        %v3497 = vand.u32 %v3495, 127
        %v3498 = vsub.s32 0, %v3497
        %v3499 = vsel %vm3493, %v3498, %v3497
        %vm3500 = vcmp.lt.s32.totalorder %v2616, 0
        %v3501 = vsub.s32 0, %v2616
        %v3502 = vsel %vm3500, %v3501, %v2616
        %v3503 = vshrl.u32 %v3502, 7
        %v3504 = vand.u32 %v3502, 127
        %v3505 = vsub.s32 0, %v3504
        %v3506 = vsel %vm3500, %v3505, %v3504
        %vm3507 = vcmp.lt.s32.totalorder %v2617, 0
        %v3508 = vsub.s32 0, %v2617
        %v3509 = vsel %vm3507, %v3508, %v2617
        %v3510 = vshrl.u32 %v3509, 7
        %v3511 = vand.u32 %v3509, 127
        %v3512 = vsub.s32 0, %v3511
        %v3513 = vsel %vm3507, %v3512, %v3511
        %vm3514 = vcmp.ne.s32.totalorder %v2624, 0
        %vm3515 = vcmp.ne.s32.totalorder %v2631, 0
        %vm3516 = vcmp.ne.s32.totalorder %v2638, 0
        %vm3517 = vcmp.ne.s32.totalorder %v2645, 0
        %vm3518 = vcmp.ne.s32.totalorder %v2652, 0
        %vm3519 = vcmp.ne.s32.totalorder %v2659, 0
        %vm3520 = vcmp.ne.s32.totalorder %v2666, 0
        %vm3521 = vcmp.ne.s32.totalorder %v2673, 0
        %vm3522 = vcmp.ne.s32.totalorder %v2680, 0
        %vm3523 = vcmp.ne.s32.totalorder %v2687, 0
        %vm3524 = vcmp.ne.s32.totalorder %v2694, 0
        %vm3525 = vcmp.ne.s32.totalorder %v2701, 0
        %vm3526 = vcmp.ne.s32.totalorder %v2708, 0
        %vm3527 = vcmp.ne.s32.totalorder %v2715, 0
        %vm3528 = vcmp.ne.s32.totalorder %v2722, 0
        %vm3529 = vcmp.ne.s32.totalorder %v2729, 0
        %vm3530 = vcmp.ne.s32.totalorder %v2736, 0
        %vm3531 = vcmp.ne.s32.totalorder %v2743, 0
        %vm3532 = vcmp.ne.s32.totalorder %v2750, 0
        %vm3533 = vcmp.ne.s32.totalorder %v2757, 0
        %vm3534 = vcmp.ne.s32.totalorder %v2764, 0
        %vm3535 = vcmp.ne.s32.totalorder %v2771, 0
        %vm3536 = vcmp.ne.s32.totalorder %v2778, 0
        %vm3537 = vcmp.ne.s32.totalorder %v2785, 0
        %vm3538 = vcmp.ne.s32.totalorder %v2792, 0
        %vm3539 = vcmp.ne.s32.totalorder %v2799, 0
        %vm3540 = vcmp.ne.s32.totalorder %v2806, 0
        %vm3541 = vcmp.ne.s32.totalorder %v2813, 0
        %vm3542 = vcmp.ne.s32.totalorder %v2820, 0
        %vm3543 = vcmp.ne.s32.totalorder %v2827, 0
        %vm3544 = vcmp.ne.s32.totalorder %v2834, 0
        %vm3545 = vcmp.ne.s32.totalorder %v2841, 0
        %vm3546 = vcmp.ne.s32.totalorder %v2848, 0
        %vm3547 = vcmp.ne.s32.totalorder %v2855, 0
        %vm3548 = vcmp.ne.s32.totalorder %v2862, 0
        %vm3549 = vcmp.ne.s32.totalorder %v2869, 0
        %vm3550 = vcmp.ne.s32.totalorder %v2876, 0
        %vm3551 = vcmp.ne.s32.totalorder %v2883, 0
        %vm3552 = vcmp.ne.s32.totalorder %v2890, 0
        %vm3553 = vcmp.ne.s32.totalorder %v2897, 0
        %vm3554 = vcmp.ne.s32.totalorder %v2904, 0
        %vm3555 = vcmp.ne.s32.totalorder %v2911, 0
        %vm3556 = vcmp.ne.s32.totalorder %v2918, 0
        %vm3557 = vcmp.ne.s32.totalorder %v2925, 0
        %vm3558 = vcmp.ne.s32.totalorder %v2932, 0
        %vm3559 = vcmp.ne.s32.totalorder %v2939, 0
        %vm3560 = vcmp.ne.s32.totalorder %v2946, 0
        %vm3561 = vcmp.ne.s32.totalorder %v2953, 0
        %vm3562 = vcmp.ne.s32.totalorder %v2960, 0
        %vm3563 = vcmp.ne.s32.totalorder %v2967, 0
        %vm3564 = vcmp.ne.s32.totalorder %v2974, 0
        %vm3565 = vcmp.ne.s32.totalorder %v2981, 0
        %vm3566 = vcmp.ne.s32.totalorder %v2988, 0
        %vm3567 = vcmp.ne.s32.totalorder %v2995, 0
        %vm3568 = vcmp.ne.s32.totalorder %v3002, 0
        %vm3569 = vcmp.ne.s32.totalorder %v3009, 0
        %vm3570 = vcmp.ne.s32.totalorder %v3016, 0
        %vm3571 = vcmp.ne.s32.totalorder %v3023, 0
        %vm3572 = vcmp.ne.s32.totalorder %v3030, 0
        %vm3573 = vcmp.ne.s32.totalorder %v3037, 0
        %vm3574 = vcmp.ne.s32.totalorder %v3044, 0
        %vm3575 = vcmp.ne.s32.totalorder %v3051, 0
        %vm3576 = vcmp.ne.s32.totalorder %v3058, 0
        %vm3577 = vcmp.ne.s32.totalorder %v3065, 0
        %vm3578 = vcmp.ne.s32.totalorder %v3072, 0
        %vm3579 = vcmp.ne.s32.totalorder %v3079, 0
        %vm3580 = vcmp.ne.s32.totalorder %v3086, 0
        %vm3581 = vcmp.ne.s32.totalorder %v3093, 0
        %vm3582 = vcmp.ne.s32.totalorder %v3100, 0
        %vm3583 = vcmp.ne.s32.totalorder %v3107, 0
        %vm3584 = vcmp.ne.s32.totalorder %v3114, 0
        %vm3585 = vcmp.ne.s32.totalorder %v3121, 0
        %vm3586 = vcmp.ne.s32.totalorder %v3128, 0
        %vm3587 = vcmp.ne.s32.totalorder %v3135, 0
        %vm3588 = vcmp.ne.s32.totalorder %v3142, 0
        %vm3589 = vcmp.ne.s32.totalorder %v3149, 0
        %vm3590 = vcmp.ne.s32.totalorder %v3156, 0
        %vm3591 = vcmp.ne.s32.totalorder %v3163, 0
        %vm3592 = vcmp.ne.s32.totalorder %v3170, 0
        %vm3593 = vcmp.ne.s32.totalorder %v3177, 0
        %vm3594 = vcmp.ne.s32.totalorder %v3184, 0
        %vm3595 = vcmp.ne.s32.totalorder %v3191, 0
        %vm3596 = vcmp.ne.s32.totalorder %v3198, 0
        %vm3597 = vcmp.ne.s32.totalorder %v3205, 0
        %vm3598 = vcmp.ne.s32.totalorder %v3212, 0
        %vm3599 = vcmp.ne.s32.totalorder %v3219, 0
        %vm3600 = vcmp.ne.s32.totalorder %v3226, 0
        %vm3601 = vcmp.ne.s32.totalorder %v3233, 0
        %vm3602 = vcmp.ne.s32.totalorder %v3240, 0
        %vm3603 = vcmp.ne.s32.totalorder %v3247, 0
        %vm3604 = vcmp.ne.s32.totalorder %v3254, 0
        %vm3605 = vcmp.ne.s32.totalorder %v3261, 0
        %vm3606 = vcmp.ne.s32.totalorder %v3268, 0
        %vm3607 = vcmp.ne.s32.totalorder %v3275, 0
        %vm3608 = vcmp.ne.s32.totalorder %v3282, 0
        %vm3609 = vcmp.ne.s32.totalorder %v3289, 0
        %vm3610 = vcmp.ne.s32.totalorder %v3296, 0
        %vm3611 = vcmp.ne.s32.totalorder %v3303, 0
        %vm3612 = vcmp.ne.s32.totalorder %v3310, 0
        %vm3613 = vcmp.ne.s32.totalorder %v3317, 0
        %vm3614 = vcmp.ne.s32.totalorder %v3324, 0
        %vm3615 = vcmp.ne.s32.totalorder %v3331, 0
        %vm3616 = vcmp.ne.s32.totalorder %v3338, 0
        %vm3617 = vcmp.ne.s32.totalorder %v3345, 0
        %vm3618 = vcmp.ne.s32.totalorder %v3352, 0
        %vm3619 = vcmp.ne.s32.totalorder %v3359, 0
        %vm3620 = vcmp.ne.s32.totalorder %v3366, 0
        %vm3621 = vcmp.ne.s32.totalorder %v3373, 0
        %vm3622 = vcmp.ne.s32.totalorder %v3380, 0
        %vm3623 = vcmp.ne.s32.totalorder %v3387, 0
        %vm3624 = vcmp.ne.s32.totalorder %v3394, 0
        %vm3625 = vcmp.ne.s32.totalorder %v3401, 0
        %vm3626 = vcmp.ne.s32.totalorder %v3408, 0
        %vm3627 = vcmp.ne.s32.totalorder %v3415, 0
        %vm3628 = vcmp.ne.s32.totalorder %v3422, 0
        %vm3629 = vcmp.ne.s32.totalorder %v3429, 0
        %vm3630 = vcmp.ne.s32.totalorder %v3436, 0
        %vm3631 = vcmp.ne.s32.totalorder %v3443, 0
        %vm3632 = vcmp.ne.s32.totalorder %v3450, 0
        %vm3633 = vcmp.ne.s32.totalorder %v3457, 0
        %vm3634 = vcmp.ne.s32.totalorder %v3464, 0
        %vm3635 = vcmp.ne.s32.totalorder %v3471, 0
        %vm3636 = vcmp.ne.s32.totalorder %v3478, 0
        %vm3637 = vcmp.ne.s32.totalorder %v3485, 0
        %vm3638 = vcmp.ne.s32.totalorder %v3492, 0
        %vm3639 = vcmp.ne.s32.totalorder %v3499, 0
        %vm3640 = vcmp.ne.s32.totalorder %v3506, 0
        %vm3641 = vcmp.ne.s32.totalorder %v3513, 0
        %vm3642 = vcmp.lt.s32.totalorder %v2624, 0
        %vm3643 = vcmp.lt.s32.totalorder %v2631, 0
        %vm3644 = vcmp.lt.s32.totalorder %v2638, 0
        %vm3645 = vcmp.lt.s32.totalorder %v2645, 0
        %vm3646 = vcmp.lt.s32.totalorder %v2652, 0
        %vm3647 = vcmp.lt.s32.totalorder %v2659, 0
        %vm3648 = vcmp.lt.s32.totalorder %v2666, 0
        %vm3649 = vcmp.lt.s32.totalorder %v2673, 0
        %vm3650 = vcmp.lt.s32.totalorder %v2680, 0
        %vm3651 = vcmp.lt.s32.totalorder %v2687, 0
        %vm3652 = vcmp.lt.s32.totalorder %v2694, 0
        %vm3653 = vcmp.lt.s32.totalorder %v2701, 0
        %vm3654 = vcmp.lt.s32.totalorder %v2708, 0
        %vm3655 = vcmp.lt.s32.totalorder %v2715, 0
        %vm3656 = vcmp.lt.s32.totalorder %v2722, 0
        %vm3657 = vcmp.lt.s32.totalorder %v2729, 0
        %vm3658 = vcmp.lt.s32.totalorder %v2736, 0
        %vm3659 = vcmp.lt.s32.totalorder %v2743, 0
        %vm3660 = vcmp.lt.s32.totalorder %v2750, 0
        %vm3661 = vcmp.lt.s32.totalorder %v2757, 0
        %vm3662 = vcmp.lt.s32.totalorder %v2764, 0
        %vm3663 = vcmp.lt.s32.totalorder %v2771, 0
        %vm3664 = vcmp.lt.s32.totalorder %v2778, 0
        %vm3665 = vcmp.lt.s32.totalorder %v2785, 0
        %vm3666 = vcmp.lt.s32.totalorder %v2792, 0
        %vm3667 = vcmp.lt.s32.totalorder %v2799, 0
        %vm3668 = vcmp.lt.s32.totalorder %v2806, 0
        %vm3669 = vcmp.lt.s32.totalorder %v2813, 0
        %vm3670 = vcmp.lt.s32.totalorder %v2820, 0
        %vm3671 = vcmp.lt.s32.totalorder %v2827, 0
        %vm3672 = vcmp.lt.s32.totalorder %v2834, 0
        %vm3673 = vcmp.lt.s32.totalorder %v2841, 0
        %vm3674 = vcmp.lt.s32.totalorder %v2848, 0
        %vm3675 = vcmp.lt.s32.totalorder %v2855, 0
        %vm3676 = vcmp.lt.s32.totalorder %v2862, 0
        %vm3677 = vcmp.lt.s32.totalorder %v2869, 0
        %vm3678 = vcmp.lt.s32.totalorder %v2876, 0
        %vm3679 = vcmp.lt.s32.totalorder %v2883, 0
        %vm3680 = vcmp.lt.s32.totalorder %v2890, 0
        %vm3681 = vcmp.lt.s32.totalorder %v2897, 0
        %vm3682 = vcmp.lt.s32.totalorder %v2904, 0
        %vm3683 = vcmp.lt.s32.totalorder %v2911, 0
        %vm3684 = vcmp.lt.s32.totalorder %v2918, 0
        %vm3685 = vcmp.lt.s32.totalorder %v2925, 0
        %vm3686 = vcmp.lt.s32.totalorder %v2932, 0
        %vm3687 = vcmp.lt.s32.totalorder %v2939, 0
        %vm3688 = vcmp.lt.s32.totalorder %v2946, 0
        %vm3689 = vcmp.lt.s32.totalorder %v2953, 0
        %vm3690 = vcmp.lt.s32.totalorder %v2960, 0
        %vm3691 = vcmp.lt.s32.totalorder %v2967, 0
        %vm3692 = vcmp.lt.s32.totalorder %v2974, 0
        %vm3693 = vcmp.lt.s32.totalorder %v2981, 0
        %vm3694 = vcmp.lt.s32.totalorder %v2988, 0
        %vm3695 = vcmp.lt.s32.totalorder %v2995, 0
        %vm3696 = vcmp.lt.s32.totalorder %v3002, 0
        %vm3697 = vcmp.lt.s32.totalorder %v3009, 0
        %vm3698 = vcmp.lt.s32.totalorder %v3016, 0
        %vm3699 = vcmp.lt.s32.totalorder %v3023, 0
        %vm3700 = vcmp.lt.s32.totalorder %v3030, 0
        %vm3701 = vcmp.lt.s32.totalorder %v3037, 0
        %vm3702 = vcmp.lt.s32.totalorder %v3044, 0
        %vm3703 = vcmp.lt.s32.totalorder %v3051, 0
        %vm3704 = vcmp.lt.s32.totalorder %v3058, 0
        %vm3705 = vcmp.lt.s32.totalorder %v3065, 0
        %vm3706 = vcmp.lt.s32.totalorder %v3072, 0
        %vm3707 = vcmp.lt.s32.totalorder %v3079, 0
        %vm3708 = vcmp.lt.s32.totalorder %v3086, 0
        %vm3709 = vcmp.lt.s32.totalorder %v3093, 0
        %vm3710 = vcmp.lt.s32.totalorder %v3100, 0
        %vm3711 = vcmp.lt.s32.totalorder %v3107, 0
        %vm3712 = vcmp.lt.s32.totalorder %v3114, 0
        %vm3713 = vcmp.lt.s32.totalorder %v3121, 0
        %vm3714 = vcmp.lt.s32.totalorder %v3128, 0
        %vm3715 = vcmp.lt.s32.totalorder %v3135, 0
        %vm3716 = vcmp.lt.s32.totalorder %v3142, 0
        %vm3717 = vcmp.lt.s32.totalorder %v3149, 0
        %vm3718 = vcmp.lt.s32.totalorder %v3156, 0
        %vm3719 = vcmp.lt.s32.totalorder %v3163, 0
        %vm3720 = vcmp.lt.s32.totalorder %v3170, 0
        %vm3721 = vcmp.lt.s32.totalorder %v3177, 0
        %vm3722 = vcmp.lt.s32.totalorder %v3184, 0
        %vm3723 = vcmp.lt.s32.totalorder %v3191, 0
        %vm3724 = vcmp.lt.s32.totalorder %v3198, 0
        %vm3725 = vcmp.lt.s32.totalorder %v3205, 0
        %vm3726 = vcmp.lt.s32.totalorder %v3212, 0
        %vm3727 = vcmp.lt.s32.totalorder %v3219, 0
        %vm3728 = vcmp.lt.s32.totalorder %v3226, 0
        %vm3729 = vcmp.lt.s32.totalorder %v3233, 0
        %vm3730 = vcmp.lt.s32.totalorder %v3240, 0
        %vm3731 = vcmp.lt.s32.totalorder %v3247, 0
        %vm3732 = vcmp.lt.s32.totalorder %v3254, 0
        %vm3733 = vcmp.lt.s32.totalorder %v3261, 0
        %vm3734 = vcmp.lt.s32.totalorder %v3268, 0
        %vm3735 = vcmp.lt.s32.totalorder %v3275, 0
        %vm3736 = vcmp.lt.s32.totalorder %v3282, 0
        %vm3737 = vcmp.lt.s32.totalorder %v3289, 0
        %vm3738 = vcmp.lt.s32.totalorder %v3296, 0
        %vm3739 = vcmp.lt.s32.totalorder %v3303, 0
        %vm3740 = vcmp.lt.s32.totalorder %v3310, 0
        %vm3741 = vcmp.lt.s32.totalorder %v3317, 0
        %vm3742 = vcmp.lt.s32.totalorder %v3324, 0
        %vm3743 = vcmp.lt.s32.totalorder %v3331, 0
        %vm3744 = vcmp.lt.s32.totalorder %v3338, 0
        %vm3745 = vcmp.lt.s32.totalorder %v3345, 0
        %vm3746 = vcmp.lt.s32.totalorder %v3352, 0
        %vm3747 = vcmp.lt.s32.totalorder %v3359, 0
        %vm3748 = vcmp.lt.s32.totalorder %v3366, 0
        %vm3749 = vcmp.lt.s32.totalorder %v3373, 0
        %vm3750 = vcmp.lt.s32.totalorder %v3380, 0
        %vm3751 = vcmp.lt.s32.totalorder %v3387, 0
        %vm3752 = vcmp.lt.s32.totalorder %v3394, 0
        %vm3753 = vcmp.lt.s32.totalorder %v3401, 0
        %vm3754 = vcmp.lt.s32.totalorder %v3408, 0
        %vm3755 = vcmp.lt.s32.totalorder %v3415, 0
        %vm3756 = vcmp.lt.s32.totalorder %v3422, 0
        %vm3757 = vcmp.lt.s32.totalorder %v3429, 0
        %vm3758 = vcmp.lt.s32.totalorder %v3436, 0
        %vm3759 = vcmp.lt.s32.totalorder %v3443, 0
        %vm3760 = vcmp.lt.s32.totalorder %v3450, 0
        %vm3761 = vcmp.lt.s32.totalorder %v3457, 0
        %vm3762 = vcmp.lt.s32.totalorder %v3464, 0
        %vm3763 = vcmp.lt.s32.totalorder %v3471, 0
        %vm3764 = vcmp.lt.s32.totalorder %v3478, 0
        %vm3765 = vcmp.lt.s32.totalorder %v3485, 0
        %vm3766 = vcmp.lt.s32.totalorder %v3492, 0
        %vm3767 = vcmp.lt.s32.totalorder %v3499, 0
        %vm3768 = vcmp.lt.s32.totalorder %v3506, 0
        %vm3769 = vcmp.lt.s32.totalorder %v3513, 0
        %vm3770 = vmand %vm3642, %vm3514
        %vm3771 = vmand %vm3643, %vm3515
        %vm3772 = vmand %vm3644, %vm3516
        %vm3773 = vmand %vm3645, %vm3517
        %vm3774 = vmand %vm3646, %vm3518
        %vm3775 = vmand %vm3647, %vm3519
        %vm3776 = vmand %vm3648, %vm3520
        %vm3777 = vmand %vm3649, %vm3521
        %vm3778 = vmand %vm3650, %vm3522
        %vm3779 = vmand %vm3651, %vm3523
        %vm3780 = vmand %vm3652, %vm3524
        %vm3781 = vmand %vm3653, %vm3525
        %vm3782 = vmand %vm3654, %vm3526
        %vm3783 = vmand %vm3655, %vm3527
        %vm3784 = vmand %vm3656, %vm3528
        %vm3785 = vmand %vm3657, %vm3529
        %vm3786 = vmand %vm3658, %vm3530
        %vm3787 = vmand %vm3659, %vm3531
        %vm3788 = vmand %vm3660, %vm3532
        %vm3789 = vmand %vm3661, %vm3533
        %vm3790 = vmand %vm3662, %vm3534
        %vm3791 = vmand %vm3663, %vm3535
        %vm3792 = vmand %vm3664, %vm3536
        %vm3793 = vmand %vm3665, %vm3537
        %vm3794 = vmand %vm3666, %vm3538
        %vm3795 = vmand %vm3667, %vm3539
        %vm3796 = vmand %vm3668, %vm3540
        %vm3797 = vmand %vm3669, %vm3541
        %vm3798 = vmand %vm3670, %vm3542
        %vm3799 = vmand %vm3671, %vm3543
        %vm3800 = vmand %vm3672, %vm3544
        %vm3801 = vmand %vm3673, %vm3545
        %vm3802 = vmand %vm3674, %vm3546
        %vm3803 = vmand %vm3675, %vm3547
        %vm3804 = vmand %vm3676, %vm3548
        %vm3805 = vmand %vm3677, %vm3549
        %vm3806 = vmand %vm3678, %vm3550
        %vm3807 = vmand %vm3679, %vm3551
        %vm3808 = vmand %vm3680, %vm3552
        %vm3809 = vmand %vm3681, %vm3553
        %vm3810 = vmand %vm3682, %vm3554
        %vm3811 = vmand %vm3683, %vm3555
        %vm3812 = vmand %vm3684, %vm3556
        %vm3813 = vmand %vm3685, %vm3557
        %vm3814 = vmand %vm3686, %vm3558
        %vm3815 = vmand %vm3687, %vm3559
        %vm3816 = vmand %vm3688, %vm3560
        %vm3817 = vmand %vm3689, %vm3561
        %vm3818 = vmand %vm3690, %vm3562
        %vm3819 = vmand %vm3691, %vm3563
        %vm3820 = vmand %vm3692, %vm3564
        %vm3821 = vmand %vm3693, %vm3565
        %vm3822 = vmand %vm3694, %vm3566
        %vm3823 = vmand %vm3695, %vm3567
        %vm3824 = vmand %vm3696, %vm3568
        %vm3825 = vmand %vm3697, %vm3569
        %vm3826 = vmand %vm3698, %vm3570
        %vm3827 = vmand %vm3699, %vm3571
        %vm3828 = vmand %vm3700, %vm3572
        %vm3829 = vmand %vm3701, %vm3573
        %vm3830 = vmand %vm3702, %vm3574
        %vm3831 = vmand %vm3703, %vm3575
        %vm3832 = vmand %vm3704, %vm3576
        %vm3833 = vmand %vm3705, %vm3577
        %vm3834 = vmand %vm3706, %vm3578
        %vm3835 = vmand %vm3707, %vm3579
        %vm3836 = vmand %vm3708, %vm3580
        %vm3837 = vmand %vm3709, %vm3581
        %vm3838 = vmand %vm3710, %vm3582
        %vm3839 = vmand %vm3711, %vm3583
        %vm3840 = vmand %vm3712, %vm3584
        %vm3841 = vmand %vm3713, %vm3585
        %vm3842 = vmand %vm3714, %vm3586
        %vm3843 = vmand %vm3715, %vm3587
        %vm3844 = vmand %vm3716, %vm3588
        %vm3845 = vmand %vm3717, %vm3589
        %vm3846 = vmand %vm3718, %vm3590
        %vm3847 = vmand %vm3719, %vm3591
        %vm3848 = vmand %vm3720, %vm3592
        %vm3849 = vmand %vm3721, %vm3593
        %vm3850 = vmand %vm3722, %vm3594
        %vm3851 = vmand %vm3723, %vm3595
        %vm3852 = vmand %vm3724, %vm3596
        %vm3853 = vmand %vm3725, %vm3597
        %vm3854 = vmand %vm3726, %vm3598
        %vm3855 = vmand %vm3727, %vm3599
        %vm3856 = vmand %vm3728, %vm3600
        %vm3857 = vmand %vm3729, %vm3601
        %vm3858 = vmand %vm3730, %vm3602
        %vm3859 = vmand %vm3731, %vm3603
        %vm3860 = vmand %vm3732, %vm3604
        %vm3861 = vmand %vm3733, %vm3605
        %vm3862 = vmand %vm3734, %vm3606
        %vm3863 = vmand %vm3735, %vm3607
        %vm3864 = vmand %vm3736, %vm3608
        %vm3865 = vmand %vm3737, %vm3609
        %vm3866 = vmand %vm3738, %vm3610
        %vm3867 = vmand %vm3739, %vm3611
        %vm3868 = vmand %vm3740, %vm3612
        %vm3869 = vmand %vm3741, %vm3613
        %vm3870 = vmand %vm3742, %vm3614
        %vm3871 = vmand %vm3743, %vm3615
        %vm3872 = vmand %vm3744, %vm3616
        %vm3873 = vmand %vm3745, %vm3617
        %vm3874 = vmand %vm3746, %vm3618
        %vm3875 = vmand %vm3747, %vm3619
        %vm3876 = vmand %vm3748, %vm3620
        %vm3877 = vmand %vm3749, %vm3621
        %vm3878 = vmand %vm3750, %vm3622
        %vm3879 = vmand %vm3751, %vm3623
        %vm3880 = vmand %vm3752, %vm3624
        %vm3881 = vmand %vm3753, %vm3625
        %vm3882 = vmand %vm3754, %vm3626
        %vm3883 = vmand %vm3755, %vm3627
        %vm3884 = vmand %vm3756, %vm3628
        %vm3885 = vmand %vm3757, %vm3629
        %vm3886 = vmand %vm3758, %vm3630
        %vm3887 = vmand %vm3759, %vm3631
        %vm3888 = vmand %vm3760, %vm3632
        %vm3889 = vmand %vm3761, %vm3633
        %vm3890 = vmand %vm3762, %vm3634
        %vm3891 = vmand %vm3763, %vm3635
        %vm3892 = vmand %vm3764, %vm3636
        %vm3893 = vmand %vm3765, %vm3637
        %vm3894 = vmand %vm3766, %vm3638
        %vm3895 = vmand %vm3767, %vm3639
        %vm3896 = vmand %vm3768, %vm3640
        %vm3897 = vmand %vm3769, %vm3641
        %v3898 = vadd.s32 %v2624, 128
        %v3899 = vadd.s32 %v2631, 128
        %v3900 = vadd.s32 %v2638, 128
        %v3901 = vadd.s32 %v2645, 128
        %v3902 = vadd.s32 %v2652, 128
        %v3903 = vadd.s32 %v2659, 128
        %v3904 = vadd.s32 %v2666, 128
        %v3905 = vadd.s32 %v2673, 128
        %v3906 = vadd.s32 %v2680, 128
        %v3907 = vadd.s32 %v2687, 128
        %v3908 = vadd.s32 %v2694, 128
        %v3909 = vadd.s32 %v2701, 128
        %v3910 = vadd.s32 %v2708, 128
        %v3911 = vadd.s32 %v2715, 128
        %v3912 = vadd.s32 %v2722, 128
        %v3913 = vadd.s32 %v2729, 128
        %v3914 = vadd.s32 %v2736, 128
        %v3915 = vadd.s32 %v2743, 128
        %v3916 = vadd.s32 %v2750, 128
        %v3917 = vadd.s32 %v2757, 128
        %v3918 = vadd.s32 %v2764, 128
        %v3919 = vadd.s32 %v2771, 128
        %v3920 = vadd.s32 %v2778, 128
        %v3921 = vadd.s32 %v2785, 128
        %v3922 = vadd.s32 %v2792, 128
        %v3923 = vadd.s32 %v2799, 128
        %v3924 = vadd.s32 %v2806, 128
        %v3925 = vadd.s32 %v2813, 128
        %v3926 = vadd.s32 %v2820, 128
        %v3927 = vadd.s32 %v2827, 128
        %v3928 = vadd.s32 %v2834, 128
        %v3929 = vadd.s32 %v2841, 128
        %v3930 = vadd.s32 %v2848, 128
        %v3931 = vadd.s32 %v2855, 128
        %v3932 = vadd.s32 %v2862, 128
        %v3933 = vadd.s32 %v2869, 128
        %v3934 = vadd.s32 %v2876, 128
        %v3935 = vadd.s32 %v2883, 128
        %v3936 = vadd.s32 %v2890, 128
        %v3937 = vadd.s32 %v2897, 128
        %v3938 = vadd.s32 %v2904, 128
        %v3939 = vadd.s32 %v2911, 128
        %v3940 = vadd.s32 %v2918, 128
        %v3941 = vadd.s32 %v2925, 128
        %v3942 = vadd.s32 %v2932, 128
        %v3943 = vadd.s32 %v2939, 128
        %v3944 = vadd.s32 %v2946, 128
        %v3945 = vadd.s32 %v2953, 128
        %v3946 = vadd.s32 %v2960, 128
        %v3947 = vadd.s32 %v2967, 128
        %v3948 = vadd.s32 %v2974, 128
        %v3949 = vadd.s32 %v2981, 128
        %v3950 = vadd.s32 %v2988, 128
        %v3951 = vadd.s32 %v2995, 128
        %v3952 = vadd.s32 %v3002, 128
        %v3953 = vadd.s32 %v3009, 128
        %v3954 = vadd.s32 %v3016, 128
        %v3955 = vadd.s32 %v3023, 128
        %v3956 = vadd.s32 %v3030, 128
        %v3957 = vadd.s32 %v3037, 128
        %v3958 = vadd.s32 %v3044, 128
        %v3959 = vadd.s32 %v3051, 128
        %v3960 = vadd.s32 %v3058, 128
        %v3961 = vadd.s32 %v3065, 128
        %v3962 = vadd.s32 %v3072, 128
        %v3963 = vadd.s32 %v3079, 128
        %v3964 = vadd.s32 %v3086, 128
        %v3965 = vadd.s32 %v3093, 128
        %v3966 = vadd.s32 %v3100, 128
        %v3967 = vadd.s32 %v3107, 128
        %v3968 = vadd.s32 %v3114, 128
        %v3969 = vadd.s32 %v3121, 128
        %v3970 = vadd.s32 %v3128, 128
        %v3971 = vadd.s32 %v3135, 128
        %v3972 = vadd.s32 %v3142, 128
        %v3973 = vadd.s32 %v3149, 128
        %v3974 = vadd.s32 %v3156, 128
        %v3975 = vadd.s32 %v3163, 128
        %v3976 = vadd.s32 %v3170, 128
        %v3977 = vadd.s32 %v3177, 128
        %v3978 = vadd.s32 %v3184, 128
        %v3979 = vadd.s32 %v3191, 128
        %v3980 = vadd.s32 %v3198, 128
        %v3981 = vadd.s32 %v3205, 128
        %v3982 = vadd.s32 %v3212, 128
        %v3983 = vadd.s32 %v3219, 128
        %v3984 = vadd.s32 %v3226, 128
        %v3985 = vadd.s32 %v3233, 128
        %v3986 = vadd.s32 %v3240, 128
        %v3987 = vadd.s32 %v3247, 128
        %v3988 = vadd.s32 %v3254, 128
        %v3989 = vadd.s32 %v3261, 128
        %v3990 = vadd.s32 %v3268, 128
        %v3991 = vadd.s32 %v3275, 128
        %v3992 = vadd.s32 %v3282, 128
        %v3993 = vadd.s32 %v3289, 128
        %v3994 = vadd.s32 %v3296, 128
        %v3995 = vadd.s32 %v3303, 128
        %v3996 = vadd.s32 %v3310, 128
        %v3997 = vadd.s32 %v3317, 128
        %v3998 = vadd.s32 %v3324, 128
        %v3999 = vadd.s32 %v3331, 128
        %v4000 = vadd.s32 %v3338, 128
        %v4001 = vadd.s32 %v3345, 128
        %v4002 = vadd.s32 %v3352, 128
        %v4003 = vadd.s32 %v3359, 128
        %v4004 = vadd.s32 %v3366, 128
        %v4005 = vadd.s32 %v3373, 128
        %v4006 = vadd.s32 %v3380, 128
        %v4007 = vadd.s32 %v3387, 128
        %v4008 = vadd.s32 %v3394, 128
        %v4009 = vadd.s32 %v3401, 128
        %v4010 = vadd.s32 %v3408, 128
        %v4011 = vadd.s32 %v3415, 128
        %v4012 = vadd.s32 %v3422, 128
        %v4013 = vadd.s32 %v3429, 128
        %v4014 = vadd.s32 %v3436, 128
        %v4015 = vadd.s32 %v3443, 128
        %v4016 = vadd.s32 %v3450, 128
        %v4017 = vadd.s32 %v3457, 128
        %v4018 = vadd.s32 %v3464, 128
        %v4019 = vadd.s32 %v3471, 128
        %v4020 = vadd.s32 %v3478, 128
        %v4021 = vadd.s32 %v3485, 128
        %v4022 = vadd.s32 %v3492, 128
        %v4023 = vadd.s32 %v3499, 128
        %v4024 = vadd.s32 %v3506, 128
        %v4025 = vadd.s32 %v3513, 128
        %v4026 = vsel %vm3770, %v3898, %v2624
        %v4027 = vsel %vm3771, %v3899, %v2631
        %v4028 = vsel %vm3772, %v3900, %v2638
        %v4029 = vsel %vm3773, %v3901, %v2645
        %v4030 = vsel %vm3774, %v3902, %v2652
        %v4031 = vsel %vm3775, %v3903, %v2659
        %v4032 = vsel %vm3776, %v3904, %v2666
        %v4033 = vsel %vm3777, %v3905, %v2673
        %v4034 = vsel %vm3778, %v3906, %v2680
        %v4035 = vsel %vm3779, %v3907, %v2687
        %v4036 = vsel %vm3780, %v3908, %v2694
        %v4037 = vsel %vm3781, %v3909, %v2701
        %v4038 = vsel %vm3782, %v3910, %v2708
        %v4039 = vsel %vm3783, %v3911, %v2715
        %v4040 = vsel %vm3784, %v3912, %v2722
        %v4041 = vsel %vm3785, %v3913, %v2729
        %v4042 = vsel %vm3786, %v3914, %v2736
        %v4043 = vsel %vm3787, %v3915, %v2743
        %v4044 = vsel %vm3788, %v3916, %v2750
        %v4045 = vsel %vm3789, %v3917, %v2757
        %v4046 = vsel %vm3790, %v3918, %v2764
        %v4047 = vsel %vm3791, %v3919, %v2771
        %v4048 = vsel %vm3792, %v3920, %v2778
        %v4049 = vsel %vm3793, %v3921, %v2785
        %v4050 = vsel %vm3794, %v3922, %v2792
        %v4051 = vsel %vm3795, %v3923, %v2799
        %v4052 = vsel %vm3796, %v3924, %v2806
        %v4053 = vsel %vm3797, %v3925, %v2813
        %v4054 = vsel %vm3798, %v3926, %v2820
        %v4055 = vsel %vm3799, %v3927, %v2827
        %v4056 = vsel %vm3800, %v3928, %v2834
        %v4057 = vsel %vm3801, %v3929, %v2841
        %v4058 = vsel %vm3802, %v3930, %v2848
        %v4059 = vsel %vm3803, %v3931, %v2855
        %v4060 = vsel %vm3804, %v3932, %v2862
        %v4061 = vsel %vm3805, %v3933, %v2869
        %v4062 = vsel %vm3806, %v3934, %v2876
        %v4063 = vsel %vm3807, %v3935, %v2883
        %v4064 = vsel %vm3808, %v3936, %v2890
        %v4065 = vsel %vm3809, %v3937, %v2897
        %v4066 = vsel %vm3810, %v3938, %v2904
        %v4067 = vsel %vm3811, %v3939, %v2911
        %v4068 = vsel %vm3812, %v3940, %v2918
        %v4069 = vsel %vm3813, %v3941, %v2925
        %v4070 = vsel %vm3814, %v3942, %v2932
        %v4071 = vsel %vm3815, %v3943, %v2939
        %v4072 = vsel %vm3816, %v3944, %v2946
        %v4073 = vsel %vm3817, %v3945, %v2953
        %v4074 = vsel %vm3818, %v3946, %v2960
        %v4075 = vsel %vm3819, %v3947, %v2967
        %v4076 = vsel %vm3820, %v3948, %v2974
        %v4077 = vsel %vm3821, %v3949, %v2981
        %v4078 = vsel %vm3822, %v3950, %v2988
        %v4079 = vsel %vm3823, %v3951, %v2995
        %v4080 = vsel %vm3824, %v3952, %v3002
        %v4081 = vsel %vm3825, %v3953, %v3009
        %v4082 = vsel %vm3826, %v3954, %v3016
        %v4083 = vsel %vm3827, %v3955, %v3023
        %v4084 = vsel %vm3828, %v3956, %v3030
        %v4085 = vsel %vm3829, %v3957, %v3037
        %v4086 = vsel %vm3830, %v3958, %v3044
        %v4087 = vsel %vm3831, %v3959, %v3051
        %v4088 = vsel %vm3832, %v3960, %v3058
        %v4089 = vsel %vm3833, %v3961, %v3065
        %v4090 = vsel %vm3834, %v3962, %v3072
        %v4091 = vsel %vm3835, %v3963, %v3079
        %v4092 = vsel %vm3836, %v3964, %v3086
        %v4093 = vsel %vm3837, %v3965, %v3093
        %v4094 = vsel %vm3838, %v3966, %v3100
        %v4095 = vsel %vm3839, %v3967, %v3107
        %v4096 = vsel %vm3840, %v3968, %v3114
        %v4097 = vsel %vm3841, %v3969, %v3121
        %v4098 = vsel %vm3842, %v3970, %v3128
        %v4099 = vsel %vm3843, %v3971, %v3135
        %v4100 = vsel %vm3844, %v3972, %v3142
        %v4101 = vsel %vm3845, %v3973, %v3149
        %v4102 = vsel %vm3846, %v3974, %v3156
        %v4103 = vsel %vm3847, %v3975, %v3163
        %v4104 = vsel %vm3848, %v3976, %v3170
        %v4105 = vsel %vm3849, %v3977, %v3177
        %v4106 = vsel %vm3850, %v3978, %v3184
        %v4107 = vsel %vm3851, %v3979, %v3191
        %v4108 = vsel %vm3852, %v3980, %v3198
        %v4109 = vsel %vm3853, %v3981, %v3205
        %v4110 = vsel %vm3854, %v3982, %v3212
        %v4111 = vsel %vm3855, %v3983, %v3219
        %v4112 = vsel %vm3856, %v3984, %v3226
        %v4113 = vsel %vm3857, %v3985, %v3233
        %v4114 = vsel %vm3858, %v3986, %v3240
        %v4115 = vsel %vm3859, %v3987, %v3247
        %v4116 = vsel %vm3860, %v3988, %v3254
        %v4117 = vsel %vm3861, %v3989, %v3261
        %v4118 = vsel %vm3862, %v3990, %v3268
        %v4119 = vsel %vm3863, %v3991, %v3275
        %v4120 = vsel %vm3864, %v3992, %v3282
        %v4121 = vsel %vm3865, %v3993, %v3289
        %v4122 = vsel %vm3866, %v3994, %v3296
        %v4123 = vsel %vm3867, %v3995, %v3303
        %v4124 = vsel %vm3868, %v3996, %v3310
        %v4125 = vsel %vm3869, %v3997, %v3317
        %v4126 = vsel %vm3870, %v3998, %v3324
        %v4127 = vsel %vm3871, %v3999, %v3331
        %v4128 = vsel %vm3872, %v4000, %v3338
        %v4129 = vsel %vm3873, %v4001, %v3345
        %v4130 = vsel %vm3874, %v4002, %v3352
        %v4131 = vsel %vm3875, %v4003, %v3359
        %v4132 = vsel %vm3876, %v4004, %v3366
        %v4133 = vsel %vm3877, %v4005, %v3373
        %v4134 = vsel %vm3878, %v4006, %v3380
        %v4135 = vsel %vm3879, %v4007, %v3387
        %v4136 = vsel %vm3880, %v4008, %v3394
        %v4137 = vsel %vm3881, %v4009, %v3401
        %v4138 = vsel %vm3882, %v4010, %v3408
        %v4139 = vsel %vm3883, %v4011, %v3415
        %v4140 = vsel %vm3884, %v4012, %v3422
        %v4141 = vsel %vm3885, %v4013, %v3429
        %v4142 = vsel %vm3886, %v4014, %v3436
        %v4143 = vsel %vm3887, %v4015, %v3443
        %v4144 = vsel %vm3888, %v4016, %v3450
        %v4145 = vsel %vm3889, %v4017, %v3457
        %v4146 = vsel %vm3890, %v4018, %v3464
        %v4147 = vsel %vm3891, %v4019, %v3471
        %v4148 = vsel %vm3892, %v4020, %v3478
        %v4149 = vsel %vm3893, %v4021, %v3485
        %v4150 = vsel %vm3894, %v4022, %v3492
        %v4151 = vsel %vm3895, %v4023, %v3499
        %v4152 = vsel %vm3896, %v4024, %v3506
        %v4153 = vsel %vm3897, %v4025, %v3513
        %vm4154 = vcmp.eq.s32.totalorder %v4026, 0
        %vm4155 = vcmp.eq.s32.totalorder %v4027, 0
        %vm4156 = vcmp.eq.s32.totalorder %v4028, 0
        %vm4157 = vcmp.eq.s32.totalorder %v4029, 0
        %vm4158 = vcmp.eq.s32.totalorder %v4030, 0
        %vm4159 = vcmp.eq.s32.totalorder %v4031, 0
        %vm4160 = vcmp.eq.s32.totalorder %v4032, 0
        %vm4161 = vcmp.eq.s32.totalorder %v4033, 0
        %vm4162 = vcmp.eq.s32.totalorder %v4034, 0
        %vm4163 = vcmp.eq.s32.totalorder %v4035, 0
        %vm4164 = vcmp.eq.s32.totalorder %v4036, 0
        %vm4165 = vcmp.eq.s32.totalorder %v4037, 0
        %vm4166 = vcmp.eq.s32.totalorder %v4038, 0
        %vm4167 = vcmp.eq.s32.totalorder %v4039, 0
        %vm4168 = vcmp.eq.s32.totalorder %v4040, 0
        %vm4169 = vcmp.eq.s32.totalorder %v4041, 0
        %vm4170 = vcmp.eq.s32.totalorder %v4042, 0
        %vm4171 = vcmp.eq.s32.totalorder %v4043, 0
        %vm4172 = vcmp.eq.s32.totalorder %v4044, 0
        %vm4173 = vcmp.eq.s32.totalorder %v4045, 0
        %vm4174 = vcmp.eq.s32.totalorder %v4046, 0
        %vm4175 = vcmp.eq.s32.totalorder %v4047, 0
        %vm4176 = vcmp.eq.s32.totalorder %v4048, 0
        %vm4177 = vcmp.eq.s32.totalorder %v4049, 0
        %vm4178 = vcmp.eq.s32.totalorder %v4050, 0
        %vm4179 = vcmp.eq.s32.totalorder %v4051, 0
        %vm4180 = vcmp.eq.s32.totalorder %v4052, 0
        %vm4181 = vcmp.eq.s32.totalorder %v4053, 0
        %vm4182 = vcmp.eq.s32.totalorder %v4054, 0
        %vm4183 = vcmp.eq.s32.totalorder %v4055, 0
        %vm4184 = vcmp.eq.s32.totalorder %v4056, 0
        %vm4185 = vcmp.eq.s32.totalorder %v4057, 0
        %vm4186 = vcmp.eq.s32.totalorder %v4058, 0
        %vm4187 = vcmp.eq.s32.totalorder %v4059, 0
        %vm4188 = vcmp.eq.s32.totalorder %v4060, 0
        %vm4189 = vcmp.eq.s32.totalorder %v4061, 0
        %vm4190 = vcmp.eq.s32.totalorder %v4062, 0
        %vm4191 = vcmp.eq.s32.totalorder %v4063, 0
        %vm4192 = vcmp.eq.s32.totalorder %v4064, 0
        %vm4193 = vcmp.eq.s32.totalorder %v4065, 0
        %vm4194 = vcmp.eq.s32.totalorder %v4066, 0
        %vm4195 = vcmp.eq.s32.totalorder %v4067, 0
        %vm4196 = vcmp.eq.s32.totalorder %v4068, 0
        %vm4197 = vcmp.eq.s32.totalorder %v4069, 0
        %vm4198 = vcmp.eq.s32.totalorder %v4070, 0
        %vm4199 = vcmp.eq.s32.totalorder %v4071, 0
        %vm4200 = vcmp.eq.s32.totalorder %v4072, 0
        %vm4201 = vcmp.eq.s32.totalorder %v4073, 0
        %vm4202 = vcmp.eq.s32.totalorder %v4074, 0
        %vm4203 = vcmp.eq.s32.totalorder %v4075, 0
        %vm4204 = vcmp.eq.s32.totalorder %v4076, 0
        %vm4205 = vcmp.eq.s32.totalorder %v4077, 0
        %vm4206 = vcmp.eq.s32.totalorder %v4078, 0
        %vm4207 = vcmp.eq.s32.totalorder %v4079, 0
        %vm4208 = vcmp.eq.s32.totalorder %v4080, 0
        %vm4209 = vcmp.eq.s32.totalorder %v4081, 0
        %vm4210 = vcmp.eq.s32.totalorder %v4082, 0
        %vm4211 = vcmp.eq.s32.totalorder %v4083, 0
        %vm4212 = vcmp.eq.s32.totalorder %v4084, 0
        %vm4213 = vcmp.eq.s32.totalorder %v4085, 0
        %vm4214 = vcmp.eq.s32.totalorder %v4086, 0
        %vm4215 = vcmp.eq.s32.totalorder %v4087, 0
        %vm4216 = vcmp.eq.s32.totalorder %v4088, 0
        %vm4217 = vcmp.eq.s32.totalorder %v4089, 0
        %vm4218 = vcmp.eq.s32.totalorder %v4090, 0
        %vm4219 = vcmp.eq.s32.totalorder %v4091, 0
        %vm4220 = vcmp.eq.s32.totalorder %v4092, 0
        %vm4221 = vcmp.eq.s32.totalorder %v4093, 0
        %vm4222 = vcmp.eq.s32.totalorder %v4094, 0
        %vm4223 = vcmp.eq.s32.totalorder %v4095, 0
        %vm4224 = vcmp.eq.s32.totalorder %v4096, 0
        %vm4225 = vcmp.eq.s32.totalorder %v4097, 0
        %vm4226 = vcmp.eq.s32.totalorder %v4098, 0
        %vm4227 = vcmp.eq.s32.totalorder %v4099, 0
        %vm4228 = vcmp.eq.s32.totalorder %v4100, 0
        %vm4229 = vcmp.eq.s32.totalorder %v4101, 0
        %vm4230 = vcmp.eq.s32.totalorder %v4102, 0
        %vm4231 = vcmp.eq.s32.totalorder %v4103, 0
        %vm4232 = vcmp.eq.s32.totalorder %v4104, 0
        %vm4233 = vcmp.eq.s32.totalorder %v4105, 0
        %vm4234 = vcmp.eq.s32.totalorder %v4106, 0
        %vm4235 = vcmp.eq.s32.totalorder %v4107, 0
        %vm4236 = vcmp.eq.s32.totalorder %v4108, 0
        %vm4237 = vcmp.eq.s32.totalorder %v4109, 0
        %vm4238 = vcmp.eq.s32.totalorder %v4110, 0
        %vm4239 = vcmp.eq.s32.totalorder %v4111, 0
        %vm4240 = vcmp.eq.s32.totalorder %v4112, 0
        %vm4241 = vcmp.eq.s32.totalorder %v4113, 0
        %vm4242 = vcmp.eq.s32.totalorder %v4114, 0
        %vm4243 = vcmp.eq.s32.totalorder %v4115, 0
        %vm4244 = vcmp.eq.s32.totalorder %v4116, 0
        %vm4245 = vcmp.eq.s32.totalorder %v4117, 0
        %vm4246 = vcmp.eq.s32.totalorder %v4118, 0
        %vm4247 = vcmp.eq.s32.totalorder %v4119, 0
        %vm4248 = vcmp.eq.s32.totalorder %v4120, 0
        %vm4249 = vcmp.eq.s32.totalorder %v4121, 0
        %vm4250 = vcmp.eq.s32.totalorder %v4122, 0
        %vm4251 = vcmp.eq.s32.totalorder %v4123, 0
        %vm4252 = vcmp.eq.s32.totalorder %v4124, 0
        %vm4253 = vcmp.eq.s32.totalorder %v4125, 0
        %vm4254 = vcmp.eq.s32.totalorder %v4126, 0
        %vm4255 = vcmp.eq.s32.totalorder %v4127, 0
        %vm4256 = vcmp.eq.s32.totalorder %v4128, 0
        %vm4257 = vcmp.eq.s32.totalorder %v4129, 0
        %vm4258 = vcmp.eq.s32.totalorder %v4130, 0
        %vm4259 = vcmp.eq.s32.totalorder %v4131, 0
        %vm4260 = vcmp.eq.s32.totalorder %v4132, 0
        %vm4261 = vcmp.eq.s32.totalorder %v4133, 0
        %vm4262 = vcmp.eq.s32.totalorder %v4134, 0
        %vm4263 = vcmp.eq.s32.totalorder %v4135, 0
        %vm4264 = vcmp.eq.s32.totalorder %v4136, 0
        %vm4265 = vcmp.eq.s32.totalorder %v4137, 0
        %vm4266 = vcmp.eq.s32.totalorder %v4138, 0
        %vm4267 = vcmp.eq.s32.totalorder %v4139, 0
        %vm4268 = vcmp.eq.s32.totalorder %v4140, 0
        %vm4269 = vcmp.eq.s32.totalorder %v4141, 0
        %vm4270 = vcmp.eq.s32.totalorder %v4142, 0
        %vm4271 = vcmp.eq.s32.totalorder %v4143, 0
        %vm4272 = vcmp.eq.s32.totalorder %v4144, 0
        %vm4273 = vcmp.eq.s32.totalorder %v4145, 0
        %vm4274 = vcmp.eq.s32.totalorder %v4146, 0
        %vm4275 = vcmp.eq.s32.totalorder %v4147, 0
        %vm4276 = vcmp.eq.s32.totalorder %v4148, 0
        %vm4277 = vcmp.eq.s32.totalorder %v4149, 0
        %vm4278 = vcmp.eq.s32.totalorder %v4150, 0
        %vm4279 = vcmp.eq.s32.totalorder %v4151, 0
        %vm4280 = vcmp.eq.s32.totalorder %v4152, 0
        %vm4281 = vcmp.eq.s32.totalorder %v4153, 0
        %v4282 = vrot.slane %v2297, 7
        %v4283 = vrot.slane %v2298, 7
        %v4284 = vrot.slane %v2299, 7
        %v4285 = vrot.slane %v2300, 7
        %v4286 = vrot.slane %v2301, 7
        %v4287 = vrot.slane %v2302, 7
        %v4288 = vrot.slane %v2303, 7
        %v4289 = vrot.slane %v2304, 7
        %v4290 = vrot.slane %v2305, 7
        %v4291 = vrot.slane %v2306, 7
        %v4292 = vrot.slane %v2307, 7
        %v4293 = vrot.slane %v2308, 7
        %v4294 = vrot.slane %v2309, 7
        %v4295 = vrot.slane %v2310, 7
        %v4296 = vrot.slane %v2311, 7
        %v4297 = vrot.slane %v2312, 7
        %v4298 = vrot.slane %v2313, 7
        %v4299 = vrot.slane %v2314, 7
        %v4300 = vrot.slane %v2315, 7
        %v4301 = vrot.slane %v2316, 7
        %v4302 = vrot.slane %v2317, 7
        %v4303 = vrot.slane %v2318, 7
        %v4304 = vrot.slane %v2319, 7
        %v4305 = vrot.slane %v2320, 7
        %v4306 = vrot.slane %v2321, 7
        %v4307 = vrot.slane %v2322, 7
        %v4308 = vrot.slane %v2323, 7
        %v4309 = vrot.slane %v2324, 7
        %v4310 = vrot.slane %v2325, 7
        %v4311 = vrot.slane %v2326, 7
        %v4312 = vrot.slane %v2327, 7
        %v4313 = vrot.slane %v2328, 7
        %v4314 = vrot.slane %v2329, 7
        %v4315 = vrot.slane %v2330, 7
        %v4316 = vrot.slane %v2331, 7
        %v4317 = vrot.slane %v2332, 7
        %v4318 = vrot.slane %v2333, 7
        %v4319 = vrot.slane %v2334, 7
        %v4320 = vrot.slane %v2335, 7
        %v4321 = vrot.slane %v2336, 7
        %v4322 = vrot.slane %v2337, 7
        %v4323 = vrot.slane %v2338, 7
        %v4324 = vrot.slane %v2339, 7
        %v4325 = vrot.slane %v2340, 7
        %v4326 = vrot.slane %v2341, 7
        %v4327 = vrot.slane %v2342, 7
        %v4328 = vrot.slane %v2343, 7
        %v4329 = vrot.slane %v2344, 7
        %v4330 = vrot.slane %v2345, 7
        %v4331 = vrot.slane %v2346, 7
        %v4332 = vrot.slane %v2347, 7
        %v4333 = vrot.slane %v2348, 7
        %v4334 = vrot.slane %v2349, 7
        %v4335 = vrot.slane %v2350, 7
        %v4336 = vrot.slane %v2351, 7
        %v4337 = vrot.slane %v2352, 7
        %v4338 = vrot.slane %v2353, 7
        %v4339 = vrot.slane %v2354, 7
        %v4340 = vrot.slane %v2355, 7
        %v4341 = vrot.slane %v2356, 7
        %v4342 = vrot.slane %v2357, 7
        %v4343 = vrot.slane %v2358, 7
        %v4344 = vrot.slane %v2359, 7
        %v4345 = vrot.slane %v2360, 7
        %v4346 = vrot.slane %v2361, 7
        %v4347 = vrot.slane %v2362, 7
        %v4348 = vrot.slane %v2363, 7
        %v4349 = vrot.slane %v2364, 7
        %v4350 = vrot.slane %v2365, 7
        %v4351 = vrot.slane %v2366, 7
        %v4352 = vrot.slane %v2367, 7
        %v4353 = vrot.slane %v2368, 7
        %v4354 = vrot.slane %v2369, 7
        %v4355 = vrot.slane %v2370, 7
        %v4356 = vrot.slane %v2371, 7
        %v4357 = vrot.slane %v2372, 7
        %v4358 = vrot.slane %v2373, 7
        %v4359 = vrot.slane %v2374, 7
        %v4360 = vrot.slane %v2375, 7
        %v4361 = vrot.slane %v2376, 7
        %v4362 = vrot.slane %v2377, 7
        %v4363 = vrot.slane %v2378, 7
        %v4364 = vrot.slane %v2379, 7
        %v4365 = vrot.slane %v2380, 7
        %v4366 = vrot.slane %v2381, 7
        %v4367 = vrot.slane %v2382, 7
        %v4368 = vrot.slane %v2383, 7
        %v4369 = vrot.slane %v2384, 7
        %v4370 = vrot.slane %v2385, 7
        %v4371 = vrot.slane %v2386, 7
        %v4372 = vrot.slane %v2387, 7
        %v4373 = vrot.slane %v2388, 7
        %v4374 = vrot.slane %v2389, 7
        %v4375 = vrot.slane %v2390, 7
        %v4376 = vrot.slane %v2391, 7
        %v4377 = vrot.slane %v2392, 7
        %v4378 = vrot.slane %v2393, 7
        %v4379 = vrot.slane %v2394, 7
        %v4380 = vrot.slane %v2395, 7
        %v4381 = vrot.slane %v2396, 7
        %v4382 = vrot.slane %v2397, 7
        %v4383 = vrot.slane %v2398, 7
        %v4384 = vrot.slane %v2399, 7
        %v4385 = vrot.slane %v2400, 7
        %v4386 = vrot.slane %v2401, 7
        %v4387 = vrot.slane %v2402, 7
        %v4388 = vrot.slane %v2403, 7
        %v4389 = vrot.slane %v2404, 7
        %v4390 = vrot.slane %v2405, 7
        %v4391 = vrot.slane %v2406, 7
        %v4392 = vrot.slane %v2407, 7
        %v4393 = vrot.slane %v2408, 7
        %v4394 = vrot.slane %v2409, 7
        %v4395 = vrot.slane %v2410, 7
        %v4396 = vrot.slane %v2411, 7
        %v4397 = vrot.slane %v2412, 7
        %v4398 = vrot.slane %v2413, 7
        %v4399 = vrot.slane %v2414, 7
        %v4400 = vrot.slane %v2415, 7
        %v4401 = vrot.slane %v2416, 7
        %v4402 = vrot.slane %v2417, 7
        %v4403 = vrot.slane %v2418, 7
        %v4404 = vrot.slane %v2419, 7
        %v4405 = vrot.slane %v2420, 7
        %v4406 = vrot.slane %v2421, 7
        %v4407 = vrot.slane %v2422, 7
        %v4408 = vrot.slane %v2423, 7
        %v4409 = vrot.slane %v2424, 7
        %vm4410 = vcmp.lt.s32.totalorder %v2490, 1
        %v4411 = vsel %vm4410, %v4408, %v4409
        %v4412 = vsel %vm4410, %v4407, %v4408
        %v4413 = vsel %vm4410, %v4406, %v4407
        %v4414 = vsel %vm4410, %v4405, %v4406
        %v4415 = vsel %vm4410, %v4404, %v4405
        %v4416 = vsel %vm4410, %v4403, %v4404
        %v4417 = vsel %vm4410, %v4402, %v4403
        %v4418 = vsel %vm4410, %v4401, %v4402
        %v4419 = vsel %vm4410, %v4400, %v4401
        %v4420 = vsel %vm4410, %v4399, %v4400
        %v4421 = vsel %vm4410, %v4398, %v4399
        %v4422 = vsel %vm4410, %v4397, %v4398
        %v4423 = vsel %vm4410, %v4396, %v4397
        %v4424 = vsel %vm4410, %v4395, %v4396
        %v4425 = vsel %vm4410, %v4394, %v4395
        %v4426 = vsel %vm4410, %v4393, %v4394
        %v4427 = vsel %vm4410, %v4392, %v4393
        %v4428 = vsel %vm4410, %v4391, %v4392
        %v4429 = vsel %vm4410, %v4390, %v4391
        %v4430 = vsel %vm4410, %v4389, %v4390
        %v4431 = vsel %vm4410, %v4388, %v4389
        %v4432 = vsel %vm4410, %v4387, %v4388
        %v4433 = vsel %vm4410, %v4386, %v4387
        %v4434 = vsel %vm4410, %v4385, %v4386
        %v4435 = vsel %vm4410, %v4384, %v4385
        %v4436 = vsel %vm4410, %v4383, %v4384
        %v4437 = vsel %vm4410, %v4382, %v4383
        %v4438 = vsel %vm4410, %v4381, %v4382
        %v4439 = vsel %vm4410, %v4380, %v4381
        %v4440 = vsel %vm4410, %v4379, %v4380
        %v4441 = vsel %vm4410, %v4378, %v4379
        %v4442 = vsel %vm4410, %v4377, %v4378
        %v4443 = vsel %vm4410, %v4376, %v4377
        %v4444 = vsel %vm4410, %v4375, %v4376
        %v4445 = vsel %vm4410, %v4374, %v4375
        %v4446 = vsel %vm4410, %v4373, %v4374
        %v4447 = vsel %vm4410, %v4372, %v4373
        %v4448 = vsel %vm4410, %v4371, %v4372
        %v4449 = vsel %vm4410, %v4370, %v4371
        %v4450 = vsel %vm4410, %v4369, %v4370
        %v4451 = vsel %vm4410, %v4368, %v4369
        %v4452 = vsel %vm4410, %v4367, %v4368
        %v4453 = vsel %vm4410, %v4366, %v4367
        %v4454 = vsel %vm4410, %v4365, %v4366
        %v4455 = vsel %vm4410, %v4364, %v4365
        %v4456 = vsel %vm4410, %v4363, %v4364
        %v4457 = vsel %vm4410, %v4362, %v4363
        %v4458 = vsel %vm4410, %v4361, %v4362
        %v4459 = vsel %vm4410, %v4360, %v4361
        %v4460 = vsel %vm4410, %v4359, %v4360
        %v4461 = vsel %vm4410, %v4358, %v4359
        %v4462 = vsel %vm4410, %v4357, %v4358
        %v4463 = vsel %vm4410, %v4356, %v4357
        %v4464 = vsel %vm4410, %v4355, %v4356
        %v4465 = vsel %vm4410, %v4354, %v4355
        %v4466 = vsel %vm4410, %v4353, %v4354
        %v4467 = vsel %vm4410, %v4352, %v4353
        %v4468 = vsel %vm4410, %v4351, %v4352
        %v4469 = vsel %vm4410, %v4350, %v4351
        %v4470 = vsel %vm4410, %v4349, %v4350
        %v4471 = vsel %vm4410, %v4348, %v4349
        %v4472 = vsel %vm4410, %v4347, %v4348
        %v4473 = vsel %vm4410, %v4346, %v4347
        %v4474 = vsel %vm4410, %v4345, %v4346
        %v4475 = vsel %vm4410, %v4344, %v4345
        %v4476 = vsel %vm4410, %v4343, %v4344
        %v4477 = vsel %vm4410, %v4342, %v4343
        %v4478 = vsel %vm4410, %v4341, %v4342
        %v4479 = vsel %vm4410, %v4340, %v4341
        %v4480 = vsel %vm4410, %v4339, %v4340
        %v4481 = vsel %vm4410, %v4338, %v4339
        %v4482 = vsel %vm4410, %v4337, %v4338
        %v4483 = vsel %vm4410, %v4336, %v4337
        %v4484 = vsel %vm4410, %v4335, %v4336
        %v4485 = vsel %vm4410, %v4334, %v4335
        %v4486 = vsel %vm4410, %v4333, %v4334
        %v4487 = vsel %vm4410, %v4332, %v4333
        %v4488 = vsel %vm4410, %v4331, %v4332
        %v4489 = vsel %vm4410, %v4330, %v4331
        %v4490 = vsel %vm4410, %v4329, %v4330
        %v4491 = vsel %vm4410, %v4328, %v4329
        %v4492 = vsel %vm4410, %v4327, %v4328
        %v4493 = vsel %vm4410, %v4326, %v4327
        %v4494 = vsel %vm4410, %v4325, %v4326
        %v4495 = vsel %vm4410, %v4324, %v4325
        %v4496 = vsel %vm4410, %v4323, %v4324
        %v4497 = vsel %vm4410, %v4322, %v4323
        %v4498 = vsel %vm4410, %v4321, %v4322
        %v4499 = vsel %vm4410, %v4320, %v4321
        %v4500 = vsel %vm4410, %v4319, %v4320
        %v4501 = vsel %vm4410, %v4318, %v4319
        %v4502 = vsel %vm4410, %v4317, %v4318
        %v4503 = vsel %vm4410, %v4316, %v4317
        %v4504 = vsel %vm4410, %v4315, %v4316
        %v4505 = vsel %vm4410, %v4314, %v4315
        %v4506 = vsel %vm4410, %v4313, %v4314
        %v4507 = vsel %vm4410, %v4312, %v4313
        %v4508 = vsel %vm4410, %v4311, %v4312
        %v4509 = vsel %vm4410, %v4310, %v4311
        %v4510 = vsel %vm4410, %v4309, %v4310
        %v4511 = vsel %vm4410, %v4308, %v4309
        %v4512 = vsel %vm4410, %v4307, %v4308
        %v4513 = vsel %vm4410, %v4306, %v4307
        %v4514 = vsel %vm4410, %v4305, %v4306
        %v4515 = vsel %vm4410, %v4304, %v4305
        %v4516 = vsel %vm4410, %v4303, %v4304
        %v4517 = vsel %vm4410, %v4302, %v4303
        %v4518 = vsel %vm4410, %v4301, %v4302
        %v4519 = vsel %vm4410, %v4300, %v4301
        %v4520 = vsel %vm4410, %v4299, %v4300
        %v4521 = vsel %vm4410, %v4298, %v4299
        %v4522 = vsel %vm4410, %v4297, %v4298
        %v4523 = vsel %vm4410, %v4296, %v4297
        %v4524 = vsel %vm4410, %v4295, %v4296
        %v4525 = vsel %vm4410, %v4294, %v4295
        %v4526 = vsel %vm4410, %v4293, %v4294
        %v4527 = vsel %vm4410, %v4292, %v4293
        %v4528 = vsel %vm4410, %v4291, %v4292
        %v4529 = vsel %vm4410, %v4290, %v4291
        %v4530 = vsel %vm4410, %v4289, %v4290
        %v4531 = vsel %vm4410, %v4288, %v4289
        %v4532 = vsel %vm4410, %v4287, %v4288
        %v4533 = vsel %vm4410, %v4286, %v4287
        %v4534 = vsel %vm4410, %v4285, %v4286
        %v4535 = vsel %vm4410, %v4284, %v4285
        %v4536 = vsel %vm4410, %v4283, %v4284
        %v4537 = vsel %vm4410, %v4282, %v4283
        %v4538 = vsel %vm4410, %v4409, %v4282
        %v4539 = vsel %vm4154, 0.0, %v4538
        %v4540 = vsel %vm4155, 0.0, %v4537
        %v4541 = vsel %vm4156, 0.0, %v4536
        %v4542 = vsel %vm4157, 0.0, %v4535
        %v4543 = vsel %vm4158, 0.0, %v4534
        %v4544 = vsel %vm4159, 0.0, %v4533
        %v4545 = vsel %vm4160, 0.0, %v4532
        %v4546 = vsel %vm4161, 0.0, %v4531
        %v4547 = vsel %vm4162, 0.0, %v4530
        %v4548 = vsel %vm4163, 0.0, %v4529
        %v4549 = vsel %vm4164, 0.0, %v4528
        %v4550 = vsel %vm4165, 0.0, %v4527
        %v4551 = vsel %vm4166, 0.0, %v4526
        %v4552 = vsel %vm4167, 0.0, %v4525
        %v4553 = vsel %vm4168, 0.0, %v4524
        %v4554 = vsel %vm4169, 0.0, %v4523
        %v4555 = vsel %vm4170, 0.0, %v4522
        %v4556 = vsel %vm4171, 0.0, %v4521
        %v4557 = vsel %vm4172, 0.0, %v4520
        %v4558 = vsel %vm4173, 0.0, %v4519
        %v4559 = vsel %vm4174, 0.0, %v4518
        %v4560 = vsel %vm4175, 0.0, %v4517
        %v4561 = vsel %vm4176, 0.0, %v4516
        %v4562 = vsel %vm4177, 0.0, %v4515
        %v4563 = vsel %vm4178, 0.0, %v4514
        %v4564 = vsel %vm4179, 0.0, %v4513
        %v4565 = vsel %vm4180, 0.0, %v4512
        %v4566 = vsel %vm4181, 0.0, %v4511
        %v4567 = vsel %vm4182, 0.0, %v4510
        %v4568 = vsel %vm4183, 0.0, %v4509
        %v4569 = vsel %vm4184, 0.0, %v4508
        %v4570 = vsel %vm4185, 0.0, %v4507
        %v4571 = vsel %vm4186, 0.0, %v4506
        %v4572 = vsel %vm4187, 0.0, %v4505
        %v4573 = vsel %vm4188, 0.0, %v4504
        %v4574 = vsel %vm4189, 0.0, %v4503
        %v4575 = vsel %vm4190, 0.0, %v4502
        %v4576 = vsel %vm4191, 0.0, %v4501
        %v4577 = vsel %vm4192, 0.0, %v4500
        %v4578 = vsel %vm4193, 0.0, %v4499
        %v4579 = vsel %vm4194, 0.0, %v4498
        %v4580 = vsel %vm4195, 0.0, %v4497
        %v4581 = vsel %vm4196, 0.0, %v4496
        %v4582 = vsel %vm4197, 0.0, %v4495
        %v4583 = vsel %vm4198, 0.0, %v4494
        %v4584 = vsel %vm4199, 0.0, %v4493
        %v4585 = vsel %vm4200, 0.0, %v4492
        %v4586 = vsel %vm4201, 0.0, %v4491
        %v4587 = vsel %vm4202, 0.0, %v4490
        %v4588 = vsel %vm4203, 0.0, %v4489
        %v4589 = vsel %vm4204, 0.0, %v4488
        %v4590 = vsel %vm4205, 0.0, %v4487
        %v4591 = vsel %vm4206, 0.0, %v4486
        %v4592 = vsel %vm4207, 0.0, %v4485
        %v4593 = vsel %vm4208, 0.0, %v4484
        %v4594 = vsel %vm4209, 0.0, %v4483
        %v4595 = vsel %vm4210, 0.0, %v4482
        %v4596 = vsel %vm4211, 0.0, %v4481
        %v4597 = vsel %vm4212, 0.0, %v4480
        %v4598 = vsel %vm4213, 0.0, %v4479
        %v4599 = vsel %vm4214, 0.0, %v4478
        %v4600 = vsel %vm4215, 0.0, %v4477
        %v4601 = vsel %vm4216, 0.0, %v4476
        %v4602 = vsel %vm4217, 0.0, %v4475
        %v4603 = vsel %vm4218, 0.0, %v4474
        %v4604 = vsel %vm4219, 0.0, %v4473
        %v4605 = vsel %vm4220, 0.0, %v4472
        %v4606 = vsel %vm4221, 0.0, %v4471
        %v4607 = vsel %vm4222, 0.0, %v4470
        %v4608 = vsel %vm4223, 0.0, %v4469
        %v4609 = vsel %vm4224, 0.0, %v4468
        %v4610 = vsel %vm4225, 0.0, %v4467
        %v4611 = vsel %vm4226, 0.0, %v4466
        %v4612 = vsel %vm4227, 0.0, %v4465
        %v4613 = vsel %vm4228, 0.0, %v4464
        %v4614 = vsel %vm4229, 0.0, %v4463
        %v4615 = vsel %vm4230, 0.0, %v4462
        %v4616 = vsel %vm4231, 0.0, %v4461
        %v4617 = vsel %vm4232, 0.0, %v4460
        %v4618 = vsel %vm4233, 0.0, %v4459
        %v4619 = vsel %vm4234, 0.0, %v4458
        %v4620 = vsel %vm4235, 0.0, %v4457
        %v4621 = vsel %vm4236, 0.0, %v4456
        %v4622 = vsel %vm4237, 0.0, %v4455
        %v4623 = vsel %vm4238, 0.0, %v4454
        %v4624 = vsel %vm4239, 0.0, %v4453
        %v4625 = vsel %vm4240, 0.0, %v4452
        %v4626 = vsel %vm4241, 0.0, %v4451
        %v4627 = vsel %vm4242, 0.0, %v4450
        %v4628 = vsel %vm4243, 0.0, %v4449
        %v4629 = vsel %vm4244, 0.0, %v4448
        %v4630 = vsel %vm4245, 0.0, %v4447
        %v4631 = vsel %vm4246, 0.0, %v4446
        %v4632 = vsel %vm4247, 0.0, %v4445
        %v4633 = vsel %vm4248, 0.0, %v4444
        %v4634 = vsel %vm4249, 0.0, %v4443
        %v4635 = vsel %vm4250, 0.0, %v4442
        %v4636 = vsel %vm4251, 0.0, %v4441
        %v4637 = vsel %vm4252, 0.0, %v4440
        %v4638 = vsel %vm4253, 0.0, %v4439
        %v4639 = vsel %vm4254, 0.0, %v4438
        %v4640 = vsel %vm4255, 0.0, %v4437
        %v4641 = vsel %vm4256, 0.0, %v4436
        %v4642 = vsel %vm4257, 0.0, %v4435
        %v4643 = vsel %vm4258, 0.0, %v4434
        %v4644 = vsel %vm4259, 0.0, %v4433
        %v4645 = vsel %vm4260, 0.0, %v4432
        %v4646 = vsel %vm4261, 0.0, %v4431
        %v4647 = vsel %vm4262, 0.0, %v4430
        %v4648 = vsel %vm4263, 0.0, %v4429
        %v4649 = vsel %vm4264, 0.0, %v4428
        %v4650 = vsel %vm4265, 0.0, %v4427
        %v4651 = vsel %vm4266, 0.0, %v4426
        %v4652 = vsel %vm4267, 0.0, %v4425
        %v4653 = vsel %vm4268, 0.0, %v4424
        %v4654 = vsel %vm4269, 0.0, %v4423
        %v4655 = vsel %vm4270, 0.0, %v4422
        %v4656 = vsel %vm4271, 0.0, %v4421
        %v4657 = vsel %vm4272, 0.0, %v4420
        %v4658 = vsel %vm4273, 0.0, %v4419
        %v4659 = vsel %vm4274, 0.0, %v4418
        %v4660 = vsel %vm4275, 0.0, %v4417
        %v4661 = vsel %vm4276, 0.0, %v4416
        %v4662 = vsel %vm4277, 0.0, %v4415
        %v4663 = vsel %vm4278, 0.0, %v4414
        %v4664 = vsel %vm4279, 0.0, %v4413
        %v4665 = vsel %vm4280, 0.0, %v4412
        %v4666 = vsel %vm4281, 0.0, %v4411
        %v4667 = vpack.c.bf16 %v4540, %v4539
        %v4668 = vpack.c.bf16 %v4542, %v4541
        %v4669 = vpack.c.bf16 %v4544, %v4543
        %v4670 = vpack.c.bf16 %v4546, %v4545
        %v4671 = vpack.c.bf16 %v4548, %v4547
        %v4672 = vpack.c.bf16 %v4550, %v4549
        %v4673 = vpack.c.bf16 %v4552, %v4551
        %v4674 = vpack.c.bf16 %v4554, %v4553
        %v4675 = vpack.c.bf16 %v4556, %v4555
        %v4676 = vpack.c.bf16 %v4558, %v4557
        %v4677 = vpack.c.bf16 %v4560, %v4559
        %v4678 = vpack.c.bf16 %v4562, %v4561
        %v4679 = vpack.c.bf16 %v4564, %v4563
        %v4680 = vpack.c.bf16 %v4566, %v4565
        %v4681 = vpack.c.bf16 %v4568, %v4567
        %v4682 = vpack.c.bf16 %v4570, %v4569
        %v4683 = vpack.c.bf16 %v4572, %v4571
        %v4684 = vpack.c.bf16 %v4574, %v4573
        %v4685 = vpack.c.bf16 %v4576, %v4575
        %v4686 = vpack.c.bf16 %v4578, %v4577
        %v4687 = vpack.c.bf16 %v4580, %v4579
        %v4688 = vpack.c.bf16 %v4582, %v4581
        %v4689 = vpack.c.bf16 %v4584, %v4583
        %v4690 = vpack.c.bf16 %v4586, %v4585
        %v4691 = vpack.c.bf16 %v4588, %v4587
        %v4692 = vpack.c.bf16 %v4590, %v4589
        %v4693 = vpack.c.bf16 %v4592, %v4591
        %v4694 = vpack.c.bf16 %v4594, %v4593
        %v4695 = vpack.c.bf16 %v4596, %v4595
        %v4696 = vpack.c.bf16 %v4598, %v4597
        %v4697 = vpack.c.bf16 %v4600, %v4599
        %v4698 = vpack.c.bf16 %v4602, %v4601
        %v4699 = vpack.c.bf16 %v4604, %v4603
        %v4700 = vpack.c.bf16 %v4606, %v4605
        %v4701 = vpack.c.bf16 %v4608, %v4607
        %v4702 = vpack.c.bf16 %v4610, %v4609
        %v4703 = vpack.c.bf16 %v4612, %v4611
        %v4704 = vpack.c.bf16 %v4614, %v4613
        %v4705 = vpack.c.bf16 %v4616, %v4615
        %v4706 = vpack.c.bf16 %v4618, %v4617
        %v4707 = vpack.c.bf16 %v4620, %v4619
        %v4708 = vpack.c.bf16 %v4622, %v4621
        %v4709 = vpack.c.bf16 %v4624, %v4623
        %v4710 = vpack.c.bf16 %v4626, %v4625
        %v4711 = vpack.c.bf16 %v4628, %v4627
        %v4712 = vpack.c.bf16 %v4630, %v4629
        %v4713 = vpack.c.bf16 %v4632, %v4631
        %v4714 = vpack.c.bf16 %v4634, %v4633
        %v4715 = vpack.c.bf16 %v4636, %v4635
        %v4716 = vpack.c.bf16 %v4638, %v4637
        %v4717 = vpack.c.bf16 %v4640, %v4639
        %v4718 = vpack.c.bf16 %v4642, %v4641
        %v4719 = vpack.c.bf16 %v4644, %v4643
        %v4720 = vpack.c.bf16 %v4646, %v4645
        %v4721 = vpack.c.bf16 %v4648, %v4647
        %v4722 = vpack.c.bf16 %v4650, %v4649
        %v4723 = vpack.c.bf16 %v4652, %v4651
        %v4724 = vpack.c.bf16 %v4654, %v4653
        %v4725 = vpack.c.bf16 %v4656, %v4655
        %v4726 = vpack.c.bf16 %v4658, %v4657
        %v4727 = vpack.c.bf16 %v4660, %v4659
        %v4728 = vpack.c.bf16 %v4662, %v4661
        %v4729 = vpack.c.bf16 %v4664, %v4663
        %v4730 = vpack.c.bf16 %v4666, %v4665
        %vm4731 = vcmp.eq.s32.totalorder %v4026, 127
        %vm4732 = vcmp.eq.s32.totalorder %v4027, 127
        %vm4733 = vcmp.eq.s32.totalorder %v4028, 127
        %vm4734 = vcmp.eq.s32.totalorder %v4029, 127
        %vm4735 = vcmp.eq.s32.totalorder %v4030, 127
        %vm4736 = vcmp.eq.s32.totalorder %v4031, 127
        %vm4737 = vcmp.eq.s32.totalorder %v4032, 127
        %vm4738 = vcmp.eq.s32.totalorder %v4033, 127
        %vm4739 = vcmp.eq.s32.totalorder %v4034, 127
        %vm4740 = vcmp.eq.s32.totalorder %v4035, 127
        %vm4741 = vcmp.eq.s32.totalorder %v4036, 127
        %vm4742 = vcmp.eq.s32.totalorder %v4037, 127
        %vm4743 = vcmp.eq.s32.totalorder %v4038, 127
        %vm4744 = vcmp.eq.s32.totalorder %v4039, 127
        %vm4745 = vcmp.eq.s32.totalorder %v4040, 127
        %vm4746 = vcmp.eq.s32.totalorder %v4041, 127
        %vm4747 = vcmp.eq.s32.totalorder %v4042, 127
        %vm4748 = vcmp.eq.s32.totalorder %v4043, 127
        %vm4749 = vcmp.eq.s32.totalorder %v4044, 127
        %vm4750 = vcmp.eq.s32.totalorder %v4045, 127
        %vm4751 = vcmp.eq.s32.totalorder %v4046, 127
        %vm4752 = vcmp.eq.s32.totalorder %v4047, 127
        %vm4753 = vcmp.eq.s32.totalorder %v4048, 127
        %vm4754 = vcmp.eq.s32.totalorder %v4049, 127
        %vm4755 = vcmp.eq.s32.totalorder %v4050, 127
        %vm4756 = vcmp.eq.s32.totalorder %v4051, 127
        %vm4757 = vcmp.eq.s32.totalorder %v4052, 127
        %vm4758 = vcmp.eq.s32.totalorder %v4053, 127
        %vm4759 = vcmp.eq.s32.totalorder %v4054, 127
        %vm4760 = vcmp.eq.s32.totalorder %v4055, 127
        %vm4761 = vcmp.eq.s32.totalorder %v4056, 127
        %vm4762 = vcmp.eq.s32.totalorder %v4057, 127
        %vm4763 = vcmp.eq.s32.totalorder %v4058, 127
        %vm4764 = vcmp.eq.s32.totalorder %v4059, 127
        %vm4765 = vcmp.eq.s32.totalorder %v4060, 127
        %vm4766 = vcmp.eq.s32.totalorder %v4061, 127
        %vm4767 = vcmp.eq.s32.totalorder %v4062, 127
        %vm4768 = vcmp.eq.s32.totalorder %v4063, 127
        %vm4769 = vcmp.eq.s32.totalorder %v4064, 127
        %vm4770 = vcmp.eq.s32.totalorder %v4065, 127
        %vm4771 = vcmp.eq.s32.totalorder %v4066, 127
        %vm4772 = vcmp.eq.s32.totalorder %v4067, 127
        %vm4773 = vcmp.eq.s32.totalorder %v4068, 127
        %vm4774 = vcmp.eq.s32.totalorder %v4069, 127
        %vm4775 = vcmp.eq.s32.totalorder %v4070, 127
        %vm4776 = vcmp.eq.s32.totalorder %v4071, 127
        %vm4777 = vcmp.eq.s32.totalorder %v4072, 127
        %vm4778 = vcmp.eq.s32.totalorder %v4073, 127
        %vm4779 = vcmp.eq.s32.totalorder %v4074, 127
        %vm4780 = vcmp.eq.s32.totalorder %v4075, 127
        %vm4781 = vcmp.eq.s32.totalorder %v4076, 127
        %vm4782 = vcmp.eq.s32.totalorder %v4077, 127
        %vm4783 = vcmp.eq.s32.totalorder %v4078, 127
        %vm4784 = vcmp.eq.s32.totalorder %v4079, 127
        %vm4785 = vcmp.eq.s32.totalorder %v4080, 127
        %vm4786 = vcmp.eq.s32.totalorder %v4081, 127
        %vm4787 = vcmp.eq.s32.totalorder %v4082, 127
        %vm4788 = vcmp.eq.s32.totalorder %v4083, 127
        %vm4789 = vcmp.eq.s32.totalorder %v4084, 127
        %vm4790 = vcmp.eq.s32.totalorder %v4085, 127
        %vm4791 = vcmp.eq.s32.totalorder %v4086, 127
        %vm4792 = vcmp.eq.s32.totalorder %v4087, 127
        %vm4793 = vcmp.eq.s32.totalorder %v4088, 127
        %vm4794 = vcmp.eq.s32.totalorder %v4089, 127
        %vm4795 = vcmp.eq.s32.totalorder %v4090, 127
        %vm4796 = vcmp.eq.s32.totalorder %v4091, 127
        %vm4797 = vcmp.eq.s32.totalorder %v4092, 127
        %vm4798 = vcmp.eq.s32.totalorder %v4093, 127
        %vm4799 = vcmp.eq.s32.totalorder %v4094, 127
        %vm4800 = vcmp.eq.s32.totalorder %v4095, 127
        %vm4801 = vcmp.eq.s32.totalorder %v4096, 127
        %vm4802 = vcmp.eq.s32.totalorder %v4097, 127
        %vm4803 = vcmp.eq.s32.totalorder %v4098, 127
        %vm4804 = vcmp.eq.s32.totalorder %v4099, 127
        %vm4805 = vcmp.eq.s32.totalorder %v4100, 127
        %vm4806 = vcmp.eq.s32.totalorder %v4101, 127
        %vm4807 = vcmp.eq.s32.totalorder %v4102, 127
        %vm4808 = vcmp.eq.s32.totalorder %v4103, 127
        %vm4809 = vcmp.eq.s32.totalorder %v4104, 127
        %vm4810 = vcmp.eq.s32.totalorder %v4105, 127
        %vm4811 = vcmp.eq.s32.totalorder %v4106, 127
        %vm4812 = vcmp.eq.s32.totalorder %v4107, 127
        %vm4813 = vcmp.eq.s32.totalorder %v4108, 127
        %vm4814 = vcmp.eq.s32.totalorder %v4109, 127
        %vm4815 = vcmp.eq.s32.totalorder %v4110, 127
        %vm4816 = vcmp.eq.s32.totalorder %v4111, 127
        %vm4817 = vcmp.eq.s32.totalorder %v4112, 127
        %vm4818 = vcmp.eq.s32.totalorder %v4113, 127
        %vm4819 = vcmp.eq.s32.totalorder %v4114, 127
        %vm4820 = vcmp.eq.s32.totalorder %v4115, 127
        %vm4821 = vcmp.eq.s32.totalorder %v4116, 127
        %vm4822 = vcmp.eq.s32.totalorder %v4117, 127
        %vm4823 = vcmp.eq.s32.totalorder %v4118, 127
        %vm4824 = vcmp.eq.s32.totalorder %v4119, 127
        %vm4825 = vcmp.eq.s32.totalorder %v4120, 127
        %vm4826 = vcmp.eq.s32.totalorder %v4121, 127
        %vm4827 = vcmp.eq.s32.totalorder %v4122, 127
        %vm4828 = vcmp.eq.s32.totalorder %v4123, 127
        %vm4829 = vcmp.eq.s32.totalorder %v4124, 127
        %vm4830 = vcmp.eq.s32.totalorder %v4125, 127
        %vm4831 = vcmp.eq.s32.totalorder %v4126, 127
        %vm4832 = vcmp.eq.s32.totalorder %v4127, 127
        %vm4833 = vcmp.eq.s32.totalorder %v4128, 127
        %vm4834 = vcmp.eq.s32.totalorder %v4129, 127
        %vm4835 = vcmp.eq.s32.totalorder %v4130, 127
        %vm4836 = vcmp.eq.s32.totalorder %v4131, 127
        %vm4837 = vcmp.eq.s32.totalorder %v4132, 127
        %vm4838 = vcmp.eq.s32.totalorder %v4133, 127
        %vm4839 = vcmp.eq.s32.totalorder %v4134, 127
        %vm4840 = vcmp.eq.s32.totalorder %v4135, 127
        %vm4841 = vcmp.eq.s32.totalorder %v4136, 127
        %vm4842 = vcmp.eq.s32.totalorder %v4137, 127
        %vm4843 = vcmp.eq.s32.totalorder %v4138, 127
        %vm4844 = vcmp.eq.s32.totalorder %v4139, 127
        %vm4845 = vcmp.eq.s32.totalorder %v4140, 127
        %vm4846 = vcmp.eq.s32.totalorder %v4141, 127
        %vm4847 = vcmp.eq.s32.totalorder %v4142, 127
        %vm4848 = vcmp.eq.s32.totalorder %v4143, 127
        %vm4849 = vcmp.eq.s32.totalorder %v4144, 127
        %vm4850 = vcmp.eq.s32.totalorder %v4145, 127
        %vm4851 = vcmp.eq.s32.totalorder %v4146, 127
        %vm4852 = vcmp.eq.s32.totalorder %v4147, 127
        %vm4853 = vcmp.eq.s32.totalorder %v4148, 127
        %vm4854 = vcmp.eq.s32.totalorder %v4149, 127
        %vm4855 = vcmp.eq.s32.totalorder %v4150, 127
        %vm4856 = vcmp.eq.s32.totalorder %v4151, 127
        %vm4857 = vcmp.eq.s32.totalorder %v4152, 127
        %vm4858 = vcmp.eq.s32.totalorder %v4153, 127
        %v4859 = vrot.slane %v2297, 1
        %v4860 = vrot.slane %v2298, 1
        %v4861 = vrot.slane %v2299, 1
        %v4862 = vrot.slane %v2300, 1
        %v4863 = vrot.slane %v2301, 1
        %v4864 = vrot.slane %v2302, 1
        %v4865 = vrot.slane %v2303, 1
        %v4866 = vrot.slane %v2304, 1
        %v4867 = vrot.slane %v2305, 1
        %v4868 = vrot.slane %v2306, 1
        %v4869 = vrot.slane %v2307, 1
        %v4870 = vrot.slane %v2308, 1
        %v4871 = vrot.slane %v2309, 1
        %v4872 = vrot.slane %v2310, 1
        %v4873 = vrot.slane %v2311, 1
        %v4874 = vrot.slane %v2312, 1
        %v4875 = vrot.slane %v2313, 1
        %v4876 = vrot.slane %v2314, 1
        %v4877 = vrot.slane %v2315, 1
        %v4878 = vrot.slane %v2316, 1
        %v4879 = vrot.slane %v2317, 1
        %v4880 = vrot.slane %v2318, 1
        %v4881 = vrot.slane %v2319, 1
        %v4882 = vrot.slane %v2320, 1
        %v4883 = vrot.slane %v2321, 1
        %v4884 = vrot.slane %v2322, 1
        %v4885 = vrot.slane %v2323, 1
        %v4886 = vrot.slane %v2324, 1
        %v4887 = vrot.slane %v2325, 1
        %v4888 = vrot.slane %v2326, 1
        %v4889 = vrot.slane %v2327, 1
        %v4890 = vrot.slane %v2328, 1
        %v4891 = vrot.slane %v2329, 1
        %v4892 = vrot.slane %v2330, 1
        %v4893 = vrot.slane %v2331, 1
        %v4894 = vrot.slane %v2332, 1
        %v4895 = vrot.slane %v2333, 1
        %v4896 = vrot.slane %v2334, 1
        %v4897 = vrot.slane %v2335, 1
        %v4898 = vrot.slane %v2336, 1
        %v4899 = vrot.slane %v2337, 1
        %v4900 = vrot.slane %v2338, 1
        %v4901 = vrot.slane %v2339, 1
        %v4902 = vrot.slane %v2340, 1
        %v4903 = vrot.slane %v2341, 1
        %v4904 = vrot.slane %v2342, 1
        %v4905 = vrot.slane %v2343, 1
        %v4906 = vrot.slane %v2344, 1
        %v4907 = vrot.slane %v2345, 1
        %v4908 = vrot.slane %v2346, 1
        %v4909 = vrot.slane %v2347, 1
        %v4910 = vrot.slane %v2348, 1
        %v4911 = vrot.slane %v2349, 1
        %v4912 = vrot.slane %v2350, 1
        %v4913 = vrot.slane %v2351, 1
        %v4914 = vrot.slane %v2352, 1
        %v4915 = vrot.slane %v2353, 1
        %v4916 = vrot.slane %v2354, 1
        %v4917 = vrot.slane %v2355, 1
        %v4918 = vrot.slane %v2356, 1
        %v4919 = vrot.slane %v2357, 1
        %v4920 = vrot.slane %v2358, 1
        %v4921 = vrot.slane %v2359, 1
        %v4922 = vrot.slane %v2360, 1
        %v4923 = vrot.slane %v2361, 1
        %v4924 = vrot.slane %v2362, 1
        %v4925 = vrot.slane %v2363, 1
        %v4926 = vrot.slane %v2364, 1
        %v4927 = vrot.slane %v2365, 1
        %v4928 = vrot.slane %v2366, 1
        %v4929 = vrot.slane %v2367, 1
        %v4930 = vrot.slane %v2368, 1
        %v4931 = vrot.slane %v2369, 1
        %v4932 = vrot.slane %v2370, 1
        %v4933 = vrot.slane %v2371, 1
        %v4934 = vrot.slane %v2372, 1
        %v4935 = vrot.slane %v2373, 1
        %v4936 = vrot.slane %v2374, 1
        %v4937 = vrot.slane %v2375, 1
        %v4938 = vrot.slane %v2376, 1
        %v4939 = vrot.slane %v2377, 1
        %v4940 = vrot.slane %v2378, 1
        %v4941 = vrot.slane %v2379, 1
        %v4942 = vrot.slane %v2380, 1
        %v4943 = vrot.slane %v2381, 1
        %v4944 = vrot.slane %v2382, 1
        %v4945 = vrot.slane %v2383, 1
        %v4946 = vrot.slane %v2384, 1
        %v4947 = vrot.slane %v2385, 1
        %v4948 = vrot.slane %v2386, 1
        %v4949 = vrot.slane %v2387, 1
        %v4950 = vrot.slane %v2388, 1
        %v4951 = vrot.slane %v2389, 1
        %v4952 = vrot.slane %v2390, 1
        %v4953 = vrot.slane %v2391, 1
        %v4954 = vrot.slane %v2392, 1
        %v4955 = vrot.slane %v2393, 1
        %v4956 = vrot.slane %v2394, 1
        %v4957 = vrot.slane %v2395, 1
        %v4958 = vrot.slane %v2396, 1
        %v4959 = vrot.slane %v2397, 1
        %v4960 = vrot.slane %v2398, 1
        %v4961 = vrot.slane %v2399, 1
        %v4962 = vrot.slane %v2400, 1
        %v4963 = vrot.slane %v2401, 1
        %v4964 = vrot.slane %v2402, 1
        %v4965 = vrot.slane %v2403, 1
        %v4966 = vrot.slane %v2404, 1
        %v4967 = vrot.slane %v2405, 1
        %v4968 = vrot.slane %v2406, 1
        %v4969 = vrot.slane %v2407, 1
        %v4970 = vrot.slane %v2408, 1
        %v4971 = vrot.slane %v2409, 1
        %v4972 = vrot.slane %v2410, 1
        %v4973 = vrot.slane %v2411, 1
        %v4974 = vrot.slane %v2412, 1
        %v4975 = vrot.slane %v2413, 1
        %v4976 = vrot.slane %v2414, 1
        %v4977 = vrot.slane %v2415, 1
        %v4978 = vrot.slane %v2416, 1
        %v4979 = vrot.slane %v2417, 1
        %v4980 = vrot.slane %v2418, 1
        %v4981 = vrot.slane %v2419, 1
        %v4982 = vrot.slane %v2420, 1
        %v4983 = vrot.slane %v2421, 1
        %v4984 = vrot.slane %v2422, 1
        %v4985 = vrot.slane %v2423, 1
        %v4986 = vrot.slane %v2424, 1
        %vm4987 = vcmp.lt.s32.totalorder %v2490, 7
        %v4988 = vsel %vm4987, %v4985, %v4986
        %v4989 = vsel %vm4987, %v4984, %v4985
        %v4990 = vsel %vm4987, %v4983, %v4984
        %v4991 = vsel %vm4987, %v4982, %v4983
        %v4992 = vsel %vm4987, %v4981, %v4982
        %v4993 = vsel %vm4987, %v4980, %v4981
        %v4994 = vsel %vm4987, %v4979, %v4980
        %v4995 = vsel %vm4987, %v4978, %v4979
        %v4996 = vsel %vm4987, %v4977, %v4978
        %v4997 = vsel %vm4987, %v4976, %v4977
        %v4998 = vsel %vm4987, %v4975, %v4976
        %v4999 = vsel %vm4987, %v4974, %v4975
        %v5000 = vsel %vm4987, %v4973, %v4974
        %v5001 = vsel %vm4987, %v4972, %v4973
        %v5002 = vsel %vm4987, %v4971, %v4972
        %v5003 = vsel %vm4987, %v4970, %v4971
        %v5004 = vsel %vm4987, %v4969, %v4970
        %v5005 = vsel %vm4987, %v4968, %v4969
        %v5006 = vsel %vm4987, %v4967, %v4968
        %v5007 = vsel %vm4987, %v4966, %v4967
        %v5008 = vsel %vm4987, %v4965, %v4966
        %v5009 = vsel %vm4987, %v4964, %v4965
        %v5010 = vsel %vm4987, %v4963, %v4964
        %v5011 = vsel %vm4987, %v4962, %v4963
        %v5012 = vsel %vm4987, %v4961, %v4962
        %v5013 = vsel %vm4987, %v4960, %v4961
        %v5014 = vsel %vm4987, %v4959, %v4960
        %v5015 = vsel %vm4987, %v4958, %v4959
        %v5016 = vsel %vm4987, %v4957, %v4958
        %v5017 = vsel %vm4987, %v4956, %v4957
        %v5018 = vsel %vm4987, %v4955, %v4956
        %v5019 = vsel %vm4987, %v4954, %v4955
        %v5020 = vsel %vm4987, %v4953, %v4954
        %v5021 = vsel %vm4987, %v4952, %v4953
        %v5022 = vsel %vm4987, %v4951, %v4952
        %v5023 = vsel %vm4987, %v4950, %v4951
        %v5024 = vsel %vm4987, %v4949, %v4950
        %v5025 = vsel %vm4987, %v4948, %v4949
        %v5026 = vsel %vm4987, %v4947, %v4948
        %v5027 = vsel %vm4987, %v4946, %v4947
        %v5028 = vsel %vm4987, %v4945, %v4946
        %v5029 = vsel %vm4987, %v4944, %v4945
        %v5030 = vsel %vm4987, %v4943, %v4944
        %v5031 = vsel %vm4987, %v4942, %v4943
        %v5032 = vsel %vm4987, %v4941, %v4942
        %v5033 = vsel %vm4987, %v4940, %v4941
        %v5034 = vsel %vm4987, %v4939, %v4940
        %v5035 = vsel %vm4987, %v4938, %v4939
        %v5036 = vsel %vm4987, %v4937, %v4938
        %v5037 = vsel %vm4987, %v4936, %v4937
        %v5038 = vsel %vm4987, %v4935, %v4936
        %v5039 = vsel %vm4987, %v4934, %v4935
        %v5040 = vsel %vm4987, %v4933, %v4934
        %v5041 = vsel %vm4987, %v4932, %v4933
        %v5042 = vsel %vm4987, %v4931, %v4932
        %v5043 = vsel %vm4987, %v4930, %v4931
        %v5044 = vsel %vm4987, %v4929, %v4930
        %v5045 = vsel %vm4987, %v4928, %v4929
        %v5046 = vsel %vm4987, %v4927, %v4928
        %v5047 = vsel %vm4987, %v4926, %v4927
        %v5048 = vsel %vm4987, %v4925, %v4926
        %v5049 = vsel %vm4987, %v4924, %v4925
        %v5050 = vsel %vm4987, %v4923, %v4924
        %v5051 = vsel %vm4987, %v4922, %v4923
        %v5052 = vsel %vm4987, %v4921, %v4922
        %v5053 = vsel %vm4987, %v4920, %v4921
        %v5054 = vsel %vm4987, %v4919, %v4920
        %v5055 = vsel %vm4987, %v4918, %v4919
        %v5056 = vsel %vm4987, %v4917, %v4918
        %v5057 = vsel %vm4987, %v4916, %v4917
        %v5058 = vsel %vm4987, %v4915, %v4916
        %v5059 = vsel %vm4987, %v4914, %v4915
        %v5060 = vsel %vm4987, %v4913, %v4914
        %v5061 = vsel %vm4987, %v4912, %v4913
        %v5062 = vsel %vm4987, %v4911, %v4912
        %v5063 = vsel %vm4987, %v4910, %v4911
        %v5064 = vsel %vm4987, %v4909, %v4910
        %v5065 = vsel %vm4987, %v4908, %v4909
        %v5066 = vsel %vm4987, %v4907, %v4908
        %v5067 = vsel %vm4987, %v4906, %v4907
        %v5068 = vsel %vm4987, %v4905, %v4906
        %v5069 = vsel %vm4987, %v4904, %v4905
        %v5070 = vsel %vm4987, %v4903, %v4904
        %v5071 = vsel %vm4987, %v4902, %v4903
        %v5072 = vsel %vm4987, %v4901, %v4902
        %v5073 = vsel %vm4987, %v4900, %v4901
        %v5074 = vsel %vm4987, %v4899, %v4900
        %v5075 = vsel %vm4987, %v4898, %v4899
        %v5076 = vsel %vm4987, %v4897, %v4898
        %v5077 = vsel %vm4987, %v4896, %v4897
        %v5078 = vsel %vm4987, %v4895, %v4896
        %v5079 = vsel %vm4987, %v4894, %v4895
        %v5080 = vsel %vm4987, %v4893, %v4894
        %v5081 = vsel %vm4987, %v4892, %v4893
        %v5082 = vsel %vm4987, %v4891, %v4892
        %v5083 = vsel %vm4987, %v4890, %v4891
        %v5084 = vsel %vm4987, %v4889, %v4890
        %v5085 = vsel %vm4987, %v4888, %v4889
        %v5086 = vsel %vm4987, %v4887, %v4888
        %v5087 = vsel %vm4987, %v4886, %v4887
        %v5088 = vsel %vm4987, %v4885, %v4886
        %v5089 = vsel %vm4987, %v4884, %v4885
        %v5090 = vsel %vm4987, %v4883, %v4884
        %v5091 = vsel %vm4987, %v4882, %v4883
        %v5092 = vsel %vm4987, %v4881, %v4882
        %v5093 = vsel %vm4987, %v4880, %v4881
        %v5094 = vsel %vm4987, %v4879, %v4880
        %v5095 = vsel %vm4987, %v4878, %v4879
        %v5096 = vsel %vm4987, %v4877, %v4878
        %v5097 = vsel %vm4987, %v4876, %v4877
        %v5098 = vsel %vm4987, %v4875, %v4876
        %v5099 = vsel %vm4987, %v4874, %v4875
        %v5100 = vsel %vm4987, %v4873, %v4874
        %v5101 = vsel %vm4987, %v4872, %v4873
        %v5102 = vsel %vm4987, %v4871, %v4872
        %v5103 = vsel %vm4987, %v4870, %v4871
        %v5104 = vsel %vm4987, %v4869, %v4870
        %v5105 = vsel %vm4987, %v4868, %v4869
        %v5106 = vsel %vm4987, %v4867, %v4868
        %v5107 = vsel %vm4987, %v4866, %v4867
        %v5108 = vsel %vm4987, %v4865, %v4866
        %v5109 = vsel %vm4987, %v4864, %v4865
        %v5110 = vsel %vm4987, %v4863, %v4864
        %v5111 = vsel %vm4987, %v4862, %v4863
        %v5112 = vsel %vm4987, %v4861, %v4862
        %v5113 = vsel %vm4987, %v4860, %v4861
        %v5114 = vsel %vm4987, %v4859, %v4860
        %v5115 = vsel %vm4987, %v4986, %v4859
        %v5116 = vsel %vm4731, 0.0, %v5114
        %v5117 = vsel %vm4732, 0.0, %v5113
        %v5118 = vsel %vm4733, 0.0, %v5112
        %v5119 = vsel %vm4734, 0.0, %v5111
        %v5120 = vsel %vm4735, 0.0, %v5110
        %v5121 = vsel %vm4736, 0.0, %v5109
        %v5122 = vsel %vm4737, 0.0, %v5108
        %v5123 = vsel %vm4738, 0.0, %v5107
        %v5124 = vsel %vm4739, 0.0, %v5106
        %v5125 = vsel %vm4740, 0.0, %v5105
        %v5126 = vsel %vm4741, 0.0, %v5104
        %v5127 = vsel %vm4742, 0.0, %v5103
        %v5128 = vsel %vm4743, 0.0, %v5102
        %v5129 = vsel %vm4744, 0.0, %v5101
        %v5130 = vsel %vm4745, 0.0, %v5100
        %v5131 = vsel %vm4746, 0.0, %v5099
        %v5132 = vsel %vm4747, 0.0, %v5098
        %v5133 = vsel %vm4748, 0.0, %v5097
        %v5134 = vsel %vm4749, 0.0, %v5096
        %v5135 = vsel %vm4750, 0.0, %v5095
        %v5136 = vsel %vm4751, 0.0, %v5094
        %v5137 = vsel %vm4752, 0.0, %v5093
        %v5138 = vsel %vm4753, 0.0, %v5092
        %v5139 = vsel %vm4754, 0.0, %v5091
        %v5140 = vsel %vm4755, 0.0, %v5090
        %v5141 = vsel %vm4756, 0.0, %v5089
        %v5142 = vsel %vm4757, 0.0, %v5088
        %v5143 = vsel %vm4758, 0.0, %v5087
        %v5144 = vsel %vm4759, 0.0, %v5086
        %v5145 = vsel %vm4760, 0.0, %v5085
        %v5146 = vsel %vm4761, 0.0, %v5084
        %v5147 = vsel %vm4762, 0.0, %v5083
        %v5148 = vsel %vm4763, 0.0, %v5082
        %v5149 = vsel %vm4764, 0.0, %v5081
        %v5150 = vsel %vm4765, 0.0, %v5080
        %v5151 = vsel %vm4766, 0.0, %v5079
        %v5152 = vsel %vm4767, 0.0, %v5078
        %v5153 = vsel %vm4768, 0.0, %v5077
        %v5154 = vsel %vm4769, 0.0, %v5076
        %v5155 = vsel %vm4770, 0.0, %v5075
        %v5156 = vsel %vm4771, 0.0, %v5074
        %v5157 = vsel %vm4772, 0.0, %v5073
        %v5158 = vsel %vm4773, 0.0, %v5072
        %v5159 = vsel %vm4774, 0.0, %v5071
        %v5160 = vsel %vm4775, 0.0, %v5070
        %v5161 = vsel %vm4776, 0.0, %v5069
        %v5162 = vsel %vm4777, 0.0, %v5068
        %v5163 = vsel %vm4778, 0.0, %v5067
        %v5164 = vsel %vm4779, 0.0, %v5066
        %v5165 = vsel %vm4780, 0.0, %v5065
        %v5166 = vsel %vm4781, 0.0, %v5064
        %v5167 = vsel %vm4782, 0.0, %v5063
        %v5168 = vsel %vm4783, 0.0, %v5062
        %v5169 = vsel %vm4784, 0.0, %v5061
        %v5170 = vsel %vm4785, 0.0, %v5060
        %v5171 = vsel %vm4786, 0.0, %v5059
        %v5172 = vsel %vm4787, 0.0, %v5058
        %v5173 = vsel %vm4788, 0.0, %v5057
        %v5174 = vsel %vm4789, 0.0, %v5056
        %v5175 = vsel %vm4790, 0.0, %v5055
        %v5176 = vsel %vm4791, 0.0, %v5054
        %v5177 = vsel %vm4792, 0.0, %v5053
        %v5178 = vsel %vm4793, 0.0, %v5052
        %v5179 = vsel %vm4794, 0.0, %v5051
        %v5180 = vsel %vm4795, 0.0, %v5050
        %v5181 = vsel %vm4796, 0.0, %v5049
        %v5182 = vsel %vm4797, 0.0, %v5048
        %v5183 = vsel %vm4798, 0.0, %v5047
        %v5184 = vsel %vm4799, 0.0, %v5046
        %v5185 = vsel %vm4800, 0.0, %v5045
        %v5186 = vsel %vm4801, 0.0, %v5044
        %v5187 = vsel %vm4802, 0.0, %v5043
        %v5188 = vsel %vm4803, 0.0, %v5042
        %v5189 = vsel %vm4804, 0.0, %v5041
        %v5190 = vsel %vm4805, 0.0, %v5040
        %v5191 = vsel %vm4806, 0.0, %v5039
        %v5192 = vsel %vm4807, 0.0, %v5038
        %v5193 = vsel %vm4808, 0.0, %v5037
        %v5194 = vsel %vm4809, 0.0, %v5036
        %v5195 = vsel %vm4810, 0.0, %v5035
        %v5196 = vsel %vm4811, 0.0, %v5034
        %v5197 = vsel %vm4812, 0.0, %v5033
        %v5198 = vsel %vm4813, 0.0, %v5032
        %v5199 = vsel %vm4814, 0.0, %v5031
        %v5200 = vsel %vm4815, 0.0, %v5030
        %v5201 = vsel %vm4816, 0.0, %v5029
        %v5202 = vsel %vm4817, 0.0, %v5028
        %v5203 = vsel %vm4818, 0.0, %v5027
        %v5204 = vsel %vm4819, 0.0, %v5026
        %v5205 = vsel %vm4820, 0.0, %v5025
        %v5206 = vsel %vm4821, 0.0, %v5024
        %v5207 = vsel %vm4822, 0.0, %v5023
        %v5208 = vsel %vm4823, 0.0, %v5022
        %v5209 = vsel %vm4824, 0.0, %v5021
        %v5210 = vsel %vm4825, 0.0, %v5020
        %v5211 = vsel %vm4826, 0.0, %v5019
        %v5212 = vsel %vm4827, 0.0, %v5018
        %v5213 = vsel %vm4828, 0.0, %v5017
        %v5214 = vsel %vm4829, 0.0, %v5016
        %v5215 = vsel %vm4830, 0.0, %v5015
        %v5216 = vsel %vm4831, 0.0, %v5014
        %v5217 = vsel %vm4832, 0.0, %v5013
        %v5218 = vsel %vm4833, 0.0, %v5012
        %v5219 = vsel %vm4834, 0.0, %v5011
        %v5220 = vsel %vm4835, 0.0, %v5010
        %v5221 = vsel %vm4836, 0.0, %v5009
        %v5222 = vsel %vm4837, 0.0, %v5008
        %v5223 = vsel %vm4838, 0.0, %v5007
        %v5224 = vsel %vm4839, 0.0, %v5006
        %v5225 = vsel %vm4840, 0.0, %v5005
        %v5226 = vsel %vm4841, 0.0, %v5004
        %v5227 = vsel %vm4842, 0.0, %v5003
        %v5228 = vsel %vm4843, 0.0, %v5002
        %v5229 = vsel %vm4844, 0.0, %v5001
        %v5230 = vsel %vm4845, 0.0, %v5000
        %v5231 = vsel %vm4846, 0.0, %v4999
        %v5232 = vsel %vm4847, 0.0, %v4998
        %v5233 = vsel %vm4848, 0.0, %v4997
        %v5234 = vsel %vm4849, 0.0, %v4996
        %v5235 = vsel %vm4850, 0.0, %v4995
        %v5236 = vsel %vm4851, 0.0, %v4994
        %v5237 = vsel %vm4852, 0.0, %v4993
        %v5238 = vsel %vm4853, 0.0, %v4992
        %v5239 = vsel %vm4854, 0.0, %v4991
        %v5240 = vsel %vm4855, 0.0, %v4990
        %v5241 = vsel %vm4856, 0.0, %v4989
        %v5242 = vsel %vm4857, 0.0, %v4988
        %v5243 = vsel %vm4858, 0.0, %v5115
        %v5244 = vpack.c.bf16 %v5117, %v5116
        %v5245 = vpack.c.bf16 %v5119, %v5118
        %v5246 = vpack.c.bf16 %v5121, %v5120
        %v5247 = vpack.c.bf16 %v5123, %v5122
        %v5248 = vpack.c.bf16 %v5125, %v5124
        %v5249 = vpack.c.bf16 %v5127, %v5126
        %v5250 = vpack.c.bf16 %v5129, %v5128
        %v5251 = vpack.c.bf16 %v5131, %v5130
        %v5252 = vpack.c.bf16 %v5133, %v5132
        %v5253 = vpack.c.bf16 %v5135, %v5134
        %v5254 = vpack.c.bf16 %v5137, %v5136
        %v5255 = vpack.c.bf16 %v5139, %v5138
        %v5256 = vpack.c.bf16 %v5141, %v5140
        %v5257 = vpack.c.bf16 %v5143, %v5142
        %v5258 = vpack.c.bf16 %v5145, %v5144
        %v5259 = vpack.c.bf16 %v5147, %v5146
        %v5260 = vpack.c.bf16 %v5149, %v5148
        %v5261 = vpack.c.bf16 %v5151, %v5150
        %v5262 = vpack.c.bf16 %v5153, %v5152
        %v5263 = vpack.c.bf16 %v5155, %v5154
        %v5264 = vpack.c.bf16 %v5157, %v5156
        %v5265 = vpack.c.bf16 %v5159, %v5158
        %v5266 = vpack.c.bf16 %v5161, %v5160
        %v5267 = vpack.c.bf16 %v5163, %v5162
        %v5268 = vpack.c.bf16 %v5165, %v5164
        %v5269 = vpack.c.bf16 %v5167, %v5166
        %v5270 = vpack.c.bf16 %v5169, %v5168
        %v5271 = vpack.c.bf16 %v5171, %v5170
        %v5272 = vpack.c.bf16 %v5173, %v5172
        %v5273 = vpack.c.bf16 %v5175, %v5174
        %v5274 = vpack.c.bf16 %v5177, %v5176
        %v5275 = vpack.c.bf16 %v5179, %v5178
        %v5276 = vpack.c.bf16 %v5181, %v5180
        %v5277 = vpack.c.bf16 %v5183, %v5182
        %v5278 = vpack.c.bf16 %v5185, %v5184
        %v5279 = vpack.c.bf16 %v5187, %v5186
        %v5280 = vpack.c.bf16 %v5189, %v5188
        %v5281 = vpack.c.bf16 %v5191, %v5190
        %v5282 = vpack.c.bf16 %v5193, %v5192
        %v5283 = vpack.c.bf16 %v5195, %v5194
        %v5284 = vpack.c.bf16 %v5197, %v5196
        %v5285 = vpack.c.bf16 %v5199, %v5198
        %v5286 = vpack.c.bf16 %v5201, %v5200
        %v5287 = vpack.c.bf16 %v5203, %v5202
        %v5288 = vpack.c.bf16 %v5205, %v5204
        %v5289 = vpack.c.bf16 %v5207, %v5206
        %v5290 = vpack.c.bf16 %v5209, %v5208
        %v5291 = vpack.c.bf16 %v5211, %v5210
        %v5292 = vpack.c.bf16 %v5213, %v5212
        %v5293 = vpack.c.bf16 %v5215, %v5214
        %v5294 = vpack.c.bf16 %v5217, %v5216
        %v5295 = vpack.c.bf16 %v5219, %v5218
        %v5296 = vpack.c.bf16 %v5221, %v5220
        %v5297 = vpack.c.bf16 %v5223, %v5222
        %v5298 = vpack.c.bf16 %v5225, %v5224
        %v5299 = vpack.c.bf16 %v5227, %v5226
        %v5300 = vpack.c.bf16 %v5229, %v5228
        %v5301 = vpack.c.bf16 %v5231, %v5230
        %v5302 = vpack.c.bf16 %v5233, %v5232
        %v5303 = vpack.c.bf16 %v5235, %v5234
        %v5304 = vpack.c.bf16 %v5237, %v5236
        %v5305 = vpack.c.bf16 %v5239, %v5238
        %v5306 = vpack.c.bf16 %v5241, %v5240
        %v5307 = vpack.c.bf16 %v5243, %v5242
        %v5308 = vld [vmem:[%s5] sm:$0xf]
        %v5309 = vld [vmem:[%s5 + $0x4] sm:$0xf]
        %v5310 = vld [vmem:[%s5 + $0x8] sm:$0xf]
        %v5311 = vld [vmem:[%s5 + $0xc] sm:$0xf]
        %v5312 = vld [vmem:[%s5 + $0x10] sm:$0xf]
        %v5313 = vld [vmem:[%s5 + $0x14] sm:$0xf]
        %v5314 = vld [vmem:[%s5 + $0x18] sm:$0xf]
        %v5315 = vld [vmem:[%s5 + $0x1c] sm:$0xf]
        %v5316 = vld [vmem:[%s5 + $0x20] sm:$0xf]
        %v5317 = vld [vmem:[%s5 + $0x24] sm:$0xf]
        %v5318 = vld [vmem:[%s5 + $0x28] sm:$0xf]
        %v5319 = vld [vmem:[%s5 + $0x2c] sm:$0xf]
        %v5320 = vld [vmem:[%s5 + $0x30] sm:$0xf]
        %v5321 = vld [vmem:[%s5 + $0x34] sm:$0xf]
        %v5322 = vld [vmem:[%s5 + $0x38] sm:$0xf]
        %v5323 = vld [vmem:[%s5 + $0x3c] sm:$0xf]
        %s5324 = scalar_lea.vmem %s5, 64
        %v5325 = vld [vmem:[%s5324] sm:$0xf]
        %v5326 = vld [vmem:[%s5324 + $0x4] sm:$0xf]
        %v5327 = vld [vmem:[%s5324 + $0x8] sm:$0xf]
        %v5328 = vld [vmem:[%s5324 + $0xc] sm:$0xf]
        %v5329 = vld [vmem:[%s5324 + $0x10] sm:$0xf]
        %v5330 = vld [vmem:[%s5324 + $0x14] sm:$0xf]
        %v5331 = vld [vmem:[%s5324 + $0x18] sm:$0xf]
        %v5332 = vld [vmem:[%s5324 + $0x1c] sm:$0xf]
        %v5333 = vld [vmem:[%s5324 + $0x20] sm:$0xf]
        %v5334 = vld [vmem:[%s5324 + $0x24] sm:$0xf]
        %v5335 = vld [vmem:[%s5324 + $0x28] sm:$0xf]
        %v5336 = vld [vmem:[%s5324 + $0x2c] sm:$0xf]
        %v5337 = vld [vmem:[%s5324 + $0x30] sm:$0xf]
        %v5338 = vld [vmem:[%s5324 + $0x34] sm:$0xf]
        %v5339 = vld [vmem:[%s5324 + $0x38] sm:$0xf]
        %v5340 = vld [vmem:[%s5324 + $0x3c] sm:$0xf]
        %v5357 = vunpack.c.l.b16 %v5325
        %v5358 = vunpack.c.l.b16 %v5326
        %v5359 = vunpack.c.l.b16 %v5327
        %v5360 = vunpack.c.l.b16 %v5328
        %v5361 = vunpack.c.l.b16 %v5329
        %v5362 = vunpack.c.l.b16 %v5330
        %v5363 = vunpack.c.l.b16 %v5331
        %v5364 = vunpack.c.l.b16 %v5332
        %v5365 = vunpack.c.l.b16 %v5333
        %v5366 = vunpack.c.l.b16 %v5334
        %v5367 = vunpack.c.l.b16 %v5335
        %v5368 = vunpack.c.l.b16 %v5336
        %v5369 = vunpack.c.l.b16 %v5337
        %v5370 = vunpack.c.l.b16 %v5338
        %v5371 = vunpack.c.l.b16 %v5339
        %v5372 = vunpack.c.l.b16 %v5340
        %v5373 = vpack.c.b16 %v5358, %v5357
        %v5374 = vpack.c.b16 %v5360, %v5359
        %v5375 = vpack.c.b16 %v5362, %v5361
        %v5376 = vpack.c.b16 %v5364, %v5363
        %v5377 = vpack.c.b16 %v5366, %v5365
        %v5378 = vpack.c.b16 %v5368, %v5367
        %v5379 = vpack.c.b16 %v5370, %v5369
        %v5380 = vpack.c.b16 %v5372, %v5371
        %5389 = vmatpush.bf16.msra.mxu0 %v5380
        %5390 = vmatpush.bf16.msra.mxu0 %v5379
        %5391 = vmatpush.bf16.msra.mxu0 %v5378
        %5392 = vmatpush.bf16.msra.mxu0 %v5377
        %5393 = vmatpush.bf16.msra.mxu0 %v5376
        %5394 = vmatpush.bf16.msra.mxu0 %v5375
        %5395 = vmatpush.bf16.msra.mxu0 %v5374
        %5396 = vmatpush.bf16.msra.mxu0 %v5373
        %5397 = vmatmul.bf16.gmra.mxu0 %v2425
        %v5398 = vpop.f32.mrf.mxu0
        %v5399 = vadd.f32 0.0, %v5398
        %v5400 = vpop.f32.mrf.mxu0
        %v5401 = vadd.f32 0.0, %v5400
        %5402 = vmatmul.bf16.gmra.mxu0 %v2426
        %v5403 = vpop.f32.mrf.mxu0
        %v5404 = vadd.f32 0.0, %v5403
        %v5405 = vpop.f32.mrf.mxu0
        %v5406 = vadd.f32 0.0, %v5405
        %5407 = vmatmul.bf16.gmra.mxu0 %v2427
        %v5408 = vpop.f32.mrf.mxu0
        %v5409 = vadd.f32 0.0, %v5408
        %v5410 = vpop.f32.mrf.mxu0
        %v5411 = vadd.f32 0.0, %v5410
        %5412 = vmatmul.bf16.gmra.mxu0 %v2428
        %v5413 = vpop.f32.mrf.mxu0
        %v5414 = vadd.f32 0.0, %v5413
        %v5415 = vpop.f32.mrf.mxu0
        %v5416 = vadd.f32 0.0, %v5415
        %5417 = vmatmul.bf16.gmra.mxu0 %v2429
        %v5418 = vpop.f32.mrf.mxu0
        %v5419 = vadd.f32 0.0, %v5418
        %v5420 = vpop.f32.mrf.mxu0
        %v5421 = vadd.f32 0.0, %v5420
        %5422 = vmatmul.bf16.gmra.mxu0 %v2430
        %v5423 = vpop.f32.mrf.mxu0
        %v5424 = vadd.f32 0.0, %v5423
        %v5425 = vpop.f32.mrf.mxu0
        %v5426 = vadd.f32 0.0, %v5425
        %5427 = vmatmul.bf16.gmra.mxu0 %v2431
        %v5428 = vpop.f32.mrf.mxu0
        %v5429 = vadd.f32 0.0, %v5428
        %v5430 = vpop.f32.mrf.mxu0
        %v5431 = vadd.f32 0.0, %v5430
        %5432 = vmatmul.bf16.gmra.mxu0 %v2432
        %v5433 = vpop.f32.mrf.mxu0
        %v5434 = vadd.f32 0.0, %v5433
        %v5435 = vpop.f32.mrf.mxu0
        %v5436 = vadd.f32 0.0, %v5435
        %5437 = vmatmul.bf16.gmra.mxu0 %v2433
        %v5438 = vpop.f32.mrf.mxu0
        %v5439 = vadd.f32 0.0, %v5438
        %v5440 = vpop.f32.mrf.mxu0
        %v5441 = vadd.f32 0.0, %v5440
        %5442 = vmatmul.bf16.gmra.mxu0 %v2434
        %v5443 = vpop.f32.mrf.mxu0
        %v5444 = vadd.f32 0.0, %v5443
        %v5445 = vpop.f32.mrf.mxu0
        %v5446 = vadd.f32 0.0, %v5445
        %5447 = vmatmul.bf16.gmra.mxu0 %v2435
        %v5448 = vpop.f32.mrf.mxu0
        %v5449 = vadd.f32 0.0, %v5448
        %v5450 = vpop.f32.mrf.mxu0
        %v5451 = vadd.f32 0.0, %v5450
        %5452 = vmatmul.bf16.gmra.mxu0 %v2436
        %v5453 = vpop.f32.mrf.mxu0
        %v5454 = vadd.f32 0.0, %v5453
        %v5455 = vpop.f32.mrf.mxu0
        %v5456 = vadd.f32 0.0, %v5455
        %5457 = vmatmul.bf16.gmra.mxu0 %v2437
        %v5458 = vpop.f32.mrf.mxu0
        %v5459 = vadd.f32 0.0, %v5458
        %v5460 = vpop.f32.mrf.mxu0
        %v5461 = vadd.f32 0.0, %v5460
        %5462 = vmatmul.bf16.gmra.mxu0 %v2438
        %v5463 = vpop.f32.mrf.mxu0
        %v5464 = vadd.f32 0.0, %v5463
        %v5465 = vpop.f32.mrf.mxu0
        %v5466 = vadd.f32 0.0, %v5465
        %5467 = vmatmul.bf16.gmra.mxu0 %v2439
        %v5468 = vpop.f32.mrf.mxu0
        %v5469 = vadd.f32 0.0, %v5468
        %v5470 = vpop.f32.mrf.mxu0
        %v5471 = vadd.f32 0.0, %v5470
        %5472 = vmatmul.bf16.gmra.mxu0 %v2440
        %v5473 = vpop.f32.mrf.mxu0
        %v5474 = vadd.f32 0.0, %v5473
        %v5475 = vpop.f32.mrf.mxu0
        %v5476 = vadd.f32 0.0, %v5475
        %5477 = vmatmul.bf16.gmra.mxu0 %v2441
        %v5478 = vpop.f32.mrf.mxu0
        %v5479 = vadd.f32 0.0, %v5478
        %v5480 = vpop.f32.mrf.mxu0
        %v5481 = vadd.f32 0.0, %v5480
        %5482 = vmatmul.bf16.gmra.mxu0 %v2442
        %v5483 = vpop.f32.mrf.mxu0
        %v5484 = vadd.f32 0.0, %v5483
        %v5485 = vpop.f32.mrf.mxu0
        %v5486 = vadd.f32 0.0, %v5485
        %5487 = vmatmul.bf16.gmra.mxu0 %v2443
        %v5488 = vpop.f32.mrf.mxu0
        %v5489 = vadd.f32 0.0, %v5488
        %v5490 = vpop.f32.mrf.mxu0
        %v5491 = vadd.f32 0.0, %v5490
        %5492 = vmatmul.bf16.gmra.mxu0 %v2444
        %v5493 = vpop.f32.mrf.mxu0
        %v5494 = vadd.f32 0.0, %v5493
        %v5495 = vpop.f32.mrf.mxu0
        %v5496 = vadd.f32 0.0, %v5495
        %5497 = vmatmul.bf16.gmra.mxu0 %v2445
        %v5498 = vpop.f32.mrf.mxu0
        %v5499 = vadd.f32 0.0, %v5498
        %v5500 = vpop.f32.mrf.mxu0
        %v5501 = vadd.f32 0.0, %v5500
        %5502 = vmatmul.bf16.gmra.mxu0 %v2446
        %v5503 = vpop.f32.mrf.mxu0
        %v5504 = vadd.f32 0.0, %v5503
        %v5505 = vpop.f32.mrf.mxu0
        %v5506 = vadd.f32 0.0, %v5505
        %5507 = vmatmul.bf16.gmra.mxu0 %v2447
        %v5508 = vpop.f32.mrf.mxu0
        %v5509 = vadd.f32 0.0, %v5508
        %v5510 = vpop.f32.mrf.mxu0
        %v5511 = vadd.f32 0.0, %v5510
        %5512 = vmatmul.bf16.gmra.mxu0 %v2448
        %v5513 = vpop.f32.mrf.mxu0
        %v5514 = vadd.f32 0.0, %v5513
        %v5515 = vpop.f32.mrf.mxu0
        %v5516 = vadd.f32 0.0, %v5515
        %5517 = vmatmul.bf16.gmra.mxu0 %v2449
        %v5518 = vpop.f32.mrf.mxu0
        %v5519 = vadd.f32 0.0, %v5518
        %v5520 = vpop.f32.mrf.mxu0
        %v5521 = vadd.f32 0.0, %v5520
        %5522 = vmatmul.bf16.gmra.mxu0 %v2450
        %v5523 = vpop.f32.mrf.mxu0
        %v5524 = vadd.f32 0.0, %v5523
        %v5525 = vpop.f32.mrf.mxu0
        %v5526 = vadd.f32 0.0, %v5525
        %5527 = vmatmul.bf16.gmra.mxu0 %v2451
        %v5528 = vpop.f32.mrf.mxu0
        %v5529 = vadd.f32 0.0, %v5528
        %v5530 = vpop.f32.mrf.mxu0
        %v5531 = vadd.f32 0.0, %v5530
        %5532 = vmatmul.bf16.gmra.mxu0 %v2452
        %v5533 = vpop.f32.mrf.mxu0
        %v5534 = vadd.f32 0.0, %v5533
        %v5535 = vpop.f32.mrf.mxu0
        %v5536 = vadd.f32 0.0, %v5535
        %5537 = vmatmul.bf16.gmra.mxu0 %v2453
        %v5538 = vpop.f32.mrf.mxu0
        %v5539 = vadd.f32 0.0, %v5538
        %v5540 = vpop.f32.mrf.mxu0
        %v5541 = vadd.f32 0.0, %v5540
        %5542 = vmatmul.bf16.gmra.mxu0 %v2454
        %v5543 = vpop.f32.mrf.mxu0
        %v5544 = vadd.f32 0.0, %v5543
        %v5545 = vpop.f32.mrf.mxu0
        %v5546 = vadd.f32 0.0, %v5545
        %5547 = vmatmul.bf16.gmra.mxu0 %v2455
        %v5548 = vpop.f32.mrf.mxu0
        %v5549 = vadd.f32 0.0, %v5548
        %v5550 = vpop.f32.mrf.mxu0
        %v5551 = vadd.f32 0.0, %v5550
        %5552 = vmatmul.bf16.gmra.mxu0 %v2456
        %v5553 = vpop.f32.mrf.mxu0
        %v5554 = vadd.f32 0.0, %v5553
        %v5555 = vpop.f32.mrf.mxu0
        %v5556 = vadd.f32 0.0, %v5555
        %5557 = vmatmul.bf16.gmra.mxu0 %v2457
        %v5558 = vpop.f32.mrf.mxu0
        %v5559 = vadd.f32 0.0, %v5558
        %v5560 = vpop.f32.mrf.mxu0
        %v5561 = vadd.f32 0.0, %v5560
        %5562 = vmatmul.bf16.gmra.mxu0 %v2458
        %v5563 = vpop.f32.mrf.mxu0
        %v5564 = vadd.f32 0.0, %v5563
        %v5565 = vpop.f32.mrf.mxu0
        %v5566 = vadd.f32 0.0, %v5565
        %5567 = vmatmul.bf16.gmra.mxu0 %v2459
        %v5568 = vpop.f32.mrf.mxu0
        %v5569 = vadd.f32 0.0, %v5568
        %v5570 = vpop.f32.mrf.mxu0
        %v5571 = vadd.f32 0.0, %v5570
        %5572 = vmatmul.bf16.gmra.mxu0 %v2460
        %v5573 = vpop.f32.mrf.mxu0
        %v5574 = vadd.f32 0.0, %v5573
        %v5575 = vpop.f32.mrf.mxu0
        %v5576 = vadd.f32 0.0, %v5575
        %5577 = vmatmul.bf16.gmra.mxu0 %v2461
        %v5578 = vpop.f32.mrf.mxu0
        %v5579 = vadd.f32 0.0, %v5578
        %v5580 = vpop.f32.mrf.mxu0
        %v5581 = vadd.f32 0.0, %v5580
        %5582 = vmatmul.bf16.gmra.mxu0 %v2462
        %v5583 = vpop.f32.mrf.mxu0
        %v5584 = vadd.f32 0.0, %v5583
        %v5585 = vpop.f32.mrf.mxu0
        %v5586 = vadd.f32 0.0, %v5585
        %5587 = vmatmul.bf16.gmra.mxu0 %v2463
        %v5588 = vpop.f32.mrf.mxu0
        %v5589 = vadd.f32 0.0, %v5588
        %v5590 = vpop.f32.mrf.mxu0
        %v5591 = vadd.f32 0.0, %v5590
        %5592 = vmatmul.bf16.gmra.mxu0 %v2464
        %v5593 = vpop.f32.mrf.mxu0
        %v5594 = vadd.f32 0.0, %v5593
        %v5595 = vpop.f32.mrf.mxu0
        %v5596 = vadd.f32 0.0, %v5595
        %5597 = vmatmul.bf16.gmra.mxu0 %v2465
        %v5598 = vpop.f32.mrf.mxu0
        %v5599 = vadd.f32 0.0, %v5598
        %v5600 = vpop.f32.mrf.mxu0
        %v5601 = vadd.f32 0.0, %v5600
        %5602 = vmatmul.bf16.gmra.mxu0 %v2466
        %v5603 = vpop.f32.mrf.mxu0
        %v5604 = vadd.f32 0.0, %v5603
        %v5605 = vpop.f32.mrf.mxu0
        %v5606 = vadd.f32 0.0, %v5605
        %5607 = vmatmul.bf16.gmra.mxu0 %v2467
        %v5608 = vpop.f32.mrf.mxu0
        %v5609 = vadd.f32 0.0, %v5608
        %v5610 = vpop.f32.mrf.mxu0
        %v5611 = vadd.f32 0.0, %v5610
        %5612 = vmatmul.bf16.gmra.mxu0 %v2468
        %v5613 = vpop.f32.mrf.mxu0
        %v5614 = vadd.f32 0.0, %v5613
        %v5615 = vpop.f32.mrf.mxu0
        %v5616 = vadd.f32 0.0, %v5615
        %5617 = vmatmul.bf16.gmra.mxu0 %v2469
        %v5618 = vpop.f32.mrf.mxu0
        %v5619 = vadd.f32 0.0, %v5618
        %v5620 = vpop.f32.mrf.mxu0
        %v5621 = vadd.f32 0.0, %v5620
        %5622 = vmatmul.bf16.gmra.mxu0 %v2470
        %v5623 = vpop.f32.mrf.mxu0
        %v5624 = vadd.f32 0.0, %v5623
        %v5625 = vpop.f32.mrf.mxu0
        %v5626 = vadd.f32 0.0, %v5625
        %5627 = vmatmul.bf16.gmra.mxu0 %v2471
        %v5628 = vpop.f32.mrf.mxu0
        %v5629 = vadd.f32 0.0, %v5628
        %v5630 = vpop.f32.mrf.mxu0
        %v5631 = vadd.f32 0.0, %v5630
        %5632 = vmatmul.bf16.gmra.mxu0 %v2472
        %v5633 = vpop.f32.mrf.mxu0
        %v5634 = vadd.f32 0.0, %v5633
        %v5635 = vpop.f32.mrf.mxu0
        %v5636 = vadd.f32 0.0, %v5635
        %5637 = vmatmul.bf16.gmra.mxu0 %v2473
        %v5638 = vpop.f32.mrf.mxu0
        %v5639 = vadd.f32 0.0, %v5638
        %v5640 = vpop.f32.mrf.mxu0
        %v5641 = vadd.f32 0.0, %v5640
        %5642 = vmatmul.bf16.gmra.mxu0 %v2474
        %v5643 = vpop.f32.mrf.mxu0
        %v5644 = vadd.f32 0.0, %v5643
        %v5645 = vpop.f32.mrf.mxu0
        %v5646 = vadd.f32 0.0, %v5645
        %5647 = vmatmul.bf16.gmra.mxu0 %v2475
        %v5648 = vpop.f32.mrf.mxu0
        %v5649 = vadd.f32 0.0, %v5648
        %v5650 = vpop.f32.mrf.mxu0
        %v5651 = vadd.f32 0.0, %v5650
        %5652 = vmatmul.bf16.gmra.mxu0 %v2476
        %v5653 = vpop.f32.mrf.mxu0
        %v5654 = vadd.f32 0.0, %v5653
        %v5655 = vpop.f32.mrf.mxu0
        %v5656 = vadd.f32 0.0, %v5655
        %5657 = vmatmul.bf16.gmra.mxu0 %v2477
        %v5658 = vpop.f32.mrf.mxu0
        %v5659 = vadd.f32 0.0, %v5658
        %v5660 = vpop.f32.mrf.mxu0
        %v5661 = vadd.f32 0.0, %v5660
        %5662 = vmatmul.bf16.gmra.mxu0 %v2478
        %v5663 = vpop.f32.mrf.mxu0
        %v5664 = vadd.f32 0.0, %v5663
        %v5665 = vpop.f32.mrf.mxu0
        %v5666 = vadd.f32 0.0, %v5665
        %5667 = vmatmul.bf16.gmra.mxu0 %v2479
        %v5668 = vpop.f32.mrf.mxu0
        %v5669 = vadd.f32 0.0, %v5668
        %v5670 = vpop.f32.mrf.mxu0
        %v5671 = vadd.f32 0.0, %v5670
        %5672 = vmatmul.bf16.gmra.mxu0 %v2480
        %v5673 = vpop.f32.mrf.mxu0
        %v5674 = vadd.f32 0.0, %v5673
        %v5675 = vpop.f32.mrf.mxu0
        %v5676 = vadd.f32 0.0, %v5675
        %5677 = vmatmul.bf16.gmra.mxu0 %v2481
        %v5678 = vpop.f32.mrf.mxu0
        %v5679 = vadd.f32 0.0, %v5678
        %v5680 = vpop.f32.mrf.mxu0
        %v5681 = vadd.f32 0.0, %v5680
        %5682 = vmatmul.bf16.gmra.mxu0 %v2482
        %v5683 = vpop.f32.mrf.mxu0
        %v5684 = vadd.f32 0.0, %v5683
        %v5685 = vpop.f32.mrf.mxu0
        %v5686 = vadd.f32 0.0, %v5685
        %5687 = vmatmul.bf16.gmra.mxu0 %v2483
        %v5688 = vpop.f32.mrf.mxu0
        %v5689 = vadd.f32 0.0, %v5688
        %v5690 = vpop.f32.mrf.mxu0
        %v5691 = vadd.f32 0.0, %v5690
        %5692 = vmatmul.bf16.gmra.mxu0 %v2484
        %v5693 = vpop.f32.mrf.mxu0
        %v5694 = vadd.f32 0.0, %v5693
        %v5695 = vpop.f32.mrf.mxu0
        %v5696 = vadd.f32 0.0, %v5695
        %5697 = vmatmul.bf16.gmra.mxu0 %v2485
        %v5698 = vpop.f32.mrf.mxu0
        %v5699 = vadd.f32 0.0, %v5698
        %v5700 = vpop.f32.mrf.mxu0
        %v5701 = vadd.f32 0.0, %v5700
        %5702 = vmatmul.bf16.gmra.mxu0 %v2486
        %v5703 = vpop.f32.mrf.mxu0
        %v5704 = vadd.f32 0.0, %v5703
        %v5705 = vpop.f32.mrf.mxu0
        %v5706 = vadd.f32 0.0, %v5705
        %5707 = vmatmul.bf16.gmra.mxu0 %v2487
        %v5708 = vpop.f32.mrf.mxu0
        %v5709 = vadd.f32 0.0, %v5708
        %v5710 = vpop.f32.mrf.mxu0
        %v5711 = vadd.f32 0.0, %v5710
        %5712 = vmatmul.bf16.gmra.mxu0 %v2488
        %v5713 = vpop.f32.mrf.mxu0
        %v5714 = vadd.f32 0.0, %v5713
        %v5715 = vpop.f32.mrf.mxu0
        %v5716 = vadd.f32 0.0, %v5715
        %5717 = vdwg.mxu0
        %v5734 = vunpack.c.l.b16 %v5308
        %v5735 = vunpack.c.l.b16 %v5309
        %v5736 = vunpack.c.l.b16 %v5310
        %v5737 = vunpack.c.l.b16 %v5311
        %v5738 = vunpack.c.l.b16 %v5312
        %v5739 = vunpack.c.l.b16 %v5313
        %v5740 = vunpack.c.l.b16 %v5314
        %v5741 = vunpack.c.l.b16 %v5315
        %v5742 = vunpack.c.l.b16 %v5316
        %v5743 = vunpack.c.l.b16 %v5317
        %v5744 = vunpack.c.l.b16 %v5318
        %v5745 = vunpack.c.l.b16 %v5319
        %v5746 = vunpack.c.l.b16 %v5320
        %v5747 = vunpack.c.l.b16 %v5321
        %v5748 = vunpack.c.l.b16 %v5322
        %v5749 = vunpack.c.l.b16 %v5323
        %v5750 = vpack.c.b16 %v5735, %v5734
        %v5751 = vpack.c.b16 %v5737, %v5736
        %v5752 = vpack.c.b16 %v5739, %v5738
        %v5753 = vpack.c.b16 %v5741, %v5740
        %v5754 = vpack.c.b16 %v5743, %v5742
        %v5755 = vpack.c.b16 %v5745, %v5744
        %v5756 = vpack.c.b16 %v5747, %v5746
        %v5757 = vpack.c.b16 %v5749, %v5748
        %5766 = vmatpush.bf16.msra.mxu0 %v5757
        %5767 = vmatpush.bf16.msra.mxu0 %v5756
        %5768 = vmatpush.bf16.msra.mxu0 %v5755
        %5769 = vmatpush.bf16.msra.mxu0 %v5754
        %5770 = vmatpush.bf16.msra.mxu0 %v5753
        %5771 = vmatpush.bf16.msra.mxu0 %v5752
        %5772 = vmatpush.bf16.msra.mxu0 %v5751
        %5773 = vmatpush.bf16.msra.mxu0 %v5750
        %5774 = vmatmul.bf16.gmra.mxu0 %v4667
        %v5775 = vpop.f32.mrf.mxu0
        %v5776 = vadd.f32 %v5399, %v5775
        %v5777 = vpop.f32.mrf.mxu0
        %v5778 = vadd.f32 %v5401, %v5777
        %5779 = vmatmul.bf16.gmra.mxu0 %v4668
        %v5780 = vpop.f32.mrf.mxu0
        %v5781 = vadd.f32 %v5404, %v5780
        %v5782 = vpop.f32.mrf.mxu0
        %v5783 = vadd.f32 %v5406, %v5782
        %5784 = vmatmul.bf16.gmra.mxu0 %v4669
        %v5785 = vpop.f32.mrf.mxu0
        %v5786 = vadd.f32 %v5409, %v5785
        %v5787 = vpop.f32.mrf.mxu0
        %v5788 = vadd.f32 %v5411, %v5787
        %5789 = vmatmul.bf16.gmra.mxu0 %v4670
        %v5790 = vpop.f32.mrf.mxu0
        %v5791 = vadd.f32 %v5414, %v5790
        %v5792 = vpop.f32.mrf.mxu0
        %v5793 = vadd.f32 %v5416, %v5792
        %5794 = vmatmul.bf16.gmra.mxu0 %v4671
        %v5795 = vpop.f32.mrf.mxu0
        %v5796 = vadd.f32 %v5419, %v5795
        %v5797 = vpop.f32.mrf.mxu0
        %v5798 = vadd.f32 %v5421, %v5797
        %5799 = vmatmul.bf16.gmra.mxu0 %v4672
        %v5800 = vpop.f32.mrf.mxu0
        %v5801 = vadd.f32 %v5424, %v5800
        %v5802 = vpop.f32.mrf.mxu0
        %v5803 = vadd.f32 %v5426, %v5802
        %5804 = vmatmul.bf16.gmra.mxu0 %v4673
        %v5805 = vpop.f32.mrf.mxu0
        %v5806 = vadd.f32 %v5429, %v5805
        %v5807 = vpop.f32.mrf.mxu0
        %v5808 = vadd.f32 %v5431, %v5807
        %5809 = vmatmul.bf16.gmra.mxu0 %v4674
        %v5810 = vpop.f32.mrf.mxu0
        %v5811 = vadd.f32 %v5434, %v5810
        %v5812 = vpop.f32.mrf.mxu0
        %v5813 = vadd.f32 %v5436, %v5812
        %5814 = vmatmul.bf16.gmra.mxu0 %v4675
        %v5815 = vpop.f32.mrf.mxu0
        %v5816 = vadd.f32 %v5439, %v5815
        %v5817 = vpop.f32.mrf.mxu0
        %v5818 = vadd.f32 %v5441, %v5817
        %5819 = vmatmul.bf16.gmra.mxu0 %v4676
        %v5820 = vpop.f32.mrf.mxu0
        %v5821 = vadd.f32 %v5444, %v5820
        %v5822 = vpop.f32.mrf.mxu0
        %v5823 = vadd.f32 %v5446, %v5822
        %5824 = vmatmul.bf16.gmra.mxu0 %v4677
        %v5825 = vpop.f32.mrf.mxu0
        %v5826 = vadd.f32 %v5449, %v5825
        %v5827 = vpop.f32.mrf.mxu0
        %v5828 = vadd.f32 %v5451, %v5827
        %5829 = vmatmul.bf16.gmra.mxu0 %v4678
        %v5830 = vpop.f32.mrf.mxu0
        %v5831 = vadd.f32 %v5454, %v5830
        %v5832 = vpop.f32.mrf.mxu0
        %v5833 = vadd.f32 %v5456, %v5832
        %5834 = vmatmul.bf16.gmra.mxu0 %v4679
        %v5835 = vpop.f32.mrf.mxu0
        %v5836 = vadd.f32 %v5459, %v5835
        %v5837 = vpop.f32.mrf.mxu0
        %v5838 = vadd.f32 %v5461, %v5837
        %5839 = vmatmul.bf16.gmra.mxu0 %v4680
        %v5840 = vpop.f32.mrf.mxu0
        %v5841 = vadd.f32 %v5464, %v5840
        %v5842 = vpop.f32.mrf.mxu0
        %v5843 = vadd.f32 %v5466, %v5842
        %5844 = vmatmul.bf16.gmra.mxu0 %v4681
        %v5845 = vpop.f32.mrf.mxu0
        %v5846 = vadd.f32 %v5469, %v5845
        %v5847 = vpop.f32.mrf.mxu0
        %v5848 = vadd.f32 %v5471, %v5847
        %5849 = vmatmul.bf16.gmra.mxu0 %v4682
        %v5850 = vpop.f32.mrf.mxu0
        %v5851 = vadd.f32 %v5474, %v5850
        %v5852 = vpop.f32.mrf.mxu0
        %v5853 = vadd.f32 %v5476, %v5852
        %5854 = vmatmul.bf16.gmra.mxu0 %v4683
        %v5855 = vpop.f32.mrf.mxu0
        %v5856 = vadd.f32 %v5479, %v5855
        %v5857 = vpop.f32.mrf.mxu0
        %v5858 = vadd.f32 %v5481, %v5857
        %5859 = vmatmul.bf16.gmra.mxu0 %v4684
        %v5860 = vpop.f32.mrf.mxu0
        %v5861 = vadd.f32 %v5484, %v5860
        %v5862 = vpop.f32.mrf.mxu0
        %v5863 = vadd.f32 %v5486, %v5862
        %5864 = vmatmul.bf16.gmra.mxu0 %v4685
        %v5865 = vpop.f32.mrf.mxu0
        %v5866 = vadd.f32 %v5489, %v5865
        %v5867 = vpop.f32.mrf.mxu0
        %v5868 = vadd.f32 %v5491, %v5867
        %5869 = vmatmul.bf16.gmra.mxu0 %v4686
        %v5870 = vpop.f32.mrf.mxu0
        %v5871 = vadd.f32 %v5494, %v5870
        %v5872 = vpop.f32.mrf.mxu0
        %v5873 = vadd.f32 %v5496, %v5872
        %5874 = vmatmul.bf16.gmra.mxu0 %v4687
        %v5875 = vpop.f32.mrf.mxu0
        %v5876 = vadd.f32 %v5499, %v5875
        %v5877 = vpop.f32.mrf.mxu0
        %v5878 = vadd.f32 %v5501, %v5877
        %5879 = vmatmul.bf16.gmra.mxu0 %v4688
        %v5880 = vpop.f32.mrf.mxu0
        %v5881 = vadd.f32 %v5504, %v5880
        %v5882 = vpop.f32.mrf.mxu0
        %v5883 = vadd.f32 %v5506, %v5882
        %5884 = vmatmul.bf16.gmra.mxu0 %v4689
        %v5885 = vpop.f32.mrf.mxu0
        %v5886 = vadd.f32 %v5509, %v5885
        %v5887 = vpop.f32.mrf.mxu0
        %v5888 = vadd.f32 %v5511, %v5887
        %5889 = vmatmul.bf16.gmra.mxu0 %v4690
        %v5890 = vpop.f32.mrf.mxu0
        %v5891 = vadd.f32 %v5514, %v5890
        %v5892 = vpop.f32.mrf.mxu0
        %v5893 = vadd.f32 %v5516, %v5892
        %5894 = vmatmul.bf16.gmra.mxu0 %v4691
        %v5895 = vpop.f32.mrf.mxu0
        %v5896 = vadd.f32 %v5519, %v5895
        %v5897 = vpop.f32.mrf.mxu0
        %v5898 = vadd.f32 %v5521, %v5897
        %5899 = vmatmul.bf16.gmra.mxu0 %v4692
        %v5900 = vpop.f32.mrf.mxu0
        %v5901 = vadd.f32 %v5524, %v5900
        %v5902 = vpop.f32.mrf.mxu0
        %v5903 = vadd.f32 %v5526, %v5902
        %5904 = vmatmul.bf16.gmra.mxu0 %v4693
        %v5905 = vpop.f32.mrf.mxu0
        %v5906 = vadd.f32 %v5529, %v5905
        %v5907 = vpop.f32.mrf.mxu0
        %v5908 = vadd.f32 %v5531, %v5907
        %5909 = vmatmul.bf16.gmra.mxu0 %v4694
        %v5910 = vpop.f32.mrf.mxu0
        %v5911 = vadd.f32 %v5534, %v5910
        %v5912 = vpop.f32.mrf.mxu0
        %v5913 = vadd.f32 %v5536, %v5912
        %5914 = vmatmul.bf16.gmra.mxu0 %v4695
        %v5915 = vpop.f32.mrf.mxu0
        %v5916 = vadd.f32 %v5539, %v5915
        %v5917 = vpop.f32.mrf.mxu0
        %v5918 = vadd.f32 %v5541, %v5917
        %5919 = vmatmul.bf16.gmra.mxu0 %v4696
        %v5920 = vpop.f32.mrf.mxu0
        %v5921 = vadd.f32 %v5544, %v5920
        %v5922 = vpop.f32.mrf.mxu0
        %v5923 = vadd.f32 %v5546, %v5922
        %5924 = vmatmul.bf16.gmra.mxu0 %v4697
        %v5925 = vpop.f32.mrf.mxu0
        %v5926 = vadd.f32 %v5549, %v5925
        %v5927 = vpop.f32.mrf.mxu0
        %v5928 = vadd.f32 %v5551, %v5927
        %5929 = vmatmul.bf16.gmra.mxu0 %v4698
        %v5930 = vpop.f32.mrf.mxu0
        %v5931 = vadd.f32 %v5554, %v5930
        %v5932 = vpop.f32.mrf.mxu0
        %v5933 = vadd.f32 %v5556, %v5932
        %5934 = vmatmul.bf16.gmra.mxu0 %v4699
        %v5935 = vpop.f32.mrf.mxu0
        %v5936 = vadd.f32 %v5559, %v5935
        %v5937 = vpop.f32.mrf.mxu0
        %v5938 = vadd.f32 %v5561, %v5937
        %5939 = vmatmul.bf16.gmra.mxu0 %v4700
        %v5940 = vpop.f32.mrf.mxu0
        %v5941 = vadd.f32 %v5564, %v5940
        %v5942 = vpop.f32.mrf.mxu0
        %v5943 = vadd.f32 %v5566, %v5942
        %5944 = vmatmul.bf16.gmra.mxu0 %v4701
        %v5945 = vpop.f32.mrf.mxu0
        %v5946 = vadd.f32 %v5569, %v5945
        %v5947 = vpop.f32.mrf.mxu0
        %v5948 = vadd.f32 %v5571, %v5947
        %5949 = vmatmul.bf16.gmra.mxu0 %v4702
        %v5950 = vpop.f32.mrf.mxu0
        %v5951 = vadd.f32 %v5574, %v5950
        %v5952 = vpop.f32.mrf.mxu0
        %v5953 = vadd.f32 %v5576, %v5952
        %5954 = vmatmul.bf16.gmra.mxu0 %v4703
        %v5955 = vpop.f32.mrf.mxu0
        %v5956 = vadd.f32 %v5579, %v5955
        %v5957 = vpop.f32.mrf.mxu0
        %v5958 = vadd.f32 %v5581, %v5957
        %5959 = vmatmul.bf16.gmra.mxu0 %v4704
        %v5960 = vpop.f32.mrf.mxu0
        %v5961 = vadd.f32 %v5584, %v5960
        %v5962 = vpop.f32.mrf.mxu0
        %v5963 = vadd.f32 %v5586, %v5962
        %5964 = vmatmul.bf16.gmra.mxu0 %v4705
        %v5965 = vpop.f32.mrf.mxu0
        %v5966 = vadd.f32 %v5589, %v5965
        %v5967 = vpop.f32.mrf.mxu0
        %v5968 = vadd.f32 %v5591, %v5967
        %5969 = vmatmul.bf16.gmra.mxu0 %v4706
        %v5970 = vpop.f32.mrf.mxu0
        %v5971 = vadd.f32 %v5594, %v5970
        %v5972 = vpop.f32.mrf.mxu0
        %v5973 = vadd.f32 %v5596, %v5972
        %5974 = vmatmul.bf16.gmra.mxu0 %v4707
        %v5975 = vpop.f32.mrf.mxu0
        %v5976 = vadd.f32 %v5599, %v5975
        %v5977 = vpop.f32.mrf.mxu0
        %v5978 = vadd.f32 %v5601, %v5977
        %5979 = vmatmul.bf16.gmra.mxu0 %v4708
        %v5980 = vpop.f32.mrf.mxu0
        %v5981 = vadd.f32 %v5604, %v5980
        %v5982 = vpop.f32.mrf.mxu0
        %v5983 = vadd.f32 %v5606, %v5982
        %5984 = vmatmul.bf16.gmra.mxu0 %v4709
        %v5985 = vpop.f32.mrf.mxu0
        %v5986 = vadd.f32 %v5609, %v5985
        %v5987 = vpop.f32.mrf.mxu0
        %v5988 = vadd.f32 %v5611, %v5987
        %5989 = vmatmul.bf16.gmra.mxu0 %v4710
        %v5990 = vpop.f32.mrf.mxu0
        %v5991 = vadd.f32 %v5614, %v5990
        %v5992 = vpop.f32.mrf.mxu0
        %v5993 = vadd.f32 %v5616, %v5992
        %5994 = vmatmul.bf16.gmra.mxu0 %v4711
        %v5995 = vpop.f32.mrf.mxu0
        %v5996 = vadd.f32 %v5619, %v5995
        %v5997 = vpop.f32.mrf.mxu0
        %v5998 = vadd.f32 %v5621, %v5997
        %5999 = vmatmul.bf16.gmra.mxu0 %v4712
        %v6000 = vpop.f32.mrf.mxu0
        %v6001 = vadd.f32 %v5624, %v6000
        %v6002 = vpop.f32.mrf.mxu0
        %v6003 = vadd.f32 %v5626, %v6002
        %6004 = vmatmul.bf16.gmra.mxu0 %v4713
        %v6005 = vpop.f32.mrf.mxu0
        %v6006 = vadd.f32 %v5629, %v6005
        %v6007 = vpop.f32.mrf.mxu0
        %v6008 = vadd.f32 %v5631, %v6007
        %6009 = vmatmul.bf16.gmra.mxu0 %v4714
        %v6010 = vpop.f32.mrf.mxu0
        %v6011 = vadd.f32 %v5634, %v6010
        %v6012 = vpop.f32.mrf.mxu0
        %v6013 = vadd.f32 %v5636, %v6012
        %6014 = vmatmul.bf16.gmra.mxu0 %v4715
        %v6015 = vpop.f32.mrf.mxu0
        %v6016 = vadd.f32 %v5639, %v6015
        %v6017 = vpop.f32.mrf.mxu0
        %v6018 = vadd.f32 %v5641, %v6017
        %6019 = vmatmul.bf16.gmra.mxu0 %v4716
        %v6020 = vpop.f32.mrf.mxu0
        %v6021 = vadd.f32 %v5644, %v6020
        %v6022 = vpop.f32.mrf.mxu0
        %v6023 = vadd.f32 %v5646, %v6022
        %6024 = vmatmul.bf16.gmra.mxu0 %v4717
        %v6025 = vpop.f32.mrf.mxu0
        %v6026 = vadd.f32 %v5649, %v6025
        %v6027 = vpop.f32.mrf.mxu0
        %v6028 = vadd.f32 %v5651, %v6027
        %6029 = vmatmul.bf16.gmra.mxu0 %v4718
        %v6030 = vpop.f32.mrf.mxu0
        %v6031 = vadd.f32 %v5654, %v6030
        %v6032 = vpop.f32.mrf.mxu0
        %v6033 = vadd.f32 %v5656, %v6032
        %6034 = vmatmul.bf16.gmra.mxu0 %v4719
        %v6035 = vpop.f32.mrf.mxu0
        %v6036 = vadd.f32 %v5659, %v6035
        %v6037 = vpop.f32.mrf.mxu0
        %v6038 = vadd.f32 %v5661, %v6037
        %6039 = vmatmul.bf16.gmra.mxu0 %v4720
        %v6040 = vpop.f32.mrf.mxu0
        %v6041 = vadd.f32 %v5664, %v6040
        %v6042 = vpop.f32.mrf.mxu0
        %v6043 = vadd.f32 %v5666, %v6042
        %6044 = vmatmul.bf16.gmra.mxu0 %v4721
        %v6045 = vpop.f32.mrf.mxu0
        %v6046 = vadd.f32 %v5669, %v6045
        %v6047 = vpop.f32.mrf.mxu0
        %v6048 = vadd.f32 %v5671, %v6047
        %6049 = vmatmul.bf16.gmra.mxu0 %v4722
        %v6050 = vpop.f32.mrf.mxu0
        %v6051 = vadd.f32 %v5674, %v6050
        %v6052 = vpop.f32.mrf.mxu0
        %v6053 = vadd.f32 %v5676, %v6052
        %6054 = vmatmul.bf16.gmra.mxu0 %v4723
        %v6055 = vpop.f32.mrf.mxu0
        %v6056 = vadd.f32 %v5679, %v6055
        %v6057 = vpop.f32.mrf.mxu0
        %v6058 = vadd.f32 %v5681, %v6057
        %6059 = vmatmul.bf16.gmra.mxu0 %v4724
        %v6060 = vpop.f32.mrf.mxu0
        %v6061 = vadd.f32 %v5684, %v6060
        %v6062 = vpop.f32.mrf.mxu0
        %v6063 = vadd.f32 %v5686, %v6062
        %6064 = vmatmul.bf16.gmra.mxu0 %v4725
        %v6065 = vpop.f32.mrf.mxu0
        %v6066 = vadd.f32 %v5689, %v6065
        %v6067 = vpop.f32.mrf.mxu0
        %v6068 = vadd.f32 %v5691, %v6067
        %6069 = vmatmul.bf16.gmra.mxu0 %v4726
        %v6070 = vpop.f32.mrf.mxu0
        %v6071 = vadd.f32 %v5694, %v6070
        %v6072 = vpop.f32.mrf.mxu0
        %v6073 = vadd.f32 %v5696, %v6072
        %6074 = vmatmul.bf16.gmra.mxu0 %v4727
        %v6075 = vpop.f32.mrf.mxu0
        %v6076 = vadd.f32 %v5699, %v6075
        %v6077 = vpop.f32.mrf.mxu0
        %v6078 = vadd.f32 %v5701, %v6077
        %6079 = vmatmul.bf16.gmra.mxu0 %v4728
        %v6080 = vpop.f32.mrf.mxu0
        %v6081 = vadd.f32 %v5704, %v6080
        %v6082 = vpop.f32.mrf.mxu0
        %v6083 = vadd.f32 %v5706, %v6082
        %6084 = vmatmul.bf16.gmra.mxu0 %v4729
        %v6085 = vpop.f32.mrf.mxu0
        %v6086 = vadd.f32 %v5709, %v6085
        %v6087 = vpop.f32.mrf.mxu0
        %v6088 = vadd.f32 %v5711, %v6087
        %6089 = vmatmul.bf16.gmra.mxu0 %v4730
        %v6090 = vpop.f32.mrf.mxu0
        %v6091 = vadd.f32 %v5714, %v6090
        %v6092 = vpop.f32.mrf.mxu0
        %v6093 = vadd.f32 %v5716, %v6092
        %6094 = vdwg.mxu0
        %s6095 = scalar_lea.vmem %s5, 128
        %v6096 = vld [vmem:[%s6095] sm:$0xf]
        %v6097 = vld [vmem:[%s6095 + $0x4] sm:$0xf]
        %v6098 = vld [vmem:[%s6095 + $0x8] sm:$0xf]
        %v6099 = vld [vmem:[%s6095 + $0xc] sm:$0xf]
        %v6100 = vld [vmem:[%s6095 + $0x10] sm:$0xf]
        %v6101 = vld [vmem:[%s6095 + $0x14] sm:$0xf]
        %v6102 = vld [vmem:[%s6095 + $0x18] sm:$0xf]
        %v6103 = vld [vmem:[%s6095 + $0x1c] sm:$0xf]
        %v6104 = vld [vmem:[%s6095 + $0x20] sm:$0xf]
        %v6105 = vld [vmem:[%s6095 + $0x24] sm:$0xf]
        %v6106 = vld [vmem:[%s6095 + $0x28] sm:$0xf]
        %v6107 = vld [vmem:[%s6095 + $0x2c] sm:$0xf]
        %v6108 = vld [vmem:[%s6095 + $0x30] sm:$0xf]
        %v6109 = vld [vmem:[%s6095 + $0x34] sm:$0xf]
        %v6110 = vld [vmem:[%s6095 + $0x38] sm:$0xf]
        %v6111 = vld [vmem:[%s6095 + $0x3c] sm:$0xf]
        %v6128 = vunpack.c.l.b16 %v6096
        %v6129 = vunpack.c.l.b16 %v6097
        %v6130 = vunpack.c.l.b16 %v6098
        %v6131 = vunpack.c.l.b16 %v6099
        %v6132 = vunpack.c.l.b16 %v6100
        %v6133 = vunpack.c.l.b16 %v6101
        %v6134 = vunpack.c.l.b16 %v6102
        %v6135 = vunpack.c.l.b16 %v6103
        %v6136 = vunpack.c.l.b16 %v6104
        %v6137 = vunpack.c.l.b16 %v6105
        %v6138 = vunpack.c.l.b16 %v6106
        %v6139 = vunpack.c.l.b16 %v6107
        %v6140 = vunpack.c.l.b16 %v6108
        %v6141 = vunpack.c.l.b16 %v6109
        %v6142 = vunpack.c.l.b16 %v6110
        %v6143 = vunpack.c.l.b16 %v6111
        %v6144 = vpack.c.b16 %v6129, %v6128
        %v6145 = vpack.c.b16 %v6131, %v6130
        %v6146 = vpack.c.b16 %v6133, %v6132
        %v6147 = vpack.c.b16 %v6135, %v6134
        %v6148 = vpack.c.b16 %v6137, %v6136
        %v6149 = vpack.c.b16 %v6139, %v6138
        %v6150 = vpack.c.b16 %v6141, %v6140
        %v6151 = vpack.c.b16 %v6143, %v6142
        %6160 = vmatpush.bf16.msra.mxu0 %v6151
        %6161 = vmatpush.bf16.msra.mxu0 %v6150
        %6162 = vmatpush.bf16.msra.mxu0 %v6149
        %6163 = vmatpush.bf16.msra.mxu0 %v6148
        %6164 = vmatpush.bf16.msra.mxu0 %v6147
        %6165 = vmatpush.bf16.msra.mxu0 %v6146
        %6166 = vmatpush.bf16.msra.mxu0 %v6145
        %6167 = vmatpush.bf16.msra.mxu0 %v6144
        %6168 = vmatmul.bf16.gmra.mxu0 %v5244
        %v6169 = vpop.f32.mrf.mxu0
        %v6170 = vadd.f32 0.0, %v6169
        %v6171 = vpop.f32.mrf.mxu0
        %v6172 = vadd.f32 0.0, %v6171
        %6173 = vmatmul.bf16.gmra.mxu0 %v5245
        %v6174 = vpop.f32.mrf.mxu0
        %v6175 = vadd.f32 0.0, %v6174
        %v6176 = vpop.f32.mrf.mxu0
        %v6177 = vadd.f32 0.0, %v6176
        %6178 = vmatmul.bf16.gmra.mxu0 %v5246
        %v6179 = vpop.f32.mrf.mxu0
        %v6180 = vadd.f32 0.0, %v6179
        %v6181 = vpop.f32.mrf.mxu0
        %v6182 = vadd.f32 0.0, %v6181
        %6183 = vmatmul.bf16.gmra.mxu0 %v5247
        %v6184 = vpop.f32.mrf.mxu0
        %v6185 = vadd.f32 0.0, %v6184
        %v6186 = vpop.f32.mrf.mxu0
        %v6187 = vadd.f32 0.0, %v6186
        %6188 = vmatmul.bf16.gmra.mxu0 %v5248
        %v6189 = vpop.f32.mrf.mxu0
        %v6190 = vadd.f32 0.0, %v6189
        %v6191 = vpop.f32.mrf.mxu0
        %v6192 = vadd.f32 0.0, %v6191
        %6193 = vmatmul.bf16.gmra.mxu0 %v5249
        %v6194 = vpop.f32.mrf.mxu0
        %v6195 = vadd.f32 0.0, %v6194
        %v6196 = vpop.f32.mrf.mxu0
        %v6197 = vadd.f32 0.0, %v6196
        %6198 = vmatmul.bf16.gmra.mxu0 %v5250
        %v6199 = vpop.f32.mrf.mxu0
        %v6200 = vadd.f32 0.0, %v6199
        %v6201 = vpop.f32.mrf.mxu0
        %v6202 = vadd.f32 0.0, %v6201
        %6203 = vmatmul.bf16.gmra.mxu0 %v5251
        %v6204 = vpop.f32.mrf.mxu0
        %v6205 = vadd.f32 0.0, %v6204
        %v6206 = vpop.f32.mrf.mxu0
        %v6207 = vadd.f32 0.0, %v6206
        %6208 = vmatmul.bf16.gmra.mxu0 %v5252
        %v6209 = vpop.f32.mrf.mxu0
        %v6210 = vadd.f32 0.0, %v6209
        %v6211 = vpop.f32.mrf.mxu0
        %v6212 = vadd.f32 0.0, %v6211
        %6213 = vmatmul.bf16.gmra.mxu0 %v5253
        %v6214 = vpop.f32.mrf.mxu0
        %v6215 = vadd.f32 0.0, %v6214
        %v6216 = vpop.f32.mrf.mxu0
        %v6217 = vadd.f32 0.0, %v6216
        %6218 = vmatmul.bf16.gmra.mxu0 %v5254
        %v6219 = vpop.f32.mrf.mxu0
        %v6220 = vadd.f32 0.0, %v6219
        %v6221 = vpop.f32.mrf.mxu0
        %v6222 = vadd.f32 0.0, %v6221
        %6223 = vmatmul.bf16.gmra.mxu0 %v5255
        %v6224 = vpop.f32.mrf.mxu0
        %v6225 = vadd.f32 0.0, %v6224
        %v6226 = vpop.f32.mrf.mxu0
        %v6227 = vadd.f32 0.0, %v6226
        %6228 = vmatmul.bf16.gmra.mxu0 %v5256
        %v6229 = vpop.f32.mrf.mxu0
        %v6230 = vadd.f32 0.0, %v6229
        %v6231 = vpop.f32.mrf.mxu0
        %v6232 = vadd.f32 0.0, %v6231
        %6233 = vmatmul.bf16.gmra.mxu0 %v5257
        %v6234 = vpop.f32.mrf.mxu0
        %v6235 = vadd.f32 0.0, %v6234
        %v6236 = vpop.f32.mrf.mxu0
        %v6237 = vadd.f32 0.0, %v6236
        %6238 = vmatmul.bf16.gmra.mxu0 %v5258
        %v6239 = vpop.f32.mrf.mxu0
        %v6240 = vadd.f32 0.0, %v6239
        %v6241 = vpop.f32.mrf.mxu0
        %v6242 = vadd.f32 0.0, %v6241
        %6243 = vmatmul.bf16.gmra.mxu0 %v5259
        %v6244 = vpop.f32.mrf.mxu0
        %v6245 = vadd.f32 0.0, %v6244
        %v6246 = vpop.f32.mrf.mxu0
        %v6247 = vadd.f32 0.0, %v6246
        %6248 = vmatmul.bf16.gmra.mxu0 %v5260
        %v6249 = vpop.f32.mrf.mxu0
        %v6250 = vadd.f32 0.0, %v6249
        %v6251 = vpop.f32.mrf.mxu0
        %v6252 = vadd.f32 0.0, %v6251
        %6253 = vmatmul.bf16.gmra.mxu0 %v5261
        %v6254 = vpop.f32.mrf.mxu0
        %v6255 = vadd.f32 0.0, %v6254
        %v6256 = vpop.f32.mrf.mxu0
        %v6257 = vadd.f32 0.0, %v6256
        %6258 = vmatmul.bf16.gmra.mxu0 %v5262
        %v6259 = vpop.f32.mrf.mxu0
        %v6260 = vadd.f32 0.0, %v6259
        %v6261 = vpop.f32.mrf.mxu0
        %v6262 = vadd.f32 0.0, %v6261
        %6263 = vmatmul.bf16.gmra.mxu0 %v5263
        %v6264 = vpop.f32.mrf.mxu0
        %v6265 = vadd.f32 0.0, %v6264
        %v6266 = vpop.f32.mrf.mxu0
        %v6267 = vadd.f32 0.0, %v6266
        %6268 = vmatmul.bf16.gmra.mxu0 %v5264
        %v6269 = vpop.f32.mrf.mxu0
        %v6270 = vadd.f32 0.0, %v6269
        %v6271 = vpop.f32.mrf.mxu0
        %v6272 = vadd.f32 0.0, %v6271
        %6273 = vmatmul.bf16.gmra.mxu0 %v5265
        %v6274 = vpop.f32.mrf.mxu0
        %v6275 = vadd.f32 0.0, %v6274
        %v6276 = vpop.f32.mrf.mxu0
        %v6277 = vadd.f32 0.0, %v6276
        %6278 = vmatmul.bf16.gmra.mxu0 %v5266
        %v6279 = vpop.f32.mrf.mxu0
        %v6280 = vadd.f32 0.0, %v6279
        %v6281 = vpop.f32.mrf.mxu0
        %v6282 = vadd.f32 0.0, %v6281
        %6283 = vmatmul.bf16.gmra.mxu0 %v5267
        %v6284 = vpop.f32.mrf.mxu0
        %v6285 = vadd.f32 0.0, %v6284
        %v6286 = vpop.f32.mrf.mxu0
        %v6287 = vadd.f32 0.0, %v6286
        %6288 = vmatmul.bf16.gmra.mxu0 %v5268
        %v6289 = vpop.f32.mrf.mxu0
        %v6290 = vadd.f32 0.0, %v6289
        %v6291 = vpop.f32.mrf.mxu0
        %v6292 = vadd.f32 0.0, %v6291
        %6293 = vmatmul.bf16.gmra.mxu0 %v5269
        %v6294 = vpop.f32.mrf.mxu0
        %v6295 = vadd.f32 0.0, %v6294
        %v6296 = vpop.f32.mrf.mxu0
        %v6297 = vadd.f32 0.0, %v6296
        %6298 = vmatmul.bf16.gmra.mxu0 %v5270
        %v6299 = vpop.f32.mrf.mxu0
        %v6300 = vadd.f32 0.0, %v6299
        %v6301 = vpop.f32.mrf.mxu0
        %v6302 = vadd.f32 0.0, %v6301
        %6303 = vmatmul.bf16.gmra.mxu0 %v5271
        %v6304 = vpop.f32.mrf.mxu0
        %v6305 = vadd.f32 0.0, %v6304
        %v6306 = vpop.f32.mrf.mxu0
        %v6307 = vadd.f32 0.0, %v6306
        %6308 = vmatmul.bf16.gmra.mxu0 %v5272
        %v6309 = vpop.f32.mrf.mxu0
        %v6310 = vadd.f32 0.0, %v6309
        %v6311 = vpop.f32.mrf.mxu0
        %v6312 = vadd.f32 0.0, %v6311
        %6313 = vmatmul.bf16.gmra.mxu0 %v5273
        %v6314 = vpop.f32.mrf.mxu0
        %v6315 = vadd.f32 0.0, %v6314
        %v6316 = vpop.f32.mrf.mxu0
        %v6317 = vadd.f32 0.0, %v6316
        %6318 = vmatmul.bf16.gmra.mxu0 %v5274
        %v6319 = vpop.f32.mrf.mxu0
        %v6320 = vadd.f32 0.0, %v6319
        %v6321 = vpop.f32.mrf.mxu0
        %v6322 = vadd.f32 0.0, %v6321
        %6323 = vmatmul.bf16.gmra.mxu0 %v5275
        %v6324 = vpop.f32.mrf.mxu0
        %v6325 = vadd.f32 0.0, %v6324
        %v6326 = vpop.f32.mrf.mxu0
        %v6327 = vadd.f32 0.0, %v6326
        %6328 = vmatmul.bf16.gmra.mxu0 %v5276
        %v6329 = vpop.f32.mrf.mxu0
        %v6330 = vadd.f32 0.0, %v6329
        %v6331 = vpop.f32.mrf.mxu0
        %v6332 = vadd.f32 0.0, %v6331
        %6333 = vmatmul.bf16.gmra.mxu0 %v5277
        %v6334 = vpop.f32.mrf.mxu0
        %v6335 = vadd.f32 0.0, %v6334
        %v6336 = vpop.f32.mrf.mxu0
        %v6337 = vadd.f32 0.0, %v6336
        %6338 = vmatmul.bf16.gmra.mxu0 %v5278
        %v6339 = vpop.f32.mrf.mxu0
        %v6340 = vadd.f32 0.0, %v6339
        %v6341 = vpop.f32.mrf.mxu0
        %v6342 = vadd.f32 0.0, %v6341
        %6343 = vmatmul.bf16.gmra.mxu0 %v5279
        %v6344 = vpop.f32.mrf.mxu0
        %v6345 = vadd.f32 0.0, %v6344
        %v6346 = vpop.f32.mrf.mxu0
        %v6347 = vadd.f32 0.0, %v6346
        %6348 = vmatmul.bf16.gmra.mxu0 %v5280
        %v6349 = vpop.f32.mrf.mxu0
        %v6350 = vadd.f32 0.0, %v6349
        %v6351 = vpop.f32.mrf.mxu0
        %v6352 = vadd.f32 0.0, %v6351
        %6353 = vmatmul.bf16.gmra.mxu0 %v5281
        %v6354 = vpop.f32.mrf.mxu0
        %v6355 = vadd.f32 0.0, %v6354
        %v6356 = vpop.f32.mrf.mxu0
        %v6357 = vadd.f32 0.0, %v6356
        %6358 = vmatmul.bf16.gmra.mxu0 %v5282
        %v6359 = vpop.f32.mrf.mxu0
        %v6360 = vadd.f32 0.0, %v6359
        %v6361 = vpop.f32.mrf.mxu0
        %v6362 = vadd.f32 0.0, %v6361
        %6363 = vmatmul.bf16.gmra.mxu0 %v5283
        %v6364 = vpop.f32.mrf.mxu0
        %v6365 = vadd.f32 0.0, %v6364
        %v6366 = vpop.f32.mrf.mxu0
        %v6367 = vadd.f32 0.0, %v6366
        %6368 = vmatmul.bf16.gmra.mxu0 %v5284
        %v6369 = vpop.f32.mrf.mxu0
        %v6370 = vadd.f32 0.0, %v6369
        %v6371 = vpop.f32.mrf.mxu0
        %v6372 = vadd.f32 0.0, %v6371
        %6373 = vmatmul.bf16.gmra.mxu0 %v5285
        %v6374 = vpop.f32.mrf.mxu0
        %v6375 = vadd.f32 0.0, %v6374
        %v6376 = vpop.f32.mrf.mxu0
        %v6377 = vadd.f32 0.0, %v6376
        %6378 = vmatmul.bf16.gmra.mxu0 %v5286
        %v6379 = vpop.f32.mrf.mxu0
        %v6380 = vadd.f32 0.0, %v6379
        %v6381 = vpop.f32.mrf.mxu0
        %v6382 = vadd.f32 0.0, %v6381
        %6383 = vmatmul.bf16.gmra.mxu0 %v5287
        %v6384 = vpop.f32.mrf.mxu0
        %v6385 = vadd.f32 0.0, %v6384
        %v6386 = vpop.f32.mrf.mxu0
        %v6387 = vadd.f32 0.0, %v6386
        %6388 = vmatmul.bf16.gmra.mxu0 %v5288
        %v6389 = vpop.f32.mrf.mxu0
        %v6390 = vadd.f32 0.0, %v6389
        %v6391 = vpop.f32.mrf.mxu0
        %v6392 = vadd.f32 0.0, %v6391
        %6393 = vmatmul.bf16.gmra.mxu0 %v5289
        %v6394 = vpop.f32.mrf.mxu0
        %v6395 = vadd.f32 0.0, %v6394
        %v6396 = vpop.f32.mrf.mxu0
        %v6397 = vadd.f32 0.0, %v6396
        %6398 = vmatmul.bf16.gmra.mxu0 %v5290
        %v6399 = vpop.f32.mrf.mxu0
        %v6400 = vadd.f32 0.0, %v6399
        %v6401 = vpop.f32.mrf.mxu0
        %v6402 = vadd.f32 0.0, %v6401
        %6403 = vmatmul.bf16.gmra.mxu0 %v5291
        %v6404 = vpop.f32.mrf.mxu0
        %v6405 = vadd.f32 0.0, %v6404
        %v6406 = vpop.f32.mrf.mxu0
        %v6407 = vadd.f32 0.0, %v6406
        %6408 = vmatmul.bf16.gmra.mxu0 %v5292
        %v6409 = vpop.f32.mrf.mxu0
        %v6410 = vadd.f32 0.0, %v6409
        %v6411 = vpop.f32.mrf.mxu0
        %v6412 = vadd.f32 0.0, %v6411
        %6413 = vmatmul.bf16.gmra.mxu0 %v5293
        %v6414 = vpop.f32.mrf.mxu0
        %v6415 = vadd.f32 0.0, %v6414
        %v6416 = vpop.f32.mrf.mxu0
        %v6417 = vadd.f32 0.0, %v6416
        %6418 = vmatmul.bf16.gmra.mxu0 %v5294
        %v6419 = vpop.f32.mrf.mxu0
        %v6420 = vadd.f32 0.0, %v6419
        %v6421 = vpop.f32.mrf.mxu0
        %v6422 = vadd.f32 0.0, %v6421
        %6423 = vmatmul.bf16.gmra.mxu0 %v5295
        %v6424 = vpop.f32.mrf.mxu0
        %v6425 = vadd.f32 0.0, %v6424
        %v6426 = vpop.f32.mrf.mxu0
        %v6427 = vadd.f32 0.0, %v6426
        %6428 = vmatmul.bf16.gmra.mxu0 %v5296
        %v6429 = vpop.f32.mrf.mxu0
        %v6430 = vadd.f32 0.0, %v6429
        %v6431 = vpop.f32.mrf.mxu0
        %v6432 = vadd.f32 0.0, %v6431
        %6433 = vmatmul.bf16.gmra.mxu0 %v5297
        %v6434 = vpop.f32.mrf.mxu0
        %v6435 = vadd.f32 0.0, %v6434
        %v6436 = vpop.f32.mrf.mxu0
        %v6437 = vadd.f32 0.0, %v6436
        %6438 = vmatmul.bf16.gmra.mxu0 %v5298
        %v6439 = vpop.f32.mrf.mxu0
        %v6440 = vadd.f32 0.0, %v6439
        %v6441 = vpop.f32.mrf.mxu0
        %v6442 = vadd.f32 0.0, %v6441
        %6443 = vmatmul.bf16.gmra.mxu0 %v5299
        %v6444 = vpop.f32.mrf.mxu0
        %v6445 = vadd.f32 0.0, %v6444
        %v6446 = vpop.f32.mrf.mxu0
        %v6447 = vadd.f32 0.0, %v6446
        %6448 = vmatmul.bf16.gmra.mxu0 %v5300
        %v6449 = vpop.f32.mrf.mxu0
        %v6450 = vadd.f32 0.0, %v6449
        %v6451 = vpop.f32.mrf.mxu0
        %v6452 = vadd.f32 0.0, %v6451
        %6453 = vmatmul.bf16.gmra.mxu0 %v5301
        %v6454 = vpop.f32.mrf.mxu0
        %v6455 = vadd.f32 0.0, %v6454
        %v6456 = vpop.f32.mrf.mxu0
        %v6457 = vadd.f32 0.0, %v6456
        %6458 = vmatmul.bf16.gmra.mxu0 %v5302
        %v6459 = vpop.f32.mrf.mxu0
        %v6460 = vadd.f32 0.0, %v6459
        %v6461 = vpop.f32.mrf.mxu0
        %v6462 = vadd.f32 0.0, %v6461
        %6463 = vmatmul.bf16.gmra.mxu0 %v5303
        %v6464 = vpop.f32.mrf.mxu0
        %v6465 = vadd.f32 0.0, %v6464
        %v6466 = vpop.f32.mrf.mxu0
        %v6467 = vadd.f32 0.0, %v6466
        %6468 = vmatmul.bf16.gmra.mxu0 %v5304
        %v6469 = vpop.f32.mrf.mxu0
        %v6470 = vadd.f32 0.0, %v6469
        %v6471 = vpop.f32.mrf.mxu0
        %v6472 = vadd.f32 0.0, %v6471
        %6473 = vmatmul.bf16.gmra.mxu0 %v5305
        %v6474 = vpop.f32.mrf.mxu0
        %v6475 = vadd.f32 0.0, %v6474
        %v6476 = vpop.f32.mrf.mxu0
        %v6477 = vadd.f32 0.0, %v6476
        %6478 = vmatmul.bf16.gmra.mxu0 %v5306
        %v6479 = vpop.f32.mrf.mxu0
        %v6480 = vadd.f32 0.0, %v6479
        %v6481 = vpop.f32.mrf.mxu0
        %v6482 = vadd.f32 0.0, %v6481
        %6483 = vmatmul.bf16.gmra.mxu0 %v5307
        %v6484 = vpop.f32.mrf.mxu0
        %v6485 = vadd.f32 0.0, %v6484
        %v6486 = vpop.f32.mrf.mxu0
        %v6487 = vadd.f32 0.0, %v6486
        %6488 = vdwg.mxu0
        %v6489 = vadd.f32 %v5776, %v6170
        %v6490 = vadd.f32 %v5778, %v6172
        %v6491 = vadd.f32 %v5781, %v6175
        %v6492 = vadd.f32 %v5783, %v6177
        %v6493 = vadd.f32 %v5786, %v6180
        %v6494 = vadd.f32 %v5788, %v6182
        %v6495 = vadd.f32 %v5791, %v6185
        %v6496 = vadd.f32 %v5793, %v6187
        %v6497 = vadd.f32 %v5796, %v6190
        %v6498 = vadd.f32 %v5798, %v6192
        %v6499 = vadd.f32 %v5801, %v6195
        %v6500 = vadd.f32 %v5803, %v6197
        %v6501 = vadd.f32 %v5806, %v6200
        %v6502 = vadd.f32 %v5808, %v6202
        %v6503 = vadd.f32 %v5811, %v6205
        %v6504 = vadd.f32 %v5813, %v6207
        %v6505 = vadd.f32 %v5816, %v6210
        %v6506 = vadd.f32 %v5818, %v6212
        %v6507 = vadd.f32 %v5821, %v6215
        %v6508 = vadd.f32 %v5823, %v6217
        %v6509 = vadd.f32 %v5826, %v6220
        %v6510 = vadd.f32 %v5828, %v6222
        %v6511 = vadd.f32 %v5831, %v6225
        %v6512 = vadd.f32 %v5833, %v6227
        %v6513 = vadd.f32 %v5836, %v6230
        %v6514 = vadd.f32 %v5838, %v6232
        %v6515 = vadd.f32 %v5841, %v6235
        %v6516 = vadd.f32 %v5843, %v6237
        %v6517 = vadd.f32 %v5846, %v6240
        %v6518 = vadd.f32 %v5848, %v6242
        %v6519 = vadd.f32 %v5851, %v6245
        %v6520 = vadd.f32 %v5853, %v6247
        %v6521 = vadd.f32 %v5856, %v6250
        %v6522 = vadd.f32 %v5858, %v6252
        %v6523 = vadd.f32 %v5861, %v6255
        %v6524 = vadd.f32 %v5863, %v6257
        %v6525 = vadd.f32 %v5866, %v6260
        %v6526 = vadd.f32 %v5868, %v6262
        %v6527 = vadd.f32 %v5871, %v6265
        %v6528 = vadd.f32 %v5873, %v6267
        %v6529 = vadd.f32 %v5876, %v6270
        %v6530 = vadd.f32 %v5878, %v6272
        %v6531 = vadd.f32 %v5881, %v6275
        %v6532 = vadd.f32 %v5883, %v6277
        %v6533 = vadd.f32 %v5886, %v6280
        %v6534 = vadd.f32 %v5888, %v6282
        %v6535 = vadd.f32 %v5891, %v6285
        %v6536 = vadd.f32 %v5893, %v6287
        %v6537 = vadd.f32 %v5896, %v6290
        %v6538 = vadd.f32 %v5898, %v6292
        %v6539 = vadd.f32 %v5901, %v6295
        %v6540 = vadd.f32 %v5903, %v6297
        %v6541 = vadd.f32 %v5906, %v6300
        %v6542 = vadd.f32 %v5908, %v6302
        %v6543 = vadd.f32 %v5911, %v6305
        %v6544 = vadd.f32 %v5913, %v6307
        %v6545 = vadd.f32 %v5916, %v6310
        %v6546 = vadd.f32 %v5918, %v6312
        %v6547 = vadd.f32 %v5921, %v6315
        %v6548 = vadd.f32 %v5923, %v6317
        %v6549 = vadd.f32 %v5926, %v6320
        %v6550 = vadd.f32 %v5928, %v6322
        %v6551 = vadd.f32 %v5931, %v6325
        %v6552 = vadd.f32 %v5933, %v6327
        %v6553 = vadd.f32 %v5936, %v6330
        %v6554 = vadd.f32 %v5938, %v6332
        %v6555 = vadd.f32 %v5941, %v6335
        %v6556 = vadd.f32 %v5943, %v6337
        %v6557 = vadd.f32 %v5946, %v6340
        %v6558 = vadd.f32 %v5948, %v6342
        %v6559 = vadd.f32 %v5951, %v6345
        %v6560 = vadd.f32 %v5953, %v6347
        %v6561 = vadd.f32 %v5956, %v6350
        %v6562 = vadd.f32 %v5958, %v6352
        %v6563 = vadd.f32 %v5961, %v6355
        %v6564 = vadd.f32 %v5963, %v6357
        %v6565 = vadd.f32 %v5966, %v6360
        %v6566 = vadd.f32 %v5968, %v6362
        %v6567 = vadd.f32 %v5971, %v6365
        %v6568 = vadd.f32 %v5973, %v6367
        %v6569 = vadd.f32 %v5976, %v6370
        %v6570 = vadd.f32 %v5978, %v6372
        %v6571 = vadd.f32 %v5981, %v6375
        %v6572 = vadd.f32 %v5983, %v6377
        %v6573 = vadd.f32 %v5986, %v6380
        %v6574 = vadd.f32 %v5988, %v6382
        %v6575 = vadd.f32 %v5991, %v6385
        %v6576 = vadd.f32 %v5993, %v6387
        %v6577 = vadd.f32 %v5996, %v6390
        %v6578 = vadd.f32 %v5998, %v6392
        %v6579 = vadd.f32 %v6001, %v6395
        %v6580 = vadd.f32 %v6003, %v6397
        %v6581 = vadd.f32 %v6006, %v6400
        %v6582 = vadd.f32 %v6008, %v6402
        %v6583 = vadd.f32 %v6011, %v6405
        %v6584 = vadd.f32 %v6013, %v6407
        %v6585 = vadd.f32 %v6016, %v6410
        %v6586 = vadd.f32 %v6018, %v6412
        %v6587 = vadd.f32 %v6021, %v6415
        %v6588 = vadd.f32 %v6023, %v6417
        %v6589 = vadd.f32 %v6026, %v6420
        %v6590 = vadd.f32 %v6028, %v6422
        %v6591 = vadd.f32 %v6031, %v6425
        %v6592 = vadd.f32 %v6033, %v6427
        %v6593 = vadd.f32 %v6036, %v6430
        %v6594 = vadd.f32 %v6038, %v6432
        %v6595 = vadd.f32 %v6041, %v6435
        %v6596 = vadd.f32 %v6043, %v6437
        %v6597 = vadd.f32 %v6046, %v6440
        %v6598 = vadd.f32 %v6048, %v6442
        %v6599 = vadd.f32 %v6051, %v6445
        %v6600 = vadd.f32 %v6053, %v6447
        %v6601 = vadd.f32 %v6056, %v6450
        %v6602 = vadd.f32 %v6058, %v6452
        %v6603 = vadd.f32 %v6061, %v6455
        %v6604 = vadd.f32 %v6063, %v6457
        %v6605 = vadd.f32 %v6066, %v6460
        %v6606 = vadd.f32 %v6068, %v6462
        %v6607 = vadd.f32 %v6071, %v6465
        %v6608 = vadd.f32 %v6073, %v6467
        %v6609 = vadd.f32 %v6076, %v6470
        %v6610 = vadd.f32 %v6078, %v6472
        %v6611 = vadd.f32 %v6081, %v6475
        %v6612 = vadd.f32 %v6083, %v6477
        %v6613 = vadd.f32 %v6086, %v6480
        %v6614 = vadd.f32 %v6088, %v6482
        %v6615 = vadd.f32 %v6091, %v6485
        %v6616 = vadd.f32 %v6093, %v6487
        %v6617 = vld [vmem:[%s6] sm:$0x1]
        %v6619 = vperm.slane %v6617, 0
        %v6621 = vadd.f32 %v6489, %v6619
        %v6622 = vadd.f32 %v6490, %v6619
        %v6623 = vadd.f32 %v6491, %v6619
        %v6624 = vadd.f32 %v6492, %v6619
        %v6625 = vadd.f32 %v6493, %v6619
        %v6626 = vadd.f32 %v6494, %v6619
        %v6627 = vadd.f32 %v6495, %v6619
        %v6628 = vadd.f32 %v6496, %v6619
        %v6629 = vadd.f32 %v6497, %v6619
        %v6630 = vadd.f32 %v6498, %v6619
        %v6631 = vadd.f32 %v6499, %v6619
        %v6632 = vadd.f32 %v6500, %v6619
        %v6633 = vadd.f32 %v6501, %v6619
        %v6634 = vadd.f32 %v6502, %v6619
        %v6635 = vadd.f32 %v6503, %v6619
        %v6636 = vadd.f32 %v6504, %v6619
        %v6637 = vadd.f32 %v6505, %v6619
        %v6638 = vadd.f32 %v6506, %v6619
        %v6639 = vadd.f32 %v6507, %v6619
        %v6640 = vadd.f32 %v6508, %v6619
        %v6641 = vadd.f32 %v6509, %v6619
        %v6642 = vadd.f32 %v6510, %v6619
        %v6643 = vadd.f32 %v6511, %v6619
        %v6644 = vadd.f32 %v6512, %v6619
        %v6645 = vadd.f32 %v6513, %v6619
        %v6646 = vadd.f32 %v6514, %v6619
        %v6647 = vadd.f32 %v6515, %v6619
        %v6648 = vadd.f32 %v6516, %v6619
        %v6649 = vadd.f32 %v6517, %v6619
        %v6650 = vadd.f32 %v6518, %v6619
        %v6651 = vadd.f32 %v6519, %v6619
        %v6652 = vadd.f32 %v6520, %v6619
        %v6653 = vadd.f32 %v6521, %v6619
        %v6654 = vadd.f32 %v6522, %v6619
        %v6655 = vadd.f32 %v6523, %v6619
        %v6656 = vadd.f32 %v6524, %v6619
        %v6657 = vadd.f32 %v6525, %v6619
        %v6658 = vadd.f32 %v6526, %v6619
        %v6659 = vadd.f32 %v6527, %v6619
        %v6660 = vadd.f32 %v6528, %v6619
        %v6661 = vadd.f32 %v6529, %v6619
        %v6662 = vadd.f32 %v6530, %v6619
        %v6663 = vadd.f32 %v6531, %v6619
        %v6664 = vadd.f32 %v6532, %v6619
        %v6665 = vadd.f32 %v6533, %v6619
        %v6666 = vadd.f32 %v6534, %v6619
        %v6667 = vadd.f32 %v6535, %v6619
        %v6668 = vadd.f32 %v6536, %v6619
        %v6669 = vadd.f32 %v6537, %v6619
        %v6670 = vadd.f32 %v6538, %v6619
        %v6671 = vadd.f32 %v6539, %v6619
        %v6672 = vadd.f32 %v6540, %v6619
        %v6673 = vadd.f32 %v6541, %v6619
        %v6674 = vadd.f32 %v6542, %v6619
        %v6675 = vadd.f32 %v6543, %v6619
        %v6676 = vadd.f32 %v6544, %v6619
        %v6677 = vadd.f32 %v6545, %v6619
        %v6678 = vadd.f32 %v6546, %v6619
        %v6679 = vadd.f32 %v6547, %v6619
        %v6680 = vadd.f32 %v6548, %v6619
        %v6681 = vadd.f32 %v6549, %v6619
        %v6682 = vadd.f32 %v6550, %v6619
        %v6683 = vadd.f32 %v6551, %v6619
        %v6684 = vadd.f32 %v6552, %v6619
        %v6685 = vadd.f32 %v6553, %v6619
        %v6686 = vadd.f32 %v6554, %v6619
        %v6687 = vadd.f32 %v6555, %v6619
        %v6688 = vadd.f32 %v6556, %v6619
        %v6689 = vadd.f32 %v6557, %v6619
        %v6690 = vadd.f32 %v6558, %v6619
        %v6691 = vadd.f32 %v6559, %v6619
        %v6692 = vadd.f32 %v6560, %v6619
        %v6693 = vadd.f32 %v6561, %v6619
        %v6694 = vadd.f32 %v6562, %v6619
        %v6695 = vadd.f32 %v6563, %v6619
        %v6696 = vadd.f32 %v6564, %v6619
        %v6697 = vadd.f32 %v6565, %v6619
        %v6698 = vadd.f32 %v6566, %v6619
        %v6699 = vadd.f32 %v6567, %v6619
        %v6700 = vadd.f32 %v6568, %v6619
        %v6701 = vadd.f32 %v6569, %v6619
        %v6702 = vadd.f32 %v6570, %v6619
        %v6703 = vadd.f32 %v6571, %v6619
        %v6704 = vadd.f32 %v6572, %v6619
        %v6705 = vadd.f32 %v6573, %v6619
        %v6706 = vadd.f32 %v6574, %v6619
        %v6707 = vadd.f32 %v6575, %v6619
        %v6708 = vadd.f32 %v6576, %v6619
        %v6709 = vadd.f32 %v6577, %v6619
        %v6710 = vadd.f32 %v6578, %v6619
        %v6711 = vadd.f32 %v6579, %v6619
        %v6712 = vadd.f32 %v6580, %v6619
        %v6713 = vadd.f32 %v6581, %v6619
        %v6714 = vadd.f32 %v6582, %v6619
        %v6715 = vadd.f32 %v6583, %v6619
        %v6716 = vadd.f32 %v6584, %v6619
        %v6717 = vadd.f32 %v6585, %v6619
        %v6718 = vadd.f32 %v6586, %v6619
        %v6719 = vadd.f32 %v6587, %v6619
        %v6720 = vadd.f32 %v6588, %v6619
        %v6721 = vadd.f32 %v6589, %v6619
        %v6722 = vadd.f32 %v6590, %v6619
        %v6723 = vadd.f32 %v6591, %v6619
        %v6724 = vadd.f32 %v6592, %v6619
        %v6725 = vadd.f32 %v6593, %v6619
        %v6726 = vadd.f32 %v6594, %v6619
        %v6727 = vadd.f32 %v6595, %v6619
        %v6728 = vadd.f32 %v6596, %v6619
        %v6729 = vadd.f32 %v6597, %v6619
        %v6730 = vadd.f32 %v6598, %v6619
        %v6731 = vadd.f32 %v6599, %v6619
        %v6732 = vadd.f32 %v6600, %v6619
        %v6733 = vadd.f32 %v6601, %v6619
        %v6734 = vadd.f32 %v6602, %v6619
        %v6735 = vadd.f32 %v6603, %v6619
        %v6736 = vadd.f32 %v6604, %v6619
        %v6737 = vadd.f32 %v6605, %v6619
        %v6738 = vadd.f32 %v6606, %v6619
        %v6739 = vadd.f32 %v6607, %v6619
        %v6740 = vadd.f32 %v6608, %v6619
        %v6741 = vadd.f32 %v6609, %v6619
        %v6742 = vadd.f32 %v6610, %v6619
        %v6743 = vadd.f32 %v6611, %v6619
        %v6744 = vadd.f32 %v6612, %v6619
        %v6745 = vadd.f32 %v6613, %v6619
        %v6746 = vadd.f32 %v6614, %v6619
        %v6747 = vadd.f32 %v6615, %v6619
        %v6748 = vadd.f32 %v6616, %v6619
        %v6749 = vmax.f32 %v6621, 0.0
        %v6750 = vmax.f32 %v6622, 0.0
        %v6751 = vmax.f32 %v6623, 0.0
        %v6752 = vmax.f32 %v6624, 0.0
        %v6753 = vmax.f32 %v6625, 0.0
        %v6754 = vmax.f32 %v6626, 0.0
        %v6755 = vmax.f32 %v6627, 0.0
        %v6756 = vmax.f32 %v6628, 0.0
        %v6757 = vmax.f32 %v6629, 0.0
        %v6758 = vmax.f32 %v6630, 0.0
        %v6759 = vmax.f32 %v6631, 0.0
        %v6760 = vmax.f32 %v6632, 0.0
        %v6761 = vmax.f32 %v6633, 0.0
        %v6762 = vmax.f32 %v6634, 0.0
        %v6763 = vmax.f32 %v6635, 0.0
        %v6764 = vmax.f32 %v6636, 0.0
        %v6765 = vmax.f32 %v6637, 0.0
        %v6766 = vmax.f32 %v6638, 0.0
        %v6767 = vmax.f32 %v6639, 0.0
        %v6768 = vmax.f32 %v6640, 0.0
        %v6769 = vmax.f32 %v6641, 0.0
        %v6770 = vmax.f32 %v6642, 0.0
        %v6771 = vmax.f32 %v6643, 0.0
        %v6772 = vmax.f32 %v6644, 0.0
        %v6773 = vmax.f32 %v6645, 0.0
        %v6774 = vmax.f32 %v6646, 0.0
        %v6775 = vmax.f32 %v6647, 0.0
        %v6776 = vmax.f32 %v6648, 0.0
        %v6777 = vmax.f32 %v6649, 0.0
        %v6778 = vmax.f32 %v6650, 0.0
        %v6779 = vmax.f32 %v6651, 0.0
        %v6780 = vmax.f32 %v6652, 0.0
        %v6781 = vmax.f32 %v6653, 0.0
        %v6782 = vmax.f32 %v6654, 0.0
        %v6783 = vmax.f32 %v6655, 0.0
        %v6784 = vmax.f32 %v6656, 0.0
        %v6785 = vmax.f32 %v6657, 0.0
        %v6786 = vmax.f32 %v6658, 0.0
        %v6787 = vmax.f32 %v6659, 0.0
        %v6788 = vmax.f32 %v6660, 0.0
        %v6789 = vmax.f32 %v6661, 0.0
        %v6790 = vmax.f32 %v6662, 0.0
        %v6791 = vmax.f32 %v6663, 0.0
        %v6792 = vmax.f32 %v6664, 0.0
        %v6793 = vmax.f32 %v6665, 0.0
        %v6794 = vmax.f32 %v6666, 0.0
        %v6795 = vmax.f32 %v6667, 0.0
        %v6796 = vmax.f32 %v6668, 0.0
        %v6797 = vmax.f32 %v6669, 0.0
        %v6798 = vmax.f32 %v6670, 0.0
        %v6799 = vmax.f32 %v6671, 0.0
        %v6800 = vmax.f32 %v6672, 0.0
        %v6801 = vmax.f32 %v6673, 0.0
        %v6802 = vmax.f32 %v6674, 0.0
        %v6803 = vmax.f32 %v6675, 0.0
        %v6804 = vmax.f32 %v6676, 0.0
        %v6805 = vmax.f32 %v6677, 0.0
        %v6806 = vmax.f32 %v6678, 0.0
        %v6807 = vmax.f32 %v6679, 0.0
        %v6808 = vmax.f32 %v6680, 0.0
        %v6809 = vmax.f32 %v6681, 0.0
        %v6810 = vmax.f32 %v6682, 0.0
        %v6811 = vmax.f32 %v6683, 0.0
        %v6812 = vmax.f32 %v6684, 0.0
        %v6813 = vmax.f32 %v6685, 0.0
        %v6814 = vmax.f32 %v6686, 0.0
        %v6815 = vmax.f32 %v6687, 0.0
        %v6816 = vmax.f32 %v6688, 0.0
        %v6817 = vmax.f32 %v6689, 0.0
        %v6818 = vmax.f32 %v6690, 0.0
        %v6819 = vmax.f32 %v6691, 0.0
        %v6820 = vmax.f32 %v6692, 0.0
        %v6821 = vmax.f32 %v6693, 0.0
        %v6822 = vmax.f32 %v6694, 0.0
        %v6823 = vmax.f32 %v6695, 0.0
        %v6824 = vmax.f32 %v6696, 0.0
        %v6825 = vmax.f32 %v6697, 0.0
        %v6826 = vmax.f32 %v6698, 0.0
        %v6827 = vmax.f32 %v6699, 0.0
        %v6828 = vmax.f32 %v6700, 0.0
        %v6829 = vmax.f32 %v6701, 0.0
        %v6830 = vmax.f32 %v6702, 0.0
        %v6831 = vmax.f32 %v6703, 0.0
        %v6832 = vmax.f32 %v6704, 0.0
        %v6833 = vmax.f32 %v6705, 0.0
        %v6834 = vmax.f32 %v6706, 0.0
        %v6835 = vmax.f32 %v6707, 0.0
        %v6836 = vmax.f32 %v6708, 0.0
        %v6837 = vmax.f32 %v6709, 0.0
        %v6838 = vmax.f32 %v6710, 0.0
        %v6839 = vmax.f32 %v6711, 0.0
        %v6840 = vmax.f32 %v6712, 0.0
        %v6841 = vmax.f32 %v6713, 0.0
        %v6842 = vmax.f32 %v6714, 0.0
        %v6843 = vmax.f32 %v6715, 0.0
        %v6844 = vmax.f32 %v6716, 0.0
        %v6845 = vmax.f32 %v6717, 0.0
        %v6846 = vmax.f32 %v6718, 0.0
        %v6847 = vmax.f32 %v6719, 0.0
        %v6848 = vmax.f32 %v6720, 0.0
        %v6849 = vmax.f32 %v6721, 0.0
        %v6850 = vmax.f32 %v6722, 0.0
        %v6851 = vmax.f32 %v6723, 0.0
        %v6852 = vmax.f32 %v6724, 0.0
        %v6853 = vmax.f32 %v6725, 0.0
        %v6854 = vmax.f32 %v6726, 0.0
        %v6855 = vmax.f32 %v6727, 0.0
        %v6856 = vmax.f32 %v6728, 0.0
        %v6857 = vmax.f32 %v6729, 0.0
        %v6858 = vmax.f32 %v6730, 0.0
        %v6859 = vmax.f32 %v6731, 0.0
        %v6860 = vmax.f32 %v6732, 0.0
        %v6861 = vmax.f32 %v6733, 0.0
        %v6862 = vmax.f32 %v6734, 0.0
        %v6863 = vmax.f32 %v6735, 0.0
        %v6864 = vmax.f32 %v6736, 0.0
        %v6865 = vmax.f32 %v6737, 0.0
        %v6866 = vmax.f32 %v6738, 0.0
        %v6867 = vmax.f32 %v6739, 0.0
        %v6868 = vmax.f32 %v6740, 0.0
        %v6869 = vmax.f32 %v6741, 0.0
        %v6870 = vmax.f32 %v6742, 0.0
        %v6871 = vmax.f32 %v6743, 0.0
        %v6872 = vmax.f32 %v6744, 0.0
        %v6873 = vmax.f32 %v6745, 0.0
        %v6874 = vmax.f32 %v6746, 0.0
        %v6875 = vmax.f32 %v6747, 0.0
        %v6876 = vmax.f32 %v6748, 0.0
        %v6877 = vpack.c.bf16 %v6749, %v6749
        %v6878 = vpack.c.bf16 %v6750, %v6750
        %v6879 = vpack.c.bf16 %v6751, %v6751
        %v6880 = vpack.c.bf16 %v6752, %v6752
        %v6881 = vpack.c.bf16 %v6753, %v6753
        %v6882 = vpack.c.bf16 %v6754, %v6754
        %v6883 = vpack.c.bf16 %v6755, %v6755
        %v6884 = vpack.c.bf16 %v6756, %v6756
        %v6885 = vpack.c.bf16 %v6757, %v6757
        %v6886 = vpack.c.bf16 %v6758, %v6758
        %v6887 = vpack.c.bf16 %v6759, %v6759
        %v6888 = vpack.c.bf16 %v6760, %v6760
        %v6889 = vpack.c.bf16 %v6761, %v6761
        %v6890 = vpack.c.bf16 %v6762, %v6762
        %v6891 = vpack.c.bf16 %v6763, %v6763
        %v6892 = vpack.c.bf16 %v6764, %v6764
        %v6893 = vpack.c.bf16 %v6765, %v6765
        %v6894 = vpack.c.bf16 %v6766, %v6766
        %v6895 = vpack.c.bf16 %v6767, %v6767
        %v6896 = vpack.c.bf16 %v6768, %v6768
        %v6897 = vpack.c.bf16 %v6769, %v6769
        %v6898 = vpack.c.bf16 %v6770, %v6770
        %v6899 = vpack.c.bf16 %v6771, %v6771
        %v6900 = vpack.c.bf16 %v6772, %v6772
        %v6901 = vpack.c.bf16 %v6773, %v6773
        %v6902 = vpack.c.bf16 %v6774, %v6774
        %v6903 = vpack.c.bf16 %v6775, %v6775
        %v6904 = vpack.c.bf16 %v6776, %v6776
        %v6905 = vpack.c.bf16 %v6777, %v6777
        %v6906 = vpack.c.bf16 %v6778, %v6778
        %v6907 = vpack.c.bf16 %v6779, %v6779
        %v6908 = vpack.c.bf16 %v6780, %v6780
        %v6909 = vpack.c.bf16 %v6781, %v6781
        %v6910 = vpack.c.bf16 %v6782, %v6782
        %v6911 = vpack.c.bf16 %v6783, %v6783
        %v6912 = vpack.c.bf16 %v6784, %v6784
        %v6913 = vpack.c.bf16 %v6785, %v6785
        %v6914 = vpack.c.bf16 %v6786, %v6786
        %v6915 = vpack.c.bf16 %v6787, %v6787
        %v6916 = vpack.c.bf16 %v6788, %v6788
        %v6917 = vpack.c.bf16 %v6789, %v6789
        %v6918 = vpack.c.bf16 %v6790, %v6790
        %v6919 = vpack.c.bf16 %v6791, %v6791
        %v6920 = vpack.c.bf16 %v6792, %v6792
        %v6921 = vpack.c.bf16 %v6793, %v6793
        %v6922 = vpack.c.bf16 %v6794, %v6794
        %v6923 = vpack.c.bf16 %v6795, %v6795
        %v6924 = vpack.c.bf16 %v6796, %v6796
        %v6925 = vpack.c.bf16 %v6797, %v6797
        %v6926 = vpack.c.bf16 %v6798, %v6798
        %v6927 = vpack.c.bf16 %v6799, %v6799
        %v6928 = vpack.c.bf16 %v6800, %v6800
        %v6929 = vpack.c.bf16 %v6801, %v6801
        %v6930 = vpack.c.bf16 %v6802, %v6802
        %v6931 = vpack.c.bf16 %v6803, %v6803
        %v6932 = vpack.c.bf16 %v6804, %v6804
        %v6933 = vpack.c.bf16 %v6805, %v6805
        %v6934 = vpack.c.bf16 %v6806, %v6806
        %v6935 = vpack.c.bf16 %v6807, %v6807
        %v6936 = vpack.c.bf16 %v6808, %v6808
        %v6937 = vpack.c.bf16 %v6809, %v6809
        %v6938 = vpack.c.bf16 %v6810, %v6810
        %v6939 = vpack.c.bf16 %v6811, %v6811
        %v6940 = vpack.c.bf16 %v6812, %v6812
        %v6941 = vpack.c.bf16 %v6813, %v6813
        %v6942 = vpack.c.bf16 %v6814, %v6814
        %v6943 = vpack.c.bf16 %v6815, %v6815
        %v6944 = vpack.c.bf16 %v6816, %v6816
        %v6945 = vpack.c.bf16 %v6817, %v6817
        %v6946 = vpack.c.bf16 %v6818, %v6818
        %v6947 = vpack.c.bf16 %v6819, %v6819
        %v6948 = vpack.c.bf16 %v6820, %v6820
        %v6949 = vpack.c.bf16 %v6821, %v6821
        %v6950 = vpack.c.bf16 %v6822, %v6822
        %v6951 = vpack.c.bf16 %v6823, %v6823
        %v6952 = vpack.c.bf16 %v6824, %v6824
        %v6953 = vpack.c.bf16 %v6825, %v6825
        %v6954 = vpack.c.bf16 %v6826, %v6826
        %v6955 = vpack.c.bf16 %v6827, %v6827
        %v6956 = vpack.c.bf16 %v6828, %v6828
        %v6957 = vpack.c.bf16 %v6829, %v6829
        %v6958 = vpack.c.bf16 %v6830, %v6830
        %v6959 = vpack.c.bf16 %v6831, %v6831
        %v6960 = vpack.c.bf16 %v6832, %v6832
        %v6961 = vpack.c.bf16 %v6833, %v6833
        %v6962 = vpack.c.bf16 %v6834, %v6834
        %v6963 = vpack.c.bf16 %v6835, %v6835
        %v6964 = vpack.c.bf16 %v6836, %v6836
        %v6965 = vpack.c.bf16 %v6837, %v6837
        %v6966 = vpack.c.bf16 %v6838, %v6838
        %v6967 = vpack.c.bf16 %v6839, %v6839
        %v6968 = vpack.c.bf16 %v6840, %v6840
        %v6969 = vpack.c.bf16 %v6841, %v6841
        %v6970 = vpack.c.bf16 %v6842, %v6842
        %v6971 = vpack.c.bf16 %v6843, %v6843
        %v6972 = vpack.c.bf16 %v6844, %v6844
        %v6973 = vpack.c.bf16 %v6845, %v6845
        %v6974 = vpack.c.bf16 %v6846, %v6846
        %v6975 = vpack.c.bf16 %v6847, %v6847
        %v6976 = vpack.c.bf16 %v6848, %v6848
        %v6977 = vpack.c.bf16 %v6849, %v6849
        %v6978 = vpack.c.bf16 %v6850, %v6850
        %v6979 = vpack.c.bf16 %v6851, %v6851
        %v6980 = vpack.c.bf16 %v6852, %v6852
        %v6981 = vpack.c.bf16 %v6853, %v6853
        %v6982 = vpack.c.bf16 %v6854, %v6854
        %v6983 = vpack.c.bf16 %v6855, %v6855
        %v6984 = vpack.c.bf16 %v6856, %v6856
        %v6985 = vpack.c.bf16 %v6857, %v6857
        %v6986 = vpack.c.bf16 %v6858, %v6858
        %v6987 = vpack.c.bf16 %v6859, %v6859
        %v6988 = vpack.c.bf16 %v6860, %v6860
        %v6989 = vpack.c.bf16 %v6861, %v6861
        %v6990 = vpack.c.bf16 %v6862, %v6862
        %v6991 = vpack.c.bf16 %v6863, %v6863
        %v6992 = vpack.c.bf16 %v6864, %v6864
        %v6993 = vpack.c.bf16 %v6865, %v6865
        %v6994 = vpack.c.bf16 %v6866, %v6866
        %v6995 = vpack.c.bf16 %v6867, %v6867
        %v6996 = vpack.c.bf16 %v6868, %v6868
        %v6997 = vpack.c.bf16 %v6869, %v6869
        %v6998 = vpack.c.bf16 %v6870, %v6870
        %v6999 = vpack.c.bf16 %v6871, %v6871
        %v7000 = vpack.c.bf16 %v6872, %v6872
        %v7001 = vpack.c.bf16 %v6873, %v6873
        %v7002 = vpack.c.bf16 %v6874, %v6874
        %v7003 = vpack.c.bf16 %v6875, %v6875
        %v7004 = vpack.c.bf16 %v6876, %v6876
        %v7133 = vunpack.c.l.b16 %v6877
        %v7134 = vunpack.c.l.b16 %v6878
        %v7135 = vunpack.c.l.b16 %v6879
        %v7136 = vunpack.c.l.b16 %v6880
        %v7137 = vunpack.c.l.b16 %v6881
        %v7138 = vunpack.c.l.b16 %v6882
        %v7139 = vunpack.c.l.b16 %v6883
        %v7140 = vunpack.c.l.b16 %v6884
        %v7141 = vunpack.c.l.b16 %v6885
        %v7142 = vunpack.c.l.b16 %v6886
        %v7143 = vunpack.c.l.b16 %v6887
        %v7144 = vunpack.c.l.b16 %v6888
        %v7145 = vunpack.c.l.b16 %v6889
        %v7146 = vunpack.c.l.b16 %v6890
        %v7147 = vunpack.c.l.b16 %v6891
        %v7148 = vunpack.c.l.b16 %v6892
        %v7149 = vunpack.c.l.b16 %v6893
        %v7150 = vunpack.c.l.b16 %v6894
        %v7151 = vunpack.c.l.b16 %v6895
        %v7152 = vunpack.c.l.b16 %v6896
        %v7153 = vunpack.c.l.b16 %v6897
        %v7154 = vunpack.c.l.b16 %v6898
        %v7155 = vunpack.c.l.b16 %v6899
        %v7156 = vunpack.c.l.b16 %v6900
        %v7157 = vunpack.c.l.b16 %v6901
        %v7158 = vunpack.c.l.b16 %v6902
        %v7159 = vunpack.c.l.b16 %v6903
        %v7160 = vunpack.c.l.b16 %v6904
        %v7161 = vunpack.c.l.b16 %v6905
        %v7162 = vunpack.c.l.b16 %v6906
        %v7163 = vunpack.c.l.b16 %v6907
        %v7164 = vunpack.c.l.b16 %v6908
        %v7165 = vunpack.c.l.b16 %v6909
        %v7166 = vunpack.c.l.b16 %v6910
        %v7167 = vunpack.c.l.b16 %v6911
        %v7168 = vunpack.c.l.b16 %v6912
        %v7169 = vunpack.c.l.b16 %v6913
        %v7170 = vunpack.c.l.b16 %v6914
        %v7171 = vunpack.c.l.b16 %v6915
        %v7172 = vunpack.c.l.b16 %v6916
        %v7173 = vunpack.c.l.b16 %v6917
        %v7174 = vunpack.c.l.b16 %v6918
        %v7175 = vunpack.c.l.b16 %v6919
        %v7176 = vunpack.c.l.b16 %v6920
        %v7177 = vunpack.c.l.b16 %v6921
        %v7178 = vunpack.c.l.b16 %v6922
        %v7179 = vunpack.c.l.b16 %v6923
        %v7180 = vunpack.c.l.b16 %v6924
        %v7181 = vunpack.c.l.b16 %v6925
        %v7182 = vunpack.c.l.b16 %v6926
        %v7183 = vunpack.c.l.b16 %v6927
        %v7184 = vunpack.c.l.b16 %v6928
        %v7185 = vunpack.c.l.b16 %v6929
        %v7186 = vunpack.c.l.b16 %v6930
        %v7187 = vunpack.c.l.b16 %v6931
        %v7188 = vunpack.c.l.b16 %v6932
        %v7189 = vunpack.c.l.b16 %v6933
        %v7190 = vunpack.c.l.b16 %v6934
        %v7191 = vunpack.c.l.b16 %v6935
        %v7192 = vunpack.c.l.b16 %v6936
        %v7193 = vunpack.c.l.b16 %v6937
        %v7194 = vunpack.c.l.b16 %v6938
        %v7195 = vunpack.c.l.b16 %v6939
        %v7196 = vunpack.c.l.b16 %v6940
        %v7197 = vunpack.c.l.b16 %v6941
        %v7198 = vunpack.c.l.b16 %v6942
        %v7199 = vunpack.c.l.b16 %v6943
        %v7200 = vunpack.c.l.b16 %v6944
        %v7201 = vunpack.c.l.b16 %v6945
        %v7202 = vunpack.c.l.b16 %v6946
        %v7203 = vunpack.c.l.b16 %v6947
        %v7204 = vunpack.c.l.b16 %v6948
        %v7205 = vunpack.c.l.b16 %v6949
        %v7206 = vunpack.c.l.b16 %v6950
        %v7207 = vunpack.c.l.b16 %v6951
        %v7208 = vunpack.c.l.b16 %v6952
        %v7209 = vunpack.c.l.b16 %v6953
        %v7210 = vunpack.c.l.b16 %v6954
        %v7211 = vunpack.c.l.b16 %v6955
        %v7212 = vunpack.c.l.b16 %v6956
        %v7213 = vunpack.c.l.b16 %v6957
        %v7214 = vunpack.c.l.b16 %v6958
        %v7215 = vunpack.c.l.b16 %v6959
        %v7216 = vunpack.c.l.b16 %v6960
        %v7217 = vunpack.c.l.b16 %v6961
        %v7218 = vunpack.c.l.b16 %v6962
        %v7219 = vunpack.c.l.b16 %v6963
        %v7220 = vunpack.c.l.b16 %v6964
        %v7221 = vunpack.c.l.b16 %v6965
        %v7222 = vunpack.c.l.b16 %v6966
        %v7223 = vunpack.c.l.b16 %v6967
        %v7224 = vunpack.c.l.b16 %v6968
        %v7225 = vunpack.c.l.b16 %v6969
        %v7226 = vunpack.c.l.b16 %v6970
        %v7227 = vunpack.c.l.b16 %v6971
        %v7228 = vunpack.c.l.b16 %v6972
        %v7229 = vunpack.c.l.b16 %v6973
        %v7230 = vunpack.c.l.b16 %v6974
        %v7231 = vunpack.c.l.b16 %v6975
        %v7232 = vunpack.c.l.b16 %v6976
        %v7233 = vunpack.c.l.b16 %v6977
        %v7234 = vunpack.c.l.b16 %v6978
        %v7235 = vunpack.c.l.b16 %v6979
        %v7236 = vunpack.c.l.b16 %v6980
        %v7237 = vunpack.c.l.b16 %v6981
        %v7238 = vunpack.c.l.b16 %v6982
        %v7239 = vunpack.c.l.b16 %v6983
        %v7240 = vunpack.c.l.b16 %v6984
        %v7241 = vunpack.c.l.b16 %v6985
        %v7242 = vunpack.c.l.b16 %v6986
        %v7243 = vunpack.c.l.b16 %v6987
        %v7244 = vunpack.c.l.b16 %v6988
        %v7245 = vunpack.c.l.b16 %v6989
        %v7246 = vunpack.c.l.b16 %v6990
        %v7247 = vunpack.c.l.b16 %v6991
        %v7248 = vunpack.c.l.b16 %v6992
        %v7249 = vunpack.c.l.b16 %v6993
        %v7250 = vunpack.c.l.b16 %v6994
        %v7251 = vunpack.c.l.b16 %v6995
        %v7252 = vunpack.c.l.b16 %v6996
        %v7253 = vunpack.c.l.b16 %v6997
        %v7254 = vunpack.c.l.b16 %v6998
        %v7255 = vunpack.c.l.b16 %v6999
        %v7256 = vunpack.c.l.b16 %v7000
        %v7257 = vunpack.c.l.b16 %v7001
        %v7258 = vunpack.c.l.b16 %v7002
        %v7259 = vunpack.c.l.b16 %v7003
        %v7260 = vunpack.c.l.b16 %v7004
        %v7261 = vpack.c.b16 %v7134, %v7133
        %v7262 = vpack.c.b16 %v7136, %v7135
        %v7263 = vpack.c.b16 %v7138, %v7137
        %v7264 = vpack.c.b16 %v7140, %v7139
        %v7265 = vpack.c.b16 %v7142, %v7141
        %v7266 = vpack.c.b16 %v7144, %v7143
        %v7267 = vpack.c.b16 %v7146, %v7145
        %v7268 = vpack.c.b16 %v7148, %v7147
        %v7269 = vpack.c.b16 %v7150, %v7149
        %v7270 = vpack.c.b16 %v7152, %v7151
        %v7271 = vpack.c.b16 %v7154, %v7153
        %v7272 = vpack.c.b16 %v7156, %v7155
        %v7273 = vpack.c.b16 %v7158, %v7157
        %v7274 = vpack.c.b16 %v7160, %v7159
        %v7275 = vpack.c.b16 %v7162, %v7161
        %v7276 = vpack.c.b16 %v7164, %v7163
        %v7277 = vpack.c.b16 %v7166, %v7165
        %v7278 = vpack.c.b16 %v7168, %v7167
        %v7279 = vpack.c.b16 %v7170, %v7169
        %v7280 = vpack.c.b16 %v7172, %v7171
        %v7281 = vpack.c.b16 %v7174, %v7173
        %v7282 = vpack.c.b16 %v7176, %v7175
        %v7283 = vpack.c.b16 %v7178, %v7177
        %v7284 = vpack.c.b16 %v7180, %v7179
        %v7285 = vpack.c.b16 %v7182, %v7181
        %v7286 = vpack.c.b16 %v7184, %v7183
        %v7287 = vpack.c.b16 %v7186, %v7185
        %v7288 = vpack.c.b16 %v7188, %v7187
        %v7289 = vpack.c.b16 %v7190, %v7189
        %v7290 = vpack.c.b16 %v7192, %v7191
        %v7291 = vpack.c.b16 %v7194, %v7193
        %v7292 = vpack.c.b16 %v7196, %v7195
        %v7293 = vpack.c.b16 %v7198, %v7197
        %v7294 = vpack.c.b16 %v7200, %v7199
        %v7295 = vpack.c.b16 %v7202, %v7201
        %v7296 = vpack.c.b16 %v7204, %v7203
        %v7297 = vpack.c.b16 %v7206, %v7205
        %v7298 = vpack.c.b16 %v7208, %v7207
        %v7299 = vpack.c.b16 %v7210, %v7209
        %v7300 = vpack.c.b16 %v7212, %v7211
        %v7301 = vpack.c.b16 %v7214, %v7213
        %v7302 = vpack.c.b16 %v7216, %v7215
        %v7303 = vpack.c.b16 %v7218, %v7217
        %v7304 = vpack.c.b16 %v7220, %v7219
        %v7305 = vpack.c.b16 %v7222, %v7221
        %v7306 = vpack.c.b16 %v7224, %v7223
        %v7307 = vpack.c.b16 %v7226, %v7225
        %v7308 = vpack.c.b16 %v7228, %v7227
        %v7309 = vpack.c.b16 %v7230, %v7229
        %v7310 = vpack.c.b16 %v7232, %v7231
        %v7311 = vpack.c.b16 %v7234, %v7233
        %v7312 = vpack.c.b16 %v7236, %v7235
        %v7313 = vpack.c.b16 %v7238, %v7237
        %v7314 = vpack.c.b16 %v7240, %v7239
        %v7315 = vpack.c.b16 %v7242, %v7241
        %v7316 = vpack.c.b16 %v7244, %v7243
        %v7317 = vpack.c.b16 %v7246, %v7245
        %v7318 = vpack.c.b16 %v7248, %v7247
        %v7319 = vpack.c.b16 %v7250, %v7249
        %v7320 = vpack.c.b16 %v7252, %v7251
        %v7321 = vpack.c.b16 %v7254, %v7253
        %v7322 = vpack.c.b16 %v7256, %v7255
        %v7323 = vpack.c.b16 %v7258, %v7257
        %v7324 = vpack.c.b16 %v7260, %v7259
        %v7389 = vld [vmem:[%s7] sm:$0xf]
        %v7390 = vld [vmem:[%s7 + $0x4] sm:$0xf]
        %v7391 = vld [vmem:[%s7 + $0x8] sm:$0xf]
        %v7392 = vld [vmem:[%s7 + $0xc] sm:$0xf]
        %v7393 = vld [vmem:[%s7 + $0x10] sm:$0xf]
        %v7394 = vld [vmem:[%s7 + $0x14] sm:$0xf]
        %v7395 = vld [vmem:[%s7 + $0x18] sm:$0xf]
        %v7396 = vld [vmem:[%s7 + $0x1c] sm:$0xf]
        %v7397 = vld [vmem:[%s7 + $0x20] sm:$0xf]
        %v7398 = vld [vmem:[%s7 + $0x24] sm:$0xf]
        %v7399 = vld [vmem:[%s7 + $0x28] sm:$0xf]
        %v7400 = vld [vmem:[%s7 + $0x2c] sm:$0xf]
        %v7401 = vld [vmem:[%s7 + $0x30] sm:$0xf]
        %v7402 = vld [vmem:[%s7 + $0x34] sm:$0xf]
        %v7403 = vld [vmem:[%s7 + $0x38] sm:$0xf]
        %v7404 = vld [vmem:[%s7 + $0x3c] sm:$0xf]
        %v7405 = vld [vmem:[%s7 + $0x40] sm:$0xf]
        %v7406 = vld [vmem:[%s7 + $0x44] sm:$0xf]
        %v7407 = vld [vmem:[%s7 + $0x48] sm:$0xf]
        %v7408 = vld [vmem:[%s7 + $0x4c] sm:$0xf]
        %v7409 = vld [vmem:[%s7 + $0x50] sm:$0xf]
        %v7410 = vld [vmem:[%s7 + $0x54] sm:$0xf]
        %v7411 = vld [vmem:[%s7 + $0x58] sm:$0xf]
        %v7412 = vld [vmem:[%s7 + $0x5c] sm:$0xf]
        %v7413 = vld [vmem:[%s7 + $0x60] sm:$0xf]
        %v7414 = vld [vmem:[%s7 + $0x64] sm:$0xf]
        %v7415 = vld [vmem:[%s7 + $0x68] sm:$0xf]
        %v7416 = vld [vmem:[%s7 + $0x6c] sm:$0xf]
        %v7417 = vld [vmem:[%s7 + $0x70] sm:$0xf]
        %v7418 = vld [vmem:[%s7 + $0x74] sm:$0xf]
        %v7419 = vld [vmem:[%s7 + $0x78] sm:$0xf]
        %v7420 = vld [vmem:[%s7 + $0x7c] sm:$0xf]
        %v7421 = vld [vmem:[%s8] sm:$0x1]
        %v7423 = vperm.slane %v7421, 0
        %v7457 = vunpack.c.l.b16 %v7389
        %v7458 = vunpack.c.l.b16 %v7390
        %v7459 = vunpack.c.l.b16 %v7391
        %v7460 = vunpack.c.l.b16 %v7392
        %v7461 = vunpack.c.l.b16 %v7393
        %v7462 = vunpack.c.l.b16 %v7394
        %v7463 = vunpack.c.l.b16 %v7395
        %v7464 = vunpack.c.l.b16 %v7396
        %v7465 = vunpack.c.l.b16 %v7397
        %v7466 = vunpack.c.l.b16 %v7398
        %v7467 = vunpack.c.l.b16 %v7399
        %v7468 = vunpack.c.l.b16 %v7400
        %v7469 = vunpack.c.l.b16 %v7401
        %v7470 = vunpack.c.l.b16 %v7402
        %v7471 = vunpack.c.l.b16 %v7403
        %v7472 = vunpack.c.l.b16 %v7404
        %v7473 = vunpack.c.l.b16 %v7405
        %v7474 = vunpack.c.l.b16 %v7406
        %v7475 = vunpack.c.l.b16 %v7407
        %v7476 = vunpack.c.l.b16 %v7408
        %v7477 = vunpack.c.l.b16 %v7409
        %v7478 = vunpack.c.l.b16 %v7410
        %v7479 = vunpack.c.l.b16 %v7411
        %v7480 = vunpack.c.l.b16 %v7412
        %v7481 = vunpack.c.l.b16 %v7413
        %v7482 = vunpack.c.l.b16 %v7414
        %v7483 = vunpack.c.l.b16 %v7415
        %v7484 = vunpack.c.l.b16 %v7416
        %v7485 = vunpack.c.l.b16 %v7417
        %v7486 = vunpack.c.l.b16 %v7418
        %v7487 = vunpack.c.l.b16 %v7419
        %v7488 = vunpack.c.l.b16 %v7420
        %v7489 = vpack.c.b16 %v7458, %v7457
        %v7490 = vpack.c.b16 %v7460, %v7459
        %v7491 = vpack.c.b16 %v7462, %v7461
        %v7492 = vpack.c.b16 %v7464, %v7463
        %v7493 = vpack.c.b16 %v7466, %v7465
        %v7494 = vpack.c.b16 %v7468, %v7467
        %v7495 = vpack.c.b16 %v7470, %v7469
        %v7496 = vpack.c.b16 %v7472, %v7471
        %v7497 = vpack.c.b16 %v7474, %v7473
        %v7498 = vpack.c.b16 %v7476, %v7475
        %v7499 = vpack.c.b16 %v7478, %v7477
        %v7500 = vpack.c.b16 %v7480, %v7479
        %v7501 = vpack.c.b16 %v7482, %v7481
        %v7502 = vpack.c.b16 %v7484, %v7483
        %v7503 = vpack.c.b16 %v7486, %v7485
        %v7504 = vpack.c.b16 %v7488, %v7487
        %7521 = vmatpush.bf16.msra.mxu0 %v7496
        %7522 = vmatpush.bf16.msra.mxu0 %v7495
        %7523 = vmatpush.bf16.msra.mxu0 %v7494
        %7524 = vmatpush.bf16.msra.mxu0 %v7493
        %7525 = vmatpush.bf16.msra.mxu0 %v7492
        %7526 = vmatpush.bf16.msra.mxu0 %v7491
        %7527 = vmatpush.bf16.msra.mxu0 %v7490
        %7528 = vmatpush.bf16.msra.mxu0 %v7489
        %7529 = vmatmul.bf16.gmra.mxu0 %v7261
        %v7530 = vpop.f32.mrf.mxu0
        %v7531 = vadd.f32 %v7423, %v7530
        %v7532 = vpop.f32.mrf.mxu0
        %v7533 = vadd.f32 %v7423, %v7532
        %7534 = vmatmul.bf16.gmra.mxu0 %v7262
        %v7535 = vpop.f32.mrf.mxu0
        %v7536 = vadd.f32 %v7423, %v7535
        %v7537 = vpop.f32.mrf.mxu0
        %v7538 = vadd.f32 %v7423, %v7537
        %7539 = vmatmul.bf16.gmra.mxu0 %v7263
        %v7540 = vpop.f32.mrf.mxu0
        %v7541 = vadd.f32 %v7423, %v7540
        %v7542 = vpop.f32.mrf.mxu0
        %v7543 = vadd.f32 %v7423, %v7542
        %7544 = vmatmul.bf16.gmra.mxu0 %v7264
        %v7545 = vpop.f32.mrf.mxu0
        %v7546 = vadd.f32 %v7423, %v7545
        %v7547 = vpop.f32.mrf.mxu0
        %v7548 = vadd.f32 %v7423, %v7547
        %7549 = vmatmul.bf16.gmra.mxu0 %v7265
        %v7550 = vpop.f32.mrf.mxu0
        %v7551 = vadd.f32 %v7423, %v7550
        %v7552 = vpop.f32.mrf.mxu0
        %v7553 = vadd.f32 %v7423, %v7552
        %7554 = vmatmul.bf16.gmra.mxu0 %v7266
        %v7555 = vpop.f32.mrf.mxu0
        %v7556 = vadd.f32 %v7423, %v7555
        %v7557 = vpop.f32.mrf.mxu0
        %v7558 = vadd.f32 %v7423, %v7557
        %7559 = vmatmul.bf16.gmra.mxu0 %v7267
        %v7560 = vpop.f32.mrf.mxu0
        %v7561 = vadd.f32 %v7423, %v7560
        %v7562 = vpop.f32.mrf.mxu0
        %v7563 = vadd.f32 %v7423, %v7562
        %7564 = vmatmul.bf16.gmra.mxu0 %v7268
        %v7565 = vpop.f32.mrf.mxu0
        %v7566 = vadd.f32 %v7423, %v7565
        %v7567 = vpop.f32.mrf.mxu0
        %v7568 = vadd.f32 %v7423, %v7567
        %7569 = vmatmul.bf16.gmra.mxu0 %v7269
        %v7570 = vpop.f32.mrf.mxu0
        %v7571 = vadd.f32 %v7423, %v7570
        %v7572 = vpop.f32.mrf.mxu0
        %v7573 = vadd.f32 %v7423, %v7572
        %7574 = vmatmul.bf16.gmra.mxu0 %v7270
        %v7575 = vpop.f32.mrf.mxu0
        %v7576 = vadd.f32 %v7423, %v7575
        %v7577 = vpop.f32.mrf.mxu0
        %v7578 = vadd.f32 %v7423, %v7577
        %7579 = vmatmul.bf16.gmra.mxu0 %v7271
        %v7580 = vpop.f32.mrf.mxu0
        %v7581 = vadd.f32 %v7423, %v7580
        %v7582 = vpop.f32.mrf.mxu0
        %v7583 = vadd.f32 %v7423, %v7582
        %7584 = vmatmul.bf16.gmra.mxu0 %v7272
        %v7585 = vpop.f32.mrf.mxu0
        %v7586 = vadd.f32 %v7423, %v7585
        %v7587 = vpop.f32.mrf.mxu0
        %v7588 = vadd.f32 %v7423, %v7587
        %7589 = vmatmul.bf16.gmra.mxu0 %v7273
        %v7590 = vpop.f32.mrf.mxu0
        %v7591 = vadd.f32 %v7423, %v7590
        %v7592 = vpop.f32.mrf.mxu0
        %v7593 = vadd.f32 %v7423, %v7592
        %7594 = vmatmul.bf16.gmra.mxu0 %v7274
        %v7595 = vpop.f32.mrf.mxu0
        %v7596 = vadd.f32 %v7423, %v7595
        %v7597 = vpop.f32.mrf.mxu0
        %v7598 = vadd.f32 %v7423, %v7597
        %7599 = vmatmul.bf16.gmra.mxu0 %v7275
        %v7600 = vpop.f32.mrf.mxu0
        %v7601 = vadd.f32 %v7423, %v7600
        %v7602 = vpop.f32.mrf.mxu0
        %v7603 = vadd.f32 %v7423, %v7602
        %7604 = vmatmul.bf16.gmra.mxu0 %v7276
        %v7605 = vpop.f32.mrf.mxu0
        %v7606 = vadd.f32 %v7423, %v7605
        %v7607 = vpop.f32.mrf.mxu0
        %v7608 = vadd.f32 %v7423, %v7607
        %7609 = vmatmul.bf16.gmra.mxu0 %v7277
        %v7610 = vpop.f32.mrf.mxu0
        %v7611 = vadd.f32 %v7423, %v7610
        %v7612 = vpop.f32.mrf.mxu0
        %v7613 = vadd.f32 %v7423, %v7612
        %7614 = vmatmul.bf16.gmra.mxu0 %v7278
        %v7615 = vpop.f32.mrf.mxu0
        %v7616 = vadd.f32 %v7423, %v7615
        %v7617 = vpop.f32.mrf.mxu0
        %v7618 = vadd.f32 %v7423, %v7617
        %7619 = vmatmul.bf16.gmra.mxu0 %v7279
        %v7620 = vpop.f32.mrf.mxu0
        %v7621 = vadd.f32 %v7423, %v7620
        %v7622 = vpop.f32.mrf.mxu0
        %v7623 = vadd.f32 %v7423, %v7622
        %7624 = vmatmul.bf16.gmra.mxu0 %v7280
        %v7625 = vpop.f32.mrf.mxu0
        %v7626 = vadd.f32 %v7423, %v7625
        %v7627 = vpop.f32.mrf.mxu0
        %v7628 = vadd.f32 %v7423, %v7627
        %7629 = vmatmul.bf16.gmra.mxu0 %v7281
        %v7630 = vpop.f32.mrf.mxu0
        %v7631 = vadd.f32 %v7423, %v7630
        %v7632 = vpop.f32.mrf.mxu0
        %v7633 = vadd.f32 %v7423, %v7632
        %7634 = vmatmul.bf16.gmra.mxu0 %v7282
        %v7635 = vpop.f32.mrf.mxu0
        %v7636 = vadd.f32 %v7423, %v7635
        %v7637 = vpop.f32.mrf.mxu0
        %v7638 = vadd.f32 %v7423, %v7637
        %7639 = vmatmul.bf16.gmra.mxu0 %v7283
        %v7640 = vpop.f32.mrf.mxu0
        %v7641 = vadd.f32 %v7423, %v7640
        %v7642 = vpop.f32.mrf.mxu0
        %v7643 = vadd.f32 %v7423, %v7642
        %7644 = vmatmul.bf16.gmra.mxu0 %v7284
        %v7645 = vpop.f32.mrf.mxu0
        %v7646 = vadd.f32 %v7423, %v7645
        %v7647 = vpop.f32.mrf.mxu0
        %v7648 = vadd.f32 %v7423, %v7647
        %7649 = vmatmul.bf16.gmra.mxu0 %v7285
        %v7650 = vpop.f32.mrf.mxu0
        %v7651 = vadd.f32 %v7423, %v7650
        %v7652 = vpop.f32.mrf.mxu0
        %v7653 = vadd.f32 %v7423, %v7652
        %7654 = vmatmul.bf16.gmra.mxu0 %v7286
        %v7655 = vpop.f32.mrf.mxu0
        %v7656 = vadd.f32 %v7423, %v7655
        %v7657 = vpop.f32.mrf.mxu0
        %v7658 = vadd.f32 %v7423, %v7657
        %7659 = vmatmul.bf16.gmra.mxu0 %v7287
        %v7660 = vpop.f32.mrf.mxu0
        %v7661 = vadd.f32 %v7423, %v7660
        %v7662 = vpop.f32.mrf.mxu0
        %v7663 = vadd.f32 %v7423, %v7662
        %7664 = vmatmul.bf16.gmra.mxu0 %v7288
        %v7665 = vpop.f32.mrf.mxu0
        %v7666 = vadd.f32 %v7423, %v7665
        %v7667 = vpop.f32.mrf.mxu0
        %v7668 = vadd.f32 %v7423, %v7667
        %7669 = vmatmul.bf16.gmra.mxu0 %v7289
        %v7670 = vpop.f32.mrf.mxu0
        %v7671 = vadd.f32 %v7423, %v7670
        %v7672 = vpop.f32.mrf.mxu0
        %v7673 = vadd.f32 %v7423, %v7672
        %7674 = vmatmul.bf16.gmra.mxu0 %v7290
        %v7675 = vpop.f32.mrf.mxu0
        %v7676 = vadd.f32 %v7423, %v7675
        %v7677 = vpop.f32.mrf.mxu0
        %v7678 = vadd.f32 %v7423, %v7677
        %7679 = vmatmul.bf16.gmra.mxu0 %v7291
        %v7680 = vpop.f32.mrf.mxu0
        %v7681 = vadd.f32 %v7423, %v7680
        %v7682 = vpop.f32.mrf.mxu0
        %v7683 = vadd.f32 %v7423, %v7682
        %7684 = vmatmul.bf16.gmra.mxu0 %v7292
        %v7685 = vpop.f32.mrf.mxu0
        %v7686 = vadd.f32 %v7423, %v7685
        %v7687 = vpop.f32.mrf.mxu0
        %v7688 = vadd.f32 %v7423, %v7687
        %7689 = vmatmul.bf16.gmra.mxu0 %v7293
        %v7690 = vpop.f32.mrf.mxu0
        %v7691 = vadd.f32 %v7423, %v7690
        %v7692 = vpop.f32.mrf.mxu0
        %v7693 = vadd.f32 %v7423, %v7692
        %7694 = vmatmul.bf16.gmra.mxu0 %v7294
        %v7695 = vpop.f32.mrf.mxu0
        %v7696 = vadd.f32 %v7423, %v7695
        %v7697 = vpop.f32.mrf.mxu0
        %v7698 = vadd.f32 %v7423, %v7697
        %7699 = vmatmul.bf16.gmra.mxu0 %v7295
        %v7700 = vpop.f32.mrf.mxu0
        %v7701 = vadd.f32 %v7423, %v7700
        %v7702 = vpop.f32.mrf.mxu0
        %v7703 = vadd.f32 %v7423, %v7702
        %7704 = vmatmul.bf16.gmra.mxu0 %v7296
        %v7705 = vpop.f32.mrf.mxu0
        %v7706 = vadd.f32 %v7423, %v7705
        %v7707 = vpop.f32.mrf.mxu0
        %v7708 = vadd.f32 %v7423, %v7707
        %7709 = vmatmul.bf16.gmra.mxu0 %v7297
        %v7710 = vpop.f32.mrf.mxu0
        %v7711 = vadd.f32 %v7423, %v7710
        %v7712 = vpop.f32.mrf.mxu0
        %v7713 = vadd.f32 %v7423, %v7712
        %7714 = vmatmul.bf16.gmra.mxu0 %v7298
        %v7715 = vpop.f32.mrf.mxu0
        %v7716 = vadd.f32 %v7423, %v7715
        %v7717 = vpop.f32.mrf.mxu0
        %v7718 = vadd.f32 %v7423, %v7717
        %7719 = vmatmul.bf16.gmra.mxu0 %v7299
        %v7720 = vpop.f32.mrf.mxu0
        %v7721 = vadd.f32 %v7423, %v7720
        %v7722 = vpop.f32.mrf.mxu0
        %v7723 = vadd.f32 %v7423, %v7722
        %7724 = vmatmul.bf16.gmra.mxu0 %v7300
        %v7725 = vpop.f32.mrf.mxu0
        %v7726 = vadd.f32 %v7423, %v7725
        %v7727 = vpop.f32.mrf.mxu0
        %v7728 = vadd.f32 %v7423, %v7727
        %7729 = vmatmul.bf16.gmra.mxu0 %v7301
        %v7730 = vpop.f32.mrf.mxu0
        %v7731 = vadd.f32 %v7423, %v7730
        %v7732 = vpop.f32.mrf.mxu0
        %v7733 = vadd.f32 %v7423, %v7732
        %7734 = vmatmul.bf16.gmra.mxu0 %v7302
        %v7735 = vpop.f32.mrf.mxu0
        %v7736 = vadd.f32 %v7423, %v7735
        %v7737 = vpop.f32.mrf.mxu0
        %v7738 = vadd.f32 %v7423, %v7737
        %7739 = vmatmul.bf16.gmra.mxu0 %v7303
        %v7740 = vpop.f32.mrf.mxu0
        %v7741 = vadd.f32 %v7423, %v7740
        %v7742 = vpop.f32.mrf.mxu0
        %v7743 = vadd.f32 %v7423, %v7742
        %7744 = vmatmul.bf16.gmra.mxu0 %v7304
        %v7745 = vpop.f32.mrf.mxu0
        %v7746 = vadd.f32 %v7423, %v7745
        %v7747 = vpop.f32.mrf.mxu0
        %v7748 = vadd.f32 %v7423, %v7747
        %7749 = vmatmul.bf16.gmra.mxu0 %v7305
        %v7750 = vpop.f32.mrf.mxu0
        %v7751 = vadd.f32 %v7423, %v7750
        %v7752 = vpop.f32.mrf.mxu0
        %v7753 = vadd.f32 %v7423, %v7752
        %7754 = vmatmul.bf16.gmra.mxu0 %v7306
        %v7755 = vpop.f32.mrf.mxu0
        %v7756 = vadd.f32 %v7423, %v7755
        %v7757 = vpop.f32.mrf.mxu0
        %v7758 = vadd.f32 %v7423, %v7757
        %7759 = vmatmul.bf16.gmra.mxu0 %v7307
        %v7760 = vpop.f32.mrf.mxu0
        %v7761 = vadd.f32 %v7423, %v7760
        %v7762 = vpop.f32.mrf.mxu0
        %v7763 = vadd.f32 %v7423, %v7762
        %7764 = vmatmul.bf16.gmra.mxu0 %v7308
        %v7765 = vpop.f32.mrf.mxu0
        %v7766 = vadd.f32 %v7423, %v7765
        %v7767 = vpop.f32.mrf.mxu0
        %v7768 = vadd.f32 %v7423, %v7767
        %7769 = vmatmul.bf16.gmra.mxu0 %v7309
        %v7770 = vpop.f32.mrf.mxu0
        %v7771 = vadd.f32 %v7423, %v7770
        %v7772 = vpop.f32.mrf.mxu0
        %v7773 = vadd.f32 %v7423, %v7772
        %7774 = vmatmul.bf16.gmra.mxu0 %v7310
        %v7775 = vpop.f32.mrf.mxu0
        %v7776 = vadd.f32 %v7423, %v7775
        %v7777 = vpop.f32.mrf.mxu0
        %v7778 = vadd.f32 %v7423, %v7777
        %7779 = vmatmul.bf16.gmra.mxu0 %v7311
        %v7780 = vpop.f32.mrf.mxu0
        %v7781 = vadd.f32 %v7423, %v7780
        %v7782 = vpop.f32.mrf.mxu0
        %v7783 = vadd.f32 %v7423, %v7782
        %7784 = vmatmul.bf16.gmra.mxu0 %v7312
        %v7785 = vpop.f32.mrf.mxu0
        %v7786 = vadd.f32 %v7423, %v7785
        %v7787 = vpop.f32.mrf.mxu0
        %v7788 = vadd.f32 %v7423, %v7787
        %7789 = vmatmul.bf16.gmra.mxu0 %v7313
        %v7790 = vpop.f32.mrf.mxu0
        %v7791 = vadd.f32 %v7423, %v7790
        %v7792 = vpop.f32.mrf.mxu0
        %v7793 = vadd.f32 %v7423, %v7792
        %7794 = vmatmul.bf16.gmra.mxu0 %v7314
        %v7795 = vpop.f32.mrf.mxu0
        %v7796 = vadd.f32 %v7423, %v7795
        %v7797 = vpop.f32.mrf.mxu0
        %v7798 = vadd.f32 %v7423, %v7797
        %7799 = vmatmul.bf16.gmra.mxu0 %v7315
        %v7800 = vpop.f32.mrf.mxu0
        %v7801 = vadd.f32 %v7423, %v7800
        %v7802 = vpop.f32.mrf.mxu0
        %v7803 = vadd.f32 %v7423, %v7802
        %7804 = vmatmul.bf16.gmra.mxu0 %v7316
        %v7805 = vpop.f32.mrf.mxu0
        %v7806 = vadd.f32 %v7423, %v7805
        %v7807 = vpop.f32.mrf.mxu0
        %v7808 = vadd.f32 %v7423, %v7807
        %7809 = vmatmul.bf16.gmra.mxu0 %v7317
        %v7810 = vpop.f32.mrf.mxu0
        %v7811 = vadd.f32 %v7423, %v7810
        %v7812 = vpop.f32.mrf.mxu0
        %v7813 = vadd.f32 %v7423, %v7812
        %7814 = vmatmul.bf16.gmra.mxu0 %v7318
        %v7815 = vpop.f32.mrf.mxu0
        %v7816 = vadd.f32 %v7423, %v7815
        %v7817 = vpop.f32.mrf.mxu0
        %v7818 = vadd.f32 %v7423, %v7817
        %7819 = vmatmul.bf16.gmra.mxu0 %v7319
        %v7820 = vpop.f32.mrf.mxu0
        %v7821 = vadd.f32 %v7423, %v7820
        %v7822 = vpop.f32.mrf.mxu0
        %v7823 = vadd.f32 %v7423, %v7822
        %7824 = vmatmul.bf16.gmra.mxu0 %v7320
        %v7825 = vpop.f32.mrf.mxu0
        %v7826 = vadd.f32 %v7423, %v7825
        %v7827 = vpop.f32.mrf.mxu0
        %v7828 = vadd.f32 %v7423, %v7827
        %7829 = vmatmul.bf16.gmra.mxu0 %v7321
        %v7830 = vpop.f32.mrf.mxu0
        %v7831 = vadd.f32 %v7423, %v7830
        %v7832 = vpop.f32.mrf.mxu0
        %v7833 = vadd.f32 %v7423, %v7832
        %7834 = vmatmul.bf16.gmra.mxu0 %v7322
        %v7835 = vpop.f32.mrf.mxu0
        %v7836 = vadd.f32 %v7423, %v7835
        %v7837 = vpop.f32.mrf.mxu0
        %v7838 = vadd.f32 %v7423, %v7837
        %7839 = vmatmul.bf16.gmra.mxu0 %v7323
        %v7840 = vpop.f32.mrf.mxu0
        %v7841 = vadd.f32 %v7423, %v7840
        %v7842 = vpop.f32.mrf.mxu0
        %v7843 = vadd.f32 %v7423, %v7842
        %7844 = vmatmul.bf16.gmra.mxu0 %v7324
        %v7845 = vpop.f32.mrf.mxu0
        %v7846 = vadd.f32 %v7423, %v7845
        %v7847 = vpop.f32.mrf.mxu0
        %v7848 = vadd.f32 %v7423, %v7847
        %7849 = vdwg.mxu0
        %7850 = vmatpush.bf16.msra.mxu0 %v7504
        %7851 = vmatpush.bf16.msra.mxu0 %v7503
        %7852 = vmatpush.bf16.msra.mxu0 %v7502
        %7853 = vmatpush.bf16.msra.mxu0 %v7501
        %7854 = vmatpush.bf16.msra.mxu0 %v7500
        %7855 = vmatpush.bf16.msra.mxu0 %v7499
        %7856 = vmatpush.bf16.msra.mxu0 %v7498
        %7857 = vmatpush.bf16.msra.mxu0 %v7497
        %7858 = vmatmul.bf16.gmra.mxu0 %v1792
        %v7859 = vpop.f32.mrf.mxu0
        %v7860 = vadd.f32 %v7531, %v7859
        %v7861 = vpop.f32.mrf.mxu0
        %v7862 = vadd.f32 %v7533, %v7861
        %7863 = vmatmul.bf16.gmra.mxu0 %v1793
        %v7864 = vpop.f32.mrf.mxu0
        %v7865 = vadd.f32 %v7536, %v7864
        %v7866 = vpop.f32.mrf.mxu0
        %v7867 = vadd.f32 %v7538, %v7866
        %7868 = vmatmul.bf16.gmra.mxu0 %v1794
        %v7869 = vpop.f32.mrf.mxu0
        %v7870 = vadd.f32 %v7541, %v7869
        %v7871 = vpop.f32.mrf.mxu0
        %v7872 = vadd.f32 %v7543, %v7871
        %7873 = vmatmul.bf16.gmra.mxu0 %v1795
        %v7874 = vpop.f32.mrf.mxu0
        %v7875 = vadd.f32 %v7546, %v7874
        %v7876 = vpop.f32.mrf.mxu0
        %v7877 = vadd.f32 %v7548, %v7876
        %7878 = vmatmul.bf16.gmra.mxu0 %v1796
        %v7879 = vpop.f32.mrf.mxu0
        %v7880 = vadd.f32 %v7551, %v7879
        %v7881 = vpop.f32.mrf.mxu0
        %v7882 = vadd.f32 %v7553, %v7881
        %7883 = vmatmul.bf16.gmra.mxu0 %v1797
        %v7884 = vpop.f32.mrf.mxu0
        %v7885 = vadd.f32 %v7556, %v7884
        %v7886 = vpop.f32.mrf.mxu0
        %v7887 = vadd.f32 %v7558, %v7886
        %7888 = vmatmul.bf16.gmra.mxu0 %v1798
        %v7889 = vpop.f32.mrf.mxu0
        %v7890 = vadd.f32 %v7561, %v7889
        %v7891 = vpop.f32.mrf.mxu0
        %v7892 = vadd.f32 %v7563, %v7891
        %7893 = vmatmul.bf16.gmra.mxu0 %v1799
        %v7894 = vpop.f32.mrf.mxu0
        %v7895 = vadd.f32 %v7566, %v7894
        %v7896 = vpop.f32.mrf.mxu0
        %v7897 = vadd.f32 %v7568, %v7896
        %7898 = vmatmul.bf16.gmra.mxu0 %v1800
        %v7899 = vpop.f32.mrf.mxu0
        %v7900 = vadd.f32 %v7571, %v7899
        %v7901 = vpop.f32.mrf.mxu0
        %v7902 = vadd.f32 %v7573, %v7901
        %7903 = vmatmul.bf16.gmra.mxu0 %v1801
        %v7904 = vpop.f32.mrf.mxu0
        %v7905 = vadd.f32 %v7576, %v7904
        %v7906 = vpop.f32.mrf.mxu0
        %v7907 = vadd.f32 %v7578, %v7906
        %7908 = vmatmul.bf16.gmra.mxu0 %v1802
        %v7909 = vpop.f32.mrf.mxu0
        %v7910 = vadd.f32 %v7581, %v7909
        %v7911 = vpop.f32.mrf.mxu0
        %v7912 = vadd.f32 %v7583, %v7911
        %7913 = vmatmul.bf16.gmra.mxu0 %v1803
        %v7914 = vpop.f32.mrf.mxu0
        %v7915 = vadd.f32 %v7586, %v7914
        %v7916 = vpop.f32.mrf.mxu0
        %v7917 = vadd.f32 %v7588, %v7916
        %7918 = vmatmul.bf16.gmra.mxu0 %v1804
        %v7919 = vpop.f32.mrf.mxu0
        %v7920 = vadd.f32 %v7591, %v7919
        %v7921 = vpop.f32.mrf.mxu0
        %v7922 = vadd.f32 %v7593, %v7921
        %7923 = vmatmul.bf16.gmra.mxu0 %v1805
        %v7924 = vpop.f32.mrf.mxu0
        %v7925 = vadd.f32 %v7596, %v7924
        %v7926 = vpop.f32.mrf.mxu0
        %v7927 = vadd.f32 %v7598, %v7926
        %7928 = vmatmul.bf16.gmra.mxu0 %v1806
        %v7929 = vpop.f32.mrf.mxu0
        %v7930 = vadd.f32 %v7601, %v7929
        %v7931 = vpop.f32.mrf.mxu0
        %v7932 = vadd.f32 %v7603, %v7931
        %7933 = vmatmul.bf16.gmra.mxu0 %v1807
        %v7934 = vpop.f32.mrf.mxu0
        %v7935 = vadd.f32 %v7606, %v7934
        %v7936 = vpop.f32.mrf.mxu0
        %v7937 = vadd.f32 %v7608, %v7936
        %7938 = vmatmul.bf16.gmra.mxu0 %v1808
        %v7939 = vpop.f32.mrf.mxu0
        %v7940 = vadd.f32 %v7611, %v7939
        %v7941 = vpop.f32.mrf.mxu0
        %v7942 = vadd.f32 %v7613, %v7941
        %7943 = vmatmul.bf16.gmra.mxu0 %v1809
        %v7944 = vpop.f32.mrf.mxu0
        %v7945 = vadd.f32 %v7616, %v7944
        %v7946 = vpop.f32.mrf.mxu0
        %v7947 = vadd.f32 %v7618, %v7946
        %7948 = vmatmul.bf16.gmra.mxu0 %v1810
        %v7949 = vpop.f32.mrf.mxu0
        %v7950 = vadd.f32 %v7621, %v7949
        %v7951 = vpop.f32.mrf.mxu0
        %v7952 = vadd.f32 %v7623, %v7951
        %7953 = vmatmul.bf16.gmra.mxu0 %v1811
        %v7954 = vpop.f32.mrf.mxu0
        %v7955 = vadd.f32 %v7626, %v7954
        %v7956 = vpop.f32.mrf.mxu0
        %v7957 = vadd.f32 %v7628, %v7956
        %7958 = vmatmul.bf16.gmra.mxu0 %v1812
        %v7959 = vpop.f32.mrf.mxu0
        %v7960 = vadd.f32 %v7631, %v7959
        %v7961 = vpop.f32.mrf.mxu0
        %v7962 = vadd.f32 %v7633, %v7961
        %7963 = vmatmul.bf16.gmra.mxu0 %v1813
        %v7964 = vpop.f32.mrf.mxu0
        %v7965 = vadd.f32 %v7636, %v7964
        %v7966 = vpop.f32.mrf.mxu0
        %v7967 = vadd.f32 %v7638, %v7966
        %7968 = vmatmul.bf16.gmra.mxu0 %v1814
        %v7969 = vpop.f32.mrf.mxu0
        %v7970 = vadd.f32 %v7641, %v7969
        %v7971 = vpop.f32.mrf.mxu0
        %v7972 = vadd.f32 %v7643, %v7971
        %7973 = vmatmul.bf16.gmra.mxu0 %v1815
        %v7974 = vpop.f32.mrf.mxu0
        %v7975 = vadd.f32 %v7646, %v7974
        %v7976 = vpop.f32.mrf.mxu0
        %v7977 = vadd.f32 %v7648, %v7976
        %7978 = vmatmul.bf16.gmra.mxu0 %v1816
        %v7979 = vpop.f32.mrf.mxu0
        %v7980 = vadd.f32 %v7651, %v7979
        %v7981 = vpop.f32.mrf.mxu0
        %v7982 = vadd.f32 %v7653, %v7981
        %7983 = vmatmul.bf16.gmra.mxu0 %v1817
        %v7984 = vpop.f32.mrf.mxu0
        %v7985 = vadd.f32 %v7656, %v7984
        %v7986 = vpop.f32.mrf.mxu0
        %v7987 = vadd.f32 %v7658, %v7986
        %7988 = vmatmul.bf16.gmra.mxu0 %v1818
        %v7989 = vpop.f32.mrf.mxu0
        %v7990 = vadd.f32 %v7661, %v7989
        %v7991 = vpop.f32.mrf.mxu0
        %v7992 = vadd.f32 %v7663, %v7991
        %7993 = vmatmul.bf16.gmra.mxu0 %v1819
        %v7994 = vpop.f32.mrf.mxu0
        %v7995 = vadd.f32 %v7666, %v7994
        %v7996 = vpop.f32.mrf.mxu0
        %v7997 = vadd.f32 %v7668, %v7996
        %7998 = vmatmul.bf16.gmra.mxu0 %v1820
        %v7999 = vpop.f32.mrf.mxu0
        %v8000 = vadd.f32 %v7671, %v7999
        %v8001 = vpop.f32.mrf.mxu0
        %v8002 = vadd.f32 %v7673, %v8001
        %8003 = vmatmul.bf16.gmra.mxu0 %v1821
        %v8004 = vpop.f32.mrf.mxu0
        %v8005 = vadd.f32 %v7676, %v8004
        %v8006 = vpop.f32.mrf.mxu0
        %v8007 = vadd.f32 %v7678, %v8006
        %8008 = vmatmul.bf16.gmra.mxu0 %v1822
        %v8009 = vpop.f32.mrf.mxu0
        %v8010 = vadd.f32 %v7681, %v8009
        %v8011 = vpop.f32.mrf.mxu0
        %v8012 = vadd.f32 %v7683, %v8011
        %8013 = vmatmul.bf16.gmra.mxu0 %v1823
        %v8014 = vpop.f32.mrf.mxu0
        %v8015 = vadd.f32 %v7686, %v8014
        %v8016 = vpop.f32.mrf.mxu0
        %v8017 = vadd.f32 %v7688, %v8016
        %8018 = vmatmul.bf16.gmra.mxu0 %v1824
        %v8019 = vpop.f32.mrf.mxu0
        %v8020 = vadd.f32 %v7691, %v8019
        %v8021 = vpop.f32.mrf.mxu0
        %v8022 = vadd.f32 %v7693, %v8021
        %8023 = vmatmul.bf16.gmra.mxu0 %v1825
        %v8024 = vpop.f32.mrf.mxu0
        %v8025 = vadd.f32 %v7696, %v8024
        %v8026 = vpop.f32.mrf.mxu0
        %v8027 = vadd.f32 %v7698, %v8026
        %8028 = vmatmul.bf16.gmra.mxu0 %v1826
        %v8029 = vpop.f32.mrf.mxu0
        %v8030 = vadd.f32 %v7701, %v8029
        %v8031 = vpop.f32.mrf.mxu0
        %v8032 = vadd.f32 %v7703, %v8031
        %8033 = vmatmul.bf16.gmra.mxu0 %v1827
        %v8034 = vpop.f32.mrf.mxu0
        %v8035 = vadd.f32 %v7706, %v8034
        %v8036 = vpop.f32.mrf.mxu0
        %v8037 = vadd.f32 %v7708, %v8036
        %8038 = vmatmul.bf16.gmra.mxu0 %v1828
        %v8039 = vpop.f32.mrf.mxu0
        %v8040 = vadd.f32 %v7711, %v8039
        %v8041 = vpop.f32.mrf.mxu0
        %v8042 = vadd.f32 %v7713, %v8041
        %8043 = vmatmul.bf16.gmra.mxu0 %v1829
        %v8044 = vpop.f32.mrf.mxu0
        %v8045 = vadd.f32 %v7716, %v8044
        %v8046 = vpop.f32.mrf.mxu0
        %v8047 = vadd.f32 %v7718, %v8046
        %8048 = vmatmul.bf16.gmra.mxu0 %v1830
        %v8049 = vpop.f32.mrf.mxu0
        %v8050 = vadd.f32 %v7721, %v8049
        %v8051 = vpop.f32.mrf.mxu0
        %v8052 = vadd.f32 %v7723, %v8051
        %8053 = vmatmul.bf16.gmra.mxu0 %v1831
        %v8054 = vpop.f32.mrf.mxu0
        %v8055 = vadd.f32 %v7726, %v8054
        %v8056 = vpop.f32.mrf.mxu0
        %v8057 = vadd.f32 %v7728, %v8056
        %8058 = vmatmul.bf16.gmra.mxu0 %v1832
        %v8059 = vpop.f32.mrf.mxu0
        %v8060 = vadd.f32 %v7731, %v8059
        %v8061 = vpop.f32.mrf.mxu0
        %v8062 = vadd.f32 %v7733, %v8061
        %8063 = vmatmul.bf16.gmra.mxu0 %v1833
        %v8064 = vpop.f32.mrf.mxu0
        %v8065 = vadd.f32 %v7736, %v8064
        %v8066 = vpop.f32.mrf.mxu0
        %v8067 = vadd.f32 %v7738, %v8066
        %8068 = vmatmul.bf16.gmra.mxu0 %v1834
        %v8069 = vpop.f32.mrf.mxu0
        %v8070 = vadd.f32 %v7741, %v8069
        %v8071 = vpop.f32.mrf.mxu0
        %v8072 = vadd.f32 %v7743, %v8071
        %8073 = vmatmul.bf16.gmra.mxu0 %v1835
        %v8074 = vpop.f32.mrf.mxu0
        %v8075 = vadd.f32 %v7746, %v8074
        %v8076 = vpop.f32.mrf.mxu0
        %v8077 = vadd.f32 %v7748, %v8076
        %8078 = vmatmul.bf16.gmra.mxu0 %v1836
        %v8079 = vpop.f32.mrf.mxu0
        %v8080 = vadd.f32 %v7751, %v8079
        %v8081 = vpop.f32.mrf.mxu0
        %v8082 = vadd.f32 %v7753, %v8081
        %8083 = vmatmul.bf16.gmra.mxu0 %v1837
        %v8084 = vpop.f32.mrf.mxu0
        %v8085 = vadd.f32 %v7756, %v8084
        %v8086 = vpop.f32.mrf.mxu0
        %v8087 = vadd.f32 %v7758, %v8086
        %8088 = vmatmul.bf16.gmra.mxu0 %v1838
        %v8089 = vpop.f32.mrf.mxu0
        %v8090 = vadd.f32 %v7761, %v8089
        %v8091 = vpop.f32.mrf.mxu0
        %v8092 = vadd.f32 %v7763, %v8091
        %8093 = vmatmul.bf16.gmra.mxu0 %v1839
        %v8094 = vpop.f32.mrf.mxu0
        %v8095 = vadd.f32 %v7766, %v8094
        %v8096 = vpop.f32.mrf.mxu0
        %v8097 = vadd.f32 %v7768, %v8096
        %8098 = vmatmul.bf16.gmra.mxu0 %v1840
        %v8099 = vpop.f32.mrf.mxu0
        %v8100 = vadd.f32 %v7771, %v8099
        %v8101 = vpop.f32.mrf.mxu0
        %v8102 = vadd.f32 %v7773, %v8101
        %8103 = vmatmul.bf16.gmra.mxu0 %v1841
        %v8104 = vpop.f32.mrf.mxu0
        %v8105 = vadd.f32 %v7776, %v8104
        %v8106 = vpop.f32.mrf.mxu0
        %v8107 = vadd.f32 %v7778, %v8106
        %8108 = vmatmul.bf16.gmra.mxu0 %v1842
        %v8109 = vpop.f32.mrf.mxu0
        %v8110 = vadd.f32 %v7781, %v8109
        %v8111 = vpop.f32.mrf.mxu0
        %v8112 = vadd.f32 %v7783, %v8111
        %8113 = vmatmul.bf16.gmra.mxu0 %v1843
        %v8114 = vpop.f32.mrf.mxu0
        %v8115 = vadd.f32 %v7786, %v8114
        %v8116 = vpop.f32.mrf.mxu0
        %v8117 = vadd.f32 %v7788, %v8116
        %8118 = vmatmul.bf16.gmra.mxu0 %v1844
        %v8119 = vpop.f32.mrf.mxu0
        %v8120 = vadd.f32 %v7791, %v8119
        %v8121 = vpop.f32.mrf.mxu0
        %v8122 = vadd.f32 %v7793, %v8121
        %8123 = vmatmul.bf16.gmra.mxu0 %v1845
        %v8124 = vpop.f32.mrf.mxu0
        %v8125 = vadd.f32 %v7796, %v8124
        %v8126 = vpop.f32.mrf.mxu0
        %v8127 = vadd.f32 %v7798, %v8126
        %8128 = vmatmul.bf16.gmra.mxu0 %v1846
        %v8129 = vpop.f32.mrf.mxu0
        %v8130 = vadd.f32 %v7801, %v8129
        %v8131 = vpop.f32.mrf.mxu0
        %v8132 = vadd.f32 %v7803, %v8131
        %8133 = vmatmul.bf16.gmra.mxu0 %v1847
        %v8134 = vpop.f32.mrf.mxu0
        %v8135 = vadd.f32 %v7806, %v8134
        %v8136 = vpop.f32.mrf.mxu0
        %v8137 = vadd.f32 %v7808, %v8136
        %8138 = vmatmul.bf16.gmra.mxu0 %v1848
        %v8139 = vpop.f32.mrf.mxu0
        %v8140 = vadd.f32 %v7811, %v8139
        %v8141 = vpop.f32.mrf.mxu0
        %v8142 = vadd.f32 %v7813, %v8141
        %8143 = vmatmul.bf16.gmra.mxu0 %v1849
        %v8144 = vpop.f32.mrf.mxu0
        %v8145 = vadd.f32 %v7816, %v8144
        %v8146 = vpop.f32.mrf.mxu0
        %v8147 = vadd.f32 %v7818, %v8146
        %8148 = vmatmul.bf16.gmra.mxu0 %v1850
        %v8149 = vpop.f32.mrf.mxu0
        %v8150 = vadd.f32 %v7821, %v8149
        %v8151 = vpop.f32.mrf.mxu0
        %v8152 = vadd.f32 %v7823, %v8151
        %8153 = vmatmul.bf16.gmra.mxu0 %v1851
        %v8154 = vpop.f32.mrf.mxu0
        %v8155 = vadd.f32 %v7826, %v8154
        %v8156 = vpop.f32.mrf.mxu0
        %v8157 = vadd.f32 %v7828, %v8156
        %8158 = vmatmul.bf16.gmra.mxu0 %v1852
        %v8159 = vpop.f32.mrf.mxu0
        %v8160 = vadd.f32 %v7831, %v8159
        %v8161 = vpop.f32.mrf.mxu0
        %v8162 = vadd.f32 %v7833, %v8161
        %8163 = vmatmul.bf16.gmra.mxu0 %v1853
        %v8164 = vpop.f32.mrf.mxu0
        %v8165 = vadd.f32 %v7836, %v8164
        %v8166 = vpop.f32.mrf.mxu0
        %v8167 = vadd.f32 %v7838, %v8166
        %8168 = vmatmul.bf16.gmra.mxu0 %v1854
        %v8169 = vpop.f32.mrf.mxu0
        %v8170 = vadd.f32 %v7841, %v8169
        %v8171 = vpop.f32.mrf.mxu0
        %v8172 = vadd.f32 %v7843, %v8171
        %8173 = vmatmul.bf16.gmra.mxu0 %v1855
        %v8174 = vpop.f32.mrf.mxu0
        %v8175 = vadd.f32 %v7846, %v8174
        %v8176 = vpop.f32.mrf.mxu0
        %v8177 = vadd.f32 %v7848, %v8176
        %8178 = vdwg.mxu0
        %v8179 = vmax.f32 %v7860, 0.0
        %v8180 = vmax.f32 %v7862, 0.0
        %v8181 = vmax.f32 %v7865, 0.0
        %v8182 = vmax.f32 %v7867, 0.0
        %v8183 = vmax.f32 %v7870, 0.0
        %v8184 = vmax.f32 %v7872, 0.0
        %v8185 = vmax.f32 %v7875, 0.0
        %v8186 = vmax.f32 %v7877, 0.0
        %v8187 = vmax.f32 %v7880, 0.0
        %v8188 = vmax.f32 %v7882, 0.0
        %v8189 = vmax.f32 %v7885, 0.0
        %v8190 = vmax.f32 %v7887, 0.0
        %v8191 = vmax.f32 %v7890, 0.0
        %v8192 = vmax.f32 %v7892, 0.0
        %v8193 = vmax.f32 %v7895, 0.0
        %v8194 = vmax.f32 %v7897, 0.0
        %v8195 = vmax.f32 %v7900, 0.0
        %v8196 = vmax.f32 %v7902, 0.0
        %v8197 = vmax.f32 %v7905, 0.0
        %v8198 = vmax.f32 %v7907, 0.0
        %v8199 = vmax.f32 %v7910, 0.0
        %v8200 = vmax.f32 %v7912, 0.0
        %v8201 = vmax.f32 %v7915, 0.0
        %v8202 = vmax.f32 %v7917, 0.0
        %v8203 = vmax.f32 %v7920, 0.0
        %v8204 = vmax.f32 %v7922, 0.0
        %v8205 = vmax.f32 %v7925, 0.0
        %v8206 = vmax.f32 %v7927, 0.0
        %v8207 = vmax.f32 %v7930, 0.0
        %v8208 = vmax.f32 %v7932, 0.0
        %v8209 = vmax.f32 %v7935, 0.0
        %v8210 = vmax.f32 %v7937, 0.0
        %v8211 = vmax.f32 %v7940, 0.0
        %v8212 = vmax.f32 %v7942, 0.0
        %v8213 = vmax.f32 %v7945, 0.0
        %v8214 = vmax.f32 %v7947, 0.0
        %v8215 = vmax.f32 %v7950, 0.0
        %v8216 = vmax.f32 %v7952, 0.0
        %v8217 = vmax.f32 %v7955, 0.0
        %v8218 = vmax.f32 %v7957, 0.0
        %v8219 = vmax.f32 %v7960, 0.0
        %v8220 = vmax.f32 %v7962, 0.0
        %v8221 = vmax.f32 %v7965, 0.0
        %v8222 = vmax.f32 %v7967, 0.0
        %v8223 = vmax.f32 %v7970, 0.0
        %v8224 = vmax.f32 %v7972, 0.0
        %v8225 = vmax.f32 %v7975, 0.0
        %v8226 = vmax.f32 %v7977, 0.0
        %v8227 = vmax.f32 %v7980, 0.0
        %v8228 = vmax.f32 %v7982, 0.0
        %v8229 = vmax.f32 %v7985, 0.0
        %v8230 = vmax.f32 %v7987, 0.0
        %v8231 = vmax.f32 %v7990, 0.0
        %v8232 = vmax.f32 %v7992, 0.0
        %v8233 = vmax.f32 %v7995, 0.0
        %v8234 = vmax.f32 %v7997, 0.0
        %v8235 = vmax.f32 %v8000, 0.0
        %v8236 = vmax.f32 %v8002, 0.0
        %v8237 = vmax.f32 %v8005, 0.0
        %v8238 = vmax.f32 %v8007, 0.0
        %v8239 = vmax.f32 %v8010, 0.0
        %v8240 = vmax.f32 %v8012, 0.0
        %v8241 = vmax.f32 %v8015, 0.0
        %v8242 = vmax.f32 %v8017, 0.0
        %v8243 = vmax.f32 %v8020, 0.0
        %v8244 = vmax.f32 %v8022, 0.0
        %v8245 = vmax.f32 %v8025, 0.0
        %v8246 = vmax.f32 %v8027, 0.0
        %v8247 = vmax.f32 %v8030, 0.0
        %v8248 = vmax.f32 %v8032, 0.0
        %v8249 = vmax.f32 %v8035, 0.0
        %v8250 = vmax.f32 %v8037, 0.0
        %v8251 = vmax.f32 %v8040, 0.0
        %v8252 = vmax.f32 %v8042, 0.0
        %v8253 = vmax.f32 %v8045, 0.0
        %v8254 = vmax.f32 %v8047, 0.0
        %v8255 = vmax.f32 %v8050, 0.0
        %v8256 = vmax.f32 %v8052, 0.0
        %v8257 = vmax.f32 %v8055, 0.0
        %v8258 = vmax.f32 %v8057, 0.0
        %v8259 = vmax.f32 %v8060, 0.0
        %v8260 = vmax.f32 %v8062, 0.0
        %v8261 = vmax.f32 %v8065, 0.0
        %v8262 = vmax.f32 %v8067, 0.0
        %v8263 = vmax.f32 %v8070, 0.0
        %v8264 = vmax.f32 %v8072, 0.0
        %v8265 = vmax.f32 %v8075, 0.0
        %v8266 = vmax.f32 %v8077, 0.0
        %v8267 = vmax.f32 %v8080, 0.0
        %v8268 = vmax.f32 %v8082, 0.0
        %v8269 = vmax.f32 %v8085, 0.0
        %v8270 = vmax.f32 %v8087, 0.0
        %v8271 = vmax.f32 %v8090, 0.0
        %v8272 = vmax.f32 %v8092, 0.0
        %v8273 = vmax.f32 %v8095, 0.0
        %v8274 = vmax.f32 %v8097, 0.0
        %v8275 = vmax.f32 %v8100, 0.0
        %v8276 = vmax.f32 %v8102, 0.0
        %v8277 = vmax.f32 %v8105, 0.0
        %v8278 = vmax.f32 %v8107, 0.0
        %v8279 = vmax.f32 %v8110, 0.0
        %v8280 = vmax.f32 %v8112, 0.0
        %v8281 = vmax.f32 %v8115, 0.0
        %v8282 = vmax.f32 %v8117, 0.0
        %v8283 = vmax.f32 %v8120, 0.0
        %v8284 = vmax.f32 %v8122, 0.0
        %v8285 = vmax.f32 %v8125, 0.0
        %v8286 = vmax.f32 %v8127, 0.0
        %v8287 = vmax.f32 %v8130, 0.0
        %v8288 = vmax.f32 %v8132, 0.0
        %v8289 = vmax.f32 %v8135, 0.0
        %v8290 = vmax.f32 %v8137, 0.0
        %v8291 = vmax.f32 %v8140, 0.0
        %v8292 = vmax.f32 %v8142, 0.0
        %v8293 = vmax.f32 %v8145, 0.0
        %v8294 = vmax.f32 %v8147, 0.0
        %v8295 = vmax.f32 %v8150, 0.0
        %v8296 = vmax.f32 %v8152, 0.0
        %v8297 = vmax.f32 %v8155, 0.0
        %v8298 = vmax.f32 %v8157, 0.0
        %v8299 = vmax.f32 %v8160, 0.0
        %v8300 = vmax.f32 %v8162, 0.0
        %v8301 = vmax.f32 %v8165, 0.0
        %v8302 = vmax.f32 %v8167, 0.0
        %v8303 = vmax.f32 %v8170, 0.0
        %v8304 = vmax.f32 %v8172, 0.0
        %v8305 = vmax.f32 %v8175, 0.0
        %v8306 = vmax.f32 %v8177, 0.0
        %v8307 = vadd.f32 %v8179, %v8180
        %v8308 = vadd.f32 %v8307, %v8181
        %v8309 = vadd.f32 %v8308, %v8182
        %v8310 = vadd.f32 %v8309, %v8183
        %v8311 = vadd.f32 %v8310, %v8184
        %v8312 = vadd.f32 %v8311, %v8185
        %v8313 = vadd.f32 %v8312, %v8186
        %v8314 = vadd.f32 %v8313, %v8187
        %v8315 = vadd.f32 %v8314, %v8188
        %v8316 = vadd.f32 %v8315, %v8189
        %v8317 = vadd.f32 %v8316, %v8190
        %v8318 = vadd.f32 %v8317, %v8191
        %v8319 = vadd.f32 %v8318, %v8192
        %v8320 = vadd.f32 %v8319, %v8193
        %v8321 = vadd.f32 %v8320, %v8194
        %v8322 = vrot.slane %v8321, 4
        %v8323 = vadd.f32 %v8321, %v8322
        %v8324 = vrot.slane %v8323, 2
        %v8325 = vadd.f32 %v8323, %v8324
        %v8326 = vrot.slane %v8325, 1
        %v8327 = vadd.f32 %v8325, %v8326
        %v8328 = vadd.f32 %v8195, %v8196
        %v8329 = vadd.f32 %v8328, %v8197
        %v8330 = vadd.f32 %v8329, %v8198
        %v8331 = vadd.f32 %v8330, %v8199
        %v8332 = vadd.f32 %v8331, %v8200
        %v8333 = vadd.f32 %v8332, %v8201
        %v8334 = vadd.f32 %v8333, %v8202
        %v8335 = vadd.f32 %v8334, %v8203
        %v8336 = vadd.f32 %v8335, %v8204
        %v8337 = vadd.f32 %v8336, %v8205
        %v8338 = vadd.f32 %v8337, %v8206
        %v8339 = vadd.f32 %v8338, %v8207
        %v8340 = vadd.f32 %v8339, %v8208
        %v8341 = vadd.f32 %v8340, %v8209
        %v8342 = vadd.f32 %v8341, %v8210
        %v8343 = vrot.slane %v8342, 4
        %v8344 = vadd.f32 %v8342, %v8343
        %v8345 = vrot.slane %v8344, 2
        %v8346 = vadd.f32 %v8344, %v8345
        %v8347 = vrot.slane %v8346, 1
        %v8348 = vadd.f32 %v8346, %v8347
        %v8349 = vadd.f32 %v8211, %v8212
        %v8350 = vadd.f32 %v8349, %v8213
        %v8351 = vadd.f32 %v8350, %v8214
        %v8352 = vadd.f32 %v8351, %v8215
        %v8353 = vadd.f32 %v8352, %v8216
        %v8354 = vadd.f32 %v8353, %v8217
        %v8355 = vadd.f32 %v8354, %v8218
        %v8356 = vadd.f32 %v8355, %v8219
        %v8357 = vadd.f32 %v8356, %v8220
        %v8358 = vadd.f32 %v8357, %v8221
        %v8359 = vadd.f32 %v8358, %v8222
        %v8360 = vadd.f32 %v8359, %v8223
        %v8361 = vadd.f32 %v8360, %v8224
        %v8362 = vadd.f32 %v8361, %v8225
        %v8363 = vadd.f32 %v8362, %v8226
        %v8364 = vrot.slane %v8363, 4
        %v8365 = vadd.f32 %v8363, %v8364
        %v8366 = vrot.slane %v8365, 2
        %v8367 = vadd.f32 %v8365, %v8366
        %v8368 = vrot.slane %v8367, 1
        %v8369 = vadd.f32 %v8367, %v8368
        %v8370 = vadd.f32 %v8227, %v8228
        %v8371 = vadd.f32 %v8370, %v8229
        %v8372 = vadd.f32 %v8371, %v8230
        %v8373 = vadd.f32 %v8372, %v8231
        %v8374 = vadd.f32 %v8373, %v8232
        %v8375 = vadd.f32 %v8374, %v8233
        %v8376 = vadd.f32 %v8375, %v8234
        %v8377 = vadd.f32 %v8376, %v8235
        %v8378 = vadd.f32 %v8377, %v8236
        %v8379 = vadd.f32 %v8378, %v8237
        %v8380 = vadd.f32 %v8379, %v8238
        %v8381 = vadd.f32 %v8380, %v8239
        %v8382 = vadd.f32 %v8381, %v8240
        %v8383 = vadd.f32 %v8382, %v8241
        %v8384 = vadd.f32 %v8383, %v8242
        %v8385 = vrot.slane %v8384, 4
        %v8386 = vadd.f32 %v8384, %v8385
        %v8387 = vrot.slane %v8386, 2
        %v8388 = vadd.f32 %v8386, %v8387
        %v8389 = vrot.slane %v8388, 1
        %v8390 = vadd.f32 %v8388, %v8389
        %v8391 = vadd.f32 %v8243, %v8244
        %v8392 = vadd.f32 %v8391, %v8245
        %v8393 = vadd.f32 %v8392, %v8246
        %v8394 = vadd.f32 %v8393, %v8247
        %v8395 = vadd.f32 %v8394, %v8248
        %v8396 = vadd.f32 %v8395, %v8249
        %v8397 = vadd.f32 %v8396, %v8250
        %v8398 = vadd.f32 %v8397, %v8251
        %v8399 = vadd.f32 %v8398, %v8252
        %v8400 = vadd.f32 %v8399, %v8253
        %v8401 = vadd.f32 %v8400, %v8254
        %v8402 = vadd.f32 %v8401, %v8255
        %v8403 = vadd.f32 %v8402, %v8256
        %v8404 = vadd.f32 %v8403, %v8257
        %v8405 = vadd.f32 %v8404, %v8258
        %v8406 = vrot.slane %v8405, 4
        %v8407 = vadd.f32 %v8405, %v8406
        %v8408 = vrot.slane %v8407, 2
        %v8409 = vadd.f32 %v8407, %v8408
        %v8410 = vrot.slane %v8409, 1
        %v8411 = vadd.f32 %v8409, %v8410
        %v8412 = vadd.f32 %v8259, %v8260
        %v8413 = vadd.f32 %v8412, %v8261
        %v8414 = vadd.f32 %v8413, %v8262
        %v8415 = vadd.f32 %v8414, %v8263
        %v8416 = vadd.f32 %v8415, %v8264
        %v8417 = vadd.f32 %v8416, %v8265
        %v8418 = vadd.f32 %v8417, %v8266
        %v8419 = vadd.f32 %v8418, %v8267
        %v8420 = vadd.f32 %v8419, %v8268
        %v8421 = vadd.f32 %v8420, %v8269
        %v8422 = vadd.f32 %v8421, %v8270
        %v8423 = vadd.f32 %v8422, %v8271
        %v8424 = vadd.f32 %v8423, %v8272
        %v8425 = vadd.f32 %v8424, %v8273
        %v8426 = vadd.f32 %v8425, %v8274
        %v8427 = vrot.slane %v8426, 4
        %v8428 = vadd.f32 %v8426, %v8427
        %v8429 = vrot.slane %v8428, 2
        %v8430 = vadd.f32 %v8428, %v8429
        %v8431 = vrot.slane %v8430, 1
        %v8432 = vadd.f32 %v8430, %v8431
        %v8433 = vadd.f32 %v8275, %v8276
        %v8434 = vadd.f32 %v8433, %v8277
        %v8435 = vadd.f32 %v8434, %v8278
        %v8436 = vadd.f32 %v8435, %v8279
        %v8437 = vadd.f32 %v8436, %v8280
        %v8438 = vadd.f32 %v8437, %v8281
        %v8439 = vadd.f32 %v8438, %v8282
        %v8440 = vadd.f32 %v8439, %v8283
        %v8441 = vadd.f32 %v8440, %v8284
        %v8442 = vadd.f32 %v8441, %v8285
        %v8443 = vadd.f32 %v8442, %v8286
        %v8444 = vadd.f32 %v8443, %v8287
        %v8445 = vadd.f32 %v8444, %v8288
        %v8446 = vadd.f32 %v8445, %v8289
        %v8447 = vadd.f32 %v8446, %v8290
        %v8448 = vrot.slane %v8447, 4
        %v8449 = vadd.f32 %v8447, %v8448
        %v8450 = vrot.slane %v8449, 2
        %v8451 = vadd.f32 %v8449, %v8450
        %v8452 = vrot.slane %v8451, 1
        %v8453 = vadd.f32 %v8451, %v8452
        %v8454 = vadd.f32 %v8291, %v8292
        %v8455 = vadd.f32 %v8454, %v8293
        %v8456 = vadd.f32 %v8455, %v8294
        %v8457 = vadd.f32 %v8456, %v8295
        %v8458 = vadd.f32 %v8457, %v8296
        %v8459 = vadd.f32 %v8458, %v8297
        %v8460 = vadd.f32 %v8459, %v8298
        %v8461 = vadd.f32 %v8460, %v8299
        %v8462 = vadd.f32 %v8461, %v8300
        %v8463 = vadd.f32 %v8462, %v8301
        %v8464 = vadd.f32 %v8463, %v8302
        %v8465 = vadd.f32 %v8464, %v8303
        %v8466 = vadd.f32 %v8465, %v8304
        %v8467 = vadd.f32 %v8466, %v8305
        %v8468 = vadd.f32 %v8467, %v8306
        %v8469 = vrot.slane %v8468, 4
        %v8470 = vadd.f32 %v8468, %v8469
        %v8471 = vrot.slane %v8470, 2
        %v8472 = vadd.f32 %v8470, %v8471
        %v8473 = vrot.slane %v8472, 1
        %v8474 = vadd.f32 %v8472, %v8473
        %v8475 = vrcp.pop 128.0
        %v8476 = vmul.f32 128.0, %v8475
        %v8477 = vsub.f32 1.0, %v8476
        %v8478 = vmul.f32 %v8475, %v8477
        %v8479 = vadd.f32 %v8475, %v8478
        %vm8480 = vweird.f32 %v8475
        %v8481 = vsel %vm8480, %v8475, %v8479
        %v8482 = vmul.f32 %v8327, %v8481
        %v8483 = vmul.f32 %v8348, %v8481
        %v8484 = vmul.f32 %v8369, %v8481
        %v8485 = vmul.f32 %v8390, %v8481
        %v8486 = vmul.f32 %v8411, %v8481
        %v8487 = vmul.f32 %v8432, %v8481
        %v8488 = vmul.f32 %v8453, %v8481
        %v8489 = vmul.f32 %v8474, %v8481
        %vm8498 = vcmask 1041409
        %v8499 = vsel %vm8498, %v8483, %v8482
        %vm8500 = vcmask 1042434
        %v8501 = vsel %vm8500, %v8484, %v8499
        %vm8502 = vcmask 1043459
        %v8503 = vsel %vm8502, %v8485, %v8501
        %vm8504 = vcmask 1044484
        %v8505 = vsel %vm8504, %v8486, %v8503
        %vm8506 = vcmask 1045509
        %v8507 = vsel %vm8506, %v8487, %v8505
        %vm8508 = vcmask 1046534
        %v8509 = vsel %vm8508, %v8488, %v8507
        %vm8510 = vcmask 1047559
        %v8511 = vsel %vm8510, %v8489, %v8509
        %8513 = vst [vmem:[%s328] sm:$0xff] %v8511
        %s8514 = sand.u32 %s225, 1
        %s8515 = scalar_lea.sflag [#allocation3], %s8514
        %s8516 = sand.u32 %s225, 1
        %s8517 = smul.addr %s8516, 8
        %s8518 = scalar_lea.vmem [#allocation2], %s8517
        // Predicated region
        $region57: #{tpu_custom_call.1} parent=55 // pred_check
          %p8519 = pneg %p235
        $region58: #{tpu_custom_call.1} parent=55 // pred_check_branch
          %8521 = sbr.rel (%p8519) target = $region60
        $region59: #{tpu_custom_call.1} parent=55 // pred_region
          %8523 = vsyncadd %s8515, 0
          %s8524 = smul.addr %s23, 8
          %s8525 = scalar_lea.hbm %s9, %s8524
          %s8527 = sshll.u32 %s8518, 4
          %s8528 = int_to_ptr.vmem [resolvable:$true] %s8527
          %s8529 = sshll.u32 %s8525, 4
          %s8530 = int_to_ptr.hbm [resolvable:$true] %s8529
          %8532 = dma.vmem_to_hbm [thread:$0]  %s8528, 128, %s8530, %s8515
        $region60: #{tpu_custom_call.1} parent=55 // pred_fallthru
          _
      $region56: #{tpu_custom_call.1} parent=5 // pred_fallthru
        _
      %p8533 = scmp.le.s32.totalorder 2, %s18
      // Predicated region
      $region61: #{tpu_custom_call.1} parent=5 // pred_check
        %p8534 = pneg %p8533
      $region62: #{tpu_custom_call.1} parent=5 // pred_check_branch
        %8536 = sbr.rel (%p8534) target = $region64
      $region63: #{tpu_custom_call.1} parent=5 // pred_region
        %s8537 = ssub.s32 %s18, 2
        // Predicated region
        $region65: #{tpu_custom_call.1} parent=63 // pred_check
          %p8538 = pneg %p241
        $region66: #{tpu_custom_call.1} parent=63 // pred_check_branch
          %8540 = sbr.rel (%p8538) target = $region68
        $region67: #{tpu_custom_call.1} parent=63 // pred_region
          %s8541 = sand.u32 %s226, 1
          %s8542 = scalar_lea.sflag [#allocation3], %s8541
          %s8543 = sand.u32 %s226, 1
          %s8544 = smul.addr %s8543, 8
          %s8545 = scalar_lea.vmem [#allocation2], %s8544
          %8547 = dma.done %s8542, 128
        $region68: #{tpu_custom_call.1} parent=63 // pred_fallthru
          _
      $region64: #{tpu_custom_call.1} parent=5 // pred_fallthru
        _
    $region6: #{tpu_custom_call.1} parent=1 // loop_footer
      %s22 = sadd.s32 1, %s18
    $region7: #{tpu_custom_call.1} parent=1 // loop_footer_branch
      %17 = sbr.rel target = $region3
    $region8: #{tpu_custom_call.1} parent=1 // loop_exit
      _
    %8548 = vsyncpa [#allocation3], 1
    %s8549 = scalar_lea.sflag [#allocation3], 1
    %8550 = vsyncpa %s8549, 1

</llo_original>
